<compile_context>
chip_gen: v6e
topology: v6e:2x2x1
jax: 0.10.0
libtpu: 0.0.40
codegen_flags: <defaults>
</compile_context>

<pallas_src>
import math

import jax
import jax.numpy as jnp
from jax.experimental import pallas as pl
from jax.experimental.pallas import tpu as pltpu

_EPS = 1e-5
_VMEM_LIMIT = 32 * 1024 * 1024   # safe scoped-VMEM limit on v5e/v6e/v7x


def _round_up(x, m):
    return ((x + m - 1) // m) * m


def _pad_last(v, n):
    return jnp.pad(v, (0, n - v.shape[0]))


def _pad_2d(m, r, c):
    return jnp.pad(m, ((0, r - m.shape[0]), (0, c - m.shape[1])))


def _compiler_params(semantics):
    return pltpu.CompilerParams(dimension_semantics=semantics,
                                vmem_limit_bytes=_VMEM_LIMIT)


# ----------------------------- Pallas kernels ------------------------------ #

def _conv_stats_kernel(a_ref, w_ref, s1_ref, s2_ref):
    """Pass 1: per-image matmul + per-channel sum / sum-of-squares accumulation.

    a_ref block: (1, 4, R, K) -- 4 pooling phases of one image's im2col rows.
    """
    @pl.when(pl.program_id(0) == 0)
    def _():
        s1_ref[...] = jnp.zeros_like(s1_ref)
        s2_ref[...] = jnp.zeros_like(s2_ref)

    w = w_ref[...]
    s1 = jnp.zeros(s1_ref.shape, jnp.float32)
    s2 = jnp.zeros(s2_ref.shape, jnp.float32)
    for p in range(4):                                   # static unroll
        y = jnp.dot(a_ref[0, p], w, preferred_element_type=jnp.float32)
        s1 = s1 + jnp.sum(y, axis=0, keepdims=True)
        s2 = s2 + jnp.sum(y * y, axis=0, keepdims=True)
    s1_ref[...] += s1
    s2_ref[...] += s2


def _conv_norm_pool_kernel(a_ref, w_ref, scale_ref, shift_ref, o_ref):
    """Pass 2: matmul + fused BN affine + 2x2 max-pool (over phases) + ReLU.

    a_ref block: (1, 4, R, K); o_ref block: (1, R, Cout) bf16 (pooled rows).
    """
    w = w_ref[...]
    scale = scale_ref[...]
    shift = shift_ref[...]

    def affine(p):
        y = jnp.dot(a_ref[0, p], w, preferred_element_type=jnp.float32)
        return y * scale + shift                          # BN before max (exact)

    m = jnp.maximum(jnp.maximum(affine(0), affine(1)),
                    jnp.maximum(affine(2), affine(3)))
    o_ref[0] = jnp.maximum(m, 0.0).astype(o_ref.dtype)    # ReLU(max) == max(ReLU)


def _mlp_kernel(x_ref, w1_ref, b1_ref, w2_ref, b2_ref, w3_ref, b3_ref, o_ref):
    """fc1 -> (dropout as identity) -> fc2 -> fc3, bf16 MXU operands, f32 accum."""
    h = jnp.dot(x_ref[...], w1_ref[...],
                preferred_element_type=jnp.float32) + b1_ref[...]
    # TODO(synk): Dropout2d(0.25) is train-mode stochastic; treated as identity.
    h = jnp.dot(h.astype(jnp.bfloat16), w2_ref[...],
                preferred_element_type=jnp.float32) + b2_ref[...]
    o_ref[...] = jnp.dot(h.astype(jnp.bfloat16), w3_ref[...],
                         preferred_element_type=jnp.float32) + b3_ref[...]


# ------------------------------ JAX wrappers -------------------------------- #

def _im2col_pooled(x_nhwc, ksize, pad):
    """im2col patches grouped by 2x2 pooling phase -> (N, 4, Hp*Wp, K) bf16."""
    x = x_nhwc.astype(jnp.bfloat16)                       # cast before concat
    N, H, W, C = x.shape
    if pad:
        x = jnp.pad(x, ((0, 0), (pad, pad), (pad, pad), (0, 0)))
    Ho = H + 2 * pad - ksize + 1
    Wo = W + 2 * pad - ksize + 1
    assert Ho % 2 == 0 and Wo % 2 == 0
    K = ksize * ksize * C
    cols = [x[:, kh:kh + Ho, kw:kw + Wo, :]
            for kh in range(ksize) for kw in range(ksize)]
    patches = jnp.concatenate(cols, axis=-1)              # (N, Ho, Wo, K)
    Hp, Wp = Ho // 2, Wo // 2
    # TODO(synk): patch construction stays as XLA glue; in-kernel shifted-view
    # matmuls would avoid the HBM-materialized im2col at larger Cin.
    p = patches.reshape(N, Hp, 2, Wp, 2, K)
    p = jnp.transpose(p, (0, 2, 4, 1, 3, 5))              # (N, dh, dw, Hp, Wp, K)
    return p.reshape(N, 4, Hp * Wp, K), (N, Hp, Wp)


def _w_to_mat(w_oihw):
    """PyTorch OIHW conv weight -> (kh*kw*Cin, Cout), matching im2col order."""
    O, I, KH, KW = w_oihw.shape
    return jnp.transpose(w_oihw, (2, 3, 1, 0)).reshape(KH * KW * I, O)


def conv_bn_relu_pool_pallas(x_nhwc, w_mat, gamma, beta, *, ksize, pad):
    """Fused conv + batch-stat BN + ReLU + 2x2 maxpool -> (N, Hp, Wp, Cout) bf16."""
    a4, (N, Hp, Wp) = _im2col_pooled(x_nhwc, ksize, pad)
    _, _, R, K = a4.shape
    Cout = w_mat.shape[1]

    a_spec = pl.BlockSpec((1, 4, R, K), lambda n: (n, 0, 0, 0))
    w_spec = pl.BlockSpec((K, Cout), lambda n: (0, 0))
    vec_spec = pl.BlockSpec((1, Cout), lambda n: (0, 0))

    # Pass 1: global per-channel sums for the batch-norm statistics.
    s1, s2 = pl.pallas_call(
        _conv_stats_kernel,
        out_shape=(jax.ShapeDtypeStruct((1, Cout), jnp.float32),
                   jax.ShapeDtypeStruct((1, Cout), jnp.float32)),
        grid=(N,),
        in_specs=[a_spec, w_spec],
        out_specs=(vec_spec, vec_spec),
        compiler_params=_compiler_params(("arbitrary",)),
    )(a4, w_mat)

    m_total = float(N * 4 * R)                             # = N * Ho * Wo
    mu = s1 / m_total
    var = jnp.maximum(s2 / m_total - mu * mu, 0.0)         # single-pass variance
    scale = gamma.reshape(1, Cout) * jax.lax.rsqrt(var + _EPS)
    shift = beta.reshape(1, Cout) - mu * scale

    # Pass 2: redo the cheap small-K matmul, fused BN affine + pool + ReLU,
    # store the pooled activation directly in bf16 at its real channel width.
    out = pl.pallas_call(
        _conv_norm_pool_kernel,
        out_shape=jax.ShapeDtypeStruct((N, R, Cout), jnp.bfloat16),
        grid=(N,),
        in_specs=[a_spec, w_spec, vec_spec, vec_spec],
        out_specs=pl.BlockSpec((1, R, Cout), lambda n: (n, 0, 0)),
        compiler_params=_compiler_params(("parallel",)),
    )(a4, w_mat, scale.astype(jnp.float32), shift.astype(jnp.float32))

    return out.reshape(N, Hp, Wp, Cout)


def mlp_pallas(x_flat, w1, b1, w2, b2, w3, b3, num_out):
    N, K = x_flat.shape
    F1, F2, F3 = w1.shape[1], w2.shape[1], w3.shape[1]
    tile_b = N if N <= 512 else 512                        # weights stay resident
    n_pad = _round_up(N, tile_b)
    xb = x_flat.astype(jnp.bfloat16)
    if n_pad != N:
        xb = jnp.pad(xb, ((0, n_pad - N), (0, 0)))

    def const(shape):
        return pl.BlockSpec(shape, lambda i: (0, 0))

    out = pl.pallas_call(
        _mlp_kernel,
        out_shape=jax.ShapeDtypeStruct((n_pad, F3), jnp.float32),
        grid=(n_pad // tile_b,),
        in_specs=[pl.BlockSpec((tile_b, K), lambda i: (i, 0)),
                  const((K, F1)), const((1, F1)),
                  const((F1, F2)), const((1, F2)),
                  const((F2, F3)), const((1, F3))],
        out_specs=pl.BlockSpec((tile_b, F3), lambda i: (i, 0)),
        compiler_params=_compiler_params(("parallel",)),
    )(xb, w1, b1, w2, b2, w3, b3)
    return out[:N, :num_out]


# --------------------------------- Module ----------------------------------- #

class CNNFashionPallas:
    """Pallas-TPU forward of CNNFashion (train-mode BN, inference dropout)."""

    def __init__(self, num_channels=1, num_classes=10, *, key):
        ks = jax.random.split(key, 12)

        def uni(k, shape, fan_in):
            bound = 1.0 / math.sqrt(float(fan_in))
            return jax.random.uniform(k, shape, jnp.float32, -bound, bound)

        self.num_channels = num_channels
        self.num_classes = num_classes

        # layer1: Conv2d(num_channels, 32, 3, padding=1) + BN(32)
        self.w1 = uni(ks[0], (32, num_channels, 3, 3), 9 * num_channels)
        self.g1 = 1.0 + 0.1 * jax.random.normal(ks[1], (32,), jnp.float32)
        self.b1 = 0.1 * jax.random.normal(ks[2], (32,), jnp.float32)
        # layer2: Conv2d(32, 64, 3) + BN(64)
        self.w2 = uni(ks[3], (64, 32, 3, 3), 9 * 32)
        self.g2 = 1.0 + 0.1 * jax.random.normal(ks[4], (64,), jnp.float32)
        self.b2 = 0.1 * jax.random.normal(ks[5], (64,), jnp.float32)
        # (conv biases omitted: they cancel exactly under batch-statistic BN)

        # fc head (PyTorch Linear stores weight as (out_features, in_features))
        self.fw1 = uni(ks[6], (600, 64 * 6 * 6), 64 * 6 * 6)
        self.fb1 = uni(ks[7], (600,), 64 * 6 * 6)
        self.fw2 = uni(ks[8], (120, 600), 600)
        self.fb2 = uni(ks[9], (120,), 600)
        self.fw3 = uni(ks[10], (num_classes, 120), 120)
        self.fb3 = uni(ks[11], (num_classes,), 120)

        # Pallas-side parameter forms: bf16 MXU operands at real conv widths.
        self.w1m = _w_to_mat(self.w1).astype(jnp.bfloat16)           # (9*Cin, 32)
        self.w2m = _w_to_mat(self.w2).astype(jnp.bfloat16)           # (288, 64)

        f1p = _round_up(600, 128)
        f2p = _round_up(120, 128)
        f3p = _round_up(num_classes, 128)
        # Permute fc1 rows once so the NHWC flatten (h, w, c) of the pooled
        # conv2 output feeds it directly (no runtime transpose of activations).
        fw1_nhwc = jnp.transpose(self.fw1.reshape(600, 64, 6, 6),
                                 (2, 3, 1, 0)).reshape(64 * 6 * 6, 600)
        self.fw1p = _pad_2d(fw1_nhwc, 64 * 6 * 6, f1p).astype(jnp.bfloat16)
        self.fb1p = _pad_last(self.fb1, f1p).reshape(1, f1p)
        self.fw2p = _pad_2d(self.fw2.T, f1p, f2p).astype(jnp.bfloat16)
        self.fb2p = _pad_last(self.fb2, f2p).reshape(1, f2p)
        self.fw3p = _pad_2d(self.fw3.T, f2p, f3p).astype(jnp.bfloat16)
        self.fb3p = _pad_last(self.fb3, f3p).reshape(1, f3p)

    def __call__(self, x_nchw):
        x = jnp.transpose(x_nchw, (0, 2, 3, 1)).astype(jnp.float32)   # NHWC
        n = x.shape[0]

        # layer1: conv(3x3, pad 1) + BN + ReLU + 2x2 maxpool (fused), bf16 out
        h = conv_bn_relu_pool_pallas(x, self.w1m, self.g1, self.b1,
                                     ksize=3, pad=1)                  # (N,14,14,32)
        # layer2: conv(3x3, pad 0) + BN + ReLU + 2x2 maxpool (fused), bf16 out
        h = conv_bn_relu_pool_pallas(h, self.w2m, self.g2, self.b2,
                                     ksize=3, pad=0)                  # (N,6,6,64)

        # NHWC flatten matches the permuted fc1 weight; fused fc1 -> fc2 -> fc3
        flat = h.reshape(n, -1)
        return mlp_pallas(flat, self.fw1p, self.fb1p, self.fw2p, self.fb2p,
                          self.fw3p, self.fb3p, self.num_classes)

    # Pure-JAX f32 reference mirroring the PyTorch forward (train-mode BN).
    def ref_forward(self, x_nchw):
        def conv(x, w, pad):
            return jax.lax.conv_general_dilated(
                x, w, (1, 1), [(pad, pad), (pad, pad)],
                dimension_numbers=("NCHW", "OIHW", "NCHW"),
                precision=jax.lax.Precision.HIGHEST)

        def bn(y, g, b):
            mu = jnp.mean(y, axis=(0, 2, 3), keepdims=True)
            var = jnp.mean((y - mu) ** 2, axis=(0, 2, 3), keepdims=True)
            return ((y - mu) * jax.lax.rsqrt(var + _EPS)
                    * g.reshape(1, -1, 1, 1) + b.reshape(1, -1, 1, 1))

        def pool(y):
            nn_, c, hh, ww = y.shape
            return jnp.max(y.reshape(nn_, c, hh // 2, 2, ww // 2, 2), axis=(3, 5))

        h = pool(jax.nn.relu(bn(conv(x_nchw, self.w1, 1), self.g1, self.b1)))
        h = pool(jax.nn.relu(bn(conv(h, self.w2, 0), self.g2, self.b2)))
        h = h.reshape(h.shape[0], -1)
        h = h @ self.fw1.T + self.fb1            # fc1
        h = h @ self.fw2.T + self.fb2            # dropout = identity, fc2
        return h @ self.fw3.T + self.fb3         # fc3


if __name__ == "__main__":
    root = jax.random.PRNGKey(0)
    k_x, k_p = jax.random.split(root)
    # Fashion-MNIST-shaped input (spatial/channels fixed by fc1's 64*6*6 features).
    x = jax.random.normal(k_x, (2, 1, 28, 28), jnp.float32)   # NCHW like PyTorch

    model = CNNFashionPallas(num_channels=1, num_classes=10, key=k_p)
    fwd = jax.jit(model.__call__)
    y = jax.block_until_ready(fwd(x))
    ref = model.ref_forward(x)

    assert y.shape == (2, 10), y.shape
    err = float(jnp.max(jnp.abs(y - ref)))
    scale = float(jnp.max(jnp.abs(ref)))
    assert err <= 0.1 * scale + 1e-2, f"max abs err {err} vs ref scale {scale}"
    print("KERNEL_OK")
</pallas_src>

<mosaic_0001>
module attributes {stable_mosaic.version = 11 : i64} {
  func.func @_conv_stats_kernel(%arg0: i32, %arg1: memref<1x4x196x9xbf16, #tpu.memory_space<vmem>>, %arg2: memref<9x32xbf16, #tpu.memory_space<vmem>>, %arg3: memref<1x32xf32, #tpu.memory_space<vmem>>, %arg4: memref<1x32xf32, #tpu.memory_space<vmem>>) attributes {dimension_semantics = [#tpu.dimension_semantics<arbitrary>], iteration_bounds = array<i64: 2>, scalar_prefetch = 0 : i64, scratch_operands = 0 : i64, tpu.core_type = #tpu.core_type<tc>, window_params = [{transform_indices = @transform_0, window_bounds = array<i64: 1, 4, 196, 9>}, {pipeline_mode = #tpu.pipeline_mode<synchronous>, transform_indices = @transform_1, window_bounds = array<i64: 9, 32>}, {pipeline_mode = #tpu.pipeline_mode<synchronous>, transform_indices = @transform_2, window_bounds = array<i64: 1, 32>}, {pipeline_mode = #tpu.pipeline_mode<synchronous>, transform_indices = @transform_3, window_bounds = array<i64: 1, 32>}]} {
    %c0_i32 = arith.constant 0 : i32
    %0 = arith.cmpi eq, %arg0, %c0_i32 : i32
    %1 = arith.extui %0 : i1 to i32
    %c0_i32_0 = arith.constant 0 : i32
    %2 = arith.cmpi ne, %1, %c0_i32_0 : i32
    scf.if %2 {
      %cst_36 = arith.constant 0.000000e+00 : f32
      %52 = vector.broadcast %cst_36 : f32 to vector<1x32xf32>
      %c0_37 = arith.constant 0 : index
      %c0_38 = arith.constant 0 : index
      %53 = vector.load %arg3[%c0_37, %c0_38] : memref<1x32xf32, #tpu.memory_space<vmem>>, vector<1x32xf32>
      tpu.vector_store %arg3[%c0_37, %c0_38], %52 {strides = array<i32>} : memref<1x32xf32, #tpu.memory_space<vmem>>, vector<1x32xf32>,
      %cst_39 = arith.constant 0.000000e+00 : f32
      %54 = vector.broadcast %cst_39 : f32 to vector<1x32xf32>
      %c0_40 = arith.constant 0 : index
      %c0_41 = arith.constant 0 : index
      %55 = vector.load %arg4[%c0_40, %c0_41] : memref<1x32xf32, #tpu.memory_space<vmem>>, vector<1x32xf32>
      tpu.vector_store %arg4[%c0_40, %c0_41], %54 {strides = array<i32>} : memref<1x32xf32, #tpu.memory_space<vmem>>, vector<1x32xf32>,
    } else {
    }
    %c0 = arith.constant 0 : index
    %c0_1 = arith.constant 0 : index
    %3 = vector.load %arg2[%c0, %c0_1] : memref<9x32xbf16, #tpu.memory_space<vmem>>, vector<9x32xbf16>
    %cst = arith.constant 0.000000e+00 : f32
    %4 = vector.broadcast %cst : f32 to vector<1x32xf32>
    %cst_2 = arith.constant 0.000000e+00 : f32
    %5 = vector.broadcast %cst_2 : f32 to vector<1x32xf32>
    %c0_3 = arith.constant 0 : index
    %c0_4 = arith.constant 0 : index
    %c0_5 = arith.constant 0 : index
    %c0_6 = arith.constant 0 : index
    %6 = vector.load %arg1[%c0_3, %c0_4, %c0_5, %c0_6] : memref<1x4x196x9xbf16, #tpu.memory_space<vmem>>, vector<1x1x196x9xbf16>
    %7 = vector.shape_cast %6 : vector<1x1x196x9xbf16> to vector<196x9xbf16>
    %cst_7 = arith.constant dense<0.000000e+00> : vector<196x32xf32>
    %8 = tpu.matmul %7, %3, %cst_7 {dimension_numbers = #tpu.dot_dimension_numbers<[1], [0], [0], [1], [0, 0, 1, 1], [], []>} : vector<196x9xbf16>, vector<9x32xbf16>, vector<196x32xf32> -> vector<196x32xf32>
    %cst_8 = arith.constant dense<0.000000e+00> : vector<32xf32>
    %9 = vector.multi_reduction <add>, %8, %cst_8 [0] : vector<196x32xf32> to vector<32xf32>
    %10 = vector.shape_cast %9 : vector<32xf32> to vector<1x32xf32>
    %11 = arith.addf %4, %10 : vector<1x32xf32>
    %12 = arith.mulf %8, %8 : vector<196x32xf32>
    %cst_9 = arith.constant dense<0.000000e+00> : vector<32xf32>
    %13 = vector.multi_reduction <add>, %12, %cst_9 [0] : vector<196x32xf32> to vector<32xf32>
    %14 = vector.shape_cast %13 : vector<32xf32> to vector<1x32xf32>
    %15 = arith.addf %5, %14 : vector<1x32xf32>
    %c0_10 = arith.constant 0 : index
    %c1 = arith.constant 1 : index
    %c0_11 = arith.constant 0 : index
    %c0_12 = arith.constant 0 : index
    %16 = vector.load %arg1[%c0_10, %c1, %c0_11, %c0_12] : memref<1x4x196x9xbf16, #tpu.memory_space<vmem>>, vector<1x1x196x9xbf16>
    %17 = vector.shape_cast %16 : vector<1x1x196x9xbf16> to vector<196x9xbf16>
    %cst_13 = arith.constant dense<0.000000e+00> : vector<196x32xf32>
    %18 = tpu.matmul %17, %3, %cst_13 {dimension_numbers = #tpu.dot_dimension_numbers<[1], [0], [0], [1], [0, 0, 1, 1], [], []>} : vector<196x9xbf16>, vector<9x32xbf16>, vector<196x32xf32> -> vector<196x32xf32>
    %cst_14 = arith.constant dense<0.000000e+00> : vector<32xf32>
    %19 = vector.multi_reduction <add>, %18, %cst_14 [0] : vector<196x32xf32> to vector<32xf32>
    %20 = vector.shape_cast %19 : vector<32xf32> to vector<1x32xf32>
    %21 = arith.addf %11, %20 : vector<1x32xf32>
    %22 = arith.mulf %18, %18 : vector<196x32xf32>
    %cst_15 = arith.constant dense<0.000000e+00> : vector<32xf32>
    %23 = vector.multi_reduction <add>, %22, %cst_15 [0] : vector<196x32xf32> to vector<32xf32>
    %24 = vector.shape_cast %23 : vector<32xf32> to vector<1x32xf32>
    %25 = arith.addf %15, %24 : vector<1x32xf32>
    %c0_16 = arith.constant 0 : index
    %c2 = arith.constant 2 : index
    %c0_17 = arith.constant 0 : index
    %c0_18 = arith.constant 0 : index
    %26 = vector.load %arg1[%c0_16, %c2, %c0_17, %c0_18] : memref<1x4x196x9xbf16, #tpu.memory_space<vmem>>, vector<1x1x196x9xbf16>
    %27 = vector.shape_cast %26 : vector<1x1x196x9xbf16> to vector<196x9xbf16>
    %cst_19 = arith.constant dense<0.000000e+00> : vector<196x32xf32>
    %28 = tpu.matmul %27, %3, %cst_19 {dimension_numbers = #tpu.dot_dimension_numbers<[1], [0], [0], [1], [0, 0, 1, 1], [], []>} : vector<196x9xbf16>, vector<9x32xbf16>, vector<196x32xf32> -> vector<196x32xf32>
    %cst_20 = arith.constant dense<0.000000e+00> : vector<32xf32>
    %29 = vector.multi_reduction <add>, %28, %cst_20 [0] : vector<196x32xf32> to vector<32xf32>
    %30 = vector.shape_cast %29 : vector<32xf32> to vector<1x32xf32>
    %31 = arith.addf %21, %30 : vector<1x32xf32>
    %32 = arith.mulf %28, %28 : vector<196x32xf32>
    %cst_21 = arith.constant dense<0.000000e+00> : vector<32xf32>
    %33 = vector.multi_reduction <add>, %32, %cst_21 [0] : vector<196x32xf32> to vector<32xf32>
    %34 = vector.shape_cast %33 : vector<32xf32> to vector<1x32xf32>
    %35 = arith.addf %25, %34 : vector<1x32xf32>
    %c0_22 = arith.constant 0 : index
    %c3 = arith.constant 3 : index
    %c0_23 = arith.constant 0 : index
    %c0_24 = arith.constant 0 : index
    %36 = vector.load %arg1[%c0_22, %c3, %c0_23, %c0_24] : memref<1x4x196x9xbf16, #tpu.memory_space<vmem>>, vector<1x1x196x9xbf16>
    %37 = vector.shape_cast %36 : vector<1x1x196x9xbf16> to vector<196x9xbf16>
    %cst_25 = arith.constant dense<0.000000e+00> : vector<196x32xf32>
    %38 = tpu.matmul %37, %3, %cst_25 {dimension_numbers = #tpu.dot_dimension_numbers<[1], [0], [0], [1], [0, 0, 1, 1], [], []>} : vector<196x9xbf16>, vector<9x32xbf16>, vector<196x32xf32> -> vector<196x32xf32>
    %cst_26 = arith.constant dense<0.000000e+00> : vector<32xf32>
    %39 = vector.multi_reduction <add>, %38, %cst_26 [0] : vector<196x32xf32> to vector<32xf32>
    %40 = vector.shape_cast %39 : vector<32xf32> to vector<1x32xf32>
    %41 = arith.addf %31, %40 : vector<1x32xf32>
    %42 = arith.mulf %38, %38 : vector<196x32xf32>
    %cst_27 = arith.constant dense<0.000000e+00> : vector<32xf32>
    %43 = vector.multi_reduction <add>, %42, %cst_27 [0] : vector<196x32xf32> to vector<32xf32>
    %44 = vector.shape_cast %43 : vector<32xf32> to vector<1x32xf32>
    %45 = arith.addf %35, %44 : vector<1x32xf32>
    %c0_28 = arith.constant 0 : index
    %c0_29 = arith.constant 0 : index
    %46 = vector.load %arg3[%c0_28, %c0_29] : memref<1x32xf32, #tpu.memory_space<vmem>>, vector<1x32xf32>
    %47 = arith.addf %46, %41 : vector<1x32xf32>
    %c0_30 = arith.constant 0 : index
    %c0_31 = arith.constant 0 : index
    %48 = vector.load %arg3[%c0_30, %c0_31] : memref<1x32xf32, #tpu.memory_space<vmem>>, vector<1x32xf32>
    tpu.vector_store %arg3[%c0_30, %c0_31], %47 {strides = array<i32>} : memref<1x32xf32, #tpu.memory_space<vmem>>, vector<1x32xf32>,
    %c0_32 = arith.constant 0 : index
    %c0_33 = arith.constant 0 : index
    %49 = vector.load %arg4[%c0_32, %c0_33] : memref<1x32xf32, #tpu.memory_space<vmem>>, vector<1x32xf32>
    %50 = arith.addf %49, %45 : vector<1x32xf32>
    %c0_34 = arith.constant 0 : index
    %c0_35 = arith.constant 0 : index
    %51 = vector.load %arg4[%c0_34, %c0_35] : memref<1x32xf32, #tpu.memory_space<vmem>>, vector<1x32xf32>
    tpu.vector_store %arg4[%c0_34, %c0_35], %50 {strides = array<i32>} : memref<1x32xf32, #tpu.memory_space<vmem>>, vector<1x32xf32>,
    return
  }
  func.func @transform_0(%arg0: i32) -> (i32, i32, i32, i32) {
    %c0_i32 = arith.constant 0 : i32
    %c0_i32_0 = arith.constant 0 : i32
    %c0_i32_1 = arith.constant 0 : i32
    %c0_i32_2 = arith.constant 0 : i32
    return %arg0, %c0_i32, %c0_i32_0, %c0_i32_1 : i32, i32, i32, i32
  }
  func.func @transform_1(%arg0: i32) -> (i32, i32) {
    %c0_i32 = arith.constant 0 : i32
    %c0_i32_0 = arith.constant 0 : i32
    %c0_i32_1 = arith.constant 0 : i32
    return %c0_i32, %c0_i32_0 : i32, i32
  }
  func.func @transform_2(%arg0: i32) -> (i32, i32) {
    %c0_i32 = arith.constant 0 : i32
    %c0_i32_0 = arith.constant 0 : i32
    %c0_i32_1 = arith.constant 0 : i32
    return %c0_i32, %c0_i32_0 : i32, i32
  }
  func.func @transform_3(%arg0: i32) -> (i32, i32) {
    %c0_i32 = arith.constant 0 : i32
    %c0_i32_0 = arith.constant 0 : i32
    %c0_i32_1 = arith.constant 0 : i32
    return %c0_i32, %c0_i32_0 : i32, i32
  }
}

module attributes {stable_mosaic.version = 11 : i64} {
  func.func @_conv_norm_pool_kernel(%arg0: i32, %arg1: memref<1x4x196x9xbf16, #tpu.memory_space<vmem>>, %arg2: memref<9x32xbf16, #tpu.memory_space<vmem>>, %arg3: memref<1x32xf32, #tpu.memory_space<vmem>>, %arg4: memref<1x32xf32, #tpu.memory_space<vmem>>, %arg5: memref<1x196x32xbf16, #tpu.memory_space<vmem>>) attributes {dimension_semantics = [#tpu.dimension_semantics<parallel>], iteration_bounds = array<i64: 2>, scalar_prefetch = 0 : i64, scratch_operands = 0 : i64, tpu.core_type = #tpu.core_type<tc>, window_params = [{transform_indices = @transform_0, window_bounds = array<i64: 1, 4, 196, 9>}, {pipeline_mode = #tpu.pipeline_mode<synchronous>, transform_indices = @transform_1, window_bounds = array<i64: 9, 32>}, {pipeline_mode = #tpu.pipeline_mode<synchronous>, transform_indices = @transform_2, window_bounds = array<i64: 1, 32>}, {pipeline_mode = #tpu.pipeline_mode<synchronous>, transform_indices = @transform_3, window_bounds = array<i64: 1, 32>}, {transform_indices = @transform_4, window_bounds = array<i64: 1, 196, 32>}]} {
    %c0 = arith.constant 0 : index
    %c0_0 = arith.constant 0 : index
    %0 = vector.load %arg2[%c0, %c0_0] : memref<9x32xbf16, #tpu.memory_space<vmem>>, vector<9x32xbf16>
    %c0_1 = arith.constant 0 : index
    %c0_2 = arith.constant 0 : index
    %1 = vector.load %arg3[%c0_1, %c0_2] : memref<1x32xf32, #tpu.memory_space<vmem>>, vector<1x32xf32>
    %c0_3 = arith.constant 0 : index
    %c0_4 = arith.constant 0 : index
    %2 = vector.load %arg4[%c0_3, %c0_4] : memref<1x32xf32, #tpu.memory_space<vmem>>, vector<1x32xf32>
    %c0_5 = arith.constant 0 : index
    %c0_6 = arith.constant 0 : index
    %c0_7 = arith.constant 0 : index
    %c0_8 = arith.constant 0 : index
    %3 = vector.load %arg1[%c0_5, %c0_6, %c0_7, %c0_8] : memref<1x4x196x9xbf16, #tpu.memory_space<vmem>>, vector<1x1x196x9xbf16>
    %4 = vector.shape_cast %3 : vector<1x1x196x9xbf16> to vector<196x9xbf16>
    %cst = arith.constant dense<0.000000e+00> : vector<196x32xf32>
    %5 = tpu.matmul %4, %0, %cst {dimension_numbers = #tpu.dot_dimension_numbers<[1], [0], [0], [1], [0, 0, 1, 1], [], []>} : vector<196x9xbf16>, vector<9x32xbf16>, vector<196x32xf32> -> vector<196x32xf32>
    %6 = vector.broadcast %1 : vector<1x32xf32> to vector<196x32xf32>
    %7 = arith.mulf %5, %6 : vector<196x32xf32>
    %8 = vector.broadcast %2 : vector<1x32xf32> to vector<196x32xf32>
    %9 = arith.addf %7, %8 : vector<196x32xf32>
    %c0_9 = arith.constant 0 : index
    %c1 = arith.constant 1 : index
    %c0_10 = arith.constant 0 : index
    %c0_11 = arith.constant 0 : index
    %10 = vector.load %arg1[%c0_9, %c1, %c0_10, %c0_11] : memref<1x4x196x9xbf16, #tpu.memory_space<vmem>>, vector<1x1x196x9xbf16>
    %11 = vector.shape_cast %10 : vector<1x1x196x9xbf16> to vector<196x9xbf16>
    %cst_12 = arith.constant dense<0.000000e+00> : vector<196x32xf32>
    %12 = tpu.matmul %11, %0, %cst_12 {dimension_numbers = #tpu.dot_dimension_numbers<[1], [0], [0], [1], [0, 0, 1, 1], [], []>} : vector<196x9xbf16>, vector<9x32xbf16>, vector<196x32xf32> -> vector<196x32xf32>
    %13 = vector.broadcast %1 : vector<1x32xf32> to vector<196x32xf32>
    %14 = arith.mulf %12, %13 : vector<196x32xf32>
    %15 = vector.broadcast %2 : vector<1x32xf32> to vector<196x32xf32>
    %16 = arith.addf %14, %15 : vector<196x32xf32>
    %17 = arith.maximumf %9, %16 : vector<196x32xf32>
    %c0_13 = arith.constant 0 : index
    %c2 = arith.constant 2 : index
    %c0_14 = arith.constant 0 : index
    %c0_15 = arith.constant 0 : index
    %18 = vector.load %arg1[%c0_13, %c2, %c0_14, %c0_15] : memref<1x4x196x9xbf16, #tpu.memory_space<vmem>>, vector<1x1x196x9xbf16>
    %19 = vector.shape_cast %18 : vector<1x1x196x9xbf16> to vector<196x9xbf16>
    %cst_16 = arith.constant dense<0.000000e+00> : vector<196x32xf32>
    %20 = tpu.matmul %19, %0, %cst_16 {dimension_numbers = #tpu.dot_dimension_numbers<[1], [0], [0], [1], [0, 0, 1, 1], [], []>} : vector<196x9xbf16>, vector<9x32xbf16>, vector<196x32xf32> -> vector<196x32xf32>
    %21 = vector.broadcast %1 : vector<1x32xf32> to vector<196x32xf32>
    %22 = arith.mulf %20, %21 : vector<196x32xf32>
    %23 = vector.broadcast %2 : vector<1x32xf32> to vector<196x32xf32>
    %24 = arith.addf %22, %23 : vector<196x32xf32>
    %c0_17 = arith.constant 0 : index
    %c3 = arith.constant 3 : index
    %c0_18 = arith.constant 0 : index
    %c0_19 = arith.constant 0 : index
    %25 = vector.load %arg1[%c0_17, %c3, %c0_18, %c0_19] : memref<1x4x196x9xbf16, #tpu.memory_space<vmem>>, vector<1x1x196x9xbf16>
    %26 = vector.shape_cast %25 : vector<1x1x196x9xbf16> to vector<196x9xbf16>
    %cst_20 = arith.constant dense<0.000000e+00> : vector<196x32xf32>
    %27 = tpu.matmul %26, %0, %cst_20 {dimension_numbers = #tpu.dot_dimension_numbers<[1], [0], [0], [1], [0, 0, 1, 1], [], []>} : vector<196x9xbf16>, vector<9x32xbf16>, vector<196x32xf32> -> vector<196x32xf32>
    %28 = vector.broadcast %1 : vector<1x32xf32> to vector<196x32xf32>
    %29 = arith.mulf %27, %28 : vector<196x32xf32>
    %30 = vector.broadcast %2 : vector<1x32xf32> to vector<196x32xf32>
    %31 = arith.addf %29, %30 : vector<196x32xf32>
    %32 = arith.maximumf %24, %31 : vector<196x32xf32>
    %33 = arith.maximumf %17, %32 : vector<196x32xf32>
    %cst_21 = arith.constant 0.000000e+00 : f32
    %34 = vector.broadcast %cst_21 : f32 to vector<196x32xf32>
    %35 = arith.maximumf %33, %34 : vector<196x32xf32>
    %36 = arith.truncf %35 : vector<196x32xf32> to vector<196x32xbf16>
    %c0_22 = arith.constant 0 : index
    %c0_23 = arith.constant 0 : index
    %c0_24 = arith.constant 0 : index
    %37 = vector.load %arg5[%c0_22, %c0_23, %c0_24] : memref<1x196x32xbf16, #tpu.memory_space<vmem>>, vector<1x196x32xbf16>
    %38 = vector.shape_cast %37 : vector<1x196x32xbf16> to vector<196x32xbf16>
    %39 = vector.shape_cast %36 : vector<196x32xbf16> to vector<1x196x32xbf16>
    tpu.vector_store %arg5[%c0_22, %c0_23, %c0_24], %39 {strides = array<i32>} : memref<1x196x32xbf16, #tpu.memory_space<vmem>>, vector<1x196x32xbf16>,
    return
  }
  func.func @transform_0(%arg0: i32) -> (i32, i32, i32, i32) {
    %c0_i32 = arith.constant 0 : i32
    %c0_i32_0 = arith.constant 0 : i32
    %c0_i32_1 = arith.constant 0 : i32
    %c0_i32_2 = arith.constant 0 : i32
    return %arg0, %c0_i32, %c0_i32_0, %c0_i32_1 : i32, i32, i32, i32
  }
  func.func @transform_1(%arg0: i32) -> (i32, i32) {
    %c0_i32 = arith.constant 0 : i32
    %c0_i32_0 = arith.constant 0 : i32
    %c0_i32_1 = arith.constant 0 : i32
    return %c0_i32, %c0_i32_0 : i32, i32
  }
  func.func @transform_2(%arg0: i32) -> (i32, i32) {
    %c0_i32 = arith.constant 0 : i32
    %c0_i32_0 = arith.constant 0 : i32
    %c0_i32_1 = arith.constant 0 : i32
    return %c0_i32, %c0_i32_0 : i32, i32
  }
  func.func @transform_3(%arg0: i32) -> (i32, i32) {
    %c0_i32 = arith.constant 0 : i32
    %c0_i32_0 = arith.constant 0 : i32
    %c0_i32_1 = arith.constant 0 : i32
    return %c0_i32, %c0_i32_0 : i32, i32
  }
  func.func @transform_4(%arg0: i32) -> (i32, i32, i32) {
    %c0_i32 = arith.constant 0 : i32
    %c0_i32_0 = arith.constant 0 : i32
    %c0_i32_1 = arith.constant 0 : i32
    return %arg0, %c0_i32, %c0_i32_0 : i32, i32, i32
  }
}

module attributes {stable_mosaic.version = 11 : i64} {
  func.func @_conv_stats_kernel(%arg0: i32, %arg1: memref<1x4x36x288xbf16, #tpu.memory_space<vmem>>, %arg2: memref<288x64xbf16, #tpu.memory_space<vmem>>, %arg3: memref<1x64xf32, #tpu.memory_space<vmem>>, %arg4: memref<1x64xf32, #tpu.memory_space<vmem>>) attributes {dimension_semantics = [#tpu.dimension_semantics<arbitrary>], iteration_bounds = array<i64: 2>, scalar_prefetch = 0 : i64, scratch_operands = 0 : i64, tpu.core_type = #tpu.core_type<tc>, window_params = [{transform_indices = @transform_0, window_bounds = array<i64: 1, 4, 36, 288>}, {pipeline_mode = #tpu.pipeline_mode<synchronous>, transform_indices = @transform_1, window_bounds = array<i64: 288, 64>}, {pipeline_mode = #tpu.pipeline_mode<synchronous>, transform_indices = @transform_2, window_bounds = array<i64: 1, 64>}, {pipeline_mode = #tpu.pipeline_mode<synchronous>, transform_indices = @transform_3, window_bounds = array<i64: 1, 64>}]} {
    %c0_i32 = arith.constant 0 : i32
    %0 = arith.cmpi eq, %arg0, %c0_i32 : i32
    %1 = arith.extui %0 : i1 to i32
    %c0_i32_0 = arith.constant 0 : i32
    %2 = arith.cmpi ne, %1, %c0_i32_0 : i32
    scf.if %2 {
      %cst_36 = arith.constant 0.000000e+00 : f32
      %52 = vector.broadcast %cst_36 : f32 to vector<1x64xf32>
      %c0_37 = arith.constant 0 : index
      %c0_38 = arith.constant 0 : index
      %53 = vector.load %arg3[%c0_37, %c0_38] : memref<1x64xf32, #tpu.memory_space<vmem>>, vector<1x64xf32>
      tpu.vector_store %arg3[%c0_37, %c0_38], %52 {strides = array<i32>} : memref<1x64xf32, #tpu.memory_space<vmem>>, vector<1x64xf32>,
      %cst_39 = arith.constant 0.000000e+00 : f32
      %54 = vector.broadcast %cst_39 : f32 to vector<1x64xf32>
      %c0_40 = arith.constant 0 : index
      %c0_41 = arith.constant 0 : index
      %55 = vector.load %arg4[%c0_40, %c0_41] : memref<1x64xf32, #tpu.memory_space<vmem>>, vector<1x64xf32>
      tpu.vector_store %arg4[%c0_40, %c0_41], %54 {strides = array<i32>} : memref<1x64xf32, #tpu.memory_space<vmem>>, vector<1x64xf32>,
    } else {
    }
    %c0 = arith.constant 0 : index
    %c0_1 = arith.constant 0 : index
    %3 = vector.load %arg2[%c0, %c0_1] : memref<288x64xbf16, #tpu.memory_space<vmem>>, vector<288x64xbf16>
    %cst = arith.constant 0.000000e+00 : f32
    %4 = vector.broadcast %cst : f32 to vector<1x64xf32>
    %cst_2 = arith.constant 0.000000e+00 : f32
    %5 = vector.broadcast %cst_2 : f32 to vector<1x64xf32>
    %c0_3 = arith.constant 0 : index
    %c0_4 = arith.constant 0 : index
    %c0_5 = arith.constant 0 : index
    %c0_6 = arith.constant 0 : index
    %6 = vector.load %arg1[%c0_3, %c0_4, %c0_5, %c0_6] : memref<1x4x36x288xbf16, #tpu.memory_space<vmem>>, vector<1x1x36x288xbf16>
    %7 = vector.shape_cast %6 : vector<1x1x36x288xbf16> to vector<36x288xbf16>
    %cst_7 = arith.constant dense<0.000000e+00> : vector<36x64xf32>
    %8 = tpu.matmul %7, %3, %cst_7 {dimension_numbers = #tpu.dot_dimension_numbers<[1], [0], [0], [1], [0, 0, 1, 1], [], []>} : vector<36x288xbf16>, vector<288x64xbf16>, vector<36x64xf32> -> vector<36x64xf32>
    %cst_8 = arith.constant dense<0.000000e+00> : vector<64xf32>
    %9 = vector.multi_reduction <add>, %8, %cst_8 [0] : vector<36x64xf32> to vector<64xf32>
    %10 = vector.shape_cast %9 : vector<64xf32> to vector<1x64xf32>
    %11 = arith.addf %4, %10 : vector<1x64xf32>
    %12 = arith.mulf %8, %8 : vector<36x64xf32>
    %cst_9 = arith.constant dense<0.000000e+00> : vector<64xf32>
    %13 = vector.multi_reduction <add>, %12, %cst_9 [0] : vector<36x64xf32> to vector<64xf32>
    %14 = vector.shape_cast %13 : vector<64xf32> to vector<1x64xf32>
    %15 = arith.addf %5, %14 : vector<1x64xf32>
    %c0_10 = arith.constant 0 : index
    %c1 = arith.constant 1 : index
    %c0_11 = arith.constant 0 : index
    %c0_12 = arith.constant 0 : index
    %16 = vector.load %arg1[%c0_10, %c1, %c0_11, %c0_12] : memref<1x4x36x288xbf16, #tpu.memory_space<vmem>>, vector<1x1x36x288xbf16>
    %17 = vector.shape_cast %16 : vector<1x1x36x288xbf16> to vector<36x288xbf16>
    %cst_13 = arith.constant dense<0.000000e+00> : vector<36x64xf32>
    %18 = tpu.matmul %17, %3, %cst_13 {dimension_numbers = #tpu.dot_dimension_numbers<[1], [0], [0], [1], [0, 0, 1, 1], [], []>} : vector<36x288xbf16>, vector<288x64xbf16>, vector<36x64xf32> -> vector<36x64xf32>
    %cst_14 = arith.constant dense<0.000000e+00> : vector<64xf32>
    %19 = vector.multi_reduction <add>, %18, %cst_14 [0] : vector<36x64xf32> to vector<64xf32>
    %20 = vector.shape_cast %19 : vector<64xf32> to vector<1x64xf32>
    %21 = arith.addf %11, %20 : vector<1x64xf32>
    %22 = arith.mulf %18, %18 : vector<36x64xf32>
    %cst_15 = arith.constant dense<0.000000e+00> : vector<64xf32>
    %23 = vector.multi_reduction <add>, %22, %cst_15 [0] : vector<36x64xf32> to vector<64xf32>
    %24 = vector.shape_cast %23 : vector<64xf32> to vector<1x64xf32>
    %25 = arith.addf %15, %24 : vector<1x64xf32>
    %c0_16 = arith.constant 0 : index
    %c2 = arith.constant 2 : index
    %c0_17 = arith.constant 0 : index
    %c0_18 = arith.constant 0 : index
    %26 = vector.load %arg1[%c0_16, %c2, %c0_17, %c0_18] : memref<1x4x36x288xbf16, #tpu.memory_space<vmem>>, vector<1x1x36x288xbf16>
    %27 = vector.shape_cast %26 : vector<1x1x36x288xbf16> to vector<36x288xbf16>
    %cst_19 = arith.constant dense<0.000000e+00> : vector<36x64xf32>
    %28 = tpu.matmul %27, %3, %cst_19 {dimension_numbers = #tpu.dot_dimension_numbers<[1], [0], [0], [1], [0, 0, 1, 1], [], []>} : vector<36x288xbf16>, vector<288x64xbf16>, vector<36x64xf32> -> vector<36x64xf32>
    %cst_20 = arith.constant dense<0.000000e+00> : vector<64xf32>
    %29 = vector.multi_reduction <add>, %28, %cst_20 [0] : vector<36x64xf32> to vector<64xf32>
    %30 = vector.shape_cast %29 : vector<64xf32> to vector<1x64xf32>
    %31 = arith.addf %21, %30 : vector<1x64xf32>
    %32 = arith.mulf %28, %28 : vector<36x64xf32>
    %cst_21 = arith.constant dense<0.000000e+00> : vector<64xf32>
    %33 = vector.multi_reduction <add>, %32, %cst_21 [0] : vector<36x64xf32> to vector<64xf32>
    %34 = vector.shape_cast %33 : vector<64xf32> to vector<1x64xf32>
    %35 = arith.addf %25, %34 : vector<1x64xf32>
    %c0_22 = arith.constant 0 : index
    %c3 = arith.constant 3 : index
    %c0_23 = arith.constant 0 : index
    %c0_24 = arith.constant 0 : index
    %36 = vector.load %arg1[%c0_22, %c3, %c0_23, %c0_24] : memref<1x4x36x288xbf16, #tpu.memory_space<vmem>>, vector<1x1x36x288xbf16>
    %37 = vector.shape_cast %36 : vector<1x1x36x288xbf16> to vector<36x288xbf16>
    %cst_25 = arith.constant dense<0.000000e+00> : vector<36x64xf32>
    %38 = tpu.matmul %37, %3, %cst_25 {dimension_numbers = #tpu.dot_dimension_numbers<[1], [0], [0], [1], [0, 0, 1, 1], [], []>} : vector<36x288xbf16>, vector<288x64xbf16>, vector<36x64xf32> -> vector<36x64xf32>
    %cst_26 = arith.constant dense<0.000000e+00> : vector<64xf32>
    %39 = vector.multi_reduction <add>, %38, %cst_26 [0] : vector<36x64xf32> to vector<64xf32>
    %40 = vector.shape_cast %39 : vector<64xf32> to vector<1x64xf32>
    %41 = arith.addf %31, %40 : vector<1x64xf32>
    %42 = arith.mulf %38, %38 : vector<36x64xf32>
    %cst_27 = arith.constant dense<0.000000e+00> : vector<64xf32>
    %43 = vector.multi_reduction <add>, %42, %cst_27 [0] : vector<36x64xf32> to vector<64xf32>
    %44 = vector.shape_cast %43 : vector<64xf32> to vector<1x64xf32>
    %45 = arith.addf %35, %44 : vector<1x64xf32>
    %c0_28 = arith.constant 0 : index
    %c0_29 = arith.constant 0 : index
    %46 = vector.load %arg3[%c0_28, %c0_29] : memref<1x64xf32, #tpu.memory_space<vmem>>, vector<1x64xf32>
    %47 = arith.addf %46, %41 : vector<1x64xf32>
    %c0_30 = arith.constant 0 : index
    %c0_31 = arith.constant 0 : index
    %48 = vector.load %arg3[%c0_30, %c0_31] : memref<1x64xf32, #tpu.memory_space<vmem>>, vector<1x64xf32>
    tpu.vector_store %arg3[%c0_30, %c0_31], %47 {strides = array<i32>} : memref<1x64xf32, #tpu.memory_space<vmem>>, vector<1x64xf32>,
    %c0_32 = arith.constant 0 : index
    %c0_33 = arith.constant 0 : index
    %49 = vector.load %arg4[%c0_32, %c0_33] : memref<1x64xf32, #tpu.memory_space<vmem>>, vector<1x64xf32>
    %50 = arith.addf %49, %45 : vector<1x64xf32>
    %c0_34 = arith.constant 0 : index
    %c0_35 = arith.constant 0 : index
    %51 = vector.load %arg4[%c0_34, %c0_35] : memref<1x64xf32, #tpu.memory_space<vmem>>, vector<1x64xf32>
    tpu.vector_store %arg4[%c0_34, %c0_35], %50 {strides = array<i32>} : memref<1x64xf32, #tpu.memory_space<vmem>>, vector<1x64xf32>,
    return
  }
  func.func @transform_0(%arg0: i32) -> (i32, i32, i32, i32) {
    %c0_i32 = arith.constant 0 : i32
    %c0_i32_0 = arith.constant 0 : i32
    %c0_i32_1 = arith.constant 0 : i32
    %c0_i32_2 = arith.constant 0 : i32
    return %arg0, %c0_i32, %c0_i32_0, %c0_i32_1 : i32, i32, i32, i32
  }
  func.func @transform_1(%arg0: i32) -> (i32, i32) {
    %c0_i32 = arith.constant 0 : i32
    %c0_i32_0 = arith.constant 0 : i32
    %c0_i32_1 = arith.constant 0 : i32
    return %c0_i32, %c0_i32_0 : i32, i32
  }
  func.func @transform_2(%arg0: i32) -> (i32, i32) {
    %c0_i32 = arith.constant 0 : i32
    %c0_i32_0 = arith.constant 0 : i32
    %c0_i32_1 = arith.constant 0 : i32
    return %c0_i32, %c0_i32_0 : i32, i32
  }
  func.func @transform_3(%arg0: i32) -> (i32, i32) {
    %c0_i32 = arith.constant 0 : i32
    %c0_i32_0 = arith.constant 0 : i32
    %c0_i32_1 = arith.constant 0 : i32
    return %c0_i32, %c0_i32_0 : i32, i32
  }
}

module attributes {stable_mosaic.version = 11 : i64} {
  func.func @_conv_norm_pool_kernel(%arg0: i32, %arg1: memref<1x4x36x288xbf16, #tpu.memory_space<vmem>>, %arg2: memref<288x64xbf16, #tpu.memory_space<vmem>>, %arg3: memref<1x64xf32, #tpu.memory_space<vmem>>, %arg4: memref<1x64xf32, #tpu.memory_space<vmem>>, %arg5: memref<1x36x64xbf16, #tpu.memory_space<vmem>>) attributes {dimension_semantics = [#tpu.dimension_semantics<parallel>], iteration_bounds = array<i64: 2>, scalar_prefetch = 0 : i64, scratch_operands = 0 : i64, tpu.core_type = #tpu.core_type<tc>, window_params = [{transform_indices = @transform_0, window_bounds = array<i64: 1, 4, 36, 288>}, {pipeline_mode = #tpu.pipeline_mode<synchronous>, transform_indices = @transform_1, window_bounds = array<i64: 288, 64>}, {pipeline_mode = #tpu.pipeline_mode<synchronous>, transform_indices = @transform_2, window_bounds = array<i64: 1, 64>}, {pipeline_mode = #tpu.pipeline_mode<synchronous>, transform_indices = @transform_3, window_bounds = array<i64: 1, 64>}, {transform_indices = @transform_4, window_bounds = array<i64: 1, 36, 64>}]} {
    %c0 = arith.constant 0 : index
    %c0_0 = arith.constant 0 : index
    %0 = vector.load %arg2[%c0, %c0_0] : memref<288x64xbf16, #tpu.memory_space<vmem>>, vector<288x64xbf16>
    %c0_1 = arith.constant 0 : index
    %c0_2 = arith.constant 0 : index
    %1 = vector.load %arg3[%c0_1, %c0_2] : memref<1x64xf32, #tpu.memory_space<vmem>>, vector<1x64xf32>
    %c0_3 = arith.constant 0 : index
    %c0_4 = arith.constant 0 : index
    %2 = vector.load %arg4[%c0_3, %c0_4] : memref<1x64xf32, #tpu.memory_space<vmem>>, vector<1x64xf32>
    %c0_5 = arith.constant 0 : index
    %c0_6 = arith.constant 0 : index
    %c0_7 = arith.constant 0 : index
    %c0_8 = arith.constant 0 : index
    %3 = vector.load %arg1[%c0_5, %c0_6, %c0_7, %c0_8] : memref<1x4x36x288xbf16, #tpu.memory_space<vmem>>, vector<1x1x36x288xbf16>
    %4 = vector.shape_cast %3 : vector<1x1x36x288xbf16> to vector<36x288xbf16>
    %cst = arith.constant dense<0.000000e+00> : vector<36x64xf32>
    %5 = tpu.matmul %4, %0, %cst {dimension_numbers = #tpu.dot_dimension_numbers<[1], [0], [0], [1], [0, 0, 1, 1], [], []>} : vector<36x288xbf16>, vector<288x64xbf16>, vector<36x64xf32> -> vector<36x64xf32>
    %6 = vector.broadcast %1 : vector<1x64xf32> to vector<36x64xf32>
    %7 = arith.mulf %5, %6 : vector<36x64xf32>
    %8 = vector.broadcast %2 : vector<1x64xf32> to vector<36x64xf32>
    %9 = arith.addf %7, %8 : vector<36x64xf32>
    %c0_9 = arith.constant 0 : index
    %c1 = arith.constant 1 : index
    %c0_10 = arith.constant 0 : index
    %c0_11 = arith.constant 0 : index
    %10 = vector.load %arg1[%c0_9, %c1, %c0_10, %c0_11] : memref<1x4x36x288xbf16, #tpu.memory_space<vmem>>, vector<1x1x36x288xbf16>
    %11 = vector.shape_cast %10 : vector<1x1x36x288xbf16> to vector<36x288xbf16>
    %cst_12 = arith.constant dense<0.000000e+00> : vector<36x64xf32>
    %12 = tpu.matmul %11, %0, %cst_12 {dimension_numbers = #tpu.dot_dimension_numbers<[1], [0], [0], [1], [0, 0, 1, 1], [], []>} : vector<36x288xbf16>, vector<288x64xbf16>, vector<36x64xf32> -> vector<36x64xf32>
    %13 = vector.broadcast %1 : vector<1x64xf32> to vector<36x64xf32>
    %14 = arith.mulf %12, %13 : vector<36x64xf32>
    %15 = vector.broadcast %2 : vector<1x64xf32> to vector<36x64xf32>
    %16 = arith.addf %14, %15 : vector<36x64xf32>
    %17 = arith.maximumf %9, %16 : vector<36x64xf32>
    %c0_13 = arith.constant 0 : index
    %c2 = arith.constant 2 : index
    %c0_14 = arith.constant 0 : index
    %c0_15 = arith.constant 0 : index
    %18 = vector.load %arg1[%c0_13, %c2, %c0_14, %c0_15] : memref<1x4x36x288xbf16, #tpu.memory_space<vmem>>, vector<1x1x36x288xbf16>
    %19 = vector.shape_cast %18 : vector<1x1x36x288xbf16> to vector<36x288xbf16>
    %cst_16 = arith.constant dense<0.000000e+00> : vector<36x64xf32>
    %20 = tpu.matmul %19, %0, %cst_16 {dimension_numbers = #tpu.dot_dimension_numbers<[1], [0], [0], [1], [0, 0, 1, 1], [], []>} : vector<36x288xbf16>, vector<288x64xbf16>, vector<36x64xf32> -> vector<36x64xf32>
    %21 = vector.broadcast %1 : vector<1x64xf32> to vector<36x64xf32>
    %22 = arith.mulf %20, %21 : vector<36x64xf32>
    %23 = vector.broadcast %2 : vector<1x64xf32> to vector<36x64xf32>
    %24 = arith.addf %22, %23 : vector<36x64xf32>
    %c0_17 = arith.constant 0 : index
    %c3 = arith.constant 3 : index
    %c0_18 = arith.constant 0 : index
    %c0_19 = arith.constant 0 : index
    %25 = vector.load %arg1[%c0_17, %c3, %c0_18, %c0_19] : memref<1x4x36x288xbf16, #tpu.memory_space<vmem>>, vector<1x1x36x288xbf16>
    %26 = vector.shape_cast %25 : vector<1x1x36x288xbf16> to vector<36x288xbf16>
    %cst_20 = arith.constant dense<0.000000e+00> : vector<36x64xf32>
    %27 = tpu.matmul %26, %0, %cst_20 {dimension_numbers = #tpu.dot_dimension_numbers<[1], [0], [0], [1], [0, 0, 1, 1], [], []>} : vector<36x288xbf16>, vector<288x64xbf16>, vector<36x64xf32> -> vector<36x64xf32>
    %28 = vector.broadcast %1 : vector<1x64xf32> to vector<36x64xf32>
    %29 = arith.mulf %27, %28 : vector<36x64xf32>
    %30 = vector.broadcast %2 : vector<1x64xf32> to vector<36x64xf32>
    %31 = arith.addf %29, %30 : vector<36x64xf32>
    %32 = arith.maximumf %24, %31 : vector<36x64xf32>
    %33 = arith.maximumf %17, %32 : vector<36x64xf32>
    %cst_21 = arith.constant 0.000000e+00 : f32
    %34 = vector.broadcast %cst_21 : f32 to vector<36x64xf32>
    %35 = arith.maximumf %33, %34 : vector<36x64xf32>
    %36 = arith.truncf %35 : vector<36x64xf32> to vector<36x64xbf16>
    %c0_22 = arith.constant 0 : index
    %c0_23 = arith.constant 0 : index
    %c0_24 = arith.constant 0 : index
    %37 = vector.load %arg5[%c0_22, %c0_23, %c0_24] : memref<1x36x64xbf16, #tpu.memory_space<vmem>>, vector<1x36x64xbf16>
    %38 = vector.shape_cast %37 : vector<1x36x64xbf16> to vector<36x64xbf16>
    %39 = vector.shape_cast %36 : vector<36x64xbf16> to vector<1x36x64xbf16>
    tpu.vector_store %arg5[%c0_22, %c0_23, %c0_24], %39 {strides = array<i32>} : memref<1x36x64xbf16, #tpu.memory_space<vmem>>, vector<1x36x64xbf16>,
    return
  }
  func.func @transform_0(%arg0: i32) -> (i32, i32, i32, i32) {
    %c0_i32 = arith.constant 0 : i32
    %c0_i32_0 = arith.constant 0 : i32
    %c0_i32_1 = arith.constant 0 : i32
    %c0_i32_2 = arith.constant 0 : i32
    return %arg0, %c0_i32, %c0_i32_0, %c0_i32_1 : i32, i32, i32, i32
  }
  func.func @transform_1(%arg0: i32) -> (i32, i32) {
    %c0_i32 = arith.constant 0 : i32
    %c0_i32_0 = arith.constant 0 : i32
    %c0_i32_1 = arith.constant 0 : i32
    return %c0_i32, %c0_i32_0 : i32, i32
  }
  func.func @transform_2(%arg0: i32) -> (i32, i32) {
    %c0_i32 = arith.constant 0 : i32
    %c0_i32_0 = arith.constant 0 : i32
    %c0_i32_1 = arith.constant 0 : i32
    return %c0_i32, %c0_i32_0 : i32, i32
  }
  func.func @transform_3(%arg0: i32) -> (i32, i32) {
    %c0_i32 = arith.constant 0 : i32
    %c0_i32_0 = arith.constant 0 : i32
    %c0_i32_1 = arith.constant 0 : i32
    return %c0_i32, %c0_i32_0 : i32, i32
  }
  func.func @transform_4(%arg0: i32) -> (i32, i32, i32) {
    %c0_i32 = arith.constant 0 : i32
    %c0_i32_0 = arith.constant 0 : i32
    %c0_i32_1 = arith.constant 0 : i32
    return %arg0, %c0_i32, %c0_i32_0 : i32, i32, i32
  }
}

module attributes {stable_mosaic.version = 11 : i64} {
  func.func @_mlp_kernel(%arg0: i32, %arg1: memref<2x2304xbf16, #tpu.memory_space<vmem>>, %arg2: memref<2304x640xbf16, #tpu.memory_space<vmem>>, %arg3: memref<1x640xf32, #tpu.memory_space<vmem>>, %arg4: memref<640x128xbf16, #tpu.memory_space<vmem>>, %arg5: memref<1x128xf32, #tpu.memory_space<vmem>>, %arg6: memref<128x128xbf16, #tpu.memory_space<vmem>>, %arg7: memref<1x128xf32, #tpu.memory_space<vmem>>, %arg8: memref<2x128xf32, #tpu.memory_space<vmem>>) attributes {dimension_semantics = [#tpu.dimension_semantics<parallel>], iteration_bounds = array<i64: 1>, scalar_prefetch = 0 : i64, scratch_operands = 0 : i64, tpu.core_type = #tpu.core_type<tc>, window_params = [{transform_indices = @transform_0, window_bounds = array<i64: 2, 2304>}, {pipeline_mode = #tpu.pipeline_mode<synchronous>, transform_indices = @transform_1, window_bounds = array<i64: 2304, 640>}, {pipeline_mode = #tpu.pipeline_mode<synchronous>, transform_indices = @transform_2, window_bounds = array<i64: 1, 640>}, {pipeline_mode = #tpu.pipeline_mode<synchronous>, transform_indices = @transform_3, window_bounds = array<i64: 640, 128>}, {pipeline_mode = #tpu.pipeline_mode<synchronous>, transform_indices = @transform_4, window_bounds = array<i64: 1, 128>}, {pipeline_mode = #tpu.pipeline_mode<synchronous>, transform_indices = @transform_5, window_bounds = array<i64: 128, 128>}, {pipeline_mode = #tpu.pipeline_mode<synchronous>, transform_indices = @transform_6, window_bounds = array<i64: 1, 128>}, {transform_indices = @transform_7, window_bounds = array<i64: 2, 128>}]} {
    %c0 = arith.constant 0 : index
    %c0_0 = arith.constant 0 : index
    %0 = vector.load %arg1[%c0, %c0_0] : memref<2x2304xbf16, #tpu.memory_space<vmem>>, vector<2x2304xbf16>
    %c0_1 = arith.constant 0 : index
    %c0_2 = arith.constant 0 : index
    %1 = vector.load %arg2[%c0_1, %c0_2] : memref<2304x640xbf16, #tpu.memory_space<vmem>>, vector<2304x640xbf16>
    %cst = arith.constant dense<0.000000e+00> : vector<2x640xf32>
    %2 = tpu.matmul %0, %1, %cst {dimension_numbers = #tpu.dot_dimension_numbers<[1], [0], [0], [1], [0, 0, 1, 1], [], []>} : vector<2x2304xbf16>, vector<2304x640xbf16>, vector<2x640xf32> -> vector<2x640xf32>
    %c0_3 = arith.constant 0 : index
    %c0_4 = arith.constant 0 : index
    %3 = vector.load %arg3[%c0_3, %c0_4] : memref<1x640xf32, #tpu.memory_space<vmem>>, vector<1x640xf32>
    %4 = vector.broadcast %3 : vector<1x640xf32> to vector<2x640xf32>
    %5 = arith.addf %2, %4 : vector<2x640xf32>
    %6 = arith.truncf %5 : vector<2x640xf32> to vector<2x640xbf16>
    %c0_5 = arith.constant 0 : index
    %c0_6 = arith.constant 0 : index
    %7 = vector.load %arg4[%c0_5, %c0_6] : memref<640x128xbf16, #tpu.memory_space<vmem>>, vector<640x128xbf16>
    %cst_7 = arith.constant dense<0.000000e+00> : vector<2x128xf32>
    %8 = tpu.matmul %6, %7, %cst_7 {dimension_numbers = #tpu.dot_dimension_numbers<[1], [0], [0], [1], [0, 0, 1, 1], [], []>} : vector<2x640xbf16>, vector<640x128xbf16>, vector<2x128xf32> -> vector<2x128xf32>
    %c0_8 = arith.constant 0 : index
    %c0_9 = arith.constant 0 : index
    %9 = vector.load %arg5[%c0_8, %c0_9] : memref<1x128xf32, #tpu.memory_space<vmem>>, vector<1x128xf32>
    %10 = vector.broadcast %9 : vector<1x128xf32> to vector<2x128xf32>
    %11 = arith.addf %8, %10 : vector<2x128xf32>
    %12 = arith.truncf %11 : vector<2x128xf32> to vector<2x128xbf16>
    %c0_10 = arith.constant 0 : index
    %c0_11 = arith.constant 0 : index
    %13 = vector.load %arg6[%c0_10, %c0_11] : memref<128x128xbf16, #tpu.memory_space<vmem>>, vector<128x128xbf16>
    %cst_12 = arith.constant dense<0.000000e+00> : vector<2x128xf32>
    %14 = tpu.matmul %12, %13, %cst_12 {dimension_numbers = #tpu.dot_dimension_numbers<[1], [0], [0], [1], [0, 0, 1, 1], [], []>} : vector<2x128xbf16>, vector<128x128xbf16>, vector<2x128xf32> -> vector<2x128xf32>
    %c0_13 = arith.constant 0 : index
    %c0_14 = arith.constant 0 : index
    %15 = vector.load %arg7[%c0_13, %c0_14] : memref<1x128xf32, #tpu.memory_space<vmem>>, vector<1x128xf32>
    %16 = vector.broadcast %15 : vector<1x128xf32> to vector<2x128xf32>
    %17 = arith.addf %14, %16 : vector<2x128xf32>
    %c0_15 = arith.constant 0 : index
    %c0_16 = arith.constant 0 : index
    %18 = vector.load %arg8[%c0_15, %c0_16] : memref<2x128xf32, #tpu.memory_space<vmem>>, vector<2x128xf32>
    tpu.vector_store %arg8[%c0_15, %c0_16], %17 {strides = array<i32>} : memref<2x128xf32, #tpu.memory_space<vmem>>, vector<2x128xf32>,
    return
  }
  func.func @transform_0(%arg0: i32) -> (i32, i32) {
    %c0_i32 = arith.constant 0 : i32
    %c0_i32_0 = arith.constant 0 : i32
    return %arg0, %c0_i32 : i32, i32
  }
  func.func @transform_1(%arg0: i32) -> (i32, i32) {
    %c0_i32 = arith.constant 0 : i32
    %c0_i32_0 = arith.constant 0 : i32
    %c0_i32_1 = arith.constant 0 : i32
    return %c0_i32, %c0_i32_0 : i32, i32
  }
  func.func @transform_2(%arg0: i32) -> (i32, i32) {
    %c0_i32 = arith.constant 0 : i32
    %c0_i32_0 = arith.constant 0 : i32
    %c0_i32_1 = arith.constant 0 : i32
    return %c0_i32, %c0_i32_0 : i32, i32
  }
  func.func @transform_3(%arg0: i32) -> (i32, i32) {
    %c0_i32 = arith.constant 0 : i32
    %c0_i32_0 = arith.constant 0 : i32
    %c0_i32_1 = arith.constant 0 : i32
    return %c0_i32, %c0_i32_0 : i32, i32
  }
  func.func @transform_4(%arg0: i32) -> (i32, i32) {
    %c0_i32 = arith.constant 0 : i32
    %c0_i32_0 = arith.constant 0 : i32
    %c0_i32_1 = arith.constant 0 : i32
    return %c0_i32, %c0_i32_0 : i32, i32
  }
  func.func @transform_5(%arg0: i32) -> (i32, i32) {
    %c0_i32 = arith.constant 0 : i32
    %c0_i32_0 = arith.constant 0 : i32
    %c0_i32_1 = arith.constant 0 : i32
    return %c0_i32, %c0_i32_0 : i32, i32
  }
  func.func @transform_6(%arg0: i32) -> (i32, i32) {
    %c0_i32 = arith.constant 0 : i32
    %c0_i32_0 = arith.constant 0 : i32
    %c0_i32_1 = arith.constant 0 : i32
    return %c0_i32, %c0_i32_0 : i32, i32
  }
  func.func @transform_7(%arg0: i32) -> (i32, i32) {
    %c0_i32 = arith.constant 0 : i32
    %c0_i32_0 = arith.constant 0 : i32
    return %arg0, %c0_i32 : i32, i32
  }
}

</mosaic_0001>

<llo_original>
// kernel: a_call__.5
$region0: #{a_call__.5}
  #allocation0 [shape = 'u32[]', space=smem, size = 0x4, offset = 0x4, fixed_abs, tag = 'smem constant byte address 0x4 - core index']
  #allocation1 [shape = 'u32[144,128]{1,0:T(1,128)}', space=vmem, size = 0x12000, scoped, tag = 'internal scratch']
  %s0 = inlined_call_operand.vmem [shape: bf16[2,4,196,9], index: 0, kind: input, shape index: {}]
  %s1 = inlined_call_operand.vmem [shape: bf16[9,32], index: 1, kind: input, shape index: {}]
  %s2 = inlined_call_operand.vmem [shape: f32[1,32], index: 2, kind: output, shape index: {0}]
  %s3 = inlined_call_operand.vmem [shape: f32[1,32], index: 3, kind: output, shape index: {1}]
  %4 = xla_tuple %s2, %s3
  %s5 = sld [smem:[#allocation0]]
  $region53: #{a_call__.5} parent=0
    _
  %s7 = ssub.s32 1, %s5
  %s8 = scalar_select 0, %s7, %s5
  loop: start=0, step=1, limit=4
  $region2: #{a_call__.5} parent=0 // loop_pre_header
    _
  $region3: #{a_call__.5} parent=0 // loop_header
    %s10 = sphi 0, %s14
    %p11 = scmp.ge.s32.totalorder %s10, 4
    %s20 = sphi 0, %s22
    %s23 = sphi 0, %s20
    %s24 = sphi 0, %s23
    %s40 = sphi 0, %s24
    %s44 = sphi 0, %s44
    %s46 = sphi 0, %s44
    %s47 = sphi 0, %s46
    %s61 = sphi 0, %s47
    %s65 = sphi 0, %s65
    %s67 = sphi 0, %s65
    %s68 = sphi 0, %s67
    %s82 = sphi 0, %s68
    %s86 = sphi 0, %s86
    %s88 = sphi 0, %s86
    %s89 = sphi 0, %s88
    %s103 = sphi 0, %s89
  $region4: #{a_call__.5} parent=0 // loop_header_branch
    %13 = sbr.rel (%p11) target = $region8
  $region5: #{a_call__.5} parent=0 // loop_body
    %s15 = ssub.s32 %s10, 1
    %s16 = ssub.s32 %s10, 2
    %s17 = sadd.s32 %s10, 1
    %s18 = ssub.s32 %s10, %s17
    %p19 = scmp.eq.s32.totalorder %s18, 0
    %s21 = sadd.s32 %s20, 1
    %s22 = scalar_select %p19, %s20, %s21
    %p25 = pneg %p19
    %p26 = scmp.eq.s32.totalorder %s10, 1
    %p27 = por %p25, %p26
    %p28 = scmp.ne.s32.totalorder %s20, %s23
    %p29 = scmp.eq.s32.totalorder %s10, 0
    %p30 = por %p28, %p29
    %p31 = scmp.ne.s32.totalorder %s20, %s23
    %p32 = scmp.eq.s32.totalorder %s15, 1
    %p33 = por %p31, %p32
    %p34 = scmp.ne.s32.totalorder %s23, %s24
    %p35 = scmp.eq.s32.totalorder %s15, 0
    %p36 = por %p34, %p35
    %p37 = scmp.ne.s32.totalorder %s23, %s24
    %p38 = scmp.eq.s32.totalorder %s16, 1
    %p39 = por %p37, %p38
    %p41 = scmp.ne.s32.totalorder %s24, %s40
    %p42 = scmp.eq.s32.totalorder %s16, 0
    %p43 = por %p41, %p42
    %s45 = sadd.s32 %s44, 1
    %p48 = scmp.eq.s32.totalorder %s10, 1
    %p49 = scmp.ne.s32.totalorder %s44, %s46
    %p50 = scmp.eq.s32.totalorder %s10, 0
    %p51 = por %p49, %p50
    %p52 = scmp.ne.s32.totalorder %s44, %s46
    %p53 = scmp.eq.s32.totalorder %s15, 1
    %p54 = por %p52, %p53
    %p55 = scmp.ne.s32.totalorder %s46, %s47
    %p56 = scmp.eq.s32.totalorder %s15, 0
    %p57 = por %p55, %p56
    %p58 = scmp.ne.s32.totalorder %s46, %s47
    %p59 = scmp.eq.s32.totalorder %s16, 1
    %p60 = por %p58, %p59
    %p62 = scmp.ne.s32.totalorder %s47, %s61
    %p63 = scmp.eq.s32.totalorder %s16, 0
    %p64 = por %p62, %p63
    %s66 = sadd.s32 %s65, 1
    %p69 = scmp.eq.s32.totalorder %s10, 1
    %p70 = scmp.ne.s32.totalorder %s65, %s67
    %p71 = scmp.eq.s32.totalorder %s10, 0
    %p72 = por %p70, %p71
    %p73 = scmp.ne.s32.totalorder %s65, %s67
    %p74 = scmp.eq.s32.totalorder %s15, 1
    %p75 = por %p73, %p74
    %p76 = scmp.ne.s32.totalorder %s67, %s68
    %p77 = scmp.eq.s32.totalorder %s15, 0
    %p78 = por %p76, %p77
    %p79 = scmp.ne.s32.totalorder %s67, %s68
    %p80 = scmp.eq.s32.totalorder %s16, 1
    %p81 = por %p79, %p80
    %p83 = scmp.ne.s32.totalorder %s68, %s82
    %p84 = scmp.eq.s32.totalorder %s16, 0
    %p85 = por %p83, %p84
    %s87 = sadd.s32 %s86, 1
    %p90 = scmp.eq.s32.totalorder %s10, 1
    %p91 = scmp.ne.s32.totalorder %s86, %s88
    %p92 = scmp.eq.s32.totalorder %s10, 0
    %p93 = por %p91, %p92
    %p94 = scmp.ne.s32.totalorder %s86, %s88
    %p95 = scmp.eq.s32.totalorder %s15, 1
    %p96 = por %p94, %p95
    %p97 = scmp.ne.s32.totalorder %s88, %s89
    %p98 = scmp.eq.s32.totalorder %s15, 0
    %p99 = por %p97, %p98
    %p100 = scmp.ne.s32.totalorder %s88, %s89
    %p101 = scmp.eq.s32.totalorder %s16, 1
    %p102 = por %p100, %p101
    %p104 = scmp.ne.s32.totalorder %s89, %s103
    %p105 = scmp.eq.s32.totalorder %s16, 0
    %p106 = por %p104, %p105
    %p107 = scmp.le.s32.totalorder 1, %s10
    %p108 = scmp.lt.s32.totalorder %s10, 3
    %p109 = pnand %p107, %p108
    %p110 = pneg %p109
    // Predicated region
    $region9: #{a_call__.5} parent=5 // pred_check
      _
    $region10: #{a_call__.5} parent=5 // pred_check_branch
      %112 = sbr.rel (%p109) target = $region12
    $region11: #{a_call__.5} parent=5 // pred_region
      %s113 = ssub.s32 %s10, 1
      // Predicated region
      $region13: #{a_call__.5} parent=11 // pred_check
        %p114 = pneg %p57
      $region14: #{a_call__.5} parent=11 // pred_check_branch
        %116 = sbr.rel (%p114) target = $region16
      $region15: #{a_call__.5} parent=11 // pred_region
        _
      $region16: #{a_call__.5} parent=11 // pred_fallthru
        _
    $region12: #{a_call__.5} parent=5 // pred_fallthru
      _
    %p117 = scmp.lt.s32.totalorder %s10, 2
    // Predicated region
    $region17: #{a_call__.5} parent=5 // pred_check
      %p118 = pneg %p117
    $region18: #{a_call__.5} parent=5 // pred_check_branch
      %120 = sbr.rel (%p118) target = $region20
    $region19: #{a_call__.5} parent=5 // pred_region
      // Predicated region
      $region21: #{a_call__.5} parent=19 // pred_check
        %p121 = pneg %p30
      $region22: #{a_call__.5} parent=19 // pred_check_branch
        %123 = sbr.rel (%p121) target = $region24
      $region23: #{a_call__.5} parent=19 // pred_region
        %p124 = scmp.lt.s32.totalorder %s10, 1
        %s125 = scalar_select %p124, %s10, 1
        %s126 = smul.addr %s125, 100
        %s127 = smul.addr %s126, 4
        %s128 = scalar_lea.vmem %s0, %s127
      $region24: #{a_call__.5} parent=19 // pred_fallthru
        _
    $region20: #{a_call__.5} parent=5 // pred_fallthru
      _
    %p129 = scmp.le.s32.totalorder 1, %s10
    %p130 = scmp.lt.s32.totalorder %s10, 3
    %p131 = pnand %p129, %p130
    %p132 = pneg %p131
    // Predicated region
    $region25: #{a_call__.5} parent=5 // pred_check
      _
    $region26: #{a_call__.5} parent=5 // pred_check_branch
      %134 = sbr.rel (%p131) target = $region28
    $region27: #{a_call__.5} parent=5 // pred_region
      %s135 = ssub.s32 %s10, 1
      %p136 = scmp.lt.s32.totalorder %s15, 1
      %s137 = scalar_select %p136, %s15, 1
      %s138 = smul.addr %s137, 100
      %s139 = smul.addr %s138, 4
      %s140 = scalar_lea.vmem %s0, %s139
      %p141 = pneg %p36
      %p142 = pneg %p33
      %p143 = pneg %p57
      %p144 = pneg %p54
      %p145 = pneg %p78
      %p146 = pneg %p75
      %p147 = pneg %p99
      %p148 = pneg %p96
      %p149 = scmp.lt.s32.totalorder %s15, 1
      %s150 = scalar_select %p149, %s15, 1
      %s151 = smul.addr %s150, 100
      %s152 = smul.addr %s151, 4
      %s153 = scalar_lea.vmem %s0, %s152
      %p155 = scmp.eq.s32.totalorder %s15, 0
      // Predicated region
      $region29: #{a_call__.5} parent=27 // pred_check
        %p156 = pneg %p155
      $region30: #{a_call__.5} parent=27 // pred_check_branch
        %158 = sbr.rel (%p156) target = $region32
      $region31: #{a_call__.5} parent=27 // pred_region
        %vm159 = vcmask 253952
        %160 = vst.msk [vmem:[%s2] sm:$0x1] %vm159, 0.0
        %161 = vst.msk [vmem:[%s3] sm:$0x1] %vm159, 0.0
      $region32: #{a_call__.5} parent=27 // pred_fallthru
        _
      %v162 = vld [vmem:[%s1] sm:$0xf]
      %v163 = vld [vmem:[%s1 + $0x4] sm:$0x1]
      %v164 = vld [vmem:[%s153] sm:$0xf]
      %v165 = vld [vmem:[%s153 + $0x4] sm:$0xf]
      %v166 = vld [vmem:[%s153 + $0x8] sm:$0xf]
      %v167 = vld [vmem:[%s153 + $0xc] sm:$0xf]
      %v168 = vld [vmem:[%s153 + $0x10] sm:$0xf]
      %v169 = vld [vmem:[%s153 + $0x14] sm:$0xf]
      %v170 = vld [vmem:[%s153 + $0x18] sm:$0xf]
      %v171 = vld [vmem:[%s153 + $0x1c] sm:$0xf]
      %v172 = vld [vmem:[%s153 + $0x20] sm:$0xf]
      %v173 = vld [vmem:[%s153 + $0x24] sm:$0xf]
      %v174 = vld [vmem:[%s153 + $0x28] sm:$0xf]
      %v175 = vld [vmem:[%s153 + $0x2c] sm:$0xf]
      %v176 = vld [vmem:[%s153 + $0x30] sm:$0xf]
      %v177 = vld [vmem:[%s153 + $0x34] sm:$0xf]
      %v178 = vld [vmem:[%s153 + $0x38] sm:$0xf]
      %v179 = vld [vmem:[%s153 + $0x3c] sm:$0xf]
      %v180 = vld [vmem:[%s153 + $0x40] sm:$0xf]
      %v181 = vld [vmem:[%s153 + $0x44] sm:$0xf]
      %v182 = vld [vmem:[%s153 + $0x48] sm:$0xf]
      %v183 = vld [vmem:[%s153 + $0x4c] sm:$0xf]
      %v184 = vld [vmem:[%s153 + $0x50] sm:$0xf]
      %v185 = vld [vmem:[%s153 + $0x54] sm:$0xf]
      %v186 = vld [vmem:[%s153 + $0x58] sm:$0xf]
      %v187 = vld [vmem:[%s153 + $0x5c] sm:$0xf]
      %v188 = vld [vmem:[%s153 + $0x60] sm:$0x3]
      %v214 = vunpack.c.l.b16 %v164
      %v215 = vunpack.c.l.b16 %v165
      %v216 = vunpack.c.l.b16 %v166
      %v217 = vunpack.c.l.b16 %v167
      %v218 = vunpack.c.l.b16 %v168
      %v219 = vunpack.c.l.b16 %v169
      %v220 = vunpack.c.l.b16 %v170
      %v221 = vunpack.c.l.b16 %v171
      %v222 = vunpack.c.l.b16 %v172
      %v223 = vunpack.c.l.b16 %v173
      %v224 = vunpack.c.l.b16 %v174
      %v225 = vunpack.c.l.b16 %v175
      %v226 = vunpack.c.l.b16 %v176
      %v227 = vunpack.c.l.b16 %v177
      %v228 = vunpack.c.l.b16 %v178
      %v229 = vunpack.c.l.b16 %v179
      %v230 = vunpack.c.l.b16 %v180
      %v231 = vunpack.c.l.b16 %v181
      %v232 = vunpack.c.l.b16 %v182
      %v233 = vunpack.c.l.b16 %v183
      %v234 = vunpack.c.l.b16 %v184
      %v235 = vunpack.c.l.b16 %v185
      %v236 = vunpack.c.l.b16 %v186
      %v237 = vunpack.c.l.b16 %v187
      %v238 = vunpack.c.l.b16 %v188
      %v239 = vpack.c.b16 %v215, %v214
      %v240 = vpack.c.b16 %v217, %v216
      %v241 = vpack.c.b16 %v219, %v218
      %v242 = vpack.c.b16 %v221, %v220
      %v243 = vpack.c.b16 %v223, %v222
      %v244 = vpack.c.b16 %v225, %v224
      %v245 = vpack.c.b16 %v227, %v226
      %v246 = vpack.c.b16 %v229, %v228
      %v247 = vpack.c.b16 %v231, %v230
      %v248 = vpack.c.b16 %v233, %v232
      %v249 = vpack.c.b16 %v235, %v234
      %v250 = vpack.c.b16 %v237, %v236
      %v251 = vpack.c.b16 %v238, %v238
      %v254 = vunpack.c.l.b16 %v162
      %v255 = vunpack.c.l.b16 %v163
      %v256 = vpack.c.b16 %v255, %v254
      %vm257 = vcmask 72704
      %v259 = vsel %vm257, %v239, 0
      %v262 = vsel %vm257, %v240, 0
      %v265 = vsel %vm257, %v241, 0
      %v268 = vsel %vm257, %v242, 0
      %v271 = vsel %vm257, %v243, 0
      %v274 = vsel %vm257, %v244, 0
      %v277 = vsel %vm257, %v245, 0
      %v280 = vsel %vm257, %v246, 0
      %v283 = vsel %vm257, %v247, 0
      %v286 = vsel %vm257, %v248, 0
      %v289 = vsel %vm257, %v249, 0
      %v292 = vsel %vm257, %v250, 0
      %v295 = vsel %vm257, %v251, 0
      %vm297 = vcmask 1043456
      %vm298 = vcmask 1044480
      %v299 = vsel %vm297, 4294967295, 65535
      %v300 = vsel %vm298, %v299, 0
      %v302 = vand.u32 %v256, %v300
      %304 = vmatprep.subr.bf16.mxu0 0
      %305 = vmatpush1.bf16.msra.mxu0 0
      %306 = vmatprep.subr.bf16.mxu0 0
      %307 = vmatpush1.bf16.msra.mxu0 0
      %308 = vmatprep.subr.bf16.mxu0 0
      %309 = vmatpush1.bf16.msra.mxu0 0
      %310 = vmatprep.subr.bf16.mxu0 0
      %311 = vmatpush1.bf16.msra.mxu0 0
      %312 = vmatprep.subr.bf16.mxu0 0
      %313 = vmatpush1.bf16.msra.mxu0 0
      %314 = vmatprep.subr.bf16.mxu0 0
      %315 = vmatpush1.bf16.msra.mxu0 0
      %316 = vmatprep.subr.bf16.mxu0 0
      %317 = vmatpush1.bf16.msra.mxu0 0
      %318 = vmatprep.subr.bf16.mxu0 0
      %319 = vmatpush1.bf16.msra.mxu0 %v302
      %320 = vmatprep.subr.bf16.mxu0 0
      %321 = vmatpush2.bf16.msra.mxu0 0
      %322 = vmatprep.subr.bf16.mxu0 0
      %323 = vmatpush2.bf16.msra.mxu0 0
      %324 = vmatprep.subr.bf16.mxu0 0
      %325 = vmatpush2.bf16.msra.mxu0 0
      %326 = vmatprep.subr.bf16.mxu0 0
      %327 = vmatpush2.bf16.msra.mxu0 0
      %328 = vmatprep.subr.bf16.mxu0 0
      %329 = vmatpush2.bf16.msra.mxu0 0
      %330 = vmatprep.subr.bf16.mxu0 0
      %331 = vmatpush2.bf16.msra.mxu0 0
      %332 = vmatprep.subr.bf16.mxu0 0
      %333 = vmatpush2.bf16.msra.mxu0 0
      %334 = vmatprep.subr.bf16.mxu0 0
      %335 = vmatpush2.bf16.msra.mxu0 0
      %336 = vmatprep.mubr.bf16.mxu0 0
      %337 = vmatmul.mubr.bf16.gmra.mxu0 %v259
      %v338 = vpop.f32.mrf.mxu0
      %v339 = vadd.f32 0.0, %v338
      %v340 = vpop.f32.mrf.mxu0
      %v341 = vpop.f32.mrf.mxu0
      %v342 = vadd.f32 0.0, %v341
      %v343 = vpop.f32.mrf.mxu0
      %344 = vmatprep.mubr.bf16.mxu0 0
      %345 = vmatmul.mubr.bf16.gmra.mxu0 %v262
      %v346 = vpop.f32.mrf.mxu0
      %v347 = vadd.f32 0.0, %v346
      %v348 = vpop.f32.mrf.mxu0
      %v349 = vpop.f32.mrf.mxu0
      %v350 = vadd.f32 0.0, %v349
      %v351 = vpop.f32.mrf.mxu0
      %352 = vmatprep.mubr.bf16.mxu0 0
      %353 = vmatmul.mubr.bf16.gmra.mxu0 %v265
      %v354 = vpop.f32.mrf.mxu0
      %v355 = vadd.f32 0.0, %v354
      %v356 = vpop.f32.mrf.mxu0
      %v357 = vpop.f32.mrf.mxu0
      %v358 = vadd.f32 0.0, %v357
      %v359 = vpop.f32.mrf.mxu0
      %360 = vmatprep.mubr.bf16.mxu0 0
      %361 = vmatmul.mubr.bf16.gmra.mxu0 %v268
      %v362 = vpop.f32.mrf.mxu0
      %v363 = vadd.f32 0.0, %v362
      %v364 = vpop.f32.mrf.mxu0
      %v365 = vpop.f32.mrf.mxu0
      %v366 = vadd.f32 0.0, %v365
      %v367 = vpop.f32.mrf.mxu0
      %368 = vmatprep.mubr.bf16.mxu0 0
      %369 = vmatmul.mubr.bf16.gmra.mxu0 %v271
      %v370 = vpop.f32.mrf.mxu0
      %v371 = vadd.f32 0.0, %v370
      %v372 = vpop.f32.mrf.mxu0
      %v373 = vpop.f32.mrf.mxu0
      %v374 = vadd.f32 0.0, %v373
      %v375 = vpop.f32.mrf.mxu0
      %376 = vmatprep.mubr.bf16.mxu0 0
      %377 = vmatmul.mubr.bf16.gmra.mxu0 %v274
      %v378 = vpop.f32.mrf.mxu0
      %v379 = vadd.f32 0.0, %v378
      %v380 = vpop.f32.mrf.mxu0
      %v381 = vpop.f32.mrf.mxu0
      %v382 = vadd.f32 0.0, %v381
      %v383 = vpop.f32.mrf.mxu0
      %384 = vmatprep.mubr.bf16.mxu0 0
      %385 = vmatmul.mubr.bf16.gmra.mxu0 %v277
      %v386 = vpop.f32.mrf.mxu0
      %v387 = vadd.f32 0.0, %v386
      %v388 = vpop.f32.mrf.mxu0
      %v389 = vpop.f32.mrf.mxu0
      %v390 = vadd.f32 0.0, %v389
      %v391 = vpop.f32.mrf.mxu0
      %392 = vmatprep.mubr.bf16.mxu0 0
      %393 = vmatmul.mubr.bf16.gmra.mxu0 %v280
      %v394 = vpop.f32.mrf.mxu0
      %v395 = vadd.f32 0.0, %v394
      %v396 = vpop.f32.mrf.mxu0
      %v397 = vpop.f32.mrf.mxu0
      %v398 = vadd.f32 0.0, %v397
      %v399 = vpop.f32.mrf.mxu0
      %400 = vmatprep.mubr.bf16.mxu0 0
      %401 = vmatmul.mubr.bf16.gmra.mxu0 %v283
      %v402 = vpop.f32.mrf.mxu0
      %v403 = vadd.f32 0.0, %v402
      %v404 = vpop.f32.mrf.mxu0
      %v405 = vpop.f32.mrf.mxu0
      %v406 = vadd.f32 0.0, %v405
      %v407 = vpop.f32.mrf.mxu0
      %408 = vmatprep.mubr.bf16.mxu0 0
      %409 = vmatmul.mubr.bf16.gmra.mxu0 %v286
      %v410 = vpop.f32.mrf.mxu0
      %v411 = vadd.f32 0.0, %v410
      %v412 = vpop.f32.mrf.mxu0
      %v413 = vpop.f32.mrf.mxu0
      %v414 = vadd.f32 0.0, %v413
      %v415 = vpop.f32.mrf.mxu0
      %416 = vmatprep.mubr.bf16.mxu0 0
      %417 = vmatmul.mubr.bf16.gmra.mxu0 %v289
      %v418 = vpop.f32.mrf.mxu0
      %v419 = vadd.f32 0.0, %v418
      %v420 = vpop.f32.mrf.mxu0
      %v421 = vpop.f32.mrf.mxu0
      %v422 = vadd.f32 0.0, %v421
      %v423 = vpop.f32.mrf.mxu0
      %424 = vmatprep.mubr.bf16.mxu0 0
      %425 = vmatmul.mubr.bf16.gmra.mxu0 %v292
      %v426 = vpop.f32.mrf.mxu0
      %v427 = vadd.f32 0.0, %v426
      %v428 = vpop.f32.mrf.mxu0
      %v429 = vpop.f32.mrf.mxu0
      %v430 = vadd.f32 0.0, %v429
      %v431 = vpop.f32.mrf.mxu0
      %432 = vmatprep.mubr.bf16.mxu0 0
      %433 = vmatmul.mubr.bf16.gmra.mxu0 %v295
      %v434 = vpop.f32.mrf.mxu0
      %v435 = vadd.f32 0.0, %v434
      %v436 = vpop.f32.mrf.mxu0
      %v437 = vpop.f32.mrf.mxu0
      %v438 = vpop.f32.mrf.mxu0
      %439 = vdwg.mxu0
      %vm440 = vcmask 261120
      %v441 = vsel %vm440, %v339, 0.0
      %v442 = vsel %vm440, %v342, 0.0
      %v443 = vadd.f32 %v441, %v442
      %v444 = vsel %vm440, %v347, 0.0
      %v445 = vadd.f32 %v443, %v444
      %v446 = vsel %vm440, %v350, 0.0
      %v447 = vadd.f32 %v445, %v446
      %v448 = vsel %vm440, %v355, 0.0
      %v449 = vadd.f32 %v447, %v448
      %v450 = vsel %vm440, %v358, 0.0
      %v451 = vadd.f32 %v449, %v450
      %v452 = vsel %vm440, %v363, 0.0
      %v453 = vadd.f32 %v451, %v452
      %v454 = vsel %vm440, %v366, 0.0
      %v455 = vadd.f32 %v453, %v454
      %v456 = vsel %vm440, %v371, 0.0
      %v457 = vadd.f32 %v455, %v456
      %v458 = vsel %vm440, %v374, 0.0
      %v459 = vadd.f32 %v457, %v458
      %v460 = vsel %vm440, %v379, 0.0
      %v461 = vadd.f32 %v459, %v460
      %v462 = vsel %vm440, %v382, 0.0
      %v463 = vadd.f32 %v461, %v462
      %v464 = vsel %vm440, %v387, 0.0
      %v465 = vadd.f32 %v463, %v464
      %v466 = vsel %vm440, %v390, 0.0
      %v467 = vadd.f32 %v465, %v466
      %v468 = vsel %vm440, %v395, 0.0
      %v469 = vadd.f32 %v467, %v468
      %v470 = vsel %vm440, %v398, 0.0
      %v471 = vadd.f32 %v469, %v470
      %v472 = vsel %vm440, %v403, 0.0
      %v473 = vadd.f32 %v471, %v472
      %v474 = vsel %vm440, %v406, 0.0
      %v475 = vadd.f32 %v473, %v474
      %v476 = vsel %vm440, %v411, 0.0
      %v477 = vadd.f32 %v475, %v476
      %v478 = vsel %vm440, %v414, 0.0
      %v479 = vadd.f32 %v477, %v478
      %v480 = vsel %vm440, %v419, 0.0
      %v481 = vadd.f32 %v479, %v480
      %v482 = vsel %vm440, %v422, 0.0
      %v483 = vadd.f32 %v481, %v482
      %v484 = vsel %vm440, %v427, 0.0
      %v485 = vadd.f32 %v483, %v484
      %v486 = vsel %vm440, %v430, 0.0
      %v487 = vadd.f32 %v485, %v486
      %vm488 = vcmask 257024
      %v489 = vsel %vm488, %v435, 0.0
      %v490 = vadd.f32 %v487, %v489
      %v491 = vrot.slane %v490, 4
      %v492 = vadd.f32 %v490, %v491
      %v493 = vrot.slane %v492, 2
      %v494 = vadd.f32 %v492, %v493
      %v495 = vrot.slane %v494, 1
      %v496 = vadd.f32 %v494, %v495
      %v497 = vadd.f32 %v496, 0.0
      %v498 = vmul.f32 %v339, %v339
      %v499 = vmul.f32 %v342, %v342
      %v500 = vmul.f32 %v347, %v347
      %v501 = vmul.f32 %v350, %v350
      %v502 = vmul.f32 %v355, %v355
      %v503 = vmul.f32 %v358, %v358
      %v504 = vmul.f32 %v363, %v363
      %v505 = vmul.f32 %v366, %v366
      %v506 = vmul.f32 %v371, %v371
      %v507 = vmul.f32 %v374, %v374
      %v508 = vmul.f32 %v379, %v379
      %v509 = vmul.f32 %v382, %v382
      %v510 = vmul.f32 %v387, %v387
      %v511 = vmul.f32 %v390, %v390
      %v512 = vmul.f32 %v395, %v395
      %v513 = vmul.f32 %v398, %v398
      %v514 = vmul.f32 %v403, %v403
      %v515 = vmul.f32 %v406, %v406
      %v516 = vmul.f32 %v411, %v411
      %v517 = vmul.f32 %v414, %v414
      %v518 = vmul.f32 %v419, %v419
      %v519 = vmul.f32 %v422, %v422
      %v520 = vmul.f32 %v427, %v427
      %v521 = vmul.f32 %v430, %v430
      %v522 = vmul.f32 %v435, %v435
      %v523 = vsel %vm440, %v498, 0.0
      %v524 = vsel %vm440, %v499, 0.0
      %v525 = vadd.f32 %v523, %v524
      %v526 = vsel %vm440, %v500, 0.0
      %v527 = vadd.f32 %v525, %v526
      %v528 = vsel %vm440, %v501, 0.0
      %v529 = vadd.f32 %v527, %v528
      %v530 = vsel %vm440, %v502, 0.0
      %v531 = vadd.f32 %v529, %v530
      %v532 = vsel %vm440, %v503, 0.0
      %v533 = vadd.f32 %v531, %v532
      %v534 = vsel %vm440, %v504, 0.0
      %v535 = vadd.f32 %v533, %v534
      %v536 = vsel %vm440, %v505, 0.0
      %v537 = vadd.f32 %v535, %v536
      %v538 = vsel %vm440, %v506, 0.0
      %v539 = vadd.f32 %v537, %v538
      %v540 = vsel %vm440, %v507, 0.0
      %v541 = vadd.f32 %v539, %v540
      %v542 = vsel %vm440, %v508, 0.0
      %v543 = vadd.f32 %v541, %v542
      %v544 = vsel %vm440, %v509, 0.0
      %v545 = vadd.f32 %v543, %v544
      %v546 = vsel %vm440, %v510, 0.0
      %v547 = vadd.f32 %v545, %v546
      %v548 = vsel %vm440, %v511, 0.0
      %v549 = vadd.f32 %v547, %v548
      %v550 = vsel %vm440, %v512, 0.0
      %v551 = vadd.f32 %v549, %v550
      %v552 = vsel %vm440, %v513, 0.0
      %v553 = vadd.f32 %v551, %v552
      %v554 = vsel %vm440, %v514, 0.0
      %v555 = vadd.f32 %v553, %v554
      %v556 = vsel %vm440, %v515, 0.0
      %v557 = vadd.f32 %v555, %v556
      %v558 = vsel %vm440, %v516, 0.0
      %v559 = vadd.f32 %v557, %v558
      %v560 = vsel %vm440, %v517, 0.0
      %v561 = vadd.f32 %v559, %v560
      %v562 = vsel %vm440, %v518, 0.0
      %v563 = vadd.f32 %v561, %v562
      %v564 = vsel %vm440, %v519, 0.0
      %v565 = vadd.f32 %v563, %v564
      %v566 = vsel %vm440, %v520, 0.0
      %v567 = vadd.f32 %v565, %v566
      %v568 = vsel %vm440, %v521, 0.0
      %v569 = vadd.f32 %v567, %v568
      %v570 = vsel %vm488, %v522, 0.0
      %v571 = vadd.f32 %v569, %v570
      %v572 = vrot.slane %v571, 4
      %v573 = vadd.f32 %v571, %v572
      %v574 = vrot.slane %v573, 2
      %v575 = vadd.f32 %v573, %v574
      %v576 = vrot.slane %v575, 1
      %v577 = vadd.f32 %v575, %v576
      %v578 = vadd.f32 %v577, 0.0
      %s579 = scalar_lea.vmem %s153, 100
      %v580 = vld [vmem:[%s579] sm:$0xf]
      %v581 = vld [vmem:[%s579 + $0x4] sm:$0xf]
      %v582 = vld [vmem:[%s579 + $0x8] sm:$0xf]
      %v583 = vld [vmem:[%s579 + $0xc] sm:$0xf]
      %v584 = vld [vmem:[%s579 + $0x10] sm:$0xf]
      %v585 = vld [vmem:[%s579 + $0x14] sm:$0xf]
      %v586 = vld [vmem:[%s579 + $0x18] sm:$0xf]
      %v587 = vld [vmem:[%s579 + $0x1c] sm:$0xf]
      %v588 = vld [vmem:[%s579 + $0x20] sm:$0xf]
      %v589 = vld [vmem:[%s579 + $0x24] sm:$0xf]
      %v590 = vld [vmem:[%s579 + $0x28] sm:$0xf]
      %v591 = vld [vmem:[%s579 + $0x2c] sm:$0xf]
      %v592 = vld [vmem:[%s579 + $0x30] sm:$0xf]
      %v593 = vld [vmem:[%s579 + $0x34] sm:$0xf]
      %v594 = vld [vmem:[%s579 + $0x38] sm:$0xf]
      %v595 = vld [vmem:[%s579 + $0x3c] sm:$0xf]
      %v596 = vld [vmem:[%s579 + $0x40] sm:$0xf]
      %v597 = vld [vmem:[%s579 + $0x44] sm:$0xf]
      %v598 = vld [vmem:[%s579 + $0x48] sm:$0xf]
      %v599 = vld [vmem:[%s579 + $0x4c] sm:$0xf]
      %v600 = vld [vmem:[%s579 + $0x50] sm:$0xf]
      %v601 = vld [vmem:[%s579 + $0x54] sm:$0xf]
      %v602 = vld [vmem:[%s579 + $0x58] sm:$0xf]
      %v603 = vld [vmem:[%s579 + $0x5c] sm:$0xf]
      %v604 = vld [vmem:[%s579 + $0x60] sm:$0x3]
      %v630 = vunpack.c.l.b16 %v580
      %v631 = vunpack.c.l.b16 %v581
      %v632 = vunpack.c.l.b16 %v582
      %v633 = vunpack.c.l.b16 %v583
      %v634 = vunpack.c.l.b16 %v584
      %v635 = vunpack.c.l.b16 %v585
      %v636 = vunpack.c.l.b16 %v586
      %v637 = vunpack.c.l.b16 %v587
      %v638 = vunpack.c.l.b16 %v588
      %v639 = vunpack.c.l.b16 %v589
      %v640 = vunpack.c.l.b16 %v590
      %v641 = vunpack.c.l.b16 %v591
      %v642 = vunpack.c.l.b16 %v592
      %v643 = vunpack.c.l.b16 %v593
      %v644 = vunpack.c.l.b16 %v594
      %v645 = vunpack.c.l.b16 %v595
      %v646 = vunpack.c.l.b16 %v596
      %v647 = vunpack.c.l.b16 %v597
      %v648 = vunpack.c.l.b16 %v598
      %v649 = vunpack.c.l.b16 %v599
      %v650 = vunpack.c.l.b16 %v600
      %v651 = vunpack.c.l.b16 %v601
      %v652 = vunpack.c.l.b16 %v602
      %v653 = vunpack.c.l.b16 %v603
      %v654 = vunpack.c.l.b16 %v604
      %v655 = vpack.c.b16 %v631, %v630
      %v656 = vpack.c.b16 %v633, %v632
      %v657 = vpack.c.b16 %v635, %v634
      %v658 = vpack.c.b16 %v637, %v636
      %v659 = vpack.c.b16 %v639, %v638
      %v660 = vpack.c.b16 %v641, %v640
      %v661 = vpack.c.b16 %v643, %v642
      %v662 = vpack.c.b16 %v645, %v644
      %v663 = vpack.c.b16 %v647, %v646
      %v664 = vpack.c.b16 %v649, %v648
      %v665 = vpack.c.b16 %v651, %v650
      %v666 = vpack.c.b16 %v653, %v652
      %v667 = vpack.c.b16 %v654, %v654
      %v669 = vsel %vm257, %v655, 0
      %v672 = vsel %vm257, %v656, 0
      %v675 = vsel %vm257, %v657, 0
      %v678 = vsel %vm257, %v658, 0
      %v681 = vsel %vm257, %v659, 0
      %v684 = vsel %vm257, %v660, 0
      %v687 = vsel %vm257, %v661, 0
      %v690 = vsel %vm257, %v662, 0
      %v693 = vsel %vm257, %v663, 0
      %v696 = vsel %vm257, %v664, 0
      %v699 = vsel %vm257, %v665, 0
      %v702 = vsel %vm257, %v666, 0
      %v705 = vsel %vm257, %v667, 0
      %707 = vmatprep.subr.bf16.mxu0 0
      %708 = vmatpush1.bf16.msra.mxu0 0
      %709 = vmatprep.subr.bf16.mxu0 0
      %710 = vmatpush1.bf16.msra.mxu0 0
      %711 = vmatprep.subr.bf16.mxu0 0
      %712 = vmatpush1.bf16.msra.mxu0 0
      %713 = vmatprep.subr.bf16.mxu0 0
      %714 = vmatpush1.bf16.msra.mxu0 0
      %715 = vmatprep.subr.bf16.mxu0 0
      %716 = vmatpush1.bf16.msra.mxu0 0
      %717 = vmatprep.subr.bf16.mxu0 0
      %718 = vmatpush1.bf16.msra.mxu0 0
      %719 = vmatprep.subr.bf16.mxu0 0
      %720 = vmatpush1.bf16.msra.mxu0 0
      %721 = vmatprep.subr.bf16.mxu0 0
      %722 = vmatpush1.bf16.msra.mxu0 %v302
      %723 = vmatprep.subr.bf16.mxu0 0
      %724 = vmatpush2.bf16.msra.mxu0 0
      %725 = vmatprep.subr.bf16.mxu0 0
      %726 = vmatpush2.bf16.msra.mxu0 0
      %727 = vmatprep.subr.bf16.mxu0 0
      %728 = vmatpush2.bf16.msra.mxu0 0
      %729 = vmatprep.subr.bf16.mxu0 0
      %730 = vmatpush2.bf16.msra.mxu0 0
      %731 = vmatprep.subr.bf16.mxu0 0
      %732 = vmatpush2.bf16.msra.mxu0 0
      %733 = vmatprep.subr.bf16.mxu0 0
      %734 = vmatpush2.bf16.msra.mxu0 0
      %735 = vmatprep.subr.bf16.mxu0 0
      %736 = vmatpush2.bf16.msra.mxu0 0
      %737 = vmatprep.subr.bf16.mxu0 0
      %738 = vmatpush2.bf16.msra.mxu0 0
      %739 = vmatprep.mubr.bf16.mxu0 0
      %740 = vmatmul.mubr.bf16.gmra.mxu0 %v669
      %v741 = vpop.f32.mrf.mxu0
      %v742 = vadd.f32 0.0, %v741
      %v743 = vpop.f32.mrf.mxu0
      %v744 = vpop.f32.mrf.mxu0
      %v745 = vadd.f32 0.0, %v744
      %v746 = vpop.f32.mrf.mxu0
      %747 = vmatprep.mubr.bf16.mxu0 0
      %748 = vmatmul.mubr.bf16.gmra.mxu0 %v672
      %v749 = vpop.f32.mrf.mxu0
      %v750 = vadd.f32 0.0, %v749
      %v751 = vpop.f32.mrf.mxu0
      %v752 = vpop.f32.mrf.mxu0
      %v753 = vadd.f32 0.0, %v752
      %v754 = vpop.f32.mrf.mxu0
      %755 = vmatprep.mubr.bf16.mxu0 0
      %756 = vmatmul.mubr.bf16.gmra.mxu0 %v675
      %v757 = vpop.f32.mrf.mxu0
      %v758 = vadd.f32 0.0, %v757
      %v759 = vpop.f32.mrf.mxu0
      %v760 = vpop.f32.mrf.mxu0
      %v761 = vadd.f32 0.0, %v760
      %v762 = vpop.f32.mrf.mxu0
      %763 = vmatprep.mubr.bf16.mxu0 0
      %764 = vmatmul.mubr.bf16.gmra.mxu0 %v678
      %v765 = vpop.f32.mrf.mxu0
      %v766 = vadd.f32 0.0, %v765
      %v767 = vpop.f32.mrf.mxu0
      %v768 = vpop.f32.mrf.mxu0
      %v769 = vadd.f32 0.0, %v768
      %v770 = vpop.f32.mrf.mxu0
      %771 = vmatprep.mubr.bf16.mxu0 0
      %772 = vmatmul.mubr.bf16.gmra.mxu0 %v681
      %v773 = vpop.f32.mrf.mxu0
      %v774 = vadd.f32 0.0, %v773
      %v775 = vpop.f32.mrf.mxu0
      %v776 = vpop.f32.mrf.mxu0
      %v777 = vadd.f32 0.0, %v776
      %v778 = vpop.f32.mrf.mxu0
      %779 = vmatprep.mubr.bf16.mxu0 0
      %780 = vmatmul.mubr.bf16.gmra.mxu0 %v684
      %v781 = vpop.f32.mrf.mxu0
      %v782 = vadd.f32 0.0, %v781
      %v783 = vpop.f32.mrf.mxu0
      %v784 = vpop.f32.mrf.mxu0
      %v785 = vadd.f32 0.0, %v784
      %v786 = vpop.f32.mrf.mxu0
      %787 = vmatprep.mubr.bf16.mxu0 0
      %788 = vmatmul.mubr.bf16.gmra.mxu0 %v687
      %v789 = vpop.f32.mrf.mxu0
      %v790 = vadd.f32 0.0, %v789
      %v791 = vpop.f32.mrf.mxu0
      %v792 = vpop.f32.mrf.mxu0
      %v793 = vadd.f32 0.0, %v792
      %v794 = vpop.f32.mrf.mxu0
      %795 = vmatprep.mubr.bf16.mxu0 0
      %796 = vmatmul.mubr.bf16.gmra.mxu0 %v690
      %v797 = vpop.f32.mrf.mxu0
      %v798 = vadd.f32 0.0, %v797
      %v799 = vpop.f32.mrf.mxu0
      %v800 = vpop.f32.mrf.mxu0
      %v801 = vadd.f32 0.0, %v800
      %v802 = vpop.f32.mrf.mxu0
      %803 = vmatprep.mubr.bf16.mxu0 0
      %804 = vmatmul.mubr.bf16.gmra.mxu0 %v693
      %v805 = vpop.f32.mrf.mxu0
      %v806 = vadd.f32 0.0, %v805
      %v807 = vpop.f32.mrf.mxu0
      %v808 = vpop.f32.mrf.mxu0
      %v809 = vadd.f32 0.0, %v808
      %v810 = vpop.f32.mrf.mxu0
      %811 = vmatprep.mubr.bf16.mxu0 0
      %812 = vmatmul.mubr.bf16.gmra.mxu0 %v696
      %v813 = vpop.f32.mrf.mxu0
      %v814 = vadd.f32 0.0, %v813
      %v815 = vpop.f32.mrf.mxu0
      %v816 = vpop.f32.mrf.mxu0
      %v817 = vadd.f32 0.0, %v816
      %v818 = vpop.f32.mrf.mxu0
      %819 = vmatprep.mubr.bf16.mxu0 0
      %820 = vmatmul.mubr.bf16.gmra.mxu0 %v699
      %v821 = vpop.f32.mrf.mxu0
      %v822 = vadd.f32 0.0, %v821
      %v823 = vpop.f32.mrf.mxu0
      %v824 = vpop.f32.mrf.mxu0
      %v825 = vadd.f32 0.0, %v824
      %v826 = vpop.f32.mrf.mxu0
      %827 = vmatprep.mubr.bf16.mxu0 0
      %828 = vmatmul.mubr.bf16.gmra.mxu0 %v702
      %v829 = vpop.f32.mrf.mxu0
      %v830 = vadd.f32 0.0, %v829
      %v831 = vpop.f32.mrf.mxu0
      %v832 = vpop.f32.mrf.mxu0
      %v833 = vadd.f32 0.0, %v832
      %v834 = vpop.f32.mrf.mxu0
      %835 = vmatprep.mubr.bf16.mxu0 0
      %836 = vmatmul.mubr.bf16.gmra.mxu0 %v705
      %v837 = vpop.f32.mrf.mxu0
      %v838 = vadd.f32 0.0, %v837
      %v839 = vpop.f32.mrf.mxu0
      %v840 = vpop.f32.mrf.mxu0
      %v841 = vpop.f32.mrf.mxu0
      %842 = vdwg.mxu0
      %v843 = vsel %vm440, %v742, 0.0
      %v844 = vsel %vm440, %v745, 0.0
      %v845 = vadd.f32 %v843, %v844
      %v846 = vsel %vm440, %v750, 0.0
      %v847 = vadd.f32 %v845, %v846
      %v848 = vsel %vm440, %v753, 0.0
      %v849 = vadd.f32 %v847, %v848
      %v850 = vsel %vm440, %v758, 0.0
      %v851 = vadd.f32 %v849, %v850
      %v852 = vsel %vm440, %v761, 0.0
      %v853 = vadd.f32 %v851, %v852
      %v854 = vsel %vm440, %v766, 0.0
      %v855 = vadd.f32 %v853, %v854
      %v856 = vsel %vm440, %v769, 0.0
      %v857 = vadd.f32 %v855, %v856
      %v858 = vsel %vm440, %v774, 0.0
      %v859 = vadd.f32 %v857, %v858
      %v860 = vsel %vm440, %v777, 0.0
      %v861 = vadd.f32 %v859, %v860
      %v862 = vsel %vm440, %v782, 0.0
      %v863 = vadd.f32 %v861, %v862
      %v864 = vsel %vm440, %v785, 0.0
      %v865 = vadd.f32 %v863, %v864
      %v866 = vsel %vm440, %v790, 0.0
      %v867 = vadd.f32 %v865, %v866
      %v868 = vsel %vm440, %v793, 0.0
      %v869 = vadd.f32 %v867, %v868
      %v870 = vsel %vm440, %v798, 0.0
      %v871 = vadd.f32 %v869, %v870
      %v872 = vsel %vm440, %v801, 0.0
      %v873 = vadd.f32 %v871, %v872
      %v874 = vsel %vm440, %v806, 0.0
      %v875 = vadd.f32 %v873, %v874
      %v876 = vsel %vm440, %v809, 0.0
      %v877 = vadd.f32 %v875, %v876
      %v878 = vsel %vm440, %v814, 0.0
      %v879 = vadd.f32 %v877, %v878
      %v880 = vsel %vm440, %v817, 0.0
      %v881 = vadd.f32 %v879, %v880
      %v882 = vsel %vm440, %v822, 0.0
      %v883 = vadd.f32 %v881, %v882
      %v884 = vsel %vm440, %v825, 0.0
      %v885 = vadd.f32 %v883, %v884
      %v886 = vsel %vm440, %v830, 0.0
      %v887 = vadd.f32 %v885, %v886
      %v888 = vsel %vm440, %v833, 0.0
      %v889 = vadd.f32 %v887, %v888
      %v890 = vsel %vm488, %v838, 0.0
      %v891 = vadd.f32 %v889, %v890
      %v892 = vrot.slane %v891, 4
      %v893 = vadd.f32 %v891, %v892
      %v894 = vrot.slane %v893, 2
      %v895 = vadd.f32 %v893, %v894
      %v896 = vrot.slane %v895, 1
      %v897 = vadd.f32 %v895, %v896
      %v898 = vadd.f32 %v497, %v897
      %v899 = vmul.f32 %v742, %v742
      %v900 = vmul.f32 %v745, %v745
      %v901 = vmul.f32 %v750, %v750
      %v902 = vmul.f32 %v753, %v753
      %v903 = vmul.f32 %v758, %v758
      %v904 = vmul.f32 %v761, %v761
      %v905 = vmul.f32 %v766, %v766
      %v906 = vmul.f32 %v769, %v769
      %v907 = vmul.f32 %v774, %v774
      %v908 = vmul.f32 %v777, %v777
      %v909 = vmul.f32 %v782, %v782
      %v910 = vmul.f32 %v785, %v785
      %v911 = vmul.f32 %v790, %v790
      %v912 = vmul.f32 %v793, %v793
      %v913 = vmul.f32 %v798, %v798
      %v914 = vmul.f32 %v801, %v801
      %v915 = vmul.f32 %v806, %v806
      %v916 = vmul.f32 %v809, %v809
      %v917 = vmul.f32 %v814, %v814
      %v918 = vmul.f32 %v817, %v817
      %v919 = vmul.f32 %v822, %v822
      %v920 = vmul.f32 %v825, %v825
      %v921 = vmul.f32 %v830, %v830
      %v922 = vmul.f32 %v833, %v833
      %v923 = vmul.f32 %v838, %v838
      %v924 = vsel %vm440, %v899, 0.0
      %v925 = vsel %vm440, %v900, 0.0
      %v926 = vadd.f32 %v924, %v925
      %v927 = vsel %vm440, %v901, 0.0
      %v928 = vadd.f32 %v926, %v927
      %v929 = vsel %vm440, %v902, 0.0
      %v930 = vadd.f32 %v928, %v929
      %v931 = vsel %vm440, %v903, 0.0
      %v932 = vadd.f32 %v930, %v931
      %v933 = vsel %vm440, %v904, 0.0
      %v934 = vadd.f32 %v932, %v933
      %v935 = vsel %vm440, %v905, 0.0
      %v936 = vadd.f32 %v934, %v935
      %v937 = vsel %vm440, %v906, 0.0
      %v938 = vadd.f32 %v936, %v937
      %v939 = vsel %vm440, %v907, 0.0
      %v940 = vadd.f32 %v938, %v939
      %v941 = vsel %vm440, %v908, 0.0
      %v942 = vadd.f32 %v940, %v941
      %v943 = vsel %vm440, %v909, 0.0
      %v944 = vadd.f32 %v942, %v943
      %v945 = vsel %vm440, %v910, 0.0
      %v946 = vadd.f32 %v944, %v945
      %v947 = vsel %vm440, %v911, 0.0
      %v948 = vadd.f32 %v946, %v947
      %v949 = vsel %vm440, %v912, 0.0
      %v950 = vadd.f32 %v948, %v949
      %v951 = vsel %vm440, %v913, 0.0
      %v952 = vadd.f32 %v950, %v951
      %v953 = vsel %vm440, %v914, 0.0
      %v954 = vadd.f32 %v952, %v953
      %v955 = vsel %vm440, %v915, 0.0
      %v956 = vadd.f32 %v954, %v955
      %v957 = vsel %vm440, %v916, 0.0
      %v958 = vadd.f32 %v956, %v957
      %v959 = vsel %vm440, %v917, 0.0
      %v960 = vadd.f32 %v958, %v959
      %v961 = vsel %vm440, %v918, 0.0
      %v962 = vadd.f32 %v960, %v961
      %v963 = vsel %vm440, %v919, 0.0
      %v964 = vadd.f32 %v962, %v963
      %v965 = vsel %vm440, %v920, 0.0
      %v966 = vadd.f32 %v964, %v965
      %v967 = vsel %vm440, %v921, 0.0
      %v968 = vadd.f32 %v966, %v967
      %v969 = vsel %vm440, %v922, 0.0
      %v970 = vadd.f32 %v968, %v969
      %v971 = vsel %vm488, %v923, 0.0
      %v972 = vadd.f32 %v970, %v971
      %v973 = vrot.slane %v972, 4
      %v974 = vadd.f32 %v972, %v973
      %v975 = vrot.slane %v974, 2
      %v976 = vadd.f32 %v974, %v975
      %v977 = vrot.slane %v976, 1
      %v978 = vadd.f32 %v976, %v977
      %v979 = vadd.f32 %v578, %v978
      %s980 = scalar_lea.vmem %s153, 200
      %v981 = vld [vmem:[%s980] sm:$0xf]
      %v982 = vld [vmem:[%s980 + $0x4] sm:$0xf]
      %v983 = vld [vmem:[%s980 + $0x8] sm:$0xf]
      %v984 = vld [vmem:[%s980 + $0xc] sm:$0xf]
      %v985 = vld [vmem:[%s980 + $0x10] sm:$0xf]
      %v986 = vld [vmem:[%s980 + $0x14] sm:$0xf]
      %v987 = vld [vmem:[%s980 + $0x18] sm:$0xf]
      %v988 = vld [vmem:[%s980 + $0x1c] sm:$0xf]
      %v989 = vld [vmem:[%s980 + $0x20] sm:$0xf]
      %v990 = vld [vmem:[%s980 + $0x24] sm:$0xf]
      %v991 = vld [vmem:[%s980 + $0x28] sm:$0xf]
      %v992 = vld [vmem:[%s980 + $0x2c] sm:$0xf]
      %v993 = vld [vmem:[%s980 + $0x30] sm:$0xf]
      %v994 = vld [vmem:[%s980 + $0x34] sm:$0xf]
      %v995 = vld [vmem:[%s980 + $0x38] sm:$0xf]
      %v996 = vld [vmem:[%s980 + $0x3c] sm:$0xf]
      %v997 = vld [vmem:[%s980 + $0x40] sm:$0xf]
      %v998 = vld [vmem:[%s980 + $0x44] sm:$0xf]
      %v999 = vld [vmem:[%s980 + $0x48] sm:$0xf]
      %v1000 = vld [vmem:[%s980 + $0x4c] sm:$0xf]
      %v1001 = vld [vmem:[%s980 + $0x50] sm:$0xf]
      %v1002 = vld [vmem:[%s980 + $0x54] sm:$0xf]
      %v1003 = vld [vmem:[%s980 + $0x58] sm:$0xf]
      %v1004 = vld [vmem:[%s980 + $0x5c] sm:$0xf]
      %v1005 = vld [vmem:[%s980 + $0x60] sm:$0x3]
      %v1031 = vunpack.c.l.b16 %v981
      %v1032 = vunpack.c.l.b16 %v982
      %v1033 = vunpack.c.l.b16 %v983
      %v1034 = vunpack.c.l.b16 %v984
      %v1035 = vunpack.c.l.b16 %v985
      %v1036 = vunpack.c.l.b16 %v986
      %v1037 = vunpack.c.l.b16 %v987
      %v1038 = vunpack.c.l.b16 %v988
      %v1039 = vunpack.c.l.b16 %v989
      %v1040 = vunpack.c.l.b16 %v990
      %v1041 = vunpack.c.l.b16 %v991
      %v1042 = vunpack.c.l.b16 %v992
      %v1043 = vunpack.c.l.b16 %v993
      %v1044 = vunpack.c.l.b16 %v994
      %v1045 = vunpack.c.l.b16 %v995
      %v1046 = vunpack.c.l.b16 %v996
      %v1047 = vunpack.c.l.b16 %v997
      %v1048 = vunpack.c.l.b16 %v998
      %v1049 = vunpack.c.l.b16 %v999
      %v1050 = vunpack.c.l.b16 %v1000
      %v1051 = vunpack.c.l.b16 %v1001
      %v1052 = vunpack.c.l.b16 %v1002
      %v1053 = vunpack.c.l.b16 %v1003
      %v1054 = vunpack.c.l.b16 %v1004
      %v1055 = vunpack.c.l.b16 %v1005
      %v1056 = vpack.c.b16 %v1032, %v1031
      %v1057 = vpack.c.b16 %v1034, %v1033
      %v1058 = vpack.c.b16 %v1036, %v1035
      %v1059 = vpack.c.b16 %v1038, %v1037
      %v1060 = vpack.c.b16 %v1040, %v1039
      %v1061 = vpack.c.b16 %v1042, %v1041
      %v1062 = vpack.c.b16 %v1044, %v1043
      %v1063 = vpack.c.b16 %v1046, %v1045
      %v1064 = vpack.c.b16 %v1048, %v1047
      %v1065 = vpack.c.b16 %v1050, %v1049
      %v1066 = vpack.c.b16 %v1052, %v1051
      %v1067 = vpack.c.b16 %v1054, %v1053
      %v1068 = vpack.c.b16 %v1055, %v1055
      %v1070 = vsel %vm257, %v1056, 0
      %v1073 = vsel %vm257, %v1057, 0
      %v1076 = vsel %vm257, %v1058, 0
      %v1079 = vsel %vm257, %v1059, 0
      %v1082 = vsel %vm257, %v1060, 0
      %v1085 = vsel %vm257, %v1061, 0
      %v1088 = vsel %vm257, %v1062, 0
      %v1091 = vsel %vm257, %v1063, 0
      %v1094 = vsel %vm257, %v1064, 0
      %v1097 = vsel %vm257, %v1065, 0
      %v1100 = vsel %vm257, %v1066, 0
      %v1103 = vsel %vm257, %v1067, 0
      %v1106 = vsel %vm257, %v1068, 0
      %1108 = vmatprep.subr.bf16.mxu0 0
      %1109 = vmatpush1.bf16.msra.mxu0 0
      %1110 = vmatprep.subr.bf16.mxu0 0
      %1111 = vmatpush1.bf16.msra.mxu0 0
      %1112 = vmatprep.subr.bf16.mxu0 0
      %1113 = vmatpush1.bf16.msra.mxu0 0
      %1114 = vmatprep.subr.bf16.mxu0 0
      %1115 = vmatpush1.bf16.msra.mxu0 0
      %1116 = vmatprep.subr.bf16.mxu0 0
      %1117 = vmatpush1.bf16.msra.mxu0 0
      %1118 = vmatprep.subr.bf16.mxu0 0
      %1119 = vmatpush1.bf16.msra.mxu0 0
      %1120 = vmatprep.subr.bf16.mxu0 0
      %1121 = vmatpush1.bf16.msra.mxu0 0
      %1122 = vmatprep.subr.bf16.mxu0 0
      %1123 = vmatpush1.bf16.msra.mxu0 %v302
      %1124 = vmatprep.subr.bf16.mxu0 0
      %1125 = vmatpush2.bf16.msra.mxu0 0
      %1126 = vmatprep.subr.bf16.mxu0 0
      %1127 = vmatpush2.bf16.msra.mxu0 0
      %1128 = vmatprep.subr.bf16.mxu0 0
      %1129 = vmatpush2.bf16.msra.mxu0 0
      %1130 = vmatprep.subr.bf16.mxu0 0
      %1131 = vmatpush2.bf16.msra.mxu0 0
      %1132 = vmatprep.subr.bf16.mxu0 0
      %1133 = vmatpush2.bf16.msra.mxu0 0
      %1134 = vmatprep.subr.bf16.mxu0 0
      %1135 = vmatpush2.bf16.msra.mxu0 0
      %1136 = vmatprep.subr.bf16.mxu0 0
      %1137 = vmatpush2.bf16.msra.mxu0 0
      %1138 = vmatprep.subr.bf16.mxu0 0
      %1139 = vmatpush2.bf16.msra.mxu0 0
      %1140 = vmatprep.mubr.bf16.mxu0 0
      %1141 = vmatmul.mubr.bf16.gmra.mxu0 %v1070
      %v1142 = vpop.f32.mrf.mxu0
      %v1143 = vadd.f32 0.0, %v1142
      %v1144 = vpop.f32.mrf.mxu0
      %v1145 = vpop.f32.mrf.mxu0
      %v1146 = vadd.f32 0.0, %v1145
      %v1147 = vpop.f32.mrf.mxu0
      %1148 = vmatprep.mubr.bf16.mxu0 0
      %1149 = vmatmul.mubr.bf16.gmra.mxu0 %v1073
      %v1150 = vpop.f32.mrf.mxu0
      %v1151 = vadd.f32 0.0, %v1150
      %v1152 = vpop.f32.mrf.mxu0
      %v1153 = vpop.f32.mrf.mxu0
      %v1154 = vadd.f32 0.0, %v1153
      %v1155 = vpop.f32.mrf.mxu0
      %1156 = vmatprep.mubr.bf16.mxu0 0
      %1157 = vmatmul.mubr.bf16.gmra.mxu0 %v1076
      %v1158 = vpop.f32.mrf.mxu0
      %v1159 = vadd.f32 0.0, %v1158
      %v1160 = vpop.f32.mrf.mxu0
      %v1161 = vpop.f32.mrf.mxu0
      %v1162 = vadd.f32 0.0, %v1161
      %v1163 = vpop.f32.mrf.mxu0
      %1164 = vmatprep.mubr.bf16.mxu0 0
      %1165 = vmatmul.mubr.bf16.gmra.mxu0 %v1079
      %v1166 = vpop.f32.mrf.mxu0
      %v1167 = vadd.f32 0.0, %v1166
      %v1168 = vpop.f32.mrf.mxu0
      %v1169 = vpop.f32.mrf.mxu0
      %v1170 = vadd.f32 0.0, %v1169
      %v1171 = vpop.f32.mrf.mxu0
      %1172 = vmatprep.mubr.bf16.mxu0 0
      %1173 = vmatmul.mubr.bf16.gmra.mxu0 %v1082
      %v1174 = vpop.f32.mrf.mxu0
      %v1175 = vadd.f32 0.0, %v1174
      %v1176 = vpop.f32.mrf.mxu0
      %v1177 = vpop.f32.mrf.mxu0
      %v1178 = vadd.f32 0.0, %v1177
      %v1179 = vpop.f32.mrf.mxu0
      %1180 = vmatprep.mubr.bf16.mxu0 0
      %1181 = vmatmul.mubr.bf16.gmra.mxu0 %v1085
      %v1182 = vpop.f32.mrf.mxu0
      %v1183 = vadd.f32 0.0, %v1182
      %v1184 = vpop.f32.mrf.mxu0
      %v1185 = vpop.f32.mrf.mxu0
      %v1186 = vadd.f32 0.0, %v1185
      %v1187 = vpop.f32.mrf.mxu0
      %1188 = vmatprep.mubr.bf16.mxu0 0
      %1189 = vmatmul.mubr.bf16.gmra.mxu0 %v1088
      %v1190 = vpop.f32.mrf.mxu0
      %v1191 = vadd.f32 0.0, %v1190
      %v1192 = vpop.f32.mrf.mxu0
      %v1193 = vpop.f32.mrf.mxu0
      %v1194 = vadd.f32 0.0, %v1193
      %v1195 = vpop.f32.mrf.mxu0
      %1196 = vmatprep.mubr.bf16.mxu0 0
      %1197 = vmatmul.mubr.bf16.gmra.mxu0 %v1091
      %v1198 = vpop.f32.mrf.mxu0
      %v1199 = vadd.f32 0.0, %v1198
      %v1200 = vpop.f32.mrf.mxu0
      %v1201 = vpop.f32.mrf.mxu0
      %v1202 = vadd.f32 0.0, %v1201
      %v1203 = vpop.f32.mrf.mxu0
      %1204 = vmatprep.mubr.bf16.mxu0 0
      %1205 = vmatmul.mubr.bf16.gmra.mxu0 %v1094
      %v1206 = vpop.f32.mrf.mxu0
      %v1207 = vadd.f32 0.0, %v1206
      %v1208 = vpop.f32.mrf.mxu0
      %v1209 = vpop.f32.mrf.mxu0
      %v1210 = vadd.f32 0.0, %v1209
      %v1211 = vpop.f32.mrf.mxu0
      %1212 = vmatprep.mubr.bf16.mxu0 0
      %1213 = vmatmul.mubr.bf16.gmra.mxu0 %v1097
      %v1214 = vpop.f32.mrf.mxu0
      %v1215 = vadd.f32 0.0, %v1214
      %v1216 = vpop.f32.mrf.mxu0
      %v1217 = vpop.f32.mrf.mxu0
      %v1218 = vadd.f32 0.0, %v1217
      %v1219 = vpop.f32.mrf.mxu0
      %1220 = vmatprep.mubr.bf16.mxu0 0
      %1221 = vmatmul.mubr.bf16.gmra.mxu0 %v1100
      %v1222 = vpop.f32.mrf.mxu0
      %v1223 = vadd.f32 0.0, %v1222
      %v1224 = vpop.f32.mrf.mxu0
      %v1225 = vpop.f32.mrf.mxu0
      %v1226 = vadd.f32 0.0, %v1225
      %v1227 = vpop.f32.mrf.mxu0
      %1228 = vmatprep.mubr.bf16.mxu0 0
      %1229 = vmatmul.mubr.bf16.gmra.mxu0 %v1103
      %v1230 = vpop.f32.mrf.mxu0
      %v1231 = vadd.f32 0.0, %v1230
      %v1232 = vpop.f32.mrf.mxu0
      %v1233 = vpop.f32.mrf.mxu0
      %v1234 = vadd.f32 0.0, %v1233
      %v1235 = vpop.f32.mrf.mxu0
      %1236 = vmatprep.mubr.bf16.mxu0 0
      %1237 = vmatmul.mubr.bf16.gmra.mxu0 %v1106
      %v1238 = vpop.f32.mrf.mxu0
      %v1239 = vadd.f32 0.0, %v1238
      %v1240 = vpop.f32.mrf.mxu0
      %v1241 = vpop.f32.mrf.mxu0
      %v1242 = vpop.f32.mrf.mxu0
      %1243 = vdwg.mxu0
      %v1244 = vsel %vm440, %v1143, 0.0
      %v1245 = vsel %vm440, %v1146, 0.0
      %v1246 = vadd.f32 %v1244, %v1245
      %v1247 = vsel %vm440, %v1151, 0.0
      %v1248 = vadd.f32 %v1246, %v1247
      %v1249 = vsel %vm440, %v1154, 0.0
      %v1250 = vadd.f32 %v1248, %v1249
      %v1251 = vsel %vm440, %v1159, 0.0
      %v1252 = vadd.f32 %v1250, %v1251
      %v1253 = vsel %vm440, %v1162, 0.0
      %v1254 = vadd.f32 %v1252, %v1253
      %v1255 = vsel %vm440, %v1167, 0.0
      %v1256 = vadd.f32 %v1254, %v1255
      %v1257 = vsel %vm440, %v1170, 0.0
      %v1258 = vadd.f32 %v1256, %v1257
      %v1259 = vsel %vm440, %v1175, 0.0
      %v1260 = vadd.f32 %v1258, %v1259
      %v1261 = vsel %vm440, %v1178, 0.0
      %v1262 = vadd.f32 %v1260, %v1261
      %v1263 = vsel %vm440, %v1183, 0.0
      %v1264 = vadd.f32 %v1262, %v1263
      %v1265 = vsel %vm440, %v1186, 0.0
      %v1266 = vadd.f32 %v1264, %v1265
      %v1267 = vsel %vm440, %v1191, 0.0
      %v1268 = vadd.f32 %v1266, %v1267
      %v1269 = vsel %vm440, %v1194, 0.0
      %v1270 = vadd.f32 %v1268, %v1269
      %v1271 = vsel %vm440, %v1199, 0.0
      %v1272 = vadd.f32 %v1270, %v1271
      %v1273 = vsel %vm440, %v1202, 0.0
      %v1274 = vadd.f32 %v1272, %v1273
      %v1275 = vsel %vm440, %v1207, 0.0
      %v1276 = vadd.f32 %v1274, %v1275
      %v1277 = vsel %vm440, %v1210, 0.0
      %v1278 = vadd.f32 %v1276, %v1277
      %v1279 = vsel %vm440, %v1215, 0.0
      %v1280 = vadd.f32 %v1278, %v1279
      %v1281 = vsel %vm440, %v1218, 0.0
      %v1282 = vadd.f32 %v1280, %v1281
      %v1283 = vsel %vm440, %v1223, 0.0
      %v1284 = vadd.f32 %v1282, %v1283
      %v1285 = vsel %vm440, %v1226, 0.0
      %v1286 = vadd.f32 %v1284, %v1285
      %v1287 = vsel %vm440, %v1231, 0.0
      %v1288 = vadd.f32 %v1286, %v1287
      %v1289 = vsel %vm440, %v1234, 0.0
      %v1290 = vadd.f32 %v1288, %v1289
      %v1291 = vsel %vm488, %v1239, 0.0
      %v1292 = vadd.f32 %v1290, %v1291
      %v1293 = vrot.slane %v1292, 4
      %v1294 = vadd.f32 %v1292, %v1293
      %v1295 = vrot.slane %v1294, 2
      %v1296 = vadd.f32 %v1294, %v1295
      %v1297 = vrot.slane %v1296, 1
      %v1298 = vadd.f32 %v1296, %v1297
      %v1299 = vadd.f32 %v898, %v1298
      %v1300 = vmul.f32 %v1143, %v1143
      %v1301 = vmul.f32 %v1146, %v1146
      %v1302 = vmul.f32 %v1151, %v1151
      %v1303 = vmul.f32 %v1154, %v1154
      %v1304 = vmul.f32 %v1159, %v1159
      %v1305 = vmul.f32 %v1162, %v1162
      %v1306 = vmul.f32 %v1167, %v1167
      %v1307 = vmul.f32 %v1170, %v1170
      %v1308 = vmul.f32 %v1175, %v1175
      %v1309 = vmul.f32 %v1178, %v1178
      %v1310 = vmul.f32 %v1183, %v1183
      %v1311 = vmul.f32 %v1186, %v1186
      %v1312 = vmul.f32 %v1191, %v1191
      %v1313 = vmul.f32 %v1194, %v1194
      %v1314 = vmul.f32 %v1199, %v1199
      %v1315 = vmul.f32 %v1202, %v1202
      %v1316 = vmul.f32 %v1207, %v1207
      %v1317 = vmul.f32 %v1210, %v1210
      %v1318 = vmul.f32 %v1215, %v1215
      %v1319 = vmul.f32 %v1218, %v1218
      %v1320 = vmul.f32 %v1223, %v1223
      %v1321 = vmul.f32 %v1226, %v1226
      %v1322 = vmul.f32 %v1231, %v1231
      %v1323 = vmul.f32 %v1234, %v1234
      %v1324 = vmul.f32 %v1239, %v1239
      %v1325 = vsel %vm440, %v1300, 0.0
      %v1326 = vsel %vm440, %v1301, 0.0
      %v1327 = vadd.f32 %v1325, %v1326
      %v1328 = vsel %vm440, %v1302, 0.0
      %v1329 = vadd.f32 %v1327, %v1328
      %v1330 = vsel %vm440, %v1303, 0.0
      %v1331 = vadd.f32 %v1329, %v1330
      %v1332 = vsel %vm440, %v1304, 0.0
      %v1333 = vadd.f32 %v1331, %v1332
      %v1334 = vsel %vm440, %v1305, 0.0
      %v1335 = vadd.f32 %v1333, %v1334
      %v1336 = vsel %vm440, %v1306, 0.0
      %v1337 = vadd.f32 %v1335, %v1336
      %v1338 = vsel %vm440, %v1307, 0.0
      %v1339 = vadd.f32 %v1337, %v1338
      %v1340 = vsel %vm440, %v1308, 0.0
      %v1341 = vadd.f32 %v1339, %v1340
      %v1342 = vsel %vm440, %v1309, 0.0
      %v1343 = vadd.f32 %v1341, %v1342
      %v1344 = vsel %vm440, %v1310, 0.0
      %v1345 = vadd.f32 %v1343, %v1344
      %v1346 = vsel %vm440, %v1311, 0.0
      %v1347 = vadd.f32 %v1345, %v1346
      %v1348 = vsel %vm440, %v1312, 0.0
      %v1349 = vadd.f32 %v1347, %v1348
      %v1350 = vsel %vm440, %v1313, 0.0
      %v1351 = vadd.f32 %v1349, %v1350
      %v1352 = vsel %vm440, %v1314, 0.0
      %v1353 = vadd.f32 %v1351, %v1352
      %v1354 = vsel %vm440, %v1315, 0.0
      %v1355 = vadd.f32 %v1353, %v1354
      %v1356 = vsel %vm440, %v1316, 0.0
      %v1357 = vadd.f32 %v1355, %v1356
      %v1358 = vsel %vm440, %v1317, 0.0
      %v1359 = vadd.f32 %v1357, %v1358
      %v1360 = vsel %vm440, %v1318, 0.0
      %v1361 = vadd.f32 %v1359, %v1360
      %v1362 = vsel %vm440, %v1319, 0.0
      %v1363 = vadd.f32 %v1361, %v1362
      %v1364 = vsel %vm440, %v1320, 0.0
      %v1365 = vadd.f32 %v1363, %v1364
      %v1366 = vsel %vm440, %v1321, 0.0
      %v1367 = vadd.f32 %v1365, %v1366
      %v1368 = vsel %vm440, %v1322, 0.0
      %v1369 = vadd.f32 %v1367, %v1368
      %v1370 = vsel %vm440, %v1323, 0.0
      %v1371 = vadd.f32 %v1369, %v1370
      %v1372 = vsel %vm488, %v1324, 0.0
      %v1373 = vadd.f32 %v1371, %v1372
      %v1374 = vrot.slane %v1373, 4
      %v1375 = vadd.f32 %v1373, %v1374
      %v1376 = vrot.slane %v1375, 2
      %v1377 = vadd.f32 %v1375, %v1376
      %v1378 = vrot.slane %v1377, 1
      %v1379 = vadd.f32 %v1377, %v1378
      %v1380 = vadd.f32 %v979, %v1379
      %s1381 = scalar_lea.vmem %s153, 300
      %v1382 = vld [vmem:[%s1381] sm:$0xf]
      %v1383 = vld [vmem:[%s1381 + $0x4] sm:$0xf]
      %v1384 = vld [vmem:[%s1381 + $0x8] sm:$0xf]
      %v1385 = vld [vmem:[%s1381 + $0xc] sm:$0xf]
      %v1386 = vld [vmem:[%s1381 + $0x10] sm:$0xf]
      %v1387 = vld [vmem:[%s1381 + $0x14] sm:$0xf]
      %v1388 = vld [vmem:[%s1381 + $0x18] sm:$0xf]
      %v1389 = vld [vmem:[%s1381 + $0x1c] sm:$0xf]
      %v1390 = vld [vmem:[%s1381 + $0x20] sm:$0xf]
      %v1391 = vld [vmem:[%s1381 + $0x24] sm:$0xf]
      %v1392 = vld [vmem:[%s1381 + $0x28] sm:$0xf]
      %v1393 = vld [vmem:[%s1381 + $0x2c] sm:$0xf]
      %v1394 = vld [vmem:[%s1381 + $0x30] sm:$0xf]
      %v1395 = vld [vmem:[%s1381 + $0x34] sm:$0xf]
      %v1396 = vld [vmem:[%s1381 + $0x38] sm:$0xf]
      %v1397 = vld [vmem:[%s1381 + $0x3c] sm:$0xf]
      %v1398 = vld [vmem:[%s1381 + $0x40] sm:$0xf]
      %v1399 = vld [vmem:[%s1381 + $0x44] sm:$0xf]
      %v1400 = vld [vmem:[%s1381 + $0x48] sm:$0xf]
      %v1401 = vld [vmem:[%s1381 + $0x4c] sm:$0xf]
      %v1402 = vld [vmem:[%s1381 + $0x50] sm:$0xf]
      %v1403 = vld [vmem:[%s1381 + $0x54] sm:$0xf]
      %v1404 = vld [vmem:[%s1381 + $0x58] sm:$0xf]
      %v1405 = vld [vmem:[%s1381 + $0x5c] sm:$0xf]
      %v1406 = vld [vmem:[%s1381 + $0x60] sm:$0x3]
      %v1432 = vunpack.c.l.b16 %v1382
      %v1433 = vunpack.c.l.b16 %v1383
      %v1434 = vunpack.c.l.b16 %v1384
      %v1435 = vunpack.c.l.b16 %v1385
      %v1436 = vunpack.c.l.b16 %v1386
      %v1437 = vunpack.c.l.b16 %v1387
      %v1438 = vunpack.c.l.b16 %v1388
      %v1439 = vunpack.c.l.b16 %v1389
      %v1440 = vunpack.c.l.b16 %v1390
      %v1441 = vunpack.c.l.b16 %v1391
      %v1442 = vunpack.c.l.b16 %v1392
      %v1443 = vunpack.c.l.b16 %v1393
      %v1444 = vunpack.c.l.b16 %v1394
      %v1445 = vunpack.c.l.b16 %v1395
      %v1446 = vunpack.c.l.b16 %v1396
      %v1447 = vunpack.c.l.b16 %v1397
      %v1448 = vunpack.c.l.b16 %v1398
      %v1449 = vunpack.c.l.b16 %v1399
      %v1450 = vunpack.c.l.b16 %v1400
      %v1451 = vunpack.c.l.b16 %v1401
      %v1452 = vunpack.c.l.b16 %v1402
      %v1453 = vunpack.c.l.b16 %v1403
      %v1454 = vunpack.c.l.b16 %v1404
      %v1455 = vunpack.c.l.b16 %v1405
      %v1456 = vunpack.c.l.b16 %v1406
      %v1457 = vpack.c.b16 %v1433, %v1432
      %v1458 = vpack.c.b16 %v1435, %v1434
      %v1459 = vpack.c.b16 %v1437, %v1436
      %v1460 = vpack.c.b16 %v1439, %v1438
      %v1461 = vpack.c.b16 %v1441, %v1440
      %v1462 = vpack.c.b16 %v1443, %v1442
      %v1463 = vpack.c.b16 %v1445, %v1444
      %v1464 = vpack.c.b16 %v1447, %v1446
      %v1465 = vpack.c.b16 %v1449, %v1448
      %v1466 = vpack.c.b16 %v1451, %v1450
      %v1467 = vpack.c.b16 %v1453, %v1452
      %v1468 = vpack.c.b16 %v1455, %v1454
      %v1469 = vpack.c.b16 %v1456, %v1456
      %v1471 = vsel %vm257, %v1457, 0
      %v1474 = vsel %vm257, %v1458, 0
      %v1477 = vsel %vm257, %v1459, 0
      %v1480 = vsel %vm257, %v1460, 0
      %v1483 = vsel %vm257, %v1461, 0
      %v1486 = vsel %vm257, %v1462, 0
      %v1489 = vsel %vm257, %v1463, 0
      %v1492 = vsel %vm257, %v1464, 0
      %v1495 = vsel %vm257, %v1465, 0
      %v1498 = vsel %vm257, %v1466, 0
      %v1501 = vsel %vm257, %v1467, 0
      %v1504 = vsel %vm257, %v1468, 0
      %v1507 = vsel %vm257, %v1469, 0
      %1509 = vmatprep.subr.bf16.mxu0 0
      %1510 = vmatpush1.bf16.msra.mxu0 0
      %1511 = vmatprep.subr.bf16.mxu0 0
      %1512 = vmatpush1.bf16.msra.mxu0 0
      %1513 = vmatprep.subr.bf16.mxu0 0
      %1514 = vmatpush1.bf16.msra.mxu0 0
      %1515 = vmatprep.subr.bf16.mxu0 0
      %1516 = vmatpush1.bf16.msra.mxu0 0
      %1517 = vmatprep.subr.bf16.mxu0 0
      %1518 = vmatpush1.bf16.msra.mxu0 0
      %1519 = vmatprep.subr.bf16.mxu0 0
      %1520 = vmatpush1.bf16.msra.mxu0 0
      %1521 = vmatprep.subr.bf16.mxu0 0
      %1522 = vmatpush1.bf16.msra.mxu0 0
      %1523 = vmatprep.subr.bf16.mxu0 0
      %1524 = vmatpush1.bf16.msra.mxu0 %v302
      %1525 = vmatprep.subr.bf16.mxu0 0
      %1526 = vmatpush2.bf16.msra.mxu0 0
      %1527 = vmatprep.subr.bf16.mxu0 0
      %1528 = vmatpush2.bf16.msra.mxu0 0
      %1529 = vmatprep.subr.bf16.mxu0 0
      %1530 = vmatpush2.bf16.msra.mxu0 0
      %1531 = vmatprep.subr.bf16.mxu0 0
      %1532 = vmatpush2.bf16.msra.mxu0 0
      %1533 = vmatprep.subr.bf16.mxu0 0
      %1534 = vmatpush2.bf16.msra.mxu0 0
      %1535 = vmatprep.subr.bf16.mxu0 0
      %1536 = vmatpush2.bf16.msra.mxu0 0
      %1537 = vmatprep.subr.bf16.mxu0 0
      %1538 = vmatpush2.bf16.msra.mxu0 0
      %1539 = vmatprep.subr.bf16.mxu0 0
      %1540 = vmatpush2.bf16.msra.mxu0 0
      %1541 = vmatprep.mubr.bf16.mxu0 0
      %1542 = vmatmul.mubr.bf16.gmra.mxu0 %v1471
      %v1543 = vpop.f32.mrf.mxu0
      %v1544 = vadd.f32 0.0, %v1543
      %v1545 = vpop.f32.mrf.mxu0
      %v1546 = vpop.f32.mrf.mxu0
      %v1547 = vadd.f32 0.0, %v1546
      %v1548 = vpop.f32.mrf.mxu0
      %1549 = vmatprep.mubr.bf16.mxu0 0
      %1550 = vmatmul.mubr.bf16.gmra.mxu0 %v1474
      %v1551 = vpop.f32.mrf.mxu0
      %v1552 = vadd.f32 0.0, %v1551
      %v1553 = vpop.f32.mrf.mxu0
      %v1554 = vpop.f32.mrf.mxu0
      %v1555 = vadd.f32 0.0, %v1554
      %v1556 = vpop.f32.mrf.mxu0
      %1557 = vmatprep.mubr.bf16.mxu0 0
      %1558 = vmatmul.mubr.bf16.gmra.mxu0 %v1477
      %v1559 = vpop.f32.mrf.mxu0
      %v1560 = vadd.f32 0.0, %v1559
      %v1561 = vpop.f32.mrf.mxu0
      %v1562 = vpop.f32.mrf.mxu0
      %v1563 = vadd.f32 0.0, %v1562
      %v1564 = vpop.f32.mrf.mxu0
      %1565 = vmatprep.mubr.bf16.mxu0 0
      %1566 = vmatmul.mubr.bf16.gmra.mxu0 %v1480
      %v1567 = vpop.f32.mrf.mxu0
      %v1568 = vadd.f32 0.0, %v1567
      %v1569 = vpop.f32.mrf.mxu0
      %v1570 = vpop.f32.mrf.mxu0
      %v1571 = vadd.f32 0.0, %v1570
      %v1572 = vpop.f32.mrf.mxu0
      %1573 = vmatprep.mubr.bf16.mxu0 0
      %1574 = vmatmul.mubr.bf16.gmra.mxu0 %v1483
      %v1575 = vpop.f32.mrf.mxu0
      %v1576 = vadd.f32 0.0, %v1575
      %v1577 = vpop.f32.mrf.mxu0
      %v1578 = vpop.f32.mrf.mxu0
      %v1579 = vadd.f32 0.0, %v1578
      %v1580 = vpop.f32.mrf.mxu0
      %1581 = vmatprep.mubr.bf16.mxu0 0
      %1582 = vmatmul.mubr.bf16.gmra.mxu0 %v1486
      %v1583 = vpop.f32.mrf.mxu0
      %v1584 = vadd.f32 0.0, %v1583
      %v1585 = vpop.f32.mrf.mxu0
      %v1586 = vpop.f32.mrf.mxu0
      %v1587 = vadd.f32 0.0, %v1586
      %v1588 = vpop.f32.mrf.mxu0
      %1589 = vmatprep.mubr.bf16.mxu0 0
      %1590 = vmatmul.mubr.bf16.gmra.mxu0 %v1489
      %v1591 = vpop.f32.mrf.mxu0
      %v1592 = vadd.f32 0.0, %v1591
      %v1593 = vpop.f32.mrf.mxu0
      %v1594 = vpop.f32.mrf.mxu0
      %v1595 = vadd.f32 0.0, %v1594
      %v1596 = vpop.f32.mrf.mxu0
      %1597 = vmatprep.mubr.bf16.mxu0 0
      %1598 = vmatmul.mubr.bf16.gmra.mxu0 %v1492
      %v1599 = vpop.f32.mrf.mxu0
      %v1600 = vadd.f32 0.0, %v1599
      %v1601 = vpop.f32.mrf.mxu0
      %v1602 = vpop.f32.mrf.mxu0
      %v1603 = vadd.f32 0.0, %v1602
      %v1604 = vpop.f32.mrf.mxu0
      %1605 = vmatprep.mubr.bf16.mxu0 0
      %1606 = vmatmul.mubr.bf16.gmra.mxu0 %v1495
      %v1607 = vpop.f32.mrf.mxu0
      %v1608 = vadd.f32 0.0, %v1607
      %v1609 = vpop.f32.mrf.mxu0
      %v1610 = vpop.f32.mrf.mxu0
      %v1611 = vadd.f32 0.0, %v1610
      %v1612 = vpop.f32.mrf.mxu0
      %1613 = vmatprep.mubr.bf16.mxu0 0
      %1614 = vmatmul.mubr.bf16.gmra.mxu0 %v1498
      %v1615 = vpop.f32.mrf.mxu0
      %v1616 = vadd.f32 0.0, %v1615
      %v1617 = vpop.f32.mrf.mxu0
      %v1618 = vpop.f32.mrf.mxu0
      %v1619 = vadd.f32 0.0, %v1618
      %v1620 = vpop.f32.mrf.mxu0
      %1621 = vmatprep.mubr.bf16.mxu0 0
      %1622 = vmatmul.mubr.bf16.gmra.mxu0 %v1501
      %v1623 = vpop.f32.mrf.mxu0
      %v1624 = vadd.f32 0.0, %v1623
      %v1625 = vpop.f32.mrf.mxu0
      %v1626 = vpop.f32.mrf.mxu0
      %v1627 = vadd.f32 0.0, %v1626
      %v1628 = vpop.f32.mrf.mxu0
      %1629 = vmatprep.mubr.bf16.mxu0 0
      %1630 = vmatmul.mubr.bf16.gmra.mxu0 %v1504
      %v1631 = vpop.f32.mrf.mxu0
      %v1632 = vadd.f32 0.0, %v1631
      %v1633 = vpop.f32.mrf.mxu0
      %v1634 = vpop.f32.mrf.mxu0
      %v1635 = vadd.f32 0.0, %v1634
      %v1636 = vpop.f32.mrf.mxu0
      %1637 = vmatprep.mubr.bf16.mxu0 0
      %1638 = vmatmul.mubr.bf16.gmra.mxu0 %v1507
      %v1639 = vpop.f32.mrf.mxu0
      %v1640 = vadd.f32 0.0, %v1639
      %v1641 = vpop.f32.mrf.mxu0
      %v1642 = vpop.f32.mrf.mxu0
      %v1643 = vpop.f32.mrf.mxu0
      %1644 = vdwg.mxu0
      %v1645 = vsel %vm440, %v1544, 0.0
      %v1646 = vsel %vm440, %v1547, 0.0
      %v1647 = vadd.f32 %v1645, %v1646
      %v1648 = vsel %vm440, %v1552, 0.0
      %v1649 = vadd.f32 %v1647, %v1648
      %v1650 = vsel %vm440, %v1555, 0.0
      %v1651 = vadd.f32 %v1649, %v1650
      %v1652 = vsel %vm440, %v1560, 0.0
      %v1653 = vadd.f32 %v1651, %v1652
      %v1654 = vsel %vm440, %v1563, 0.0
      %v1655 = vadd.f32 %v1653, %v1654
      %v1656 = vsel %vm440, %v1568, 0.0
      %v1657 = vadd.f32 %v1655, %v1656
      %v1658 = vsel %vm440, %v1571, 0.0
      %v1659 = vadd.f32 %v1657, %v1658
      %v1660 = vsel %vm440, %v1576, 0.0
      %v1661 = vadd.f32 %v1659, %v1660
      %v1662 = vsel %vm440, %v1579, 0.0
      %v1663 = vadd.f32 %v1661, %v1662
      %v1664 = vsel %vm440, %v1584, 0.0
      %v1665 = vadd.f32 %v1663, %v1664
      %v1666 = vsel %vm440, %v1587, 0.0
      %v1667 = vadd.f32 %v1665, %v1666
      %v1668 = vsel %vm440, %v1592, 0.0
      %v1669 = vadd.f32 %v1667, %v1668
      %v1670 = vsel %vm440, %v1595, 0.0
      %v1671 = vadd.f32 %v1669, %v1670
      %v1672 = vsel %vm440, %v1600, 0.0
      %v1673 = vadd.f32 %v1671, %v1672
      %v1674 = vsel %vm440, %v1603, 0.0
      %v1675 = vadd.f32 %v1673, %v1674
      %v1676 = vsel %vm440, %v1608, 0.0
      %v1677 = vadd.f32 %v1675, %v1676
      %v1678 = vsel %vm440, %v1611, 0.0
      %v1679 = vadd.f32 %v1677, %v1678
      %v1680 = vsel %vm440, %v1616, 0.0
      %v1681 = vadd.f32 %v1679, %v1680
      %v1682 = vsel %vm440, %v1619, 0.0
      %v1683 = vadd.f32 %v1681, %v1682
      %v1684 = vsel %vm440, %v1624, 0.0
      %v1685 = vadd.f32 %v1683, %v1684
      %v1686 = vsel %vm440, %v1627, 0.0
      %v1687 = vadd.f32 %v1685, %v1686
      %v1688 = vsel %vm440, %v1632, 0.0
      %v1689 = vadd.f32 %v1687, %v1688
      %v1690 = vsel %vm440, %v1635, 0.0
      %v1691 = vadd.f32 %v1689, %v1690
      %v1692 = vsel %vm488, %v1640, 0.0
      %v1693 = vadd.f32 %v1691, %v1692
      %v1694 = vrot.slane %v1693, 4
      %v1695 = vadd.f32 %v1693, %v1694
      %v1696 = vrot.slane %v1695, 2
      %v1697 = vadd.f32 %v1695, %v1696
      %v1698 = vrot.slane %v1697, 1
      %v1699 = vadd.f32 %v1697, %v1698
      %v1700 = vadd.f32 %v1299, %v1699
      %v1701 = vmul.f32 %v1544, %v1544
      %v1702 = vmul.f32 %v1547, %v1547
      %v1703 = vmul.f32 %v1552, %v1552
      %v1704 = vmul.f32 %v1555, %v1555
      %v1705 = vmul.f32 %v1560, %v1560
      %v1706 = vmul.f32 %v1563, %v1563
      %v1707 = vmul.f32 %v1568, %v1568
      %v1708 = vmul.f32 %v1571, %v1571
      %v1709 = vmul.f32 %v1576, %v1576
      %v1710 = vmul.f32 %v1579, %v1579
      %v1711 = vmul.f32 %v1584, %v1584
      %v1712 = vmul.f32 %v1587, %v1587
      %v1713 = vmul.f32 %v1592, %v1592
      %v1714 = vmul.f32 %v1595, %v1595
      %v1715 = vmul.f32 %v1600, %v1600
      %v1716 = vmul.f32 %v1603, %v1603
      %v1717 = vmul.f32 %v1608, %v1608
      %v1718 = vmul.f32 %v1611, %v1611
      %v1719 = vmul.f32 %v1616, %v1616
      %v1720 = vmul.f32 %v1619, %v1619
      %v1721 = vmul.f32 %v1624, %v1624
      %v1722 = vmul.f32 %v1627, %v1627
      %v1723 = vmul.f32 %v1632, %v1632
      %v1724 = vmul.f32 %v1635, %v1635
      %v1725 = vmul.f32 %v1640, %v1640
      %v1726 = vsel %vm440, %v1701, 0.0
      %v1727 = vsel %vm440, %v1702, 0.0
      %v1728 = vadd.f32 %v1726, %v1727
      %v1729 = vsel %vm440, %v1703, 0.0
      %v1730 = vadd.f32 %v1728, %v1729
      %v1731 = vsel %vm440, %v1704, 0.0
      %v1732 = vadd.f32 %v1730, %v1731
      %v1733 = vsel %vm440, %v1705, 0.0
      %v1734 = vadd.f32 %v1732, %v1733
      %v1735 = vsel %vm440, %v1706, 0.0
      %v1736 = vadd.f32 %v1734, %v1735
      %v1737 = vsel %vm440, %v1707, 0.0
      %v1738 = vadd.f32 %v1736, %v1737
      %v1739 = vsel %vm440, %v1708, 0.0
      %v1740 = vadd.f32 %v1738, %v1739
      %v1741 = vsel %vm440, %v1709, 0.0
      %v1742 = vadd.f32 %v1740, %v1741
      %v1743 = vsel %vm440, %v1710, 0.0
      %v1744 = vadd.f32 %v1742, %v1743
      %v1745 = vsel %vm440, %v1711, 0.0
      %v1746 = vadd.f32 %v1744, %v1745
      %v1747 = vsel %vm440, %v1712, 0.0
      %v1748 = vadd.f32 %v1746, %v1747
      %v1749 = vsel %vm440, %v1713, 0.0
      %v1750 = vadd.f32 %v1748, %v1749
      %v1751 = vsel %vm440, %v1714, 0.0
      %v1752 = vadd.f32 %v1750, %v1751
      %v1753 = vsel %vm440, %v1715, 0.0
      %v1754 = vadd.f32 %v1752, %v1753
      %v1755 = vsel %vm440, %v1716, 0.0
      %v1756 = vadd.f32 %v1754, %v1755
      %v1757 = vsel %vm440, %v1717, 0.0
      %v1758 = vadd.f32 %v1756, %v1757
      %v1759 = vsel %vm440, %v1718, 0.0
      %v1760 = vadd.f32 %v1758, %v1759
      %v1761 = vsel %vm440, %v1719, 0.0
      %v1762 = vadd.f32 %v1760, %v1761
      %v1763 = vsel %vm440, %v1720, 0.0
      %v1764 = vadd.f32 %v1762, %v1763
      %v1765 = vsel %vm440, %v1721, 0.0
      %v1766 = vadd.f32 %v1764, %v1765
      %v1767 = vsel %vm440, %v1722, 0.0
      %v1768 = vadd.f32 %v1766, %v1767
      %v1769 = vsel %vm440, %v1723, 0.0
      %v1770 = vadd.f32 %v1768, %v1769
      %v1771 = vsel %vm440, %v1724, 0.0
      %v1772 = vadd.f32 %v1770, %v1771
      %v1773 = vsel %vm488, %v1725, 0.0
      %v1774 = vadd.f32 %v1772, %v1773
      %v1775 = vrot.slane %v1774, 4
      %v1776 = vadd.f32 %v1774, %v1775
      %v1777 = vrot.slane %v1776, 2
      %v1778 = vadd.f32 %v1776, %v1777
      %v1779 = vrot.slane %v1778, 1
      %v1780 = vadd.f32 %v1778, %v1779
      %v1781 = vadd.f32 %v1380, %v1780
      %v1782 = vld [vmem:[%s2] sm:$0x1]
      %v1783 = vadd.f32 %v1782, %v1700
      %vm1784 = vcmask 253952
      %1785 = vst.msk [vmem:[%s2] sm:$0x1] %vm1784, %v1783
      %v1786 = vld [vmem:[%s3] sm:$0x1]
      %v1787 = vadd.f32 %v1786, %v1781
      %1788 = vst.msk [vmem:[%s3] sm:$0x1] %vm1784, %v1787
      // Predicated region
      $region33: #{a_call__.5} parent=27 // pred_check
        %p1789 = pneg %p75
      $region34: #{a_call__.5} parent=27 // pred_check_branch
        %1791 = sbr.rel (%p1789) target = $region36
      $region35: #{a_call__.5} parent=27 // pred_region
        _
      $region36: #{a_call__.5} parent=27 // pred_fallthru
        _
      // Predicated region
      $region37: #{a_call__.5} parent=27 // pred_check
        %p1792 = pneg %p96
      $region38: #{a_call__.5} parent=27 // pred_check_branch
        %1794 = sbr.rel (%p1792) target = $region40
      $region39: #{a_call__.5} parent=27 // pred_region
        _
      $region40: #{a_call__.5} parent=27 // pred_fallthru
        _
      // Predicated region
      $region41: #{a_call__.5} parent=27 // pred_check
        %p1795 = pneg %p75
      $region42: #{a_call__.5} parent=27 // pred_check_branch
        %1797 = sbr.rel (%p1795) target = $region44
      $region43: #{a_call__.5} parent=27 // pred_region
        _
      $region44: #{a_call__.5} parent=27 // pred_fallthru
        _
      // Predicated region
      $region45: #{a_call__.5} parent=27 // pred_check
        %p1798 = pneg %p96
      $region46: #{a_call__.5} parent=27 // pred_check_branch
        %1800 = sbr.rel (%p1798) target = $region48
      $region47: #{a_call__.5} parent=27 // pred_region
        _
      $region48: #{a_call__.5} parent=27 // pred_fallthru
        _
    $region28: #{a_call__.5} parent=5 // pred_fallthru
      _
    %p1801 = scmp.le.s32.totalorder 2, %s10
    // Predicated region
    $region49: #{a_call__.5} parent=5 // pred_check
      %p1802 = pneg %p1801
    $region50: #{a_call__.5} parent=5 // pred_check_branch
      %1804 = sbr.rel (%p1802) target = $region52
    $region51: #{a_call__.5} parent=5 // pred_region
      %s1805 = ssub.s32 %s10, 2
    $region52: #{a_call__.5} parent=5 // pred_fallthru
      _
  $region6: #{a_call__.5} parent=0 // loop_footer
    %s14 = sadd.s32 1, %s10
  $region7: #{a_call__.5} parent=0 // loop_footer_branch
    %9 = sbr.rel target = $region3
  $region8: #{a_call__.5} parent=0 // loop_exit
    _

// kernel: a_call__.6
$region0: #{a_call__.6}
  #allocation0 [shape = 'u32[]', space=smem, size = 0x4, offset = 0x4, fixed_abs, tag = 'smem constant byte address 0x4 - core index']
  #allocation1 [shape = 'u32[144,128]{1,0:T(1,128)}', space=vmem, size = 0x12000, scoped, tag = 'internal scratch']
  %s0 = inlined_call_operand.vmem [shape: bf16[2,4,196,9], index: 0, kind: input, shape index: {}]
  %s1 = inlined_call_operand.vmem [shape: bf16[9,32], index: 1, kind: input, shape index: {}]
  %s2 = inlined_call_operand.vmem [shape: f32[1,32], index: 2, kind: input, shape index: {}]
  %s3 = inlined_call_operand.vmem [shape: f32[1,32], index: 3, kind: input, shape index: {}]
  %s4 = inlined_call_operand.vmem [shape: bf16[2,196,32], index: 4, kind: output, shape index: {}]
  %s5 = sld [smem:[#allocation0]]
  $region49: #{a_call__.6} parent=0
    _
  %s7 = ssub.s32 1, %s5
  %s8 = scalar_select 0, %s7, %s5
  loop: start=0, step=1, limit=4
  $region2: #{a_call__.6} parent=0 // loop_pre_header
    _
  $region3: #{a_call__.6} parent=0 // loop_header
    %s10 = sphi 0, %s14
    %p11 = scmp.ge.s32.totalorder %s10, 4
    %s20 = sphi 0, %s22
    %s23 = sphi 0, %s20
    %s24 = sphi 0, %s23
    %s40 = sphi 0, %s24
    %s44 = sphi 0, %s44
    %s46 = sphi 0, %s44
    %s47 = sphi 0, %s46
    %s61 = sphi 0, %s47
    %s65 = sphi 0, %s65
    %s67 = sphi 0, %s65
    %s68 = sphi 0, %s67
    %s82 = sphi 0, %s68
    %s86 = sphi 0, %s86
    %s88 = sphi 0, %s86
    %s89 = sphi 0, %s88
    %s103 = sphi 0, %s89
    %s109 = sphi 0, %s111
    %s112 = sphi 0, %s109
    %s113 = sphi 0, %s112
    %s129 = sphi 0, %s113
  $region4: #{a_call__.6} parent=0 // loop_header_branch
    %13 = sbr.rel (%p11) target = $region8
  $region5: #{a_call__.6} parent=0 // loop_body
    %s15 = ssub.s32 %s10, 1
    %s16 = ssub.s32 %s10, 2
    %s17 = sadd.s32 %s10, 1
    %s18 = ssub.s32 %s10, %s17
    %p19 = scmp.eq.s32.totalorder %s18, 0
    %s21 = sadd.s32 %s20, 1
    %s22 = scalar_select %p19, %s20, %s21
    %p25 = pneg %p19
    %p26 = scmp.eq.s32.totalorder %s10, 1
    %p27 = por %p25, %p26
    %p28 = scmp.ne.s32.totalorder %s20, %s23
    %p29 = scmp.eq.s32.totalorder %s10, 0
    %p30 = por %p28, %p29
    %p31 = scmp.ne.s32.totalorder %s20, %s23
    %p32 = scmp.eq.s32.totalorder %s15, 1
    %p33 = por %p31, %p32
    %p34 = scmp.ne.s32.totalorder %s23, %s24
    %p35 = scmp.eq.s32.totalorder %s15, 0
    %p36 = por %p34, %p35
    %p37 = scmp.ne.s32.totalorder %s23, %s24
    %p38 = scmp.eq.s32.totalorder %s16, 1
    %p39 = por %p37, %p38
    %p41 = scmp.ne.s32.totalorder %s24, %s40
    %p42 = scmp.eq.s32.totalorder %s16, 0
    %p43 = por %p41, %p42
    %s45 = sadd.s32 %s44, 1
    %p48 = scmp.eq.s32.totalorder %s10, 1
    %p49 = scmp.ne.s32.totalorder %s44, %s46
    %p50 = scmp.eq.s32.totalorder %s10, 0
    %p51 = por %p49, %p50
    %p52 = scmp.ne.s32.totalorder %s44, %s46
    %p53 = scmp.eq.s32.totalorder %s15, 1
    %p54 = por %p52, %p53
    %p55 = scmp.ne.s32.totalorder %s46, %s47
    %p56 = scmp.eq.s32.totalorder %s15, 0
    %p57 = por %p55, %p56
    %p58 = scmp.ne.s32.totalorder %s46, %s47
    %p59 = scmp.eq.s32.totalorder %s16, 1
    %p60 = por %p58, %p59
    %p62 = scmp.ne.s32.totalorder %s47, %s61
    %p63 = scmp.eq.s32.totalorder %s16, 0
    %p64 = por %p62, %p63
    %s66 = sadd.s32 %s65, 1
    %p69 = scmp.eq.s32.totalorder %s10, 1
    %p70 = scmp.ne.s32.totalorder %s65, %s67
    %p71 = scmp.eq.s32.totalorder %s10, 0
    %p72 = por %p70, %p71
    %p73 = scmp.ne.s32.totalorder %s65, %s67
    %p74 = scmp.eq.s32.totalorder %s15, 1
    %p75 = por %p73, %p74
    %p76 = scmp.ne.s32.totalorder %s67, %s68
    %p77 = scmp.eq.s32.totalorder %s15, 0
    %p78 = por %p76, %p77
    %p79 = scmp.ne.s32.totalorder %s67, %s68
    %p80 = scmp.eq.s32.totalorder %s16, 1
    %p81 = por %p79, %p80
    %p83 = scmp.ne.s32.totalorder %s68, %s82
    %p84 = scmp.eq.s32.totalorder %s16, 0
    %p85 = por %p83, %p84
    %s87 = sadd.s32 %s86, 1
    %p90 = scmp.eq.s32.totalorder %s10, 1
    %p91 = scmp.ne.s32.totalorder %s86, %s88
    %p92 = scmp.eq.s32.totalorder %s10, 0
    %p93 = por %p91, %p92
    %p94 = scmp.ne.s32.totalorder %s86, %s88
    %p95 = scmp.eq.s32.totalorder %s15, 1
    %p96 = por %p94, %p95
    %p97 = scmp.ne.s32.totalorder %s88, %s89
    %p98 = scmp.eq.s32.totalorder %s15, 0
    %p99 = por %p97, %p98
    %p100 = scmp.ne.s32.totalorder %s88, %s89
    %p101 = scmp.eq.s32.totalorder %s16, 1
    %p102 = por %p100, %p101
    %p104 = scmp.ne.s32.totalorder %s89, %s103
    %p105 = scmp.eq.s32.totalorder %s16, 0
    %p106 = por %p104, %p105
    %s107 = ssub.s32 %s10, %s17
    %p108 = scmp.eq.s32.totalorder %s107, 0
    %s110 = sadd.s32 %s109, 1
    %s111 = scalar_select %p108, %s109, %s110
    %p114 = pneg %p108
    %p115 = scmp.eq.s32.totalorder %s10, 1
    %p116 = por %p114, %p115
    %p117 = scmp.ne.s32.totalorder %s109, %s112
    %p118 = scmp.eq.s32.totalorder %s10, 0
    %p119 = por %p117, %p118
    %p120 = scmp.ne.s32.totalorder %s109, %s112
    %p121 = scmp.eq.s32.totalorder %s15, 1
    %p122 = por %p120, %p121
    %p123 = scmp.ne.s32.totalorder %s112, %s113
    %p124 = scmp.eq.s32.totalorder %s15, 0
    %p125 = por %p123, %p124
    %p126 = scmp.ne.s32.totalorder %s112, %s113
    %p127 = scmp.eq.s32.totalorder %s16, 1
    %p128 = por %p126, %p127
    %p130 = scmp.ne.s32.totalorder %s113, %s129
    %p131 = scmp.eq.s32.totalorder %s16, 0
    %p132 = por %p130, %p131
    %p133 = scmp.le.s32.totalorder 1, %s10
    %p134 = scmp.lt.s32.totalorder %s10, 3
    %p135 = pnand %p133, %p134
    %p136 = pneg %p135
    // Predicated region
    $region9: #{a_call__.6} parent=5 // pred_check
      _
    $region10: #{a_call__.6} parent=5 // pred_check_branch
      %138 = sbr.rel (%p135) target = $region12
    $region11: #{a_call__.6} parent=5 // pred_region
      %s139 = ssub.s32 %s10, 1
      // Predicated region
      $region13: #{a_call__.6} parent=11 // pred_check
        %p140 = pneg %p57
      $region14: #{a_call__.6} parent=11 // pred_check_branch
        %142 = sbr.rel (%p140) target = $region16
      $region15: #{a_call__.6} parent=11 // pred_region
        _
      $region16: #{a_call__.6} parent=11 // pred_fallthru
        _
      // Predicated region
      $region17: #{a_call__.6} parent=11 // pred_check
        %p143 = pneg %p78
      $region18: #{a_call__.6} parent=11 // pred_check_branch
        %145 = sbr.rel (%p143) target = $region20
      $region19: #{a_call__.6} parent=11 // pred_region
        _
      $region20: #{a_call__.6} parent=11 // pred_fallthru
        _
      // Predicated region
      $region21: #{a_call__.6} parent=11 // pred_check
        %p146 = pneg %p99
      $region22: #{a_call__.6} parent=11 // pred_check_branch
        %148 = sbr.rel (%p146) target = $region24
      $region23: #{a_call__.6} parent=11 // pred_region
        _
      $region24: #{a_call__.6} parent=11 // pred_fallthru
        _
    $region12: #{a_call__.6} parent=5 // pred_fallthru
      _
    %p149 = scmp.lt.s32.totalorder %s10, 2
    // Predicated region
    $region25: #{a_call__.6} parent=5 // pred_check
      %p150 = pneg %p149
    $region26: #{a_call__.6} parent=5 // pred_check_branch
      %152 = sbr.rel (%p150) target = $region28
    $region27: #{a_call__.6} parent=5 // pred_region
      // Predicated region
      $region29: #{a_call__.6} parent=27 // pred_check
        %p153 = pneg %p30
      $region30: #{a_call__.6} parent=27 // pred_check_branch
        %155 = sbr.rel (%p153) target = $region32
      $region31: #{a_call__.6} parent=27 // pred_region
        %p156 = scmp.lt.s32.totalorder %s10, 1
        %s157 = scalar_select %p156, %s10, 1
        %s158 = smul.addr %s157, 100
        %s159 = smul.addr %s158, 4
        %s160 = scalar_lea.vmem %s0, %s159
      $region32: #{a_call__.6} parent=27 // pred_fallthru
        _
    $region28: #{a_call__.6} parent=5 // pred_fallthru
      _
    %p161 = scmp.le.s32.totalorder 1, %s10
    %p162 = scmp.lt.s32.totalorder %s10, 3
    %p163 = pnand %p161, %p162
    %p164 = pneg %p163
    // Predicated region
    $region33: #{a_call__.6} parent=5 // pred_check
      _
    $region34: #{a_call__.6} parent=5 // pred_check_branch
      %166 = sbr.rel (%p163) target = $region36
    $region35: #{a_call__.6} parent=5 // pred_region
      %s167 = ssub.s32 %s10, 1
      %p168 = scmp.lt.s32.totalorder %s15, 1
      %s169 = scalar_select %p168, %s15, 1
      %s170 = smul.addr %s169, 100
      %s171 = smul.addr %s170, 4
      %s172 = scalar_lea.vmem %s0, %s171
      %p173 = pneg %p36
      %p174 = pneg %p33
      %p175 = pneg %p57
      %p176 = pneg %p54
      %p177 = pneg %p78
      %p178 = pneg %p75
      %p179 = pneg %p99
      %p180 = pneg %p96
      %p181 = pneg %p125
      %p182 = pneg %p122
      %p183 = scmp.lt.s32.totalorder %s15, 1
      %s184 = scalar_select %p183, %s15, 1
      %s185 = smul.addr %s184, 25
      %s186 = smul.addr %s185, 4
      %s187 = scalar_lea.vmem %s4, %s186
      %p188 = scmp.lt.s32.totalorder %s15, 1
      %s189 = scalar_select %p188, %s15, 1
      %s190 = smul.addr %s189, 100
      %s191 = smul.addr %s190, 4
      %s192 = scalar_lea.vmem %s0, %s191
      %p193 = scmp.lt.s32.totalorder %s15, 1
      %s194 = scalar_select %p193, %s15, 1
      %s195 = smul.addr %s194, 25
      %s196 = smul.addr %s195, 4
      %s197 = scalar_lea.vmem %s4, %s196
      %v199 = vld [vmem:[%s1] sm:$0xf]
      %v200 = vld [vmem:[%s1 + $0x4] sm:$0x1]
      %v201 = vld [vmem:[%s2] sm:$0x1]
      %v202 = vld [vmem:[%s3] sm:$0x1]
      %v203 = vld [vmem:[%s192] sm:$0xf]
      %v204 = vld [vmem:[%s192 + $0x4] sm:$0xf]
      %v205 = vld [vmem:[%s192 + $0x8] sm:$0xf]
      %v206 = vld [vmem:[%s192 + $0xc] sm:$0xf]
      %v207 = vld [vmem:[%s192 + $0x10] sm:$0xf]
      %v208 = vld [vmem:[%s192 + $0x14] sm:$0xf]
      %v209 = vld [vmem:[%s192 + $0x18] sm:$0xf]
      %v210 = vld [vmem:[%s192 + $0x1c] sm:$0xf]
      %v211 = vld [vmem:[%s192 + $0x20] sm:$0xf]
      %v212 = vld [vmem:[%s192 + $0x24] sm:$0xf]
      %v213 = vld [vmem:[%s192 + $0x28] sm:$0xf]
      %v214 = vld [vmem:[%s192 + $0x2c] sm:$0xf]
      %v215 = vld [vmem:[%s192 + $0x30] sm:$0xf]
      %v216 = vld [vmem:[%s192 + $0x34] sm:$0xf]
      %v217 = vld [vmem:[%s192 + $0x38] sm:$0xf]
      %v218 = vld [vmem:[%s192 + $0x3c] sm:$0xf]
      %v219 = vld [vmem:[%s192 + $0x40] sm:$0xf]
      %v220 = vld [vmem:[%s192 + $0x44] sm:$0xf]
      %v221 = vld [vmem:[%s192 + $0x48] sm:$0xf]
      %v222 = vld [vmem:[%s192 + $0x4c] sm:$0xf]
      %v223 = vld [vmem:[%s192 + $0x50] sm:$0xf]
      %v224 = vld [vmem:[%s192 + $0x54] sm:$0xf]
      %v225 = vld [vmem:[%s192 + $0x58] sm:$0xf]
      %v226 = vld [vmem:[%s192 + $0x5c] sm:$0xf]
      %v227 = vld [vmem:[%s192 + $0x60] sm:$0x3]
      %v253 = vunpack.c.l.b16 %v203
      %v254 = vunpack.c.l.b16 %v204
      %v255 = vunpack.c.l.b16 %v205
      %v256 = vunpack.c.l.b16 %v206
      %v257 = vunpack.c.l.b16 %v207
      %v258 = vunpack.c.l.b16 %v208
      %v259 = vunpack.c.l.b16 %v209
      %v260 = vunpack.c.l.b16 %v210
      %v261 = vunpack.c.l.b16 %v211
      %v262 = vunpack.c.l.b16 %v212
      %v263 = vunpack.c.l.b16 %v213
      %v264 = vunpack.c.l.b16 %v214
      %v265 = vunpack.c.l.b16 %v215
      %v266 = vunpack.c.l.b16 %v216
      %v267 = vunpack.c.l.b16 %v217
      %v268 = vunpack.c.l.b16 %v218
      %v269 = vunpack.c.l.b16 %v219
      %v270 = vunpack.c.l.b16 %v220
      %v271 = vunpack.c.l.b16 %v221
      %v272 = vunpack.c.l.b16 %v222
      %v273 = vunpack.c.l.b16 %v223
      %v274 = vunpack.c.l.b16 %v224
      %v275 = vunpack.c.l.b16 %v225
      %v276 = vunpack.c.l.b16 %v226
      %v277 = vunpack.c.l.b16 %v227
      %v278 = vpack.c.b16 %v254, %v253
      %v279 = vpack.c.b16 %v256, %v255
      %v280 = vpack.c.b16 %v258, %v257
      %v281 = vpack.c.b16 %v260, %v259
      %v282 = vpack.c.b16 %v262, %v261
      %v283 = vpack.c.b16 %v264, %v263
      %v284 = vpack.c.b16 %v266, %v265
      %v285 = vpack.c.b16 %v268, %v267
      %v286 = vpack.c.b16 %v270, %v269
      %v287 = vpack.c.b16 %v272, %v271
      %v288 = vpack.c.b16 %v274, %v273
      %v289 = vpack.c.b16 %v276, %v275
      %v290 = vpack.c.b16 %v277, %v277
      %v293 = vunpack.c.l.b16 %v199
      %v294 = vunpack.c.l.b16 %v200
      %v295 = vpack.c.b16 %v294, %v293
      %vm296 = vcmask 72704
      %v298 = vsel %vm296, %v278, 0
      %v301 = vsel %vm296, %v279, 0
      %v304 = vsel %vm296, %v280, 0
      %v307 = vsel %vm296, %v281, 0
      %v310 = vsel %vm296, %v282, 0
      %v313 = vsel %vm296, %v283, 0
      %v316 = vsel %vm296, %v284, 0
      %v319 = vsel %vm296, %v285, 0
      %v322 = vsel %vm296, %v286, 0
      %v325 = vsel %vm296, %v287, 0
      %v328 = vsel %vm296, %v288, 0
      %v331 = vsel %vm296, %v289, 0
      %v334 = vsel %vm296, %v290, 0
      %vm336 = vcmask 1043456
      %vm337 = vcmask 1044480
      %v338 = vsel %vm336, 4294967295, 65535
      %v339 = vsel %vm337, %v338, 0
      %v341 = vand.u32 %v295, %v339
      %343 = vmatprep.subr.bf16.mxu0 0
      %344 = vmatpush1.bf16.msra.mxu0 0
      %345 = vmatprep.subr.bf16.mxu0 0
      %346 = vmatpush1.bf16.msra.mxu0 0
      %347 = vmatprep.subr.bf16.mxu0 0
      %348 = vmatpush1.bf16.msra.mxu0 0
      %349 = vmatprep.subr.bf16.mxu0 0
      %350 = vmatpush1.bf16.msra.mxu0 0
      %351 = vmatprep.subr.bf16.mxu0 0
      %352 = vmatpush1.bf16.msra.mxu0 0
      %353 = vmatprep.subr.bf16.mxu0 0
      %354 = vmatpush1.bf16.msra.mxu0 0
      %355 = vmatprep.subr.bf16.mxu0 0
      %356 = vmatpush1.bf16.msra.mxu0 0
      %357 = vmatprep.subr.bf16.mxu0 0
      %358 = vmatpush1.bf16.msra.mxu0 %v341
      %359 = vmatprep.subr.bf16.mxu0 0
      %360 = vmatpush2.bf16.msra.mxu0 0
      %361 = vmatprep.subr.bf16.mxu0 0
      %362 = vmatpush2.bf16.msra.mxu0 0
      %363 = vmatprep.subr.bf16.mxu0 0
      %364 = vmatpush2.bf16.msra.mxu0 0
      %365 = vmatprep.subr.bf16.mxu0 0
      %366 = vmatpush2.bf16.msra.mxu0 0
      %367 = vmatprep.subr.bf16.mxu0 0
      %368 = vmatpush2.bf16.msra.mxu0 0
      %369 = vmatprep.subr.bf16.mxu0 0
      %370 = vmatpush2.bf16.msra.mxu0 0
      %371 = vmatprep.subr.bf16.mxu0 0
      %372 = vmatpush2.bf16.msra.mxu0 0
      %373 = vmatprep.subr.bf16.mxu0 0
      %374 = vmatpush2.bf16.msra.mxu0 0
      %375 = vmatprep.mubr.bf16.mxu0 0
      %376 = vmatmul.mubr.bf16.gmra.mxu0 %v298
      %v377 = vpop.f32.mrf.mxu0
      %v378 = vadd.f32 0.0, %v377
      %v379 = vpop.f32.mrf.mxu0
      %v380 = vpop.f32.mrf.mxu0
      %v381 = vadd.f32 0.0, %v380
      %v382 = vpop.f32.mrf.mxu0
      %383 = vmatprep.mubr.bf16.mxu0 0
      %384 = vmatmul.mubr.bf16.gmra.mxu0 %v301
      %v385 = vpop.f32.mrf.mxu0
      %v386 = vadd.f32 0.0, %v385
      %v387 = vpop.f32.mrf.mxu0
      %v388 = vpop.f32.mrf.mxu0
      %v389 = vadd.f32 0.0, %v388
      %v390 = vpop.f32.mrf.mxu0
      %391 = vmatprep.mubr.bf16.mxu0 0
      %392 = vmatmul.mubr.bf16.gmra.mxu0 %v304
      %v393 = vpop.f32.mrf.mxu0
      %v394 = vadd.f32 0.0, %v393
      %v395 = vpop.f32.mrf.mxu0
      %v396 = vpop.f32.mrf.mxu0
      %v397 = vadd.f32 0.0, %v396
      %v398 = vpop.f32.mrf.mxu0
      %399 = vmatprep.mubr.bf16.mxu0 0
      %400 = vmatmul.mubr.bf16.gmra.mxu0 %v307
      %v401 = vpop.f32.mrf.mxu0
      %v402 = vadd.f32 0.0, %v401
      %v403 = vpop.f32.mrf.mxu0
      %v404 = vpop.f32.mrf.mxu0
      %v405 = vadd.f32 0.0, %v404
      %v406 = vpop.f32.mrf.mxu0
      %407 = vmatprep.mubr.bf16.mxu0 0
      %408 = vmatmul.mubr.bf16.gmra.mxu0 %v310
      %v409 = vpop.f32.mrf.mxu0
      %v410 = vadd.f32 0.0, %v409
      %v411 = vpop.f32.mrf.mxu0
      %v412 = vpop.f32.mrf.mxu0
      %v413 = vadd.f32 0.0, %v412
      %v414 = vpop.f32.mrf.mxu0
      %415 = vmatprep.mubr.bf16.mxu0 0
      %416 = vmatmul.mubr.bf16.gmra.mxu0 %v313
      %v417 = vpop.f32.mrf.mxu0
      %v418 = vadd.f32 0.0, %v417
      %v419 = vpop.f32.mrf.mxu0
      %v420 = vpop.f32.mrf.mxu0
      %v421 = vadd.f32 0.0, %v420
      %v422 = vpop.f32.mrf.mxu0
      %423 = vmatprep.mubr.bf16.mxu0 0
      %424 = vmatmul.mubr.bf16.gmra.mxu0 %v316
      %v425 = vpop.f32.mrf.mxu0
      %v426 = vadd.f32 0.0, %v425
      %v427 = vpop.f32.mrf.mxu0
      %v428 = vpop.f32.mrf.mxu0
      %v429 = vadd.f32 0.0, %v428
      %v430 = vpop.f32.mrf.mxu0
      %431 = vmatprep.mubr.bf16.mxu0 0
      %432 = vmatmul.mubr.bf16.gmra.mxu0 %v319
      %v433 = vpop.f32.mrf.mxu0
      %v434 = vadd.f32 0.0, %v433
      %v435 = vpop.f32.mrf.mxu0
      %v436 = vpop.f32.mrf.mxu0
      %v437 = vadd.f32 0.0, %v436
      %v438 = vpop.f32.mrf.mxu0
      %439 = vmatprep.mubr.bf16.mxu0 0
      %440 = vmatmul.mubr.bf16.gmra.mxu0 %v322
      %v441 = vpop.f32.mrf.mxu0
      %v442 = vadd.f32 0.0, %v441
      %v443 = vpop.f32.mrf.mxu0
      %v444 = vpop.f32.mrf.mxu0
      %v445 = vadd.f32 0.0, %v444
      %v446 = vpop.f32.mrf.mxu0
      %447 = vmatprep.mubr.bf16.mxu0 0
      %448 = vmatmul.mubr.bf16.gmra.mxu0 %v325
      %v449 = vpop.f32.mrf.mxu0
      %v450 = vadd.f32 0.0, %v449
      %v451 = vpop.f32.mrf.mxu0
      %v452 = vpop.f32.mrf.mxu0
      %v453 = vadd.f32 0.0, %v452
      %v454 = vpop.f32.mrf.mxu0
      %455 = vmatprep.mubr.bf16.mxu0 0
      %456 = vmatmul.mubr.bf16.gmra.mxu0 %v328
      %v457 = vpop.f32.mrf.mxu0
      %v458 = vadd.f32 0.0, %v457
      %v459 = vpop.f32.mrf.mxu0
      %v460 = vpop.f32.mrf.mxu0
      %v461 = vadd.f32 0.0, %v460
      %v462 = vpop.f32.mrf.mxu0
      %463 = vmatprep.mubr.bf16.mxu0 0
      %464 = vmatmul.mubr.bf16.gmra.mxu0 %v331
      %v465 = vpop.f32.mrf.mxu0
      %v466 = vadd.f32 0.0, %v465
      %v467 = vpop.f32.mrf.mxu0
      %v468 = vpop.f32.mrf.mxu0
      %v469 = vadd.f32 0.0, %v468
      %v470 = vpop.f32.mrf.mxu0
      %471 = vmatprep.mubr.bf16.mxu0 0
      %472 = vmatmul.mubr.bf16.gmra.mxu0 %v334
      %v473 = vpop.f32.mrf.mxu0
      %v474 = vadd.f32 0.0, %v473
      %v475 = vpop.f32.mrf.mxu0
      %v476 = vpop.f32.mrf.mxu0
      %v477 = vpop.f32.mrf.mxu0
      %478 = vdwg.mxu0
      %v480 = vlaneseq
      %v481 = vshrl.u32 %v480, 7
      %v482 = vsub.s32 0, %v481
      %v483 = vrot.slane %v201, %v482
      %v485 = vmul.f32 %v378, %v483
      %v486 = vmul.f32 %v381, %v483
      %v487 = vmul.f32 %v386, %v483
      %v488 = vmul.f32 %v389, %v483
      %v489 = vmul.f32 %v394, %v483
      %v490 = vmul.f32 %v397, %v483
      %v491 = vmul.f32 %v402, %v483
      %v492 = vmul.f32 %v405, %v483
      %v493 = vmul.f32 %v410, %v483
      %v494 = vmul.f32 %v413, %v483
      %v495 = vmul.f32 %v418, %v483
      %v496 = vmul.f32 %v421, %v483
      %v497 = vmul.f32 %v426, %v483
      %v498 = vmul.f32 %v429, %v483
      %v499 = vmul.f32 %v434, %v483
      %v500 = vmul.f32 %v437, %v483
      %v501 = vmul.f32 %v442, %v483
      %v502 = vmul.f32 %v445, %v483
      %v503 = vmul.f32 %v450, %v483
      %v504 = vmul.f32 %v453, %v483
      %v505 = vmul.f32 %v458, %v483
      %v506 = vmul.f32 %v461, %v483
      %v507 = vmul.f32 %v466, %v483
      %v508 = vmul.f32 %v469, %v483
      %v509 = vmul.f32 %v474, %v483
      %v511 = vlaneseq
      %v512 = vshrl.u32 %v511, 7
      %v513 = vsub.s32 0, %v512
      %v514 = vrot.slane %v202, %v513
      %v516 = vadd.f32 %v485, %v514
      %v517 = vadd.f32 %v486, %v514
      %v518 = vadd.f32 %v487, %v514
      %v519 = vadd.f32 %v488, %v514
      %v520 = vadd.f32 %v489, %v514
      %v521 = vadd.f32 %v490, %v514
      %v522 = vadd.f32 %v491, %v514
      %v523 = vadd.f32 %v492, %v514
      %v524 = vadd.f32 %v493, %v514
      %v525 = vadd.f32 %v494, %v514
      %v526 = vadd.f32 %v495, %v514
      %v527 = vadd.f32 %v496, %v514
      %v528 = vadd.f32 %v497, %v514
      %v529 = vadd.f32 %v498, %v514
      %v530 = vadd.f32 %v499, %v514
      %v531 = vadd.f32 %v500, %v514
      %v532 = vadd.f32 %v501, %v514
      %v533 = vadd.f32 %v502, %v514
      %v534 = vadd.f32 %v503, %v514
      %v535 = vadd.f32 %v504, %v514
      %v536 = vadd.f32 %v505, %v514
      %v537 = vadd.f32 %v506, %v514
      %v538 = vadd.f32 %v507, %v514
      %v539 = vadd.f32 %v508, %v514
      %v540 = vadd.f32 %v509, %v514
      %s541 = scalar_lea.vmem %s192, 100
      %v542 = vld [vmem:[%s541] sm:$0xf]
      %v543 = vld [vmem:[%s541 + $0x4] sm:$0xf]
      %v544 = vld [vmem:[%s541 + $0x8] sm:$0xf]
      %v545 = vld [vmem:[%s541 + $0xc] sm:$0xf]
      %v546 = vld [vmem:[%s541 + $0x10] sm:$0xf]
      %v547 = vld [vmem:[%s541 + $0x14] sm:$0xf]
      %v548 = vld [vmem:[%s541 + $0x18] sm:$0xf]
      %v549 = vld [vmem:[%s541 + $0x1c] sm:$0xf]
      %v550 = vld [vmem:[%s541 + $0x20] sm:$0xf]
      %v551 = vld [vmem:[%s541 + $0x24] sm:$0xf]
      %v552 = vld [vmem:[%s541 + $0x28] sm:$0xf]
      %v553 = vld [vmem:[%s541 + $0x2c] sm:$0xf]
      %v554 = vld [vmem:[%s541 + $0x30] sm:$0xf]
      %v555 = vld [vmem:[%s541 + $0x34] sm:$0xf]
      %v556 = vld [vmem:[%s541 + $0x38] sm:$0xf]
      %v557 = vld [vmem:[%s541 + $0x3c] sm:$0xf]
      %v558 = vld [vmem:[%s541 + $0x40] sm:$0xf]
      %v559 = vld [vmem:[%s541 + $0x44] sm:$0xf]
      %v560 = vld [vmem:[%s541 + $0x48] sm:$0xf]
      %v561 = vld [vmem:[%s541 + $0x4c] sm:$0xf]
      %v562 = vld [vmem:[%s541 + $0x50] sm:$0xf]
      %v563 = vld [vmem:[%s541 + $0x54] sm:$0xf]
      %v564 = vld [vmem:[%s541 + $0x58] sm:$0xf]
      %v565 = vld [vmem:[%s541 + $0x5c] sm:$0xf]
      %v566 = vld [vmem:[%s541 + $0x60] sm:$0x3]
      %v592 = vunpack.c.l.b16 %v542
      %v593 = vunpack.c.l.b16 %v543
      %v594 = vunpack.c.l.b16 %v544
      %v595 = vunpack.c.l.b16 %v545
      %v596 = vunpack.c.l.b16 %v546
      %v597 = vunpack.c.l.b16 %v547
      %v598 = vunpack.c.l.b16 %v548
      %v599 = vunpack.c.l.b16 %v549
      %v600 = vunpack.c.l.b16 %v550
      %v601 = vunpack.c.l.b16 %v551
      %v602 = vunpack.c.l.b16 %v552
      %v603 = vunpack.c.l.b16 %v553
      %v604 = vunpack.c.l.b16 %v554
      %v605 = vunpack.c.l.b16 %v555
      %v606 = vunpack.c.l.b16 %v556
      %v607 = vunpack.c.l.b16 %v557
      %v608 = vunpack.c.l.b16 %v558
      %v609 = vunpack.c.l.b16 %v559
      %v610 = vunpack.c.l.b16 %v560
      %v611 = vunpack.c.l.b16 %v561
      %v612 = vunpack.c.l.b16 %v562
      %v613 = vunpack.c.l.b16 %v563
      %v614 = vunpack.c.l.b16 %v564
      %v615 = vunpack.c.l.b16 %v565
      %v616 = vunpack.c.l.b16 %v566
      %v617 = vpack.c.b16 %v593, %v592
      %v618 = vpack.c.b16 %v595, %v594
      %v619 = vpack.c.b16 %v597, %v596
      %v620 = vpack.c.b16 %v599, %v598
      %v621 = vpack.c.b16 %v601, %v600
      %v622 = vpack.c.b16 %v603, %v602
      %v623 = vpack.c.b16 %v605, %v604
      %v624 = vpack.c.b16 %v607, %v606
      %v625 = vpack.c.b16 %v609, %v608
      %v626 = vpack.c.b16 %v611, %v610
      %v627 = vpack.c.b16 %v613, %v612
      %v628 = vpack.c.b16 %v615, %v614
      %v629 = vpack.c.b16 %v616, %v616
      %v631 = vsel %vm296, %v617, 0
      %v634 = vsel %vm296, %v618, 0
      %v637 = vsel %vm296, %v619, 0
      %v640 = vsel %vm296, %v620, 0
      %v643 = vsel %vm296, %v621, 0
      %v646 = vsel %vm296, %v622, 0
      %v649 = vsel %vm296, %v623, 0
      %v652 = vsel %vm296, %v624, 0
      %v655 = vsel %vm296, %v625, 0
      %v658 = vsel %vm296, %v626, 0
      %v661 = vsel %vm296, %v627, 0
      %v664 = vsel %vm296, %v628, 0
      %v667 = vsel %vm296, %v629, 0
      %669 = vmatprep.subr.bf16.mxu0 0
      %670 = vmatpush1.bf16.msra.mxu0 0
      %671 = vmatprep.subr.bf16.mxu0 0
      %672 = vmatpush1.bf16.msra.mxu0 0
      %673 = vmatprep.subr.bf16.mxu0 0
      %674 = vmatpush1.bf16.msra.mxu0 0
      %675 = vmatprep.subr.bf16.mxu0 0
      %676 = vmatpush1.bf16.msra.mxu0 0
      %677 = vmatprep.subr.bf16.mxu0 0
      %678 = vmatpush1.bf16.msra.mxu0 0
      %679 = vmatprep.subr.bf16.mxu0 0
      %680 = vmatpush1.bf16.msra.mxu0 0
      %681 = vmatprep.subr.bf16.mxu0 0
      %682 = vmatpush1.bf16.msra.mxu0 0
      %683 = vmatprep.subr.bf16.mxu0 0
      %684 = vmatpush1.bf16.msra.mxu0 %v341
      %685 = vmatprep.subr.bf16.mxu0 0
      %686 = vmatpush2.bf16.msra.mxu0 0
      %687 = vmatprep.subr.bf16.mxu0 0
      %688 = vmatpush2.bf16.msra.mxu0 0
      %689 = vmatprep.subr.bf16.mxu0 0
      %690 = vmatpush2.bf16.msra.mxu0 0
      %691 = vmatprep.subr.bf16.mxu0 0
      %692 = vmatpush2.bf16.msra.mxu0 0
      %693 = vmatprep.subr.bf16.mxu0 0
      %694 = vmatpush2.bf16.msra.mxu0 0
      %695 = vmatprep.subr.bf16.mxu0 0
      %696 = vmatpush2.bf16.msra.mxu0 0
      %697 = vmatprep.subr.bf16.mxu0 0
      %698 = vmatpush2.bf16.msra.mxu0 0
      %699 = vmatprep.subr.bf16.mxu0 0
      %700 = vmatpush2.bf16.msra.mxu0 0
      %701 = vmatprep.mubr.bf16.mxu0 0
      %702 = vmatmul.mubr.bf16.gmra.mxu0 %v631
      %v703 = vpop.f32.mrf.mxu0
      %v704 = vadd.f32 0.0, %v703
      %v705 = vpop.f32.mrf.mxu0
      %v706 = vpop.f32.mrf.mxu0
      %v707 = vadd.f32 0.0, %v706
      %v708 = vpop.f32.mrf.mxu0
      %709 = vmatprep.mubr.bf16.mxu0 0
      %710 = vmatmul.mubr.bf16.gmra.mxu0 %v634
      %v711 = vpop.f32.mrf.mxu0
      %v712 = vadd.f32 0.0, %v711
      %v713 = vpop.f32.mrf.mxu0
      %v714 = vpop.f32.mrf.mxu0
      %v715 = vadd.f32 0.0, %v714
      %v716 = vpop.f32.mrf.mxu0
      %717 = vmatprep.mubr.bf16.mxu0 0
      %718 = vmatmul.mubr.bf16.gmra.mxu0 %v637
      %v719 = vpop.f32.mrf.mxu0
      %v720 = vadd.f32 0.0, %v719
      %v721 = vpop.f32.mrf.mxu0
      %v722 = vpop.f32.mrf.mxu0
      %v723 = vadd.f32 0.0, %v722
      %v724 = vpop.f32.mrf.mxu0
      %725 = vmatprep.mubr.bf16.mxu0 0
      %726 = vmatmul.mubr.bf16.gmra.mxu0 %v640
      %v727 = vpop.f32.mrf.mxu0
      %v728 = vadd.f32 0.0, %v727
      %v729 = vpop.f32.mrf.mxu0
      %v730 = vpop.f32.mrf.mxu0
      %v731 = vadd.f32 0.0, %v730
      %v732 = vpop.f32.mrf.mxu0
      %733 = vmatprep.mubr.bf16.mxu0 0
      %734 = vmatmul.mubr.bf16.gmra.mxu0 %v643
      %v735 = vpop.f32.mrf.mxu0
      %v736 = vadd.f32 0.0, %v735
      %v737 = vpop.f32.mrf.mxu0
      %v738 = vpop.f32.mrf.mxu0
      %v739 = vadd.f32 0.0, %v738
      %v740 = vpop.f32.mrf.mxu0
      %741 = vmatprep.mubr.bf16.mxu0 0
      %742 = vmatmul.mubr.bf16.gmra.mxu0 %v646
      %v743 = vpop.f32.mrf.mxu0
      %v744 = vadd.f32 0.0, %v743
      %v745 = vpop.f32.mrf.mxu0
      %v746 = vpop.f32.mrf.mxu0
      %v747 = vadd.f32 0.0, %v746
      %v748 = vpop.f32.mrf.mxu0
      %749 = vmatprep.mubr.bf16.mxu0 0
      %750 = vmatmul.mubr.bf16.gmra.mxu0 %v649
      %v751 = vpop.f32.mrf.mxu0
      %v752 = vadd.f32 0.0, %v751
      %v753 = vpop.f32.mrf.mxu0
      %v754 = vpop.f32.mrf.mxu0
      %v755 = vadd.f32 0.0, %v754
      %v756 = vpop.f32.mrf.mxu0
      %757 = vmatprep.mubr.bf16.mxu0 0
      %758 = vmatmul.mubr.bf16.gmra.mxu0 %v652
      %v759 = vpop.f32.mrf.mxu0
      %v760 = vadd.f32 0.0, %v759
      %v761 = vpop.f32.mrf.mxu0
      %v762 = vpop.f32.mrf.mxu0
      %v763 = vadd.f32 0.0, %v762
      %v764 = vpop.f32.mrf.mxu0
      %765 = vmatprep.mubr.bf16.mxu0 0
      %766 = vmatmul.mubr.bf16.gmra.mxu0 %v655
      %v767 = vpop.f32.mrf.mxu0
      %v768 = vadd.f32 0.0, %v767
      %v769 = vpop.f32.mrf.mxu0
      %v770 = vpop.f32.mrf.mxu0
      %v771 = vadd.f32 0.0, %v770
      %v772 = vpop.f32.mrf.mxu0
      %773 = vmatprep.mubr.bf16.mxu0 0
      %774 = vmatmul.mubr.bf16.gmra.mxu0 %v658
      %v775 = vpop.f32.mrf.mxu0
      %v776 = vadd.f32 0.0, %v775
      %v777 = vpop.f32.mrf.mxu0
      %v778 = vpop.f32.mrf.mxu0
      %v779 = vadd.f32 0.0, %v778
      %v780 = vpop.f32.mrf.mxu0
      %781 = vmatprep.mubr.bf16.mxu0 0
      %782 = vmatmul.mubr.bf16.gmra.mxu0 %v661
      %v783 = vpop.f32.mrf.mxu0
      %v784 = vadd.f32 0.0, %v783
      %v785 = vpop.f32.mrf.mxu0
      %v786 = vpop.f32.mrf.mxu0
      %v787 = vadd.f32 0.0, %v786
      %v788 = vpop.f32.mrf.mxu0
      %789 = vmatprep.mubr.bf16.mxu0 0
      %790 = vmatmul.mubr.bf16.gmra.mxu0 %v664
      %v791 = vpop.f32.mrf.mxu0
      %v792 = vadd.f32 0.0, %v791
      %v793 = vpop.f32.mrf.mxu0
      %v794 = vpop.f32.mrf.mxu0
      %v795 = vadd.f32 0.0, %v794
      %v796 = vpop.f32.mrf.mxu0
      %797 = vmatprep.mubr.bf16.mxu0 0
      %798 = vmatmul.mubr.bf16.gmra.mxu0 %v667
      %v799 = vpop.f32.mrf.mxu0
      %v800 = vadd.f32 0.0, %v799
      %v801 = vpop.f32.mrf.mxu0
      %v802 = vpop.f32.mrf.mxu0
      %v803 = vpop.f32.mrf.mxu0
      %804 = vdwg.mxu0
      %v805 = vmul.f32 %v704, %v483
      %v806 = vmul.f32 %v707, %v483
      %v807 = vmul.f32 %v712, %v483
      %v808 = vmul.f32 %v715, %v483
      %v809 = vmul.f32 %v720, %v483
      %v810 = vmul.f32 %v723, %v483
      %v811 = vmul.f32 %v728, %v483
      %v812 = vmul.f32 %v731, %v483
      %v813 = vmul.f32 %v736, %v483
      %v814 = vmul.f32 %v739, %v483
      %v815 = vmul.f32 %v744, %v483
      %v816 = vmul.f32 %v747, %v483
      %v817 = vmul.f32 %v752, %v483
      %v818 = vmul.f32 %v755, %v483
      %v819 = vmul.f32 %v760, %v483
      %v820 = vmul.f32 %v763, %v483
      %v821 = vmul.f32 %v768, %v483
      %v822 = vmul.f32 %v771, %v483
      %v823 = vmul.f32 %v776, %v483
      %v824 = vmul.f32 %v779, %v483
      %v825 = vmul.f32 %v784, %v483
      %v826 = vmul.f32 %v787, %v483
      %v827 = vmul.f32 %v792, %v483
      %v828 = vmul.f32 %v795, %v483
      %v829 = vmul.f32 %v800, %v483
      %v830 = vadd.f32 %v805, %v514
      %v831 = vadd.f32 %v806, %v514
      %v832 = vadd.f32 %v807, %v514
      %v833 = vadd.f32 %v808, %v514
      %v834 = vadd.f32 %v809, %v514
      %v835 = vadd.f32 %v810, %v514
      %v836 = vadd.f32 %v811, %v514
      %v837 = vadd.f32 %v812, %v514
      %v838 = vadd.f32 %v813, %v514
      %v839 = vadd.f32 %v814, %v514
      %v840 = vadd.f32 %v815, %v514
      %v841 = vadd.f32 %v816, %v514
      %v842 = vadd.f32 %v817, %v514
      %v843 = vadd.f32 %v818, %v514
      %v844 = vadd.f32 %v819, %v514
      %v845 = vadd.f32 %v820, %v514
      %v846 = vadd.f32 %v821, %v514
      %v847 = vadd.f32 %v822, %v514
      %v848 = vadd.f32 %v823, %v514
      %v849 = vadd.f32 %v824, %v514
      %v850 = vadd.f32 %v825, %v514
      %v851 = vadd.f32 %v826, %v514
      %v852 = vadd.f32 %v827, %v514
      %v853 = vadd.f32 %v828, %v514
      %v854 = vadd.f32 %v829, %v514
      %v855 = vmax.f32 %v516, %v830
      %v856 = vmax.f32 %v517, %v831
      %v857 = vmax.f32 %v518, %v832
      %v858 = vmax.f32 %v519, %v833
      %v859 = vmax.f32 %v520, %v834
      %v860 = vmax.f32 %v521, %v835
      %v861 = vmax.f32 %v522, %v836
      %v862 = vmax.f32 %v523, %v837
      %v863 = vmax.f32 %v524, %v838
      %v864 = vmax.f32 %v525, %v839
      %v865 = vmax.f32 %v526, %v840
      %v866 = vmax.f32 %v527, %v841
      %v867 = vmax.f32 %v528, %v842
      %v868 = vmax.f32 %v529, %v843
      %v869 = vmax.f32 %v530, %v844
      %v870 = vmax.f32 %v531, %v845
      %v871 = vmax.f32 %v532, %v846
      %v872 = vmax.f32 %v533, %v847
      %v873 = vmax.f32 %v534, %v848
      %v874 = vmax.f32 %v535, %v849
      %v875 = vmax.f32 %v536, %v850
      %v876 = vmax.f32 %v537, %v851
      %v877 = vmax.f32 %v538, %v852
      %v878 = vmax.f32 %v539, %v853
      %v879 = vmax.f32 %v540, %v854
      %s880 = scalar_lea.vmem %s192, 200
      %v881 = vld [vmem:[%s880] sm:$0xf]
      %v882 = vld [vmem:[%s880 + $0x4] sm:$0xf]
      %v883 = vld [vmem:[%s880 + $0x8] sm:$0xf]
      %v884 = vld [vmem:[%s880 + $0xc] sm:$0xf]
      %v885 = vld [vmem:[%s880 + $0x10] sm:$0xf]
      %v886 = vld [vmem:[%s880 + $0x14] sm:$0xf]
      %v887 = vld [vmem:[%s880 + $0x18] sm:$0xf]
      %v888 = vld [vmem:[%s880 + $0x1c] sm:$0xf]
      %v889 = vld [vmem:[%s880 + $0x20] sm:$0xf]
      %v890 = vld [vmem:[%s880 + $0x24] sm:$0xf]
      %v891 = vld [vmem:[%s880 + $0x28] sm:$0xf]
      %v892 = vld [vmem:[%s880 + $0x2c] sm:$0xf]
      %v893 = vld [vmem:[%s880 + $0x30] sm:$0xf]
      %v894 = vld [vmem:[%s880 + $0x34] sm:$0xf]
      %v895 = vld [vmem:[%s880 + $0x38] sm:$0xf]
      %v896 = vld [vmem:[%s880 + $0x3c] sm:$0xf]
      %v897 = vld [vmem:[%s880 + $0x40] sm:$0xf]
      %v898 = vld [vmem:[%s880 + $0x44] sm:$0xf]
      %v899 = vld [vmem:[%s880 + $0x48] sm:$0xf]
      %v900 = vld [vmem:[%s880 + $0x4c] sm:$0xf]
      %v901 = vld [vmem:[%s880 + $0x50] sm:$0xf]
      %v902 = vld [vmem:[%s880 + $0x54] sm:$0xf]
      %v903 = vld [vmem:[%s880 + $0x58] sm:$0xf]
      %v904 = vld [vmem:[%s880 + $0x5c] sm:$0xf]
      %v905 = vld [vmem:[%s880 + $0x60] sm:$0x3]
      %v931 = vunpack.c.l.b16 %v881
      %v932 = vunpack.c.l.b16 %v882
      %v933 = vunpack.c.l.b16 %v883
      %v934 = vunpack.c.l.b16 %v884
      %v935 = vunpack.c.l.b16 %v885
      %v936 = vunpack.c.l.b16 %v886
      %v937 = vunpack.c.l.b16 %v887
      %v938 = vunpack.c.l.b16 %v888
      %v939 = vunpack.c.l.b16 %v889
      %v940 = vunpack.c.l.b16 %v890
      %v941 = vunpack.c.l.b16 %v891
      %v942 = vunpack.c.l.b16 %v892
      %v943 = vunpack.c.l.b16 %v893
      %v944 = vunpack.c.l.b16 %v894
      %v945 = vunpack.c.l.b16 %v895
      %v946 = vunpack.c.l.b16 %v896
      %v947 = vunpack.c.l.b16 %v897
      %v948 = vunpack.c.l.b16 %v898
      %v949 = vunpack.c.l.b16 %v899
      %v950 = vunpack.c.l.b16 %v900
      %v951 = vunpack.c.l.b16 %v901
      %v952 = vunpack.c.l.b16 %v902
      %v953 = vunpack.c.l.b16 %v903
      %v954 = vunpack.c.l.b16 %v904
      %v955 = vunpack.c.l.b16 %v905
      %v956 = vpack.c.b16 %v932, %v931
      %v957 = vpack.c.b16 %v934, %v933
      %v958 = vpack.c.b16 %v936, %v935
      %v959 = vpack.c.b16 %v938, %v937
      %v960 = vpack.c.b16 %v940, %v939
      %v961 = vpack.c.b16 %v942, %v941
      %v962 = vpack.c.b16 %v944, %v943
      %v963 = vpack.c.b16 %v946, %v945
      %v964 = vpack.c.b16 %v948, %v947
      %v965 = vpack.c.b16 %v950, %v949
      %v966 = vpack.c.b16 %v952, %v951
      %v967 = vpack.c.b16 %v954, %v953
      %v968 = vpack.c.b16 %v955, %v955
      %v970 = vsel %vm296, %v956, 0
      %v973 = vsel %vm296, %v957, 0
      %v976 = vsel %vm296, %v958, 0
      %v979 = vsel %vm296, %v959, 0
      %v982 = vsel %vm296, %v960, 0
      %v985 = vsel %vm296, %v961, 0
      %v988 = vsel %vm296, %v962, 0
      %v991 = vsel %vm296, %v963, 0
      %v994 = vsel %vm296, %v964, 0
      %v997 = vsel %vm296, %v965, 0
      %v1000 = vsel %vm296, %v966, 0
      %v1003 = vsel %vm296, %v967, 0
      %v1006 = vsel %vm296, %v968, 0
      %1008 = vmatprep.subr.bf16.mxu0 0
      %1009 = vmatpush1.bf16.msra.mxu0 0
      %1010 = vmatprep.subr.bf16.mxu0 0
      %1011 = vmatpush1.bf16.msra.mxu0 0
      %1012 = vmatprep.subr.bf16.mxu0 0
      %1013 = vmatpush1.bf16.msra.mxu0 0
      %1014 = vmatprep.subr.bf16.mxu0 0
      %1015 = vmatpush1.bf16.msra.mxu0 0
      %1016 = vmatprep.subr.bf16.mxu0 0
      %1017 = vmatpush1.bf16.msra.mxu0 0
      %1018 = vmatprep.subr.bf16.mxu0 0
      %1019 = vmatpush1.bf16.msra.mxu0 0
      %1020 = vmatprep.subr.bf16.mxu0 0
      %1021 = vmatpush1.bf16.msra.mxu0 0
      %1022 = vmatprep.subr.bf16.mxu0 0
      %1023 = vmatpush1.bf16.msra.mxu0 %v341
      %1024 = vmatprep.subr.bf16.mxu0 0
      %1025 = vmatpush2.bf16.msra.mxu0 0
      %1026 = vmatprep.subr.bf16.mxu0 0
      %1027 = vmatpush2.bf16.msra.mxu0 0
      %1028 = vmatprep.subr.bf16.mxu0 0
      %1029 = vmatpush2.bf16.msra.mxu0 0
      %1030 = vmatprep.subr.bf16.mxu0 0
      %1031 = vmatpush2.bf16.msra.mxu0 0
      %1032 = vmatprep.subr.bf16.mxu0 0
      %1033 = vmatpush2.bf16.msra.mxu0 0
      %1034 = vmatprep.subr.bf16.mxu0 0
      %1035 = vmatpush2.bf16.msra.mxu0 0
      %1036 = vmatprep.subr.bf16.mxu0 0
      %1037 = vmatpush2.bf16.msra.mxu0 0
      %1038 = vmatprep.subr.bf16.mxu0 0
      %1039 = vmatpush2.bf16.msra.mxu0 0
      %1040 = vmatprep.mubr.bf16.mxu0 0
      %1041 = vmatmul.mubr.bf16.gmra.mxu0 %v970
      %v1042 = vpop.f32.mrf.mxu0
      %v1043 = vadd.f32 0.0, %v1042
      %v1044 = vpop.f32.mrf.mxu0
      %v1045 = vpop.f32.mrf.mxu0
      %v1046 = vadd.f32 0.0, %v1045
      %v1047 = vpop.f32.mrf.mxu0
      %1048 = vmatprep.mubr.bf16.mxu0 0
      %1049 = vmatmul.mubr.bf16.gmra.mxu0 %v973
      %v1050 = vpop.f32.mrf.mxu0
      %v1051 = vadd.f32 0.0, %v1050
      %v1052 = vpop.f32.mrf.mxu0
      %v1053 = vpop.f32.mrf.mxu0
      %v1054 = vadd.f32 0.0, %v1053
      %v1055 = vpop.f32.mrf.mxu0
      %1056 = vmatprep.mubr.bf16.mxu0 0
      %1057 = vmatmul.mubr.bf16.gmra.mxu0 %v976
      %v1058 = vpop.f32.mrf.mxu0
      %v1059 = vadd.f32 0.0, %v1058
      %v1060 = vpop.f32.mrf.mxu0
      %v1061 = vpop.f32.mrf.mxu0
      %v1062 = vadd.f32 0.0, %v1061
      %v1063 = vpop.f32.mrf.mxu0
      %1064 = vmatprep.mubr.bf16.mxu0 0
      %1065 = vmatmul.mubr.bf16.gmra.mxu0 %v979
      %v1066 = vpop.f32.mrf.mxu0
      %v1067 = vadd.f32 0.0, %v1066
      %v1068 = vpop.f32.mrf.mxu0
      %v1069 = vpop.f32.mrf.mxu0
      %v1070 = vadd.f32 0.0, %v1069
      %v1071 = vpop.f32.mrf.mxu0
      %1072 = vmatprep.mubr.bf16.mxu0 0
      %1073 = vmatmul.mubr.bf16.gmra.mxu0 %v982
      %v1074 = vpop.f32.mrf.mxu0
      %v1075 = vadd.f32 0.0, %v1074
      %v1076 = vpop.f32.mrf.mxu0
      %v1077 = vpop.f32.mrf.mxu0
      %v1078 = vadd.f32 0.0, %v1077
      %v1079 = vpop.f32.mrf.mxu0
      %1080 = vmatprep.mubr.bf16.mxu0 0
      %1081 = vmatmul.mubr.bf16.gmra.mxu0 %v985
      %v1082 = vpop.f32.mrf.mxu0
      %v1083 = vadd.f32 0.0, %v1082
      %v1084 = vpop.f32.mrf.mxu0
      %v1085 = vpop.f32.mrf.mxu0
      %v1086 = vadd.f32 0.0, %v1085
      %v1087 = vpop.f32.mrf.mxu0
      %1088 = vmatprep.mubr.bf16.mxu0 0
      %1089 = vmatmul.mubr.bf16.gmra.mxu0 %v988
      %v1090 = vpop.f32.mrf.mxu0
      %v1091 = vadd.f32 0.0, %v1090
      %v1092 = vpop.f32.mrf.mxu0
      %v1093 = vpop.f32.mrf.mxu0
      %v1094 = vadd.f32 0.0, %v1093
      %v1095 = vpop.f32.mrf.mxu0
      %1096 = vmatprep.mubr.bf16.mxu0 0
      %1097 = vmatmul.mubr.bf16.gmra.mxu0 %v991
      %v1098 = vpop.f32.mrf.mxu0
      %v1099 = vadd.f32 0.0, %v1098
      %v1100 = vpop.f32.mrf.mxu0
      %v1101 = vpop.f32.mrf.mxu0
      %v1102 = vadd.f32 0.0, %v1101
      %v1103 = vpop.f32.mrf.mxu0
      %1104 = vmatprep.mubr.bf16.mxu0 0
      %1105 = vmatmul.mubr.bf16.gmra.mxu0 %v994
      %v1106 = vpop.f32.mrf.mxu0
      %v1107 = vadd.f32 0.0, %v1106
      %v1108 = vpop.f32.mrf.mxu0
      %v1109 = vpop.f32.mrf.mxu0
      %v1110 = vadd.f32 0.0, %v1109
      %v1111 = vpop.f32.mrf.mxu0
      %1112 = vmatprep.mubr.bf16.mxu0 0
      %1113 = vmatmul.mubr.bf16.gmra.mxu0 %v997
      %v1114 = vpop.f32.mrf.mxu0
      %v1115 = vadd.f32 0.0, %v1114
      %v1116 = vpop.f32.mrf.mxu0
      %v1117 = vpop.f32.mrf.mxu0
      %v1118 = vadd.f32 0.0, %v1117
      %v1119 = vpop.f32.mrf.mxu0
      %1120 = vmatprep.mubr.bf16.mxu0 0
      %1121 = vmatmul.mubr.bf16.gmra.mxu0 %v1000
      %v1122 = vpop.f32.mrf.mxu0
      %v1123 = vadd.f32 0.0, %v1122
      %v1124 = vpop.f32.mrf.mxu0
      %v1125 = vpop.f32.mrf.mxu0
      %v1126 = vadd.f32 0.0, %v1125
      %v1127 = vpop.f32.mrf.mxu0
      %1128 = vmatprep.mubr.bf16.mxu0 0
      %1129 = vmatmul.mubr.bf16.gmra.mxu0 %v1003
      %v1130 = vpop.f32.mrf.mxu0
      %v1131 = vadd.f32 0.0, %v1130
      %v1132 = vpop.f32.mrf.mxu0
      %v1133 = vpop.f32.mrf.mxu0
      %v1134 = vadd.f32 0.0, %v1133
      %v1135 = vpop.f32.mrf.mxu0
      %1136 = vmatprep.mubr.bf16.mxu0 0
      %1137 = vmatmul.mubr.bf16.gmra.mxu0 %v1006
      %v1138 = vpop.f32.mrf.mxu0
      %v1139 = vadd.f32 0.0, %v1138
      %v1140 = vpop.f32.mrf.mxu0
      %v1141 = vpop.f32.mrf.mxu0
      %v1142 = vpop.f32.mrf.mxu0
      %1143 = vdwg.mxu0
      %v1144 = vmul.f32 %v1043, %v483
      %v1145 = vmul.f32 %v1046, %v483
      %v1146 = vmul.f32 %v1051, %v483
      %v1147 = vmul.f32 %v1054, %v483
      %v1148 = vmul.f32 %v1059, %v483
      %v1149 = vmul.f32 %v1062, %v483
      %v1150 = vmul.f32 %v1067, %v483
      %v1151 = vmul.f32 %v1070, %v483
      %v1152 = vmul.f32 %v1075, %v483
      %v1153 = vmul.f32 %v1078, %v483
      %v1154 = vmul.f32 %v1083, %v483
      %v1155 = vmul.f32 %v1086, %v483
      %v1156 = vmul.f32 %v1091, %v483
      %v1157 = vmul.f32 %v1094, %v483
      %v1158 = vmul.f32 %v1099, %v483
      %v1159 = vmul.f32 %v1102, %v483
      %v1160 = vmul.f32 %v1107, %v483
      %v1161 = vmul.f32 %v1110, %v483
      %v1162 = vmul.f32 %v1115, %v483
      %v1163 = vmul.f32 %v1118, %v483
      %v1164 = vmul.f32 %v1123, %v483
      %v1165 = vmul.f32 %v1126, %v483
      %v1166 = vmul.f32 %v1131, %v483
      %v1167 = vmul.f32 %v1134, %v483
      %v1168 = vmul.f32 %v1139, %v483
      %v1169 = vadd.f32 %v1144, %v514
      %v1170 = vadd.f32 %v1145, %v514
      %v1171 = vadd.f32 %v1146, %v514
      %v1172 = vadd.f32 %v1147, %v514
      %v1173 = vadd.f32 %v1148, %v514
      %v1174 = vadd.f32 %v1149, %v514
      %v1175 = vadd.f32 %v1150, %v514
      %v1176 = vadd.f32 %v1151, %v514
      %v1177 = vadd.f32 %v1152, %v514
      %v1178 = vadd.f32 %v1153, %v514
      %v1179 = vadd.f32 %v1154, %v514
      %v1180 = vadd.f32 %v1155, %v514
      %v1181 = vadd.f32 %v1156, %v514
      %v1182 = vadd.f32 %v1157, %v514
      %v1183 = vadd.f32 %v1158, %v514
      %v1184 = vadd.f32 %v1159, %v514
      %v1185 = vadd.f32 %v1160, %v514
      %v1186 = vadd.f32 %v1161, %v514
      %v1187 = vadd.f32 %v1162, %v514
      %v1188 = vadd.f32 %v1163, %v514
      %v1189 = vadd.f32 %v1164, %v514
      %v1190 = vadd.f32 %v1165, %v514
      %v1191 = vadd.f32 %v1166, %v514
      %v1192 = vadd.f32 %v1167, %v514
      %v1193 = vadd.f32 %v1168, %v514
      %s1194 = scalar_lea.vmem %s192, 300
      %v1195 = vld [vmem:[%s1194] sm:$0xf]
      %v1196 = vld [vmem:[%s1194 + $0x4] sm:$0xf]
      %v1197 = vld [vmem:[%s1194 + $0x8] sm:$0xf]
      %v1198 = vld [vmem:[%s1194 + $0xc] sm:$0xf]
      %v1199 = vld [vmem:[%s1194 + $0x10] sm:$0xf]
      %v1200 = vld [vmem:[%s1194 + $0x14] sm:$0xf]
      %v1201 = vld [vmem:[%s1194 + $0x18] sm:$0xf]
      %v1202 = vld [vmem:[%s1194 + $0x1c] sm:$0xf]
      %v1203 = vld [vmem:[%s1194 + $0x20] sm:$0xf]
      %v1204 = vld [vmem:[%s1194 + $0x24] sm:$0xf]
      %v1205 = vld [vmem:[%s1194 + $0x28] sm:$0xf]
      %v1206 = vld [vmem:[%s1194 + $0x2c] sm:$0xf]
      %v1207 = vld [vmem:[%s1194 + $0x30] sm:$0xf]
      %v1208 = vld [vmem:[%s1194 + $0x34] sm:$0xf]
      %v1209 = vld [vmem:[%s1194 + $0x38] sm:$0xf]
      %v1210 = vld [vmem:[%s1194 + $0x3c] sm:$0xf]
      %v1211 = vld [vmem:[%s1194 + $0x40] sm:$0xf]
      %v1212 = vld [vmem:[%s1194 + $0x44] sm:$0xf]
      %v1213 = vld [vmem:[%s1194 + $0x48] sm:$0xf]
      %v1214 = vld [vmem:[%s1194 + $0x4c] sm:$0xf]
      %v1215 = vld [vmem:[%s1194 + $0x50] sm:$0xf]
      %v1216 = vld [vmem:[%s1194 + $0x54] sm:$0xf]
      %v1217 = vld [vmem:[%s1194 + $0x58] sm:$0xf]
      %v1218 = vld [vmem:[%s1194 + $0x5c] sm:$0xf]
      %v1219 = vld [vmem:[%s1194 + $0x60] sm:$0x3]
      %v1245 = vunpack.c.l.b16 %v1195
      %v1246 = vunpack.c.l.b16 %v1196
      %v1247 = vunpack.c.l.b16 %v1197
      %v1248 = vunpack.c.l.b16 %v1198
      %v1249 = vunpack.c.l.b16 %v1199
      %v1250 = vunpack.c.l.b16 %v1200
      %v1251 = vunpack.c.l.b16 %v1201
      %v1252 = vunpack.c.l.b16 %v1202
      %v1253 = vunpack.c.l.b16 %v1203
      %v1254 = vunpack.c.l.b16 %v1204
      %v1255 = vunpack.c.l.b16 %v1205
      %v1256 = vunpack.c.l.b16 %v1206
      %v1257 = vunpack.c.l.b16 %v1207
      %v1258 = vunpack.c.l.b16 %v1208
      %v1259 = vunpack.c.l.b16 %v1209
      %v1260 = vunpack.c.l.b16 %v1210
      %v1261 = vunpack.c.l.b16 %v1211
      %v1262 = vunpack.c.l.b16 %v1212
      %v1263 = vunpack.c.l.b16 %v1213
      %v1264 = vunpack.c.l.b16 %v1214
      %v1265 = vunpack.c.l.b16 %v1215
      %v1266 = vunpack.c.l.b16 %v1216
      %v1267 = vunpack.c.l.b16 %v1217
      %v1268 = vunpack.c.l.b16 %v1218
      %v1269 = vunpack.c.l.b16 %v1219
      %v1270 = vpack.c.b16 %v1246, %v1245
      %v1271 = vpack.c.b16 %v1248, %v1247
      %v1272 = vpack.c.b16 %v1250, %v1249
      %v1273 = vpack.c.b16 %v1252, %v1251
      %v1274 = vpack.c.b16 %v1254, %v1253
      %v1275 = vpack.c.b16 %v1256, %v1255
      %v1276 = vpack.c.b16 %v1258, %v1257
      %v1277 = vpack.c.b16 %v1260, %v1259
      %v1278 = vpack.c.b16 %v1262, %v1261
      %v1279 = vpack.c.b16 %v1264, %v1263
      %v1280 = vpack.c.b16 %v1266, %v1265
      %v1281 = vpack.c.b16 %v1268, %v1267
      %v1282 = vpack.c.b16 %v1269, %v1269
      %v1284 = vsel %vm296, %v1270, 0
      %v1287 = vsel %vm296, %v1271, 0
      %v1290 = vsel %vm296, %v1272, 0
      %v1293 = vsel %vm296, %v1273, 0
      %v1296 = vsel %vm296, %v1274, 0
      %v1299 = vsel %vm296, %v1275, 0
      %v1302 = vsel %vm296, %v1276, 0
      %v1305 = vsel %vm296, %v1277, 0
      %v1308 = vsel %vm296, %v1278, 0
      %v1311 = vsel %vm296, %v1279, 0
      %v1314 = vsel %vm296, %v1280, 0
      %v1317 = vsel %vm296, %v1281, 0
      %v1320 = vsel %vm296, %v1282, 0
      %1322 = vmatprep.subr.bf16.mxu0 0
      %1323 = vmatpush1.bf16.msra.mxu0 0
      %1324 = vmatprep.subr.bf16.mxu0 0
      %1325 = vmatpush1.bf16.msra.mxu0 0
      %1326 = vmatprep.subr.bf16.mxu0 0
      %1327 = vmatpush1.bf16.msra.mxu0 0
      %1328 = vmatprep.subr.bf16.mxu0 0
      %1329 = vmatpush1.bf16.msra.mxu0 0
      %1330 = vmatprep.subr.bf16.mxu0 0
      %1331 = vmatpush1.bf16.msra.mxu0 0
      %1332 = vmatprep.subr.bf16.mxu0 0
      %1333 = vmatpush1.bf16.msra.mxu0 0
      %1334 = vmatprep.subr.bf16.mxu0 0
      %1335 = vmatpush1.bf16.msra.mxu0 0
      %1336 = vmatprep.subr.bf16.mxu0 0
      %1337 = vmatpush1.bf16.msra.mxu0 %v341
      %1338 = vmatprep.subr.bf16.mxu0 0
      %1339 = vmatpush2.bf16.msra.mxu0 0
      %1340 = vmatprep.subr.bf16.mxu0 0
      %1341 = vmatpush2.bf16.msra.mxu0 0
      %1342 = vmatprep.subr.bf16.mxu0 0
      %1343 = vmatpush2.bf16.msra.mxu0 0
      %1344 = vmatprep.subr.bf16.mxu0 0
      %1345 = vmatpush2.bf16.msra.mxu0 0
      %1346 = vmatprep.subr.bf16.mxu0 0
      %1347 = vmatpush2.bf16.msra.mxu0 0
      %1348 = vmatprep.subr.bf16.mxu0 0
      %1349 = vmatpush2.bf16.msra.mxu0 0
      %1350 = vmatprep.subr.bf16.mxu0 0
      %1351 = vmatpush2.bf16.msra.mxu0 0
      %1352 = vmatprep.subr.bf16.mxu0 0
      %1353 = vmatpush2.bf16.msra.mxu0 0
      %1354 = vmatprep.mubr.bf16.mxu0 0
      %1355 = vmatmul.mubr.bf16.gmra.mxu0 %v1284
      %v1356 = vpop.f32.mrf.mxu0
      %v1357 = vadd.f32 0.0, %v1356
      %v1358 = vpop.f32.mrf.mxu0
      %v1359 = vpop.f32.mrf.mxu0
      %v1360 = vadd.f32 0.0, %v1359
      %v1361 = vpop.f32.mrf.mxu0
      %1362 = vmatprep.mubr.bf16.mxu0 0
      %1363 = vmatmul.mubr.bf16.gmra.mxu0 %v1287
      %v1364 = vpop.f32.mrf.mxu0
      %v1365 = vadd.f32 0.0, %v1364
      %v1366 = vpop.f32.mrf.mxu0
      %v1367 = vpop.f32.mrf.mxu0
      %v1368 = vadd.f32 0.0, %v1367
      %v1369 = vpop.f32.mrf.mxu0
      %1370 = vmatprep.mubr.bf16.mxu0 0
      %1371 = vmatmul.mubr.bf16.gmra.mxu0 %v1290
      %v1372 = vpop.f32.mrf.mxu0
      %v1373 = vadd.f32 0.0, %v1372
      %v1374 = vpop.f32.mrf.mxu0
      %v1375 = vpop.f32.mrf.mxu0
      %v1376 = vadd.f32 0.0, %v1375
      %v1377 = vpop.f32.mrf.mxu0
      %1378 = vmatprep.mubr.bf16.mxu0 0
      %1379 = vmatmul.mubr.bf16.gmra.mxu0 %v1293
      %v1380 = vpop.f32.mrf.mxu0
      %v1381 = vadd.f32 0.0, %v1380
      %v1382 = vpop.f32.mrf.mxu0
      %v1383 = vpop.f32.mrf.mxu0
      %v1384 = vadd.f32 0.0, %v1383
      %v1385 = vpop.f32.mrf.mxu0
      %1386 = vmatprep.mubr.bf16.mxu0 0
      %1387 = vmatmul.mubr.bf16.gmra.mxu0 %v1296
      %v1388 = vpop.f32.mrf.mxu0
      %v1389 = vadd.f32 0.0, %v1388
      %v1390 = vpop.f32.mrf.mxu0
      %v1391 = vpop.f32.mrf.mxu0
      %v1392 = vadd.f32 0.0, %v1391
      %v1393 = vpop.f32.mrf.mxu0
      %1394 = vmatprep.mubr.bf16.mxu0 0
      %1395 = vmatmul.mubr.bf16.gmra.mxu0 %v1299
      %v1396 = vpop.f32.mrf.mxu0
      %v1397 = vadd.f32 0.0, %v1396
      %v1398 = vpop.f32.mrf.mxu0
      %v1399 = vpop.f32.mrf.mxu0
      %v1400 = vadd.f32 0.0, %v1399
      %v1401 = vpop.f32.mrf.mxu0
      %1402 = vmatprep.mubr.bf16.mxu0 0
      %1403 = vmatmul.mubr.bf16.gmra.mxu0 %v1302
      %v1404 = vpop.f32.mrf.mxu0
      %v1405 = vadd.f32 0.0, %v1404
      %v1406 = vpop.f32.mrf.mxu0
      %v1407 = vpop.f32.mrf.mxu0
      %v1408 = vadd.f32 0.0, %v1407
      %v1409 = vpop.f32.mrf.mxu0
      %1410 = vmatprep.mubr.bf16.mxu0 0
      %1411 = vmatmul.mubr.bf16.gmra.mxu0 %v1305
      %v1412 = vpop.f32.mrf.mxu0
      %v1413 = vadd.f32 0.0, %v1412
      %v1414 = vpop.f32.mrf.mxu0
      %v1415 = vpop.f32.mrf.mxu0
      %v1416 = vadd.f32 0.0, %v1415
      %v1417 = vpop.f32.mrf.mxu0
      %1418 = vmatprep.mubr.bf16.mxu0 0
      %1419 = vmatmul.mubr.bf16.gmra.mxu0 %v1308
      %v1420 = vpop.f32.mrf.mxu0
      %v1421 = vadd.f32 0.0, %v1420
      %v1422 = vpop.f32.mrf.mxu0
      %v1423 = vpop.f32.mrf.mxu0
      %v1424 = vadd.f32 0.0, %v1423
      %v1425 = vpop.f32.mrf.mxu0
      %1426 = vmatprep.mubr.bf16.mxu0 0
      %1427 = vmatmul.mubr.bf16.gmra.mxu0 %v1311
      %v1428 = vpop.f32.mrf.mxu0
      %v1429 = vadd.f32 0.0, %v1428
      %v1430 = vpop.f32.mrf.mxu0
      %v1431 = vpop.f32.mrf.mxu0
      %v1432 = vadd.f32 0.0, %v1431
      %v1433 = vpop.f32.mrf.mxu0
      %1434 = vmatprep.mubr.bf16.mxu0 0
      %1435 = vmatmul.mubr.bf16.gmra.mxu0 %v1314
      %v1436 = vpop.f32.mrf.mxu0
      %v1437 = vadd.f32 0.0, %v1436
      %v1438 = vpop.f32.mrf.mxu0
      %v1439 = vpop.f32.mrf.mxu0
      %v1440 = vadd.f32 0.0, %v1439
      %v1441 = vpop.f32.mrf.mxu0
      %1442 = vmatprep.mubr.bf16.mxu0 0
      %1443 = vmatmul.mubr.bf16.gmra.mxu0 %v1317
      %v1444 = vpop.f32.mrf.mxu0
      %v1445 = vadd.f32 0.0, %v1444
      %v1446 = vpop.f32.mrf.mxu0
      %v1447 = vpop.f32.mrf.mxu0
      %v1448 = vadd.f32 0.0, %v1447
      %v1449 = vpop.f32.mrf.mxu0
      %1450 = vmatprep.mubr.bf16.mxu0 0
      %1451 = vmatmul.mubr.bf16.gmra.mxu0 %v1320
      %v1452 = vpop.f32.mrf.mxu0
      %v1453 = vadd.f32 0.0, %v1452
      %v1454 = vpop.f32.mrf.mxu0
      %v1455 = vpop.f32.mrf.mxu0
      %v1456 = vpop.f32.mrf.mxu0
      %1457 = vdwg.mxu0
      %v1458 = vmul.f32 %v1357, %v483
      %v1459 = vmul.f32 %v1360, %v483
      %v1460 = vmul.f32 %v1365, %v483
      %v1461 = vmul.f32 %v1368, %v483
      %v1462 = vmul.f32 %v1373, %v483
      %v1463 = vmul.f32 %v1376, %v483
      %v1464 = vmul.f32 %v1381, %v483
      %v1465 = vmul.f32 %v1384, %v483
      %v1466 = vmul.f32 %v1389, %v483
      %v1467 = vmul.f32 %v1392, %v483
      %v1468 = vmul.f32 %v1397, %v483
      %v1469 = vmul.f32 %v1400, %v483
      %v1470 = vmul.f32 %v1405, %v483
      %v1471 = vmul.f32 %v1408, %v483
      %v1472 = vmul.f32 %v1413, %v483
      %v1473 = vmul.f32 %v1416, %v483
      %v1474 = vmul.f32 %v1421, %v483
      %v1475 = vmul.f32 %v1424, %v483
      %v1476 = vmul.f32 %v1429, %v483
      %v1477 = vmul.f32 %v1432, %v483
      %v1478 = vmul.f32 %v1437, %v483
      %v1479 = vmul.f32 %v1440, %v483
      %v1480 = vmul.f32 %v1445, %v483
      %v1481 = vmul.f32 %v1448, %v483
      %v1482 = vmul.f32 %v1453, %v483
      %v1483 = vadd.f32 %v1458, %v514
      %v1484 = vadd.f32 %v1459, %v514
      %v1485 = vadd.f32 %v1460, %v514
      %v1486 = vadd.f32 %v1461, %v514
      %v1487 = vadd.f32 %v1462, %v514
      %v1488 = vadd.f32 %v1463, %v514
      %v1489 = vadd.f32 %v1464, %v514
      %v1490 = vadd.f32 %v1465, %v514
      %v1491 = vadd.f32 %v1466, %v514
      %v1492 = vadd.f32 %v1467, %v514
      %v1493 = vadd.f32 %v1468, %v514
      %v1494 = vadd.f32 %v1469, %v514
      %v1495 = vadd.f32 %v1470, %v514
      %v1496 = vadd.f32 %v1471, %v514
      %v1497 = vadd.f32 %v1472, %v514
      %v1498 = vadd.f32 %v1473, %v514
      %v1499 = vadd.f32 %v1474, %v514
      %v1500 = vadd.f32 %v1475, %v514
      %v1501 = vadd.f32 %v1476, %v514
      %v1502 = vadd.f32 %v1477, %v514
      %v1503 = vadd.f32 %v1478, %v514
      %v1504 = vadd.f32 %v1479, %v514
      %v1505 = vadd.f32 %v1480, %v514
      %v1506 = vadd.f32 %v1481, %v514
      %v1507 = vadd.f32 %v1482, %v514
      %v1508 = vmax.f32 %v1169, %v1483
      %v1509 = vmax.f32 %v1170, %v1484
      %v1510 = vmax.f32 %v1171, %v1485
      %v1511 = vmax.f32 %v1172, %v1486
      %v1512 = vmax.f32 %v1173, %v1487
      %v1513 = vmax.f32 %v1174, %v1488
      %v1514 = vmax.f32 %v1175, %v1489
      %v1515 = vmax.f32 %v1176, %v1490
      %v1516 = vmax.f32 %v1177, %v1491
      %v1517 = vmax.f32 %v1178, %v1492
      %v1518 = vmax.f32 %v1179, %v1493
      %v1519 = vmax.f32 %v1180, %v1494
      %v1520 = vmax.f32 %v1181, %v1495
      %v1521 = vmax.f32 %v1182, %v1496
      %v1522 = vmax.f32 %v1183, %v1497
      %v1523 = vmax.f32 %v1184, %v1498
      %v1524 = vmax.f32 %v1185, %v1499
      %v1525 = vmax.f32 %v1186, %v1500
      %v1526 = vmax.f32 %v1187, %v1501
      %v1527 = vmax.f32 %v1188, %v1502
      %v1528 = vmax.f32 %v1189, %v1503
      %v1529 = vmax.f32 %v1190, %v1504
      %v1530 = vmax.f32 %v1191, %v1505
      %v1531 = vmax.f32 %v1192, %v1506
      %v1532 = vmax.f32 %v1193, %v1507
      %v1533 = vmax.f32 %v855, %v1508
      %v1534 = vmax.f32 %v856, %v1509
      %v1535 = vmax.f32 %v857, %v1510
      %v1536 = vmax.f32 %v858, %v1511
      %v1537 = vmax.f32 %v859, %v1512
      %v1538 = vmax.f32 %v860, %v1513
      %v1539 = vmax.f32 %v861, %v1514
      %v1540 = vmax.f32 %v862, %v1515
      %v1541 = vmax.f32 %v863, %v1516
      %v1542 = vmax.f32 %v864, %v1517
      %v1543 = vmax.f32 %v865, %v1518
      %v1544 = vmax.f32 %v866, %v1519
      %v1545 = vmax.f32 %v867, %v1520
      %v1546 = vmax.f32 %v868, %v1521
      %v1547 = vmax.f32 %v869, %v1522
      %v1548 = vmax.f32 %v870, %v1523
      %v1549 = vmax.f32 %v871, %v1524
      %v1550 = vmax.f32 %v872, %v1525
      %v1551 = vmax.f32 %v873, %v1526
      %v1552 = vmax.f32 %v874, %v1527
      %v1553 = vmax.f32 %v875, %v1528
      %v1554 = vmax.f32 %v876, %v1529
      %v1555 = vmax.f32 %v877, %v1530
      %v1556 = vmax.f32 %v878, %v1531
      %v1557 = vmax.f32 %v879, %v1532
      %v1558 = vmax.f32 %v1533, 0.0
      %v1559 = vmax.f32 %v1534, 0.0
      %v1560 = vmax.f32 %v1535, 0.0
      %v1561 = vmax.f32 %v1536, 0.0
      %v1562 = vmax.f32 %v1537, 0.0
      %v1563 = vmax.f32 %v1538, 0.0
      %v1564 = vmax.f32 %v1539, 0.0
      %v1565 = vmax.f32 %v1540, 0.0
      %v1566 = vmax.f32 %v1541, 0.0
      %v1567 = vmax.f32 %v1542, 0.0
      %v1568 = vmax.f32 %v1543, 0.0
      %v1569 = vmax.f32 %v1544, 0.0
      %v1570 = vmax.f32 %v1545, 0.0
      %v1571 = vmax.f32 %v1546, 0.0
      %v1572 = vmax.f32 %v1547, 0.0
      %v1573 = vmax.f32 %v1548, 0.0
      %v1574 = vmax.f32 %v1549, 0.0
      %v1575 = vmax.f32 %v1550, 0.0
      %v1576 = vmax.f32 %v1551, 0.0
      %v1577 = vmax.f32 %v1552, 0.0
      %v1578 = vmax.f32 %v1553, 0.0
      %v1579 = vmax.f32 %v1554, 0.0
      %v1580 = vmax.f32 %v1555, 0.0
      %v1581 = vmax.f32 %v1556, 0.0
      %v1582 = vmax.f32 %v1557, 0.0
      %v1583 = vpack.c.bf16 %v1559, %v1558
      %v1584 = vpack.c.bf16 %v1561, %v1560
      %v1585 = vpack.c.bf16 %v1563, %v1562
      %v1586 = vpack.c.bf16 %v1565, %v1564
      %v1587 = vpack.c.bf16 %v1567, %v1566
      %v1588 = vpack.c.bf16 %v1569, %v1568
      %v1589 = vpack.c.bf16 %v1571, %v1570
      %v1590 = vpack.c.bf16 %v1573, %v1572
      %v1591 = vpack.c.bf16 %v1575, %v1574
      %v1592 = vpack.c.bf16 %v1577, %v1576
      %v1593 = vpack.c.bf16 %v1579, %v1578
      %v1594 = vpack.c.bf16 %v1581, %v1580
      %v1595 = vpack.c.bf16 %v1582, %v1582
      %v1609 = vunpack.c.l.b16 %v1583
      %v1610 = vunpack.c.h.b16 %v1583
      %v1611 = vunpack.c.l.b16 %v1584
      %v1612 = vunpack.c.h.b16 %v1584
      %v1613 = vunpack.c.l.b16 %v1585
      %v1614 = vunpack.c.h.b16 %v1585
      %v1615 = vunpack.c.l.b16 %v1586
      %v1616 = vunpack.c.h.b16 %v1586
      %v1617 = vunpack.c.l.b16 %v1587
      %v1618 = vunpack.c.h.b16 %v1587
      %v1619 = vunpack.c.l.b16 %v1588
      %v1620 = vunpack.c.h.b16 %v1588
      %v1621 = vunpack.c.l.b16 %v1589
      %v1622 = vunpack.c.h.b16 %v1589
      %v1623 = vunpack.c.l.b16 %v1590
      %v1624 = vunpack.c.h.b16 %v1590
      %v1625 = vunpack.c.l.b16 %v1591
      %v1626 = vunpack.c.h.b16 %v1591
      %v1627 = vunpack.c.l.b16 %v1592
      %v1628 = vunpack.c.h.b16 %v1592
      %v1629 = vunpack.c.l.b16 %v1593
      %v1630 = vunpack.c.h.b16 %v1593
      %v1631 = vunpack.c.l.b16 %v1594
      %v1632 = vunpack.c.h.b16 %v1594
      %v1633 = vunpack.c.l.b16 %v1595
      %v1634 = vpack.c.b16 %v1609, %v1609
      %v1635 = vpack.c.b16 %v1610, %v1610
      %v1636 = vpack.c.b16 %v1611, %v1611
      %v1637 = vpack.c.b16 %v1612, %v1612
      %v1638 = vpack.c.b16 %v1613, %v1613
      %v1639 = vpack.c.b16 %v1614, %v1614
      %v1640 = vpack.c.b16 %v1615, %v1615
      %v1641 = vpack.c.b16 %v1616, %v1616
      %v1642 = vpack.c.b16 %v1617, %v1617
      %v1643 = vpack.c.b16 %v1618, %v1618
      %v1644 = vpack.c.b16 %v1619, %v1619
      %v1645 = vpack.c.b16 %v1620, %v1620
      %v1646 = vpack.c.b16 %v1621, %v1621
      %v1647 = vpack.c.b16 %v1622, %v1622
      %v1648 = vpack.c.b16 %v1623, %v1623
      %v1649 = vpack.c.b16 %v1624, %v1624
      %v1650 = vpack.c.b16 %v1625, %v1625
      %v1651 = vpack.c.b16 %v1626, %v1626
      %v1652 = vpack.c.b16 %v1627, %v1627
      %v1653 = vpack.c.b16 %v1628, %v1628
      %v1654 = vpack.c.b16 %v1629, %v1629
      %v1655 = vpack.c.b16 %v1630, %v1630
      %v1656 = vpack.c.b16 %v1631, %v1631
      %v1657 = vpack.c.b16 %v1632, %v1632
      %v1658 = vpack.c.b16 %v1633, %v1633
      %vm1684 = vcmask 257024
      %1685 = vst.msk [vmem:[%s197] sm:$0xf] %vm1684, %v1634
      %1686 = vst.msk [vmem:[%s197 + $0x4] sm:$0xf] %vm1684, %v1635
      %1687 = vst.msk [vmem:[%s197 + $0x8] sm:$0xf] %vm1684, %v1636
      %1688 = vst.msk [vmem:[%s197 + $0xc] sm:$0xf] %vm1684, %v1637
      %1689 = vst.msk [vmem:[%s197 + $0x10] sm:$0xf] %vm1684, %v1638
      %1690 = vst.msk [vmem:[%s197 + $0x14] sm:$0xf] %vm1684, %v1639
      %1691 = vst.msk [vmem:[%s197 + $0x18] sm:$0xf] %vm1684, %v1640
      %1692 = vst.msk [vmem:[%s197 + $0x1c] sm:$0xf] %vm1684, %v1641
      %1693 = vst.msk [vmem:[%s197 + $0x20] sm:$0xf] %vm1684, %v1642
      %1694 = vst.msk [vmem:[%s197 + $0x24] sm:$0xf] %vm1684, %v1643
      %1695 = vst.msk [vmem:[%s197 + $0x28] sm:$0xf] %vm1684, %v1644
      %1696 = vst.msk [vmem:[%s197 + $0x2c] sm:$0xf] %vm1684, %v1645
      %1697 = vst.msk [vmem:[%s197 + $0x30] sm:$0xf] %vm1684, %v1646
      %1698 = vst.msk [vmem:[%s197 + $0x34] sm:$0xf] %vm1684, %v1647
      %1699 = vst.msk [vmem:[%s197 + $0x38] sm:$0xf] %vm1684, %v1648
      %1700 = vst.msk [vmem:[%s197 + $0x3c] sm:$0xf] %vm1684, %v1649
      %1701 = vst.msk [vmem:[%s197 + $0x40] sm:$0xf] %vm1684, %v1650
      %1702 = vst.msk [vmem:[%s197 + $0x44] sm:$0xf] %vm1684, %v1651
      %1703 = vst.msk [vmem:[%s197 + $0x48] sm:$0xf] %vm1684, %v1652
      %1704 = vst.msk [vmem:[%s197 + $0x4c] sm:$0xf] %vm1684, %v1653
      %1705 = vst.msk [vmem:[%s197 + $0x50] sm:$0xf] %vm1684, %v1654
      %1706 = vst.msk [vmem:[%s197 + $0x54] sm:$0xf] %vm1684, %v1655
      %1707 = vst.msk [vmem:[%s197 + $0x58] sm:$0xf] %vm1684, %v1656
      %1708 = vst.msk [vmem:[%s197 + $0x5c] sm:$0xf] %vm1684, %v1657
      %vm1709 = vcmask 254976
      %1710 = vst.msk [vmem:[%s197 + $0x60] sm:$0x3] %vm1709, %v1658
      %p1711 = scmp.lt.s32.totalorder %s15, 1
      %s1712 = scalar_select %p1711, %s15, 1
      %s1713 = smul.addr %s1712, 25
      %s1714 = smul.addr %s1713, 4
      %s1715 = scalar_lea.vmem %s4, %s1714
      // Predicated region
      $region37: #{a_call__.6} parent=35 // pred_check
        %p1716 = pneg %p122
      $region38: #{a_call__.6} parent=35 // pred_check_branch
        %1718 = sbr.rel (%p1716) target = $region40
      $region39: #{a_call__.6} parent=35 // pred_region
        _
      $region40: #{a_call__.6} parent=35 // pred_fallthru
        _
    $region36: #{a_call__.6} parent=5 // pred_fallthru
      _
    %p1719 = scmp.le.s32.totalorder 2, %s10
    // Predicated region
    $region41: #{a_call__.6} parent=5 // pred_check
      %p1720 = pneg %p1719
    $region42: #{a_call__.6} parent=5 // pred_check_branch
      %1722 = sbr.rel (%p1720) target = $region44
    $region43: #{a_call__.6} parent=5 // pred_region
      %s1723 = ssub.s32 %s10, 2
      // Predicated region
      $region45: #{a_call__.6} parent=43 // pred_check
        %p1724 = pneg %p128
      $region46: #{a_call__.6} parent=43 // pred_check_branch
        %1726 = sbr.rel (%p1724) target = $region48
      $region47: #{a_call__.6} parent=43 // pred_region
        %p1727 = scmp.lt.s32.totalorder %s16, 1
        %s1728 = scalar_select %p1727, %s16, 1
        %s1729 = smul.addr %s1728, 25
        %s1730 = smul.addr %s1729, 4
        %s1731 = scalar_lea.vmem %s4, %s1730
      $region48: #{a_call__.6} parent=43 // pred_fallthru
        _
    $region44: #{a_call__.6} parent=5 // pred_fallthru
      _
  $region6: #{a_call__.6} parent=0 // loop_footer
    %s14 = sadd.s32 1, %s10
  $region7: #{a_call__.6} parent=0 // loop_footer_branch
    %9 = sbr.rel target = $region3
  $region8: #{a_call__.6} parent=0 // loop_exit
    _

// kernel: a_call__.7
$region0: #{a_call__.7}
  #allocation0 [shape = 'u32[]', space=smem, size = 0x4, offset = 0x4, fixed_abs, tag = 'smem constant byte address 0x4 - core index']
  #allocation1 [shape = 'u32[144,128]{1,0:T(1,128)}', space=vmem, size = 0x12000, scoped, tag = 'internal scratch']
  %s0 = inlined_call_operand.vmem [shape: bf16[2,4,36,288], index: 0, kind: input, shape index: {}]
  %s1 = inlined_call_operand.vmem [shape: bf16[288,64], index: 1, kind: input, shape index: {}]
  %s2 = inlined_call_operand.vmem [shape: f32[1,64], index: 2, kind: output, shape index: {0}]
  %s3 = inlined_call_operand.vmem [shape: f32[1,64], index: 3, kind: output, shape index: {1}]
  %4 = xla_tuple %s2, %s3
  %s5 = sld [smem:[#allocation0]]
  $region53: #{a_call__.7} parent=0
    _
  %s7 = ssub.s32 1, %s5
  %s8 = scalar_select 0, %s7, %s5
  loop: start=0, step=1, limit=4
  $region2: #{a_call__.7} parent=0 // loop_pre_header
    _
  $region3: #{a_call__.7} parent=0 // loop_header
    %s10 = sphi 0, %s14
    %p11 = scmp.ge.s32.totalorder %s10, 4
    %s20 = sphi 0, %s22
    %s23 = sphi 0, %s20
    %s24 = sphi 0, %s23
    %s40 = sphi 0, %s24
    %s44 = sphi 0, %s44
    %s46 = sphi 0, %s44
    %s47 = sphi 0, %s46
    %s61 = sphi 0, %s47
    %s65 = sphi 0, %s65
    %s67 = sphi 0, %s65
    %s68 = sphi 0, %s67
    %s82 = sphi 0, %s68
    %s86 = sphi 0, %s86
    %s88 = sphi 0, %s86
    %s89 = sphi 0, %s88
    %s103 = sphi 0, %s89
  $region4: #{a_call__.7} parent=0 // loop_header_branch
    %13 = sbr.rel (%p11) target = $region8
  $region5: #{a_call__.7} parent=0 // loop_body
    %s15 = ssub.s32 %s10, 1
    %s16 = ssub.s32 %s10, 2
    %s17 = sadd.s32 %s10, 1
    %s18 = ssub.s32 %s10, %s17
    %p19 = scmp.eq.s32.totalorder %s18, 0
    %s21 = sadd.s32 %s20, 1
    %s22 = scalar_select %p19, %s20, %s21
    %p25 = pneg %p19
    %p26 = scmp.eq.s32.totalorder %s10, 1
    %p27 = por %p25, %p26
    %p28 = scmp.ne.s32.totalorder %s20, %s23
    %p29 = scmp.eq.s32.totalorder %s10, 0
    %p30 = por %p28, %p29
    %p31 = scmp.ne.s32.totalorder %s20, %s23
    %p32 = scmp.eq.s32.totalorder %s15, 1
    %p33 = por %p31, %p32
    %p34 = scmp.ne.s32.totalorder %s23, %s24
    %p35 = scmp.eq.s32.totalorder %s15, 0
    %p36 = por %p34, %p35
    %p37 = scmp.ne.s32.totalorder %s23, %s24
    %p38 = scmp.eq.s32.totalorder %s16, 1
    %p39 = por %p37, %p38
    %p41 = scmp.ne.s32.totalorder %s24, %s40
    %p42 = scmp.eq.s32.totalorder %s16, 0
    %p43 = por %p41, %p42
    %s45 = sadd.s32 %s44, 1
    %p48 = scmp.eq.s32.totalorder %s10, 1
    %p49 = scmp.ne.s32.totalorder %s44, %s46
    %p50 = scmp.eq.s32.totalorder %s10, 0
    %p51 = por %p49, %p50
    %p52 = scmp.ne.s32.totalorder %s44, %s46
    %p53 = scmp.eq.s32.totalorder %s15, 1
    %p54 = por %p52, %p53
    %p55 = scmp.ne.s32.totalorder %s46, %s47
    %p56 = scmp.eq.s32.totalorder %s15, 0
    %p57 = por %p55, %p56
    %p58 = scmp.ne.s32.totalorder %s46, %s47
    %p59 = scmp.eq.s32.totalorder %s16, 1
    %p60 = por %p58, %p59
    %p62 = scmp.ne.s32.totalorder %s47, %s61
    %p63 = scmp.eq.s32.totalorder %s16, 0
    %p64 = por %p62, %p63
    %s66 = sadd.s32 %s65, 1
    %p69 = scmp.eq.s32.totalorder %s10, 1
    %p70 = scmp.ne.s32.totalorder %s65, %s67
    %p71 = scmp.eq.s32.totalorder %s10, 0
    %p72 = por %p70, %p71
    %p73 = scmp.ne.s32.totalorder %s65, %s67
    %p74 = scmp.eq.s32.totalorder %s15, 1
    %p75 = por %p73, %p74
    %p76 = scmp.ne.s32.totalorder %s67, %s68
    %p77 = scmp.eq.s32.totalorder %s15, 0
    %p78 = por %p76, %p77
    %p79 = scmp.ne.s32.totalorder %s67, %s68
    %p80 = scmp.eq.s32.totalorder %s16, 1
    %p81 = por %p79, %p80
    %p83 = scmp.ne.s32.totalorder %s68, %s82
    %p84 = scmp.eq.s32.totalorder %s16, 0
    %p85 = por %p83, %p84
    %s87 = sadd.s32 %s86, 1
    %p90 = scmp.eq.s32.totalorder %s10, 1
    %p91 = scmp.ne.s32.totalorder %s86, %s88
    %p92 = scmp.eq.s32.totalorder %s10, 0
    %p93 = por %p91, %p92
    %p94 = scmp.ne.s32.totalorder %s86, %s88
    %p95 = scmp.eq.s32.totalorder %s15, 1
    %p96 = por %p94, %p95
    %p97 = scmp.ne.s32.totalorder %s88, %s89
    %p98 = scmp.eq.s32.totalorder %s15, 0
    %p99 = por %p97, %p98
    %p100 = scmp.ne.s32.totalorder %s88, %s89
    %p101 = scmp.eq.s32.totalorder %s16, 1
    %p102 = por %p100, %p101
    %p104 = scmp.ne.s32.totalorder %s89, %s103
    %p105 = scmp.eq.s32.totalorder %s16, 0
    %p106 = por %p104, %p105
    %p107 = scmp.le.s32.totalorder 1, %s10
    %p108 = scmp.lt.s32.totalorder %s10, 3
    %p109 = pnand %p107, %p108
    %p110 = pneg %p109
    // Predicated region
    $region9: #{a_call__.7} parent=5 // pred_check
      _
    $region10: #{a_call__.7} parent=5 // pred_check_branch
      %112 = sbr.rel (%p109) target = $region12
    $region11: #{a_call__.7} parent=5 // pred_region
      %s113 = ssub.s32 %s10, 1
      // Predicated region
      $region13: #{a_call__.7} parent=11 // pred_check
        %p114 = pneg %p57
      $region14: #{a_call__.7} parent=11 // pred_check_branch
        %116 = sbr.rel (%p114) target = $region16
      $region15: #{a_call__.7} parent=11 // pred_region
        _
      $region16: #{a_call__.7} parent=11 // pred_fallthru
        _
    $region12: #{a_call__.7} parent=5 // pred_fallthru
      _
    %p117 = scmp.lt.s32.totalorder %s10, 2
    // Predicated region
    $region17: #{a_call__.7} parent=5 // pred_check
      %p118 = pneg %p117
    $region18: #{a_call__.7} parent=5 // pred_check_branch
      %120 = sbr.rel (%p118) target = $region20
    $region19: #{a_call__.7} parent=5 // pred_region
      // Predicated region
      $region21: #{a_call__.7} parent=19 // pred_check
        %p121 = pneg %p30
      $region22: #{a_call__.7} parent=19 // pred_check_branch
        %123 = sbr.rel (%p121) target = $region24
      $region23: #{a_call__.7} parent=19 // pred_region
        %p124 = scmp.lt.s32.totalorder %s10, 1
        %s125 = scalar_select %p124, %s10, 1
        %s126 = smul.addr %s125, 60
        %s127 = smul.addr %s126, 4
        %s128 = scalar_lea.vmem %s0, %s127
      $region24: #{a_call__.7} parent=19 // pred_fallthru
        _
    $region20: #{a_call__.7} parent=5 // pred_fallthru
      _
    %p129 = scmp.le.s32.totalorder 1, %s10
    %p130 = scmp.lt.s32.totalorder %s10, 3
    %p131 = pnand %p129, %p130
    %p132 = pneg %p131
    // Predicated region
    $region25: #{a_call__.7} parent=5 // pred_check
      _
    $region26: #{a_call__.7} parent=5 // pred_check_branch
      %134 = sbr.rel (%p131) target = $region28
    $region27: #{a_call__.7} parent=5 // pred_region
      %s135 = ssub.s32 %s10, 1
      %p136 = scmp.lt.s32.totalorder %s15, 1
      %s137 = scalar_select %p136, %s15, 1
      %s138 = smul.addr %s137, 60
      %s139 = smul.addr %s138, 4
      %s140 = scalar_lea.vmem %s0, %s139
      %p141 = pneg %p36
      %p142 = pneg %p33
      %p143 = pneg %p57
      %p144 = pneg %p54
      %p145 = pneg %p78
      %p146 = pneg %p75
      %p147 = pneg %p99
      %p148 = pneg %p96
      %p149 = scmp.lt.s32.totalorder %s15, 1
      %s150 = scalar_select %p149, %s15, 1
      %s151 = smul.addr %s150, 60
      %s152 = smul.addr %s151, 4
      %s153 = scalar_lea.vmem %s0, %s152
      %p155 = scmp.eq.s32.totalorder %s15, 0
      // Predicated region
      $region29: #{a_call__.7} parent=27 // pred_check
        %p156 = pneg %p155
      $region30: #{a_call__.7} parent=27 // pred_check_branch
        %158 = sbr.rel (%p156) target = $region32
      $region31: #{a_call__.7} parent=27 // pred_region
        %vm159 = vcmask 516096
        %160 = vst.msk [vmem:[%s2] sm:$0x1] %vm159, 0.0
        %161 = vst.msk [vmem:[%s3] sm:$0x1] %vm159, 0.0
      $region32: #{a_call__.7} parent=27 // pred_fallthru
        _
      %v162 = vld [vmem:[%s1] sm:$0xf]
      %v163 = vld [vmem:[%s1 + $0x4] sm:$0xf]
      %v164 = vld [vmem:[%s1 + $0x8] sm:$0xf]
      %v165 = vld [vmem:[%s1 + $0xc] sm:$0xf]
      %v166 = vld [vmem:[%s1 + $0x10] sm:$0xf]
      %v167 = vld [vmem:[%s1 + $0x14] sm:$0xf]
      %v168 = vld [vmem:[%s1 + $0x18] sm:$0xf]
      %v169 = vld [vmem:[%s1 + $0x1c] sm:$0xf]
      %v170 = vld [vmem:[%s1 + $0x20] sm:$0xf]
      %v171 = vld [vmem:[%s1 + $0x24] sm:$0xf]
      %v172 = vld [vmem:[%s1 + $0x28] sm:$0xf]
      %v173 = vld [vmem:[%s1 + $0x2c] sm:$0xf]
      %v174 = vld [vmem:[%s1 + $0x30] sm:$0xf]
      %v175 = vld [vmem:[%s1 + $0x34] sm:$0xf]
      %v176 = vld [vmem:[%s1 + $0x38] sm:$0xf]
      %v177 = vld [vmem:[%s1 + $0x3c] sm:$0xf]
      %v178 = vld [vmem:[%s1 + $0x40] sm:$0xf]
      %v179 = vld [vmem:[%s1 + $0x44] sm:$0xf]
      %v180 = vld [vmem:[%s1 + $0x48] sm:$0xf]
      %v181 = vld [vmem:[%s1 + $0x4c] sm:$0xf]
      %v182 = vld [vmem:[%s1 + $0x50] sm:$0xf]
      %v183 = vld [vmem:[%s1 + $0x54] sm:$0xf]
      %v184 = vld [vmem:[%s1 + $0x58] sm:$0xf]
      %v185 = vld [vmem:[%s1 + $0x5c] sm:$0xf]
      %v186 = vld [vmem:[%s1 + $0x60] sm:$0xf]
      %v187 = vld [vmem:[%s1 + $0x64] sm:$0xf]
      %v188 = vld [vmem:[%s1 + $0x68] sm:$0xf]
      %v189 = vld [vmem:[%s1 + $0x6c] sm:$0xf]
      %v190 = vld [vmem:[%s1 + $0x70] sm:$0xf]
      %v191 = vld [vmem:[%s1 + $0x74] sm:$0xf]
      %v192 = vld [vmem:[%s1 + $0x78] sm:$0xf]
      %v193 = vld [vmem:[%s1 + $0x7c] sm:$0xf]
      %v194 = vld [vmem:[%s1 + $0x80] sm:$0xf]
      %v195 = vld [vmem:[%s1 + $0x84] sm:$0xf]
      %v196 = vld [vmem:[%s1 + $0x88] sm:$0xf]
      %v197 = vld [vmem:[%s1 + $0x8c] sm:$0xf]
      %v198 = vld [vmem:[%s153] sm:$0xff]
      %v199 = vld [vmem:[%s153 + $0x8] sm:$0xf]
      %v200 = vld [vmem:[%s153 + $0xc] sm:$0xff]
      %v201 = vld [vmem:[%s153 + $0x14] sm:$0xf]
      %v202 = vld [vmem:[%s153 + $0x18] sm:$0xff]
      %v203 = vld [vmem:[%s153 + $0x20] sm:$0xf]
      %v204 = vld [vmem:[%s153 + $0x24] sm:$0xff]
      %v205 = vld [vmem:[%s153 + $0x2c] sm:$0xf]
      %v206 = vld [vmem:[%s153 + $0x30] sm:$0x33]
      %v207 = vld [vmem:[%s153 + $0x38] sm:$0x3]
      %v218 = vunpack.c.l.b16 %v198
      %v219 = vunpack.c.h.b16 %v198
      %v220 = vunpack.c.l.b16 %v199
      %v221 = vunpack.c.l.b16 %v200
      %v222 = vunpack.c.h.b16 %v200
      %v223 = vunpack.c.l.b16 %v201
      %v224 = vunpack.c.l.b16 %v202
      %v225 = vunpack.c.h.b16 %v202
      %v226 = vunpack.c.l.b16 %v203
      %v227 = vunpack.c.l.b16 %v204
      %v228 = vunpack.c.h.b16 %v204
      %v229 = vunpack.c.l.b16 %v205
      %v230 = vunpack.c.l.b16 %v206
      %v231 = vunpack.c.h.b16 %v206
      %v232 = vunpack.c.l.b16 %v207
      %v233 = vpack.c.b16 %v221, %v218
      %v234 = vpack.c.b16 %v222, %v219
      %v235 = vpack.c.b16 %v223, %v220
      %v236 = vpack.c.b16 %v227, %v224
      %v237 = vpack.c.b16 %v228, %v225
      %v238 = vpack.c.b16 %v229, %v226
      %v239 = vpack.c.b16 %v230, %v230
      %v240 = vpack.c.b16 %v231, %v231
      %v241 = vpack.c.b16 %v232, %v232
      %v284 = vunpack.c.l.b16 %v162
      %v285 = vunpack.c.l.b16 %v163
      %v286 = vunpack.c.l.b16 %v164
      %v287 = vunpack.c.l.b16 %v165
      %v288 = vunpack.c.l.b16 %v166
      %v289 = vunpack.c.l.b16 %v167
      %v290 = vunpack.c.l.b16 %v168
      %v291 = vunpack.c.l.b16 %v169
      %v292 = vunpack.c.l.b16 %v170
      %v293 = vunpack.c.l.b16 %v171
      %v294 = vunpack.c.l.b16 %v172
      %v295 = vunpack.c.l.b16 %v173
      %v296 = vunpack.c.l.b16 %v174
      %v297 = vunpack.c.l.b16 %v175
      %v298 = vunpack.c.l.b16 %v176
      %v299 = vunpack.c.l.b16 %v177
      %v300 = vunpack.c.l.b16 %v178
      %v301 = vunpack.c.l.b16 %v179
      %v302 = vunpack.c.l.b16 %v180
      %v303 = vunpack.c.l.b16 %v181
      %v304 = vunpack.c.l.b16 %v182
      %v305 = vunpack.c.l.b16 %v183
      %v306 = vunpack.c.l.b16 %v184
      %v307 = vunpack.c.l.b16 %v185
      %v308 = vunpack.c.l.b16 %v186
      %v309 = vunpack.c.l.b16 %v187
      %v310 = vunpack.c.l.b16 %v188
      %v311 = vunpack.c.l.b16 %v189
      %v312 = vunpack.c.l.b16 %v190
      %v313 = vunpack.c.l.b16 %v191
      %v314 = vunpack.c.l.b16 %v192
      %v315 = vunpack.c.l.b16 %v193
      %v316 = vunpack.c.l.b16 %v194
      %v317 = vunpack.c.l.b16 %v195
      %v318 = vunpack.c.l.b16 %v196
      %v319 = vunpack.c.l.b16 %v197
      %v320 = vpack.c.b16 %v285, %v284
      %v321 = vpack.c.b16 %v287, %v286
      %v322 = vpack.c.b16 %v289, %v288
      %v323 = vpack.c.b16 %v291, %v290
      %v324 = vpack.c.b16 %v293, %v292
      %v325 = vpack.c.b16 %v295, %v294
      %v326 = vpack.c.b16 %v297, %v296
      %v327 = vpack.c.b16 %v299, %v298
      %v328 = vpack.c.b16 %v301, %v300
      %v329 = vpack.c.b16 %v303, %v302
      %v330 = vpack.c.b16 %v305, %v304
      %v331 = vpack.c.b16 %v307, %v306
      %v332 = vpack.c.b16 %v309, %v308
      %v333 = vpack.c.b16 %v311, %v310
      %v334 = vpack.c.b16 %v313, %v312
      %v335 = vpack.c.b16 %v315, %v314
      %v336 = vpack.c.b16 %v317, %v316
      %v337 = vpack.c.b16 %v319, %v318
      %vm356 = vcmask 261120
      %v358 = vsel %vm356, %v235, 0
      %v361 = vsel %vm356, %v238, 0
      %v364 = vsel %vm356, %v241, 0
      %366 = vmatprep.subr.bf16.mxu0 0
      %367 = vmatpush1.bf16.msra.mxu0 %v327
      %368 = vmatprep.subr.bf16.mxu0 0
      %369 = vmatpush1.bf16.msra.mxu0 %v326
      %370 = vmatprep.subr.bf16.mxu0 0
      %371 = vmatpush1.bf16.msra.mxu0 %v325
      %372 = vmatprep.subr.bf16.mxu0 0
      %373 = vmatpush1.bf16.msra.mxu0 %v324
      %374 = vmatprep.subr.bf16.mxu0 0
      %375 = vmatpush1.bf16.msra.mxu0 %v323
      %376 = vmatprep.subr.bf16.mxu0 0
      %377 = vmatpush1.bf16.msra.mxu0 %v322
      %378 = vmatprep.subr.bf16.mxu0 0
      %379 = vmatpush1.bf16.msra.mxu0 %v321
      %380 = vmatprep.subr.bf16.mxu0 0
      %381 = vmatpush1.bf16.msra.mxu0 %v320
      %382 = vmatprep.subr.bf16.mxu0 0
      %383 = vmatpush2.bf16.msra.mxu0 %v335
      %384 = vmatprep.subr.bf16.mxu0 0
      %385 = vmatpush2.bf16.msra.mxu0 %v334
      %386 = vmatprep.subr.bf16.mxu0 0
      %387 = vmatpush2.bf16.msra.mxu0 %v333
      %388 = vmatprep.subr.bf16.mxu0 0
      %389 = vmatpush2.bf16.msra.mxu0 %v332
      %390 = vmatprep.subr.bf16.mxu0 0
      %391 = vmatpush2.bf16.msra.mxu0 %v331
      %392 = vmatprep.subr.bf16.mxu0 0
      %393 = vmatpush2.bf16.msra.mxu0 %v330
      %394 = vmatprep.subr.bf16.mxu0 0
      %395 = vmatpush2.bf16.msra.mxu0 %v329
      %396 = vmatprep.subr.bf16.mxu0 0
      %397 = vmatpush2.bf16.msra.mxu0 %v328
      %398 = vmatprep.mubr.bf16.mxu0 %v234
      %399 = vmatmul.mubr.bf16.gmra.mxu0 %v233
      %v400 = vpop.f32.mrf.mxu0
      %v401 = vadd.f32 0.0, %v400
      %v402 = vpop.f32.mrf.mxu0
      %v403 = vpop.f32.mrf.mxu0
      %v404 = vadd.f32 0.0, %v403
      %v405 = vpop.f32.mrf.mxu0
      %406 = vmatprep.mubr.bf16.mxu0 %v237
      %407 = vmatmul.mubr.bf16.gmra.mxu0 %v236
      %v408 = vpop.f32.mrf.mxu0
      %v409 = vadd.f32 0.0, %v408
      %v410 = vpop.f32.mrf.mxu0
      %v411 = vpop.f32.mrf.mxu0
      %v412 = vadd.f32 0.0, %v411
      %v413 = vpop.f32.mrf.mxu0
      %414 = vmatprep.mubr.bf16.mxu0 %v240
      %415 = vmatmul.mubr.bf16.gmra.mxu0 %v239
      %v416 = vpop.f32.mrf.mxu0
      %v417 = vadd.f32 0.0, %v416
      %v418 = vpop.f32.mrf.mxu0
      %v419 = vpop.f32.mrf.mxu0
      %v420 = vpop.f32.mrf.mxu0
      %421 = vdwg.mxu0
      %422 = vmatprep.subr.bf16.mxu0 0
      %423 = vmatpush1.bf16.msra.mxu0 0
      %424 = vmatprep.subr.bf16.mxu0 0
      %425 = vmatpush1.bf16.msra.mxu0 0
      %426 = vmatprep.subr.bf16.mxu0 0
      %427 = vmatpush1.bf16.msra.mxu0 0
      %428 = vmatprep.subr.bf16.mxu0 0
      %429 = vmatpush1.bf16.msra.mxu0 0
      %430 = vmatprep.subr.bf16.mxu0 0
      %431 = vmatpush1.bf16.msra.mxu0 0
      %432 = vmatprep.subr.bf16.mxu0 0
      %433 = vmatpush1.bf16.msra.mxu0 0
      %434 = vmatprep.subr.bf16.mxu0 0
      %435 = vmatpush1.bf16.msra.mxu0 %v337
      %436 = vmatprep.subr.bf16.mxu0 0
      %437 = vmatpush1.bf16.msra.mxu0 %v336
      %438 = vmatprep.subr.bf16.mxu0 0
      %439 = vmatpush2.bf16.msra.mxu0 0
      %440 = vmatprep.subr.bf16.mxu0 0
      %441 = vmatpush2.bf16.msra.mxu0 0
      %442 = vmatprep.subr.bf16.mxu0 0
      %443 = vmatpush2.bf16.msra.mxu0 0
      %444 = vmatprep.subr.bf16.mxu0 0
      %445 = vmatpush2.bf16.msra.mxu0 0
      %446 = vmatprep.subr.bf16.mxu0 0
      %447 = vmatpush2.bf16.msra.mxu0 0
      %448 = vmatprep.subr.bf16.mxu0 0
      %449 = vmatpush2.bf16.msra.mxu0 0
      %450 = vmatprep.subr.bf16.mxu0 0
      %451 = vmatpush2.bf16.msra.mxu0 0
      %452 = vmatprep.subr.bf16.mxu0 0
      %453 = vmatpush2.bf16.msra.mxu0 0
      %454 = vmatprep.mubr.bf16.mxu0 0
      %455 = vmatmul.mubr.bf16.gmra.mxu0 %v358
      %v456 = vpop.f32.mrf.mxu0
      %v457 = vadd.f32 %v401, %v456
      %v458 = vpop.f32.mrf.mxu0
      %v459 = vpop.f32.mrf.mxu0
      %v460 = vadd.f32 %v404, %v459
      %v461 = vpop.f32.mrf.mxu0
      %462 = vmatprep.mubr.bf16.mxu0 0
      %463 = vmatmul.mubr.bf16.gmra.mxu0 %v361
      %v464 = vpop.f32.mrf.mxu0
      %v465 = vadd.f32 %v409, %v464
      %v466 = vpop.f32.mrf.mxu0
      %v467 = vpop.f32.mrf.mxu0
      %v468 = vadd.f32 %v412, %v467
      %v469 = vpop.f32.mrf.mxu0
      %470 = vmatprep.mubr.bf16.mxu0 0
      %471 = vmatmul.mubr.bf16.gmra.mxu0 %v364
      %v472 = vpop.f32.mrf.mxu0
      %v473 = vadd.f32 %v417, %v472
      %v474 = vpop.f32.mrf.mxu0
      %v475 = vpop.f32.mrf.mxu0
      %v476 = vpop.f32.mrf.mxu0
      %477 = vdwg.mxu0
      %vm478 = vcmask 523264
      %v479 = vsel %vm478, %v457, 0.0
      %v480 = vsel %vm478, %v460, 0.0
      %v481 = vadd.f32 %v479, %v480
      %v482 = vsel %vm478, %v465, 0.0
      %v483 = vadd.f32 %v481, %v482
      %v484 = vsel %vm478, %v468, 0.0
      %v485 = vadd.f32 %v483, %v484
      %vm486 = vcmask 519168
      %v487 = vsel %vm486, %v473, 0.0
      %v488 = vadd.f32 %v485, %v487
      %v489 = vrot.slane %v488, 4
      %v490 = vadd.f32 %v488, %v489
      %v491 = vrot.slane %v490, 2
      %v492 = vadd.f32 %v490, %v491
      %v493 = vrot.slane %v492, 1
      %v494 = vadd.f32 %v492, %v493
      %v495 = vadd.f32 %v494, 0.0
      %v496 = vmul.f32 %v457, %v457
      %v497 = vmul.f32 %v460, %v460
      %v498 = vmul.f32 %v465, %v465
      %v499 = vmul.f32 %v468, %v468
      %v500 = vmul.f32 %v473, %v473
      %v501 = vsel %vm478, %v496, 0.0
      %v502 = vsel %vm478, %v497, 0.0
      %v503 = vadd.f32 %v501, %v502
      %v504 = vsel %vm478, %v498, 0.0
      %v505 = vadd.f32 %v503, %v504
      %v506 = vsel %vm478, %v499, 0.0
      %v507 = vadd.f32 %v505, %v506
      %v508 = vsel %vm486, %v500, 0.0
      %v509 = vadd.f32 %v507, %v508
      %v510 = vrot.slane %v509, 4
      %v511 = vadd.f32 %v509, %v510
      %v512 = vrot.slane %v511, 2
      %v513 = vadd.f32 %v511, %v512
      %v514 = vrot.slane %v513, 1
      %v515 = vadd.f32 %v513, %v514
      %v516 = vadd.f32 %v515, 0.0
      %s517 = scalar_lea.vmem %s153, 60
      %v518 = vld [vmem:[%s517] sm:$0xff]
      %v519 = vld [vmem:[%s517 + $0x8] sm:$0xf]
      %v520 = vld [vmem:[%s517 + $0xc] sm:$0xff]
      %v521 = vld [vmem:[%s517 + $0x14] sm:$0xf]
      %v522 = vld [vmem:[%s517 + $0x18] sm:$0xff]
      %v523 = vld [vmem:[%s517 + $0x20] sm:$0xf]
      %v524 = vld [vmem:[%s517 + $0x24] sm:$0xff]
      %v525 = vld [vmem:[%s517 + $0x2c] sm:$0xf]
      %v526 = vld [vmem:[%s517 + $0x30] sm:$0x33]
      %v527 = vld [vmem:[%s517 + $0x38] sm:$0x3]
      %v538 = vunpack.c.l.b16 %v518
      %v539 = vunpack.c.h.b16 %v518
      %v540 = vunpack.c.l.b16 %v519
      %v541 = vunpack.c.l.b16 %v520
      %v542 = vunpack.c.h.b16 %v520
      %v543 = vunpack.c.l.b16 %v521
      %v544 = vunpack.c.l.b16 %v522
      %v545 = vunpack.c.h.b16 %v522
      %v546 = vunpack.c.l.b16 %v523
      %v547 = vunpack.c.l.b16 %v524
      %v548 = vunpack.c.h.b16 %v524
      %v549 = vunpack.c.l.b16 %v525
      %v550 = vunpack.c.l.b16 %v526
      %v551 = vunpack.c.h.b16 %v526
      %v552 = vunpack.c.l.b16 %v527
      %v553 = vpack.c.b16 %v541, %v538
      %v554 = vpack.c.b16 %v542, %v539
      %v555 = vpack.c.b16 %v543, %v540
      %v556 = vpack.c.b16 %v547, %v544
      %v557 = vpack.c.b16 %v548, %v545
      %v558 = vpack.c.b16 %v549, %v546
      %v559 = vpack.c.b16 %v550, %v550
      %v560 = vpack.c.b16 %v551, %v551
      %v561 = vpack.c.b16 %v552, %v552
      %v569 = vsel %vm356, %v555, 0
      %v572 = vsel %vm356, %v558, 0
      %v575 = vsel %vm356, %v561, 0
      %577 = vmatprep.subr.bf16.mxu0 0
      %578 = vmatpush1.bf16.msra.mxu0 %v327
      %579 = vmatprep.subr.bf16.mxu0 0
      %580 = vmatpush1.bf16.msra.mxu0 %v326
      %581 = vmatprep.subr.bf16.mxu0 0
      %582 = vmatpush1.bf16.msra.mxu0 %v325
      %583 = vmatprep.subr.bf16.mxu0 0
      %584 = vmatpush1.bf16.msra.mxu0 %v324
      %585 = vmatprep.subr.bf16.mxu0 0
      %586 = vmatpush1.bf16.msra.mxu0 %v323
      %587 = vmatprep.subr.bf16.mxu0 0
      %588 = vmatpush1.bf16.msra.mxu0 %v322
      %589 = vmatprep.subr.bf16.mxu0 0
      %590 = vmatpush1.bf16.msra.mxu0 %v321
      %591 = vmatprep.subr.bf16.mxu0 0
      %592 = vmatpush1.bf16.msra.mxu0 %v320
      %593 = vmatprep.subr.bf16.mxu0 0
      %594 = vmatpush2.bf16.msra.mxu0 %v335
      %595 = vmatprep.subr.bf16.mxu0 0
      %596 = vmatpush2.bf16.msra.mxu0 %v334
      %597 = vmatprep.subr.bf16.mxu0 0
      %598 = vmatpush2.bf16.msra.mxu0 %v333
      %599 = vmatprep.subr.bf16.mxu0 0
      %600 = vmatpush2.bf16.msra.mxu0 %v332
      %601 = vmatprep.subr.bf16.mxu0 0
      %602 = vmatpush2.bf16.msra.mxu0 %v331
      %603 = vmatprep.subr.bf16.mxu0 0
      %604 = vmatpush2.bf16.msra.mxu0 %v330
      %605 = vmatprep.subr.bf16.mxu0 0
      %606 = vmatpush2.bf16.msra.mxu0 %v329
      %607 = vmatprep.subr.bf16.mxu0 0
      %608 = vmatpush2.bf16.msra.mxu0 %v328
      %609 = vmatprep.mubr.bf16.mxu0 %v554
      %610 = vmatmul.mubr.bf16.gmra.mxu0 %v553
      %v611 = vpop.f32.mrf.mxu0
      %v612 = vadd.f32 0.0, %v611
      %v613 = vpop.f32.mrf.mxu0
      %v614 = vpop.f32.mrf.mxu0
      %v615 = vadd.f32 0.0, %v614
      %v616 = vpop.f32.mrf.mxu0
      %617 = vmatprep.mubr.bf16.mxu0 %v557
      %618 = vmatmul.mubr.bf16.gmra.mxu0 %v556
      %v619 = vpop.f32.mrf.mxu0
      %v620 = vadd.f32 0.0, %v619
      %v621 = vpop.f32.mrf.mxu0
      %v622 = vpop.f32.mrf.mxu0
      %v623 = vadd.f32 0.0, %v622
      %v624 = vpop.f32.mrf.mxu0
      %625 = vmatprep.mubr.bf16.mxu0 %v560
      %626 = vmatmul.mubr.bf16.gmra.mxu0 %v559
      %v627 = vpop.f32.mrf.mxu0
      %v628 = vadd.f32 0.0, %v627
      %v629 = vpop.f32.mrf.mxu0
      %v630 = vpop.f32.mrf.mxu0
      %v631 = vpop.f32.mrf.mxu0
      %632 = vdwg.mxu0
      %633 = vmatprep.subr.bf16.mxu0 0
      %634 = vmatpush1.bf16.msra.mxu0 0
      %635 = vmatprep.subr.bf16.mxu0 0
      %636 = vmatpush1.bf16.msra.mxu0 0
      %637 = vmatprep.subr.bf16.mxu0 0
      %638 = vmatpush1.bf16.msra.mxu0 0
      %639 = vmatprep.subr.bf16.mxu0 0
      %640 = vmatpush1.bf16.msra.mxu0 0
      %641 = vmatprep.subr.bf16.mxu0 0
      %642 = vmatpush1.bf16.msra.mxu0 0
      %643 = vmatprep.subr.bf16.mxu0 0
      %644 = vmatpush1.bf16.msra.mxu0 0
      %645 = vmatprep.subr.bf16.mxu0 0
      %646 = vmatpush1.bf16.msra.mxu0 %v337
      %647 = vmatprep.subr.bf16.mxu0 0
      %648 = vmatpush1.bf16.msra.mxu0 %v336
      %649 = vmatprep.subr.bf16.mxu0 0
      %650 = vmatpush2.bf16.msra.mxu0 0
      %651 = vmatprep.subr.bf16.mxu0 0
      %652 = vmatpush2.bf16.msra.mxu0 0
      %653 = vmatprep.subr.bf16.mxu0 0
      %654 = vmatpush2.bf16.msra.mxu0 0
      %655 = vmatprep.subr.bf16.mxu0 0
      %656 = vmatpush2.bf16.msra.mxu0 0
      %657 = vmatprep.subr.bf16.mxu0 0
      %658 = vmatpush2.bf16.msra.mxu0 0
      %659 = vmatprep.subr.bf16.mxu0 0
      %660 = vmatpush2.bf16.msra.mxu0 0
      %661 = vmatprep.subr.bf16.mxu0 0
      %662 = vmatpush2.bf16.msra.mxu0 0
      %663 = vmatprep.subr.bf16.mxu0 0
      %664 = vmatpush2.bf16.msra.mxu0 0
      %665 = vmatprep.mubr.bf16.mxu0 0
      %666 = vmatmul.mubr.bf16.gmra.mxu0 %v569
      %v667 = vpop.f32.mrf.mxu0
      %v668 = vadd.f32 %v612, %v667
      %v669 = vpop.f32.mrf.mxu0
      %v670 = vpop.f32.mrf.mxu0
      %v671 = vadd.f32 %v615, %v670
      %v672 = vpop.f32.mrf.mxu0
      %673 = vmatprep.mubr.bf16.mxu0 0
      %674 = vmatmul.mubr.bf16.gmra.mxu0 %v572
      %v675 = vpop.f32.mrf.mxu0
      %v676 = vadd.f32 %v620, %v675
      %v677 = vpop.f32.mrf.mxu0
      %v678 = vpop.f32.mrf.mxu0
      %v679 = vadd.f32 %v623, %v678
      %v680 = vpop.f32.mrf.mxu0
      %681 = vmatprep.mubr.bf16.mxu0 0
      %682 = vmatmul.mubr.bf16.gmra.mxu0 %v575
      %v683 = vpop.f32.mrf.mxu0
      %v684 = vadd.f32 %v628, %v683
      %v685 = vpop.f32.mrf.mxu0
      %v686 = vpop.f32.mrf.mxu0
      %v687 = vpop.f32.mrf.mxu0
      %688 = vdwg.mxu0
      %v689 = vsel %vm478, %v668, 0.0
      %v690 = vsel %vm478, %v671, 0.0
      %v691 = vadd.f32 %v689, %v690
      %v692 = vsel %vm478, %v676, 0.0
      %v693 = vadd.f32 %v691, %v692
      %v694 = vsel %vm478, %v679, 0.0
      %v695 = vadd.f32 %v693, %v694
      %v696 = vsel %vm486, %v684, 0.0
      %v697 = vadd.f32 %v695, %v696
      %v698 = vrot.slane %v697, 4
      %v699 = vadd.f32 %v697, %v698
      %v700 = vrot.slane %v699, 2
      %v701 = vadd.f32 %v699, %v700
      %v702 = vrot.slane %v701, 1
      %v703 = vadd.f32 %v701, %v702
      %v704 = vadd.f32 %v495, %v703
      %v705 = vmul.f32 %v668, %v668
      %v706 = vmul.f32 %v671, %v671
      %v707 = vmul.f32 %v676, %v676
      %v708 = vmul.f32 %v679, %v679
      %v709 = vmul.f32 %v684, %v684
      %v710 = vsel %vm478, %v705, 0.0
      %v711 = vsel %vm478, %v706, 0.0
      %v712 = vadd.f32 %v710, %v711
      %v713 = vsel %vm478, %v707, 0.0
      %v714 = vadd.f32 %v712, %v713
      %v715 = vsel %vm478, %v708, 0.0
      %v716 = vadd.f32 %v714, %v715
      %v717 = vsel %vm486, %v709, 0.0
      %v718 = vadd.f32 %v716, %v717
      %v719 = vrot.slane %v718, 4
      %v720 = vadd.f32 %v718, %v719
      %v721 = vrot.slane %v720, 2
      %v722 = vadd.f32 %v720, %v721
      %v723 = vrot.slane %v722, 1
      %v724 = vadd.f32 %v722, %v723
      %v725 = vadd.f32 %v516, %v724
      %s726 = scalar_lea.vmem %s153, 120
      %v727 = vld [vmem:[%s726] sm:$0xff]
      %v728 = vld [vmem:[%s726 + $0x8] sm:$0xf]
      %v729 = vld [vmem:[%s726 + $0xc] sm:$0xff]
      %v730 = vld [vmem:[%s726 + $0x14] sm:$0xf]
      %v731 = vld [vmem:[%s726 + $0x18] sm:$0xff]
      %v732 = vld [vmem:[%s726 + $0x20] sm:$0xf]
      %v733 = vld [vmem:[%s726 + $0x24] sm:$0xff]
      %v734 = vld [vmem:[%s726 + $0x2c] sm:$0xf]
      %v735 = vld [vmem:[%s726 + $0x30] sm:$0x33]
      %v736 = vld [vmem:[%s726 + $0x38] sm:$0x3]
      %v747 = vunpack.c.l.b16 %v727
      %v748 = vunpack.c.h.b16 %v727
      %v749 = vunpack.c.l.b16 %v728
      %v750 = vunpack.c.l.b16 %v729
      %v751 = vunpack.c.h.b16 %v729
      %v752 = vunpack.c.l.b16 %v730
      %v753 = vunpack.c.l.b16 %v731
      %v754 = vunpack.c.h.b16 %v731
      %v755 = vunpack.c.l.b16 %v732
      %v756 = vunpack.c.l.b16 %v733
      %v757 = vunpack.c.h.b16 %v733
      %v758 = vunpack.c.l.b16 %v734
      %v759 = vunpack.c.l.b16 %v735
      %v760 = vunpack.c.h.b16 %v735
      %v761 = vunpack.c.l.b16 %v736
      %v762 = vpack.c.b16 %v750, %v747
      %v763 = vpack.c.b16 %v751, %v748
      %v764 = vpack.c.b16 %v752, %v749
      %v765 = vpack.c.b16 %v756, %v753
      %v766 = vpack.c.b16 %v757, %v754
      %v767 = vpack.c.b16 %v758, %v755
      %v768 = vpack.c.b16 %v759, %v759
      %v769 = vpack.c.b16 %v760, %v760
      %v770 = vpack.c.b16 %v761, %v761
      %v778 = vsel %vm356, %v764, 0
      %v781 = vsel %vm356, %v767, 0
      %v784 = vsel %vm356, %v770, 0
      %786 = vmatprep.subr.bf16.mxu0 0
      %787 = vmatpush1.bf16.msra.mxu0 %v327
      %788 = vmatprep.subr.bf16.mxu0 0
      %789 = vmatpush1.bf16.msra.mxu0 %v326
      %790 = vmatprep.subr.bf16.mxu0 0
      %791 = vmatpush1.bf16.msra.mxu0 %v325
      %792 = vmatprep.subr.bf16.mxu0 0
      %793 = vmatpush1.bf16.msra.mxu0 %v324
      %794 = vmatprep.subr.bf16.mxu0 0
      %795 = vmatpush1.bf16.msra.mxu0 %v323
      %796 = vmatprep.subr.bf16.mxu0 0
      %797 = vmatpush1.bf16.msra.mxu0 %v322
      %798 = vmatprep.subr.bf16.mxu0 0
      %799 = vmatpush1.bf16.msra.mxu0 %v321
      %800 = vmatprep.subr.bf16.mxu0 0
      %801 = vmatpush1.bf16.msra.mxu0 %v320
      %802 = vmatprep.subr.bf16.mxu0 0
      %803 = vmatpush2.bf16.msra.mxu0 %v335
      %804 = vmatprep.subr.bf16.mxu0 0
      %805 = vmatpush2.bf16.msra.mxu0 %v334
      %806 = vmatprep.subr.bf16.mxu0 0
      %807 = vmatpush2.bf16.msra.mxu0 %v333
      %808 = vmatprep.subr.bf16.mxu0 0
      %809 = vmatpush2.bf16.msra.mxu0 %v332
      %810 = vmatprep.subr.bf16.mxu0 0
      %811 = vmatpush2.bf16.msra.mxu0 %v331
      %812 = vmatprep.subr.bf16.mxu0 0
      %813 = vmatpush2.bf16.msra.mxu0 %v330
      %814 = vmatprep.subr.bf16.mxu0 0
      %815 = vmatpush2.bf16.msra.mxu0 %v329
      %816 = vmatprep.subr.bf16.mxu0 0
      %817 = vmatpush2.bf16.msra.mxu0 %v328
      %818 = vmatprep.mubr.bf16.mxu0 %v763
      %819 = vmatmul.mubr.bf16.gmra.mxu0 %v762
      %v820 = vpop.f32.mrf.mxu0
      %v821 = vadd.f32 0.0, %v820
      %v822 = vpop.f32.mrf.mxu0
      %v823 = vpop.f32.mrf.mxu0
      %v824 = vadd.f32 0.0, %v823
      %v825 = vpop.f32.mrf.mxu0
      %826 = vmatprep.mubr.bf16.mxu0 %v766
      %827 = vmatmul.mubr.bf16.gmra.mxu0 %v765
      %v828 = vpop.f32.mrf.mxu0
      %v829 = vadd.f32 0.0, %v828
      %v830 = vpop.f32.mrf.mxu0
      %v831 = vpop.f32.mrf.mxu0
      %v832 = vadd.f32 0.0, %v831
      %v833 = vpop.f32.mrf.mxu0
      %834 = vmatprep.mubr.bf16.mxu0 %v769
      %835 = vmatmul.mubr.bf16.gmra.mxu0 %v768
      %v836 = vpop.f32.mrf.mxu0
      %v837 = vadd.f32 0.0, %v836
      %v838 = vpop.f32.mrf.mxu0
      %v839 = vpop.f32.mrf.mxu0
      %v840 = vpop.f32.mrf.mxu0
      %841 = vdwg.mxu0
      %842 = vmatprep.subr.bf16.mxu0 0
      %843 = vmatpush1.bf16.msra.mxu0 0
      %844 = vmatprep.subr.bf16.mxu0 0
      %845 = vmatpush1.bf16.msra.mxu0 0
      %846 = vmatprep.subr.bf16.mxu0 0
      %847 = vmatpush1.bf16.msra.mxu0 0
      %848 = vmatprep.subr.bf16.mxu0 0
      %849 = vmatpush1.bf16.msra.mxu0 0
      %850 = vmatprep.subr.bf16.mxu0 0
      %851 = vmatpush1.bf16.msra.mxu0 0
      %852 = vmatprep.subr.bf16.mxu0 0
      %853 = vmatpush1.bf16.msra.mxu0 0
      %854 = vmatprep.subr.bf16.mxu0 0
      %855 = vmatpush1.bf16.msra.mxu0 %v337
      %856 = vmatprep.subr.bf16.mxu0 0
      %857 = vmatpush1.bf16.msra.mxu0 %v336
      %858 = vmatprep.subr.bf16.mxu0 0
      %859 = vmatpush2.bf16.msra.mxu0 0
      %860 = vmatprep.subr.bf16.mxu0 0
      %861 = vmatpush2.bf16.msra.mxu0 0
      %862 = vmatprep.subr.bf16.mxu0 0
      %863 = vmatpush2.bf16.msra.mxu0 0
      %864 = vmatprep.subr.bf16.mxu0 0
      %865 = vmatpush2.bf16.msra.mxu0 0
      %866 = vmatprep.subr.bf16.mxu0 0
      %867 = vmatpush2.bf16.msra.mxu0 0
      %868 = vmatprep.subr.bf16.mxu0 0
      %869 = vmatpush2.bf16.msra.mxu0 0
      %870 = vmatprep.subr.bf16.mxu0 0
      %871 = vmatpush2.bf16.msra.mxu0 0
      %872 = vmatprep.subr.bf16.mxu0 0
      %873 = vmatpush2.bf16.msra.mxu0 0
      %874 = vmatprep.mubr.bf16.mxu0 0
      %875 = vmatmul.mubr.bf16.gmra.mxu0 %v778
      %v876 = vpop.f32.mrf.mxu0
      %v877 = vadd.f32 %v821, %v876
      %v878 = vpop.f32.mrf.mxu0
      %v879 = vpop.f32.mrf.mxu0
      %v880 = vadd.f32 %v824, %v879
      %v881 = vpop.f32.mrf.mxu0
      %882 = vmatprep.mubr.bf16.mxu0 0
      %883 = vmatmul.mubr.bf16.gmra.mxu0 %v781
      %v884 = vpop.f32.mrf.mxu0
      %v885 = vadd.f32 %v829, %v884
      %v886 = vpop.f32.mrf.mxu0
      %v887 = vpop.f32.mrf.mxu0
      %v888 = vadd.f32 %v832, %v887
      %v889 = vpop.f32.mrf.mxu0
      %890 = vmatprep.mubr.bf16.mxu0 0
      %891 = vmatmul.mubr.bf16.gmra.mxu0 %v784
      %v892 = vpop.f32.mrf.mxu0
      %v893 = vadd.f32 %v837, %v892
      %v894 = vpop.f32.mrf.mxu0
      %v895 = vpop.f32.mrf.mxu0
      %v896 = vpop.f32.mrf.mxu0
      %897 = vdwg.mxu0
      %v898 = vsel %vm478, %v877, 0.0
      %v899 = vsel %vm478, %v880, 0.0
      %v900 = vadd.f32 %v898, %v899
      %v901 = vsel %vm478, %v885, 0.0
      %v902 = vadd.f32 %v900, %v901
      %v903 = vsel %vm478, %v888, 0.0
      %v904 = vadd.f32 %v902, %v903
      %v905 = vsel %vm486, %v893, 0.0
      %v906 = vadd.f32 %v904, %v905
      %v907 = vrot.slane %v906, 4
      %v908 = vadd.f32 %v906, %v907
      %v909 = vrot.slane %v908, 2
      %v910 = vadd.f32 %v908, %v909
      %v911 = vrot.slane %v910, 1
      %v912 = vadd.f32 %v910, %v911
      %v913 = vadd.f32 %v704, %v912
      %v914 = vmul.f32 %v877, %v877
      %v915 = vmul.f32 %v880, %v880
      %v916 = vmul.f32 %v885, %v885
      %v917 = vmul.f32 %v888, %v888
      %v918 = vmul.f32 %v893, %v893
      %v919 = vsel %vm478, %v914, 0.0
      %v920 = vsel %vm478, %v915, 0.0
      %v921 = vadd.f32 %v919, %v920
      %v922 = vsel %vm478, %v916, 0.0
      %v923 = vadd.f32 %v921, %v922
      %v924 = vsel %vm478, %v917, 0.0
      %v925 = vadd.f32 %v923, %v924
      %v926 = vsel %vm486, %v918, 0.0
      %v927 = vadd.f32 %v925, %v926
      %v928 = vrot.slane %v927, 4
      %v929 = vadd.f32 %v927, %v928
      %v930 = vrot.slane %v929, 2
      %v931 = vadd.f32 %v929, %v930
      %v932 = vrot.slane %v931, 1
      %v933 = vadd.f32 %v931, %v932
      %v934 = vadd.f32 %v725, %v933
      %s935 = scalar_lea.vmem %s153, 180
      %v936 = vld [vmem:[%s935] sm:$0xff]
      %v937 = vld [vmem:[%s935 + $0x8] sm:$0xf]
      %v938 = vld [vmem:[%s935 + $0xc] sm:$0xff]
      %v939 = vld [vmem:[%s935 + $0x14] sm:$0xf]
      %v940 = vld [vmem:[%s935 + $0x18] sm:$0xff]
      %v941 = vld [vmem:[%s935 + $0x20] sm:$0xf]
      %v942 = vld [vmem:[%s935 + $0x24] sm:$0xff]
      %v943 = vld [vmem:[%s935 + $0x2c] sm:$0xf]
      %v944 = vld [vmem:[%s935 + $0x30] sm:$0x33]
      %v945 = vld [vmem:[%s935 + $0x38] sm:$0x3]
      %v956 = vunpack.c.l.b16 %v936
      %v957 = vunpack.c.h.b16 %v936
      %v958 = vunpack.c.l.b16 %v937
      %v959 = vunpack.c.l.b16 %v938
      %v960 = vunpack.c.h.b16 %v938
      %v961 = vunpack.c.l.b16 %v939
      %v962 = vunpack.c.l.b16 %v940
      %v963 = vunpack.c.h.b16 %v940
      %v964 = vunpack.c.l.b16 %v941
      %v965 = vunpack.c.l.b16 %v942
      %v966 = vunpack.c.h.b16 %v942
      %v967 = vunpack.c.l.b16 %v943
      %v968 = vunpack.c.l.b16 %v944
      %v969 = vunpack.c.h.b16 %v944
      %v970 = vunpack.c.l.b16 %v945
      %v971 = vpack.c.b16 %v959, %v956
      %v972 = vpack.c.b16 %v960, %v957
      %v973 = vpack.c.b16 %v961, %v958
      %v974 = vpack.c.b16 %v965, %v962
      %v975 = vpack.c.b16 %v966, %v963
      %v976 = vpack.c.b16 %v967, %v964
      %v977 = vpack.c.b16 %v968, %v968
      %v978 = vpack.c.b16 %v969, %v969
      %v979 = vpack.c.b16 %v970, %v970
      %v987 = vsel %vm356, %v973, 0
      %v990 = vsel %vm356, %v976, 0
      %v993 = vsel %vm356, %v979, 0
      %995 = vmatprep.subr.bf16.mxu0 0
      %996 = vmatpush1.bf16.msra.mxu0 %v327
      %997 = vmatprep.subr.bf16.mxu0 0
      %998 = vmatpush1.bf16.msra.mxu0 %v326
      %999 = vmatprep.subr.bf16.mxu0 0
      %1000 = vmatpush1.bf16.msra.mxu0 %v325
      %1001 = vmatprep.subr.bf16.mxu0 0
      %1002 = vmatpush1.bf16.msra.mxu0 %v324
      %1003 = vmatprep.subr.bf16.mxu0 0
      %1004 = vmatpush1.bf16.msra.mxu0 %v323
      %1005 = vmatprep.subr.bf16.mxu0 0
      %1006 = vmatpush1.bf16.msra.mxu0 %v322
      %1007 = vmatprep.subr.bf16.mxu0 0
      %1008 = vmatpush1.bf16.msra.mxu0 %v321
      %1009 = vmatprep.subr.bf16.mxu0 0
      %1010 = vmatpush1.bf16.msra.mxu0 %v320
      %1011 = vmatprep.subr.bf16.mxu0 0
      %1012 = vmatpush2.bf16.msra.mxu0 %v335
      %1013 = vmatprep.subr.bf16.mxu0 0
      %1014 = vmatpush2.bf16.msra.mxu0 %v334
      %1015 = vmatprep.subr.bf16.mxu0 0
      %1016 = vmatpush2.bf16.msra.mxu0 %v333
      %1017 = vmatprep.subr.bf16.mxu0 0
      %1018 = vmatpush2.bf16.msra.mxu0 %v332
      %1019 = vmatprep.subr.bf16.mxu0 0
      %1020 = vmatpush2.bf16.msra.mxu0 %v331
      %1021 = vmatprep.subr.bf16.mxu0 0
      %1022 = vmatpush2.bf16.msra.mxu0 %v330
      %1023 = vmatprep.subr.bf16.mxu0 0
      %1024 = vmatpush2.bf16.msra.mxu0 %v329
      %1025 = vmatprep.subr.bf16.mxu0 0
      %1026 = vmatpush2.bf16.msra.mxu0 %v328
      %1027 = vmatprep.mubr.bf16.mxu0 %v972
      %1028 = vmatmul.mubr.bf16.gmra.mxu0 %v971
      %v1029 = vpop.f32.mrf.mxu0
      %v1030 = vadd.f32 0.0, %v1029
      %v1031 = vpop.f32.mrf.mxu0
      %v1032 = vpop.f32.mrf.mxu0
      %v1033 = vadd.f32 0.0, %v1032
      %v1034 = vpop.f32.mrf.mxu0
      %1035 = vmatprep.mubr.bf16.mxu0 %v975
      %1036 = vmatmul.mubr.bf16.gmra.mxu0 %v974
      %v1037 = vpop.f32.mrf.mxu0
      %v1038 = vadd.f32 0.0, %v1037
      %v1039 = vpop.f32.mrf.mxu0
      %v1040 = vpop.f32.mrf.mxu0
      %v1041 = vadd.f32 0.0, %v1040
      %v1042 = vpop.f32.mrf.mxu0
      %1043 = vmatprep.mubr.bf16.mxu0 %v978
      %1044 = vmatmul.mubr.bf16.gmra.mxu0 %v977
      %v1045 = vpop.f32.mrf.mxu0
      %v1046 = vadd.f32 0.0, %v1045
      %v1047 = vpop.f32.mrf.mxu0
      %v1048 = vpop.f32.mrf.mxu0
      %v1049 = vpop.f32.mrf.mxu0
      %1050 = vdwg.mxu0
      %1051 = vmatprep.subr.bf16.mxu0 0
      %1052 = vmatpush1.bf16.msra.mxu0 0
      %1053 = vmatprep.subr.bf16.mxu0 0
      %1054 = vmatpush1.bf16.msra.mxu0 0
      %1055 = vmatprep.subr.bf16.mxu0 0
      %1056 = vmatpush1.bf16.msra.mxu0 0
      %1057 = vmatprep.subr.bf16.mxu0 0
      %1058 = vmatpush1.bf16.msra.mxu0 0
      %1059 = vmatprep.subr.bf16.mxu0 0
      %1060 = vmatpush1.bf16.msra.mxu0 0
      %1061 = vmatprep.subr.bf16.mxu0 0
      %1062 = vmatpush1.bf16.msra.mxu0 0
      %1063 = vmatprep.subr.bf16.mxu0 0
      %1064 = vmatpush1.bf16.msra.mxu0 %v337
      %1065 = vmatprep.subr.bf16.mxu0 0
      %1066 = vmatpush1.bf16.msra.mxu0 %v336
      %1067 = vmatprep.subr.bf16.mxu0 0
      %1068 = vmatpush2.bf16.msra.mxu0 0
      %1069 = vmatprep.subr.bf16.mxu0 0
      %1070 = vmatpush2.bf16.msra.mxu0 0
      %1071 = vmatprep.subr.bf16.mxu0 0
      %1072 = vmatpush2.bf16.msra.mxu0 0
      %1073 = vmatprep.subr.bf16.mxu0 0
      %1074 = vmatpush2.bf16.msra.mxu0 0
      %1075 = vmatprep.subr.bf16.mxu0 0
      %1076 = vmatpush2.bf16.msra.mxu0 0
      %1077 = vmatprep.subr.bf16.mxu0 0
      %1078 = vmatpush2.bf16.msra.mxu0 0
      %1079 = vmatprep.subr.bf16.mxu0 0
      %1080 = vmatpush2.bf16.msra.mxu0 0
      %1081 = vmatprep.subr.bf16.mxu0 0
      %1082 = vmatpush2.bf16.msra.mxu0 0
      %1083 = vmatprep.mubr.bf16.mxu0 0
      %1084 = vmatmul.mubr.bf16.gmra.mxu0 %v987
      %v1085 = vpop.f32.mrf.mxu0
      %v1086 = vadd.f32 %v1030, %v1085
      %v1087 = vpop.f32.mrf.mxu0
      %v1088 = vpop.f32.mrf.mxu0
      %v1089 = vadd.f32 %v1033, %v1088
      %v1090 = vpop.f32.mrf.mxu0
      %1091 = vmatprep.mubr.bf16.mxu0 0
      %1092 = vmatmul.mubr.bf16.gmra.mxu0 %v990
      %v1093 = vpop.f32.mrf.mxu0
      %v1094 = vadd.f32 %v1038, %v1093
      %v1095 = vpop.f32.mrf.mxu0
      %v1096 = vpop.f32.mrf.mxu0
      %v1097 = vadd.f32 %v1041, %v1096
      %v1098 = vpop.f32.mrf.mxu0
      %1099 = vmatprep.mubr.bf16.mxu0 0
      %1100 = vmatmul.mubr.bf16.gmra.mxu0 %v993
      %v1101 = vpop.f32.mrf.mxu0
      %v1102 = vadd.f32 %v1046, %v1101
      %v1103 = vpop.f32.mrf.mxu0
      %v1104 = vpop.f32.mrf.mxu0
      %v1105 = vpop.f32.mrf.mxu0
      %1106 = vdwg.mxu0
      %v1107 = vsel %vm478, %v1086, 0.0
      %v1108 = vsel %vm478, %v1089, 0.0
      %v1109 = vadd.f32 %v1107, %v1108
      %v1110 = vsel %vm478, %v1094, 0.0
      %v1111 = vadd.f32 %v1109, %v1110
      %v1112 = vsel %vm478, %v1097, 0.0
      %v1113 = vadd.f32 %v1111, %v1112
      %v1114 = vsel %vm486, %v1102, 0.0
      %v1115 = vadd.f32 %v1113, %v1114
      %v1116 = vrot.slane %v1115, 4
      %v1117 = vadd.f32 %v1115, %v1116
      %v1118 = vrot.slane %v1117, 2
      %v1119 = vadd.f32 %v1117, %v1118
      %v1120 = vrot.slane %v1119, 1
      %v1121 = vadd.f32 %v1119, %v1120
      %v1122 = vadd.f32 %v913, %v1121
      %v1123 = vmul.f32 %v1086, %v1086
      %v1124 = vmul.f32 %v1089, %v1089
      %v1125 = vmul.f32 %v1094, %v1094
      %v1126 = vmul.f32 %v1097, %v1097
      %v1127 = vmul.f32 %v1102, %v1102
      %v1128 = vsel %vm478, %v1123, 0.0
      %v1129 = vsel %vm478, %v1124, 0.0
      %v1130 = vadd.f32 %v1128, %v1129
      %v1131 = vsel %vm478, %v1125, 0.0
      %v1132 = vadd.f32 %v1130, %v1131
      %v1133 = vsel %vm478, %v1126, 0.0
      %v1134 = vadd.f32 %v1132, %v1133
      %v1135 = vsel %vm486, %v1127, 0.0
      %v1136 = vadd.f32 %v1134, %v1135
      %v1137 = vrot.slane %v1136, 4
      %v1138 = vadd.f32 %v1136, %v1137
      %v1139 = vrot.slane %v1138, 2
      %v1140 = vadd.f32 %v1138, %v1139
      %v1141 = vrot.slane %v1140, 1
      %v1142 = vadd.f32 %v1140, %v1141
      %v1143 = vadd.f32 %v934, %v1142
      %v1144 = vld [vmem:[%s2] sm:$0x1]
      %v1145 = vadd.f32 %v1144, %v1122
      %vm1146 = vcmask 516096
      %1147 = vst.msk [vmem:[%s2] sm:$0x1] %vm1146, %v1145
      %v1148 = vld [vmem:[%s3] sm:$0x1]
      %v1149 = vadd.f32 %v1148, %v1143
      %1150 = vst.msk [vmem:[%s3] sm:$0x1] %vm1146, %v1149
      // Predicated region
      $region33: #{a_call__.7} parent=27 // pred_check
        %p1151 = pneg %p75
      $region34: #{a_call__.7} parent=27 // pred_check_branch
        %1153 = sbr.rel (%p1151) target = $region36
      $region35: #{a_call__.7} parent=27 // pred_region
        _
      $region36: #{a_call__.7} parent=27 // pred_fallthru
        _
      // Predicated region
      $region37: #{a_call__.7} parent=27 // pred_check
        %p1154 = pneg %p96
      $region38: #{a_call__.7} parent=27 // pred_check_branch
        %1156 = sbr.rel (%p1154) target = $region40
      $region39: #{a_call__.7} parent=27 // pred_region
        _
      $region40: #{a_call__.7} parent=27 // pred_fallthru
        _
      // Predicated region
      $region41: #{a_call__.7} parent=27 // pred_check
        %p1157 = pneg %p75
      $region42: #{a_call__.7} parent=27 // pred_check_branch
        %1159 = sbr.rel (%p1157) target = $region44
      $region43: #{a_call__.7} parent=27 // pred_region
        _
      $region44: #{a_call__.7} parent=27 // pred_fallthru
        _
      // Predicated region
      $region45: #{a_call__.7} parent=27 // pred_check
        %p1160 = pneg %p96
      $region46: #{a_call__.7} parent=27 // pred_check_branch
        %1162 = sbr.rel (%p1160) target = $region48
      $region47: #{a_call__.7} parent=27 // pred_region
        _
      $region48: #{a_call__.7} parent=27 // pred_fallthru
        _
    $region28: #{a_call__.7} parent=5 // pred_fallthru
      _
    %p1163 = scmp.le.s32.totalorder 2, %s10
    // Predicated region
    $region49: #{a_call__.7} parent=5 // pred_check
      %p1164 = pneg %p1163
    $region50: #{a_call__.7} parent=5 // pred_check_branch
      %1166 = sbr.rel (%p1164) target = $region52
    $region51: #{a_call__.7} parent=5 // pred_region
      %s1167 = ssub.s32 %s10, 2
    $region52: #{a_call__.7} parent=5 // pred_fallthru
      _
  $region6: #{a_call__.7} parent=0 // loop_footer
    %s14 = sadd.s32 1, %s10
  $region7: #{a_call__.7} parent=0 // loop_footer_branch
    %9 = sbr.rel target = $region3
  $region8: #{a_call__.7} parent=0 // loop_exit
    _

// kernel: a_call__.8
$region0: #{a_call__.8}
  #allocation0 [shape = 'u32[]', space=smem, size = 0x4, offset = 0x4, fixed_abs, tag = 'smem constant byte address 0x4 - core index']
  #allocation1 [shape = 'u32[144,128]{1,0:T(1,128)}', space=vmem, size = 0x12000, scoped, tag = 'internal scratch']
  %s0 = inlined_call_operand.vmem [shape: bf16[2,4,36,288], index: 0, kind: input, shape index: {}]
  %s1 = inlined_call_operand.vmem [shape: bf16[288,64], index: 1, kind: input, shape index: {}]
  %s2 = inlined_call_operand.vmem [shape: f32[1,64], index: 2, kind: input, shape index: {}]
  %s3 = inlined_call_operand.vmem [shape: f32[1,64], index: 3, kind: input, shape index: {}]
  %s4 = inlined_call_operand.vmem [shape: bf16[2,36,64], index: 4, kind: output, shape index: {}]
  %s5 = sld [smem:[#allocation0]]
  $region49: #{a_call__.8} parent=0
    _
  %s7 = ssub.s32 1, %s5
  %s8 = scalar_select 0, %s7, %s5
  loop: start=0, step=1, limit=4
  $region2: #{a_call__.8} parent=0 // loop_pre_header
    _
  $region3: #{a_call__.8} parent=0 // loop_header
    %s10 = sphi 0, %s14
    %p11 = scmp.ge.s32.totalorder %s10, 4
    %s20 = sphi 0, %s22
    %s23 = sphi 0, %s20
    %s24 = sphi 0, %s23
    %s40 = sphi 0, %s24
    %s44 = sphi 0, %s44
    %s46 = sphi 0, %s44
    %s47 = sphi 0, %s46
    %s61 = sphi 0, %s47
    %s65 = sphi 0, %s65
    %s67 = sphi 0, %s65
    %s68 = sphi 0, %s67
    %s82 = sphi 0, %s68
    %s86 = sphi 0, %s86
    %s88 = sphi 0, %s86
    %s89 = sphi 0, %s88
    %s103 = sphi 0, %s89
    %s109 = sphi 0, %s111
    %s112 = sphi 0, %s109
    %s113 = sphi 0, %s112
    %s129 = sphi 0, %s113
  $region4: #{a_call__.8} parent=0 // loop_header_branch
    %13 = sbr.rel (%p11) target = $region8
  $region5: #{a_call__.8} parent=0 // loop_body
    %s15 = ssub.s32 %s10, 1
    %s16 = ssub.s32 %s10, 2
    %s17 = sadd.s32 %s10, 1
    %s18 = ssub.s32 %s10, %s17
    %p19 = scmp.eq.s32.totalorder %s18, 0
    %s21 = sadd.s32 %s20, 1
    %s22 = scalar_select %p19, %s20, %s21
    %p25 = pneg %p19
    %p26 = scmp.eq.s32.totalorder %s10, 1
    %p27 = por %p25, %p26
    %p28 = scmp.ne.s32.totalorder %s20, %s23
    %p29 = scmp.eq.s32.totalorder %s10, 0
    %p30 = por %p28, %p29
    %p31 = scmp.ne.s32.totalorder %s20, %s23
    %p32 = scmp.eq.s32.totalorder %s15, 1
    %p33 = por %p31, %p32
    %p34 = scmp.ne.s32.totalorder %s23, %s24
    %p35 = scmp.eq.s32.totalorder %s15, 0
    %p36 = por %p34, %p35
    %p37 = scmp.ne.s32.totalorder %s23, %s24
    %p38 = scmp.eq.s32.totalorder %s16, 1
    %p39 = por %p37, %p38
    %p41 = scmp.ne.s32.totalorder %s24, %s40
    %p42 = scmp.eq.s32.totalorder %s16, 0
    %p43 = por %p41, %p42
    %s45 = sadd.s32 %s44, 1
    %p48 = scmp.eq.s32.totalorder %s10, 1
    %p49 = scmp.ne.s32.totalorder %s44, %s46
    %p50 = scmp.eq.s32.totalorder %s10, 0
    %p51 = por %p49, %p50
    %p52 = scmp.ne.s32.totalorder %s44, %s46
    %p53 = scmp.eq.s32.totalorder %s15, 1
    %p54 = por %p52, %p53
    %p55 = scmp.ne.s32.totalorder %s46, %s47
    %p56 = scmp.eq.s32.totalorder %s15, 0
    %p57 = por %p55, %p56
    %p58 = scmp.ne.s32.totalorder %s46, %s47
    %p59 = scmp.eq.s32.totalorder %s16, 1
    %p60 = por %p58, %p59
    %p62 = scmp.ne.s32.totalorder %s47, %s61
    %p63 = scmp.eq.s32.totalorder %s16, 0
    %p64 = por %p62, %p63
    %s66 = sadd.s32 %s65, 1
    %p69 = scmp.eq.s32.totalorder %s10, 1
    %p70 = scmp.ne.s32.totalorder %s65, %s67
    %p71 = scmp.eq.s32.totalorder %s10, 0
    %p72 = por %p70, %p71
    %p73 = scmp.ne.s32.totalorder %s65, %s67
    %p74 = scmp.eq.s32.totalorder %s15, 1
    %p75 = por %p73, %p74
    %p76 = scmp.ne.s32.totalorder %s67, %s68
    %p77 = scmp.eq.s32.totalorder %s15, 0
    %p78 = por %p76, %p77
    %p79 = scmp.ne.s32.totalorder %s67, %s68
    %p80 = scmp.eq.s32.totalorder %s16, 1
    %p81 = por %p79, %p80
    %p83 = scmp.ne.s32.totalorder %s68, %s82
    %p84 = scmp.eq.s32.totalorder %s16, 0
    %p85 = por %p83, %p84
    %s87 = sadd.s32 %s86, 1
    %p90 = scmp.eq.s32.totalorder %s10, 1
    %p91 = scmp.ne.s32.totalorder %s86, %s88
    %p92 = scmp.eq.s32.totalorder %s10, 0
    %p93 = por %p91, %p92
    %p94 = scmp.ne.s32.totalorder %s86, %s88
    %p95 = scmp.eq.s32.totalorder %s15, 1
    %p96 = por %p94, %p95
    %p97 = scmp.ne.s32.totalorder %s88, %s89
    %p98 = scmp.eq.s32.totalorder %s15, 0
    %p99 = por %p97, %p98
    %p100 = scmp.ne.s32.totalorder %s88, %s89
    %p101 = scmp.eq.s32.totalorder %s16, 1
    %p102 = por %p100, %p101
    %p104 = scmp.ne.s32.totalorder %s89, %s103
    %p105 = scmp.eq.s32.totalorder %s16, 0
    %p106 = por %p104, %p105
    %s107 = ssub.s32 %s10, %s17
    %p108 = scmp.eq.s32.totalorder %s107, 0
    %s110 = sadd.s32 %s109, 1
    %s111 = scalar_select %p108, %s109, %s110
    %p114 = pneg %p108
    %p115 = scmp.eq.s32.totalorder %s10, 1
    %p116 = por %p114, %p115
    %p117 = scmp.ne.s32.totalorder %s109, %s112
    %p118 = scmp.eq.s32.totalorder %s10, 0
    %p119 = por %p117, %p118
    %p120 = scmp.ne.s32.totalorder %s109, %s112
    %p121 = scmp.eq.s32.totalorder %s15, 1
    %p122 = por %p120, %p121
    %p123 = scmp.ne.s32.totalorder %s112, %s113
    %p124 = scmp.eq.s32.totalorder %s15, 0
    %p125 = por %p123, %p124
    %p126 = scmp.ne.s32.totalorder %s112, %s113
    %p127 = scmp.eq.s32.totalorder %s16, 1
    %p128 = por %p126, %p127
    %p130 = scmp.ne.s32.totalorder %s113, %s129
    %p131 = scmp.eq.s32.totalorder %s16, 0
    %p132 = por %p130, %p131
    %p133 = scmp.le.s32.totalorder 1, %s10
    %p134 = scmp.lt.s32.totalorder %s10, 3
    %p135 = pnand %p133, %p134
    %p136 = pneg %p135
    // Predicated region
    $region9: #{a_call__.8} parent=5 // pred_check
      _
    $region10: #{a_call__.8} parent=5 // pred_check_branch
      %138 = sbr.rel (%p135) target = $region12
    $region11: #{a_call__.8} parent=5 // pred_region
      %s139 = ssub.s32 %s10, 1
      // Predicated region
      $region13: #{a_call__.8} parent=11 // pred_check
        %p140 = pneg %p57
      $region14: #{a_call__.8} parent=11 // pred_check_branch
        %142 = sbr.rel (%p140) target = $region16
      $region15: #{a_call__.8} parent=11 // pred_region
        _
      $region16: #{a_call__.8} parent=11 // pred_fallthru
        _
      // Predicated region
      $region17: #{a_call__.8} parent=11 // pred_check
        %p143 = pneg %p78
      $region18: #{a_call__.8} parent=11 // pred_check_branch
        %145 = sbr.rel (%p143) target = $region20
      $region19: #{a_call__.8} parent=11 // pred_region
        _
      $region20: #{a_call__.8} parent=11 // pred_fallthru
        _
      // Predicated region
      $region21: #{a_call__.8} parent=11 // pred_check
        %p146 = pneg %p99
      $region22: #{a_call__.8} parent=11 // pred_check_branch
        %148 = sbr.rel (%p146) target = $region24
      $region23: #{a_call__.8} parent=11 // pred_region
        _
      $region24: #{a_call__.8} parent=11 // pred_fallthru
        _
    $region12: #{a_call__.8} parent=5 // pred_fallthru
      _
    %p149 = scmp.lt.s32.totalorder %s10, 2
    // Predicated region
    $region25: #{a_call__.8} parent=5 // pred_check
      %p150 = pneg %p149
    $region26: #{a_call__.8} parent=5 // pred_check_branch
      %152 = sbr.rel (%p150) target = $region28
    $region27: #{a_call__.8} parent=5 // pred_region
      // Predicated region
      $region29: #{a_call__.8} parent=27 // pred_check
        %p153 = pneg %p30
      $region30: #{a_call__.8} parent=27 // pred_check_branch
        %155 = sbr.rel (%p153) target = $region32
      $region31: #{a_call__.8} parent=27 // pred_region
        %p156 = scmp.lt.s32.totalorder %s10, 1
        %s157 = scalar_select %p156, %s10, 1
        %s158 = smul.addr %s157, 60
        %s159 = smul.addr %s158, 4
        %s160 = scalar_lea.vmem %s0, %s159
      $region32: #{a_call__.8} parent=27 // pred_fallthru
        _
    $region28: #{a_call__.8} parent=5 // pred_fallthru
      _
    %p161 = scmp.le.s32.totalorder 1, %s10
    %p162 = scmp.lt.s32.totalorder %s10, 3
    %p163 = pnand %p161, %p162
    %p164 = pneg %p163
    // Predicated region
    $region33: #{a_call__.8} parent=5 // pred_check
      _
    $region34: #{a_call__.8} parent=5 // pred_check_branch
      %166 = sbr.rel (%p163) target = $region36
    $region35: #{a_call__.8} parent=5 // pred_region
      %s167 = ssub.s32 %s10, 1
      %p168 = scmp.lt.s32.totalorder %s15, 1
      %s169 = scalar_select %p168, %s15, 1
      %s170 = smul.addr %s169, 60
      %s171 = smul.addr %s170, 4
      %s172 = scalar_lea.vmem %s0, %s171
      %p173 = pneg %p36
      %p174 = pneg %p33
      %p175 = pneg %p57
      %p176 = pneg %p54
      %p177 = pneg %p78
      %p178 = pneg %p75
      %p179 = pneg %p99
      %p180 = pneg %p96
      %p181 = pneg %p125
      %p182 = pneg %p122
      %p183 = scmp.lt.s32.totalorder %s15, 1
      %s184 = scalar_select %p183, %s15, 1
      %s185 = smul.addr %s184, 5
      %s186 = smul.addr %s185, 4
      %s187 = scalar_lea.vmem %s4, %s186
      %p188 = scmp.lt.s32.totalorder %s15, 1
      %s189 = scalar_select %p188, %s15, 1
      %s190 = smul.addr %s189, 60
      %s191 = smul.addr %s190, 4
      %s192 = scalar_lea.vmem %s0, %s191
      %p193 = scmp.lt.s32.totalorder %s15, 1
      %s194 = scalar_select %p193, %s15, 1
      %s195 = smul.addr %s194, 5
      %s196 = smul.addr %s195, 4
      %s197 = scalar_lea.vmem %s4, %s196
      %v199 = vld [vmem:[%s1] sm:$0xf]
      %v200 = vld [vmem:[%s1 + $0x4] sm:$0xf]
      %v201 = vld [vmem:[%s1 + $0x8] sm:$0xf]
      %v202 = vld [vmem:[%s1 + $0xc] sm:$0xf]
      %v203 = vld [vmem:[%s1 + $0x10] sm:$0xf]
      %v204 = vld [vmem:[%s1 + $0x14] sm:$0xf]
      %v205 = vld [vmem:[%s1 + $0x18] sm:$0xf]
      %v206 = vld [vmem:[%s1 + $0x1c] sm:$0xf]
      %v207 = vld [vmem:[%s1 + $0x20] sm:$0xf]
      %v208 = vld [vmem:[%s1 + $0x24] sm:$0xf]
      %v209 = vld [vmem:[%s1 + $0x28] sm:$0xf]
      %v210 = vld [vmem:[%s1 + $0x2c] sm:$0xf]
      %v211 = vld [vmem:[%s1 + $0x30] sm:$0xf]
      %v212 = vld [vmem:[%s1 + $0x34] sm:$0xf]
      %v213 = vld [vmem:[%s1 + $0x38] sm:$0xf]
      %v214 = vld [vmem:[%s1 + $0x3c] sm:$0xf]
      %v215 = vld [vmem:[%s1 + $0x40] sm:$0xf]
      %v216 = vld [vmem:[%s1 + $0x44] sm:$0xf]
      %v217 = vld [vmem:[%s1 + $0x48] sm:$0xf]
      %v218 = vld [vmem:[%s1 + $0x4c] sm:$0xf]
      %v219 = vld [vmem:[%s1 + $0x50] sm:$0xf]
      %v220 = vld [vmem:[%s1 + $0x54] sm:$0xf]
      %v221 = vld [vmem:[%s1 + $0x58] sm:$0xf]
      %v222 = vld [vmem:[%s1 + $0x5c] sm:$0xf]
      %v223 = vld [vmem:[%s1 + $0x60] sm:$0xf]
      %v224 = vld [vmem:[%s1 + $0x64] sm:$0xf]
      %v225 = vld [vmem:[%s1 + $0x68] sm:$0xf]
      %v226 = vld [vmem:[%s1 + $0x6c] sm:$0xf]
      %v227 = vld [vmem:[%s1 + $0x70] sm:$0xf]
      %v228 = vld [vmem:[%s1 + $0x74] sm:$0xf]
      %v229 = vld [vmem:[%s1 + $0x78] sm:$0xf]
      %v230 = vld [vmem:[%s1 + $0x7c] sm:$0xf]
      %v231 = vld [vmem:[%s1 + $0x80] sm:$0xf]
      %v232 = vld [vmem:[%s1 + $0x84] sm:$0xf]
      %v233 = vld [vmem:[%s1 + $0x88] sm:$0xf]
      %v234 = vld [vmem:[%s1 + $0x8c] sm:$0xf]
      %v235 = vld [vmem:[%s2] sm:$0x1]
      %v236 = vld [vmem:[%s3] sm:$0x1]
      %v237 = vld [vmem:[%s192] sm:$0xff]
      %v238 = vld [vmem:[%s192 + $0x8] sm:$0xf]
      %v239 = vld [vmem:[%s192 + $0xc] sm:$0xff]
      %v240 = vld [vmem:[%s192 + $0x14] sm:$0xf]
      %v241 = vld [vmem:[%s192 + $0x18] sm:$0xff]
      %v242 = vld [vmem:[%s192 + $0x20] sm:$0xf]
      %v243 = vld [vmem:[%s192 + $0x24] sm:$0xff]
      %v244 = vld [vmem:[%s192 + $0x2c] sm:$0xf]
      %v245 = vld [vmem:[%s192 + $0x30] sm:$0x33]
      %v246 = vld [vmem:[%s192 + $0x38] sm:$0x3]
      %v257 = vunpack.c.l.b16 %v237
      %v258 = vunpack.c.h.b16 %v237
      %v259 = vunpack.c.l.b16 %v238
      %v260 = vunpack.c.l.b16 %v239
      %v261 = vunpack.c.h.b16 %v239
      %v262 = vunpack.c.l.b16 %v240
      %v263 = vunpack.c.l.b16 %v241
      %v264 = vunpack.c.h.b16 %v241
      %v265 = vunpack.c.l.b16 %v242
      %v266 = vunpack.c.l.b16 %v243
      %v267 = vunpack.c.h.b16 %v243
      %v268 = vunpack.c.l.b16 %v244
      %v269 = vunpack.c.l.b16 %v245
      %v270 = vunpack.c.h.b16 %v245
      %v271 = vunpack.c.l.b16 %v246
      %v272 = vpack.c.b16 %v260, %v257
      %v273 = vpack.c.b16 %v261, %v258
      %v274 = vpack.c.b16 %v262, %v259
      %v275 = vpack.c.b16 %v266, %v263
      %v276 = vpack.c.b16 %v267, %v264
      %v277 = vpack.c.b16 %v268, %v265
      %v278 = vpack.c.b16 %v269, %v269
      %v279 = vpack.c.b16 %v270, %v270
      %v280 = vpack.c.b16 %v271, %v271
      %v323 = vunpack.c.l.b16 %v199
      %v324 = vunpack.c.l.b16 %v200
      %v325 = vunpack.c.l.b16 %v201
      %v326 = vunpack.c.l.b16 %v202
      %v327 = vunpack.c.l.b16 %v203
      %v328 = vunpack.c.l.b16 %v204
      %v329 = vunpack.c.l.b16 %v205
      %v330 = vunpack.c.l.b16 %v206
      %v331 = vunpack.c.l.b16 %v207
      %v332 = vunpack.c.l.b16 %v208
      %v333 = vunpack.c.l.b16 %v209
      %v334 = vunpack.c.l.b16 %v210
      %v335 = vunpack.c.l.b16 %v211
      %v336 = vunpack.c.l.b16 %v212
      %v337 = vunpack.c.l.b16 %v213
      %v338 = vunpack.c.l.b16 %v214
      %v339 = vunpack.c.l.b16 %v215
      %v340 = vunpack.c.l.b16 %v216
      %v341 = vunpack.c.l.b16 %v217
      %v342 = vunpack.c.l.b16 %v218
      %v343 = vunpack.c.l.b16 %v219
      %v344 = vunpack.c.l.b16 %v220
      %v345 = vunpack.c.l.b16 %v221
      %v346 = vunpack.c.l.b16 %v222
      %v347 = vunpack.c.l.b16 %v223
      %v348 = vunpack.c.l.b16 %v224
      %v349 = vunpack.c.l.b16 %v225
      %v350 = vunpack.c.l.b16 %v226
      %v351 = vunpack.c.l.b16 %v227
      %v352 = vunpack.c.l.b16 %v228
      %v353 = vunpack.c.l.b16 %v229
      %v354 = vunpack.c.l.b16 %v230
      %v355 = vunpack.c.l.b16 %v231
      %v356 = vunpack.c.l.b16 %v232
      %v357 = vunpack.c.l.b16 %v233
      %v358 = vunpack.c.l.b16 %v234
      %v359 = vpack.c.b16 %v324, %v323
      %v360 = vpack.c.b16 %v326, %v325
      %v361 = vpack.c.b16 %v328, %v327
      %v362 = vpack.c.b16 %v330, %v329
      %v363 = vpack.c.b16 %v332, %v331
      %v364 = vpack.c.b16 %v334, %v333
      %v365 = vpack.c.b16 %v336, %v335
      %v366 = vpack.c.b16 %v338, %v337
      %v367 = vpack.c.b16 %v340, %v339
      %v368 = vpack.c.b16 %v342, %v341
      %v369 = vpack.c.b16 %v344, %v343
      %v370 = vpack.c.b16 %v346, %v345
      %v371 = vpack.c.b16 %v348, %v347
      %v372 = vpack.c.b16 %v350, %v349
      %v373 = vpack.c.b16 %v352, %v351
      %v374 = vpack.c.b16 %v354, %v353
      %v375 = vpack.c.b16 %v356, %v355
      %v376 = vpack.c.b16 %v358, %v357
      %vm395 = vcmask 261120
      %v397 = vsel %vm395, %v274, 0
      %v400 = vsel %vm395, %v277, 0
      %v403 = vsel %vm395, %v280, 0
      %405 = vmatprep.subr.bf16.mxu0 0
      %406 = vmatpush1.bf16.msra.mxu0 %v366
      %407 = vmatprep.subr.bf16.mxu0 0
      %408 = vmatpush1.bf16.msra.mxu0 %v365
      %409 = vmatprep.subr.bf16.mxu0 0
      %410 = vmatpush1.bf16.msra.mxu0 %v364
      %411 = vmatprep.subr.bf16.mxu0 0
      %412 = vmatpush1.bf16.msra.mxu0 %v363
      %413 = vmatprep.subr.bf16.mxu0 0
      %414 = vmatpush1.bf16.msra.mxu0 %v362
      %415 = vmatprep.subr.bf16.mxu0 0
      %416 = vmatpush1.bf16.msra.mxu0 %v361
      %417 = vmatprep.subr.bf16.mxu0 0
      %418 = vmatpush1.bf16.msra.mxu0 %v360
      %419 = vmatprep.subr.bf16.mxu0 0
      %420 = vmatpush1.bf16.msra.mxu0 %v359
      %421 = vmatprep.subr.bf16.mxu0 0
      %422 = vmatpush2.bf16.msra.mxu0 %v374
      %423 = vmatprep.subr.bf16.mxu0 0
      %424 = vmatpush2.bf16.msra.mxu0 %v373
      %425 = vmatprep.subr.bf16.mxu0 0
      %426 = vmatpush2.bf16.msra.mxu0 %v372
      %427 = vmatprep.subr.bf16.mxu0 0
      %428 = vmatpush2.bf16.msra.mxu0 %v371
      %429 = vmatprep.subr.bf16.mxu0 0
      %430 = vmatpush2.bf16.msra.mxu0 %v370
      %431 = vmatprep.subr.bf16.mxu0 0
      %432 = vmatpush2.bf16.msra.mxu0 %v369
      %433 = vmatprep.subr.bf16.mxu0 0
      %434 = vmatpush2.bf16.msra.mxu0 %v368
      %435 = vmatprep.subr.bf16.mxu0 0
      %436 = vmatpush2.bf16.msra.mxu0 %v367
      %437 = vmatprep.mubr.bf16.mxu0 %v273
      %438 = vmatmul.mubr.bf16.gmra.mxu0 %v272
      %v439 = vpop.f32.mrf.mxu0
      %v440 = vadd.f32 0.0, %v439
      %v441 = vpop.f32.mrf.mxu0
      %v442 = vpop.f32.mrf.mxu0
      %v443 = vadd.f32 0.0, %v442
      %v444 = vpop.f32.mrf.mxu0
      %445 = vmatprep.mubr.bf16.mxu0 %v276
      %446 = vmatmul.mubr.bf16.gmra.mxu0 %v275
      %v447 = vpop.f32.mrf.mxu0
      %v448 = vadd.f32 0.0, %v447
      %v449 = vpop.f32.mrf.mxu0
      %v450 = vpop.f32.mrf.mxu0
      %v451 = vadd.f32 0.0, %v450
      %v452 = vpop.f32.mrf.mxu0
      %453 = vmatprep.mubr.bf16.mxu0 %v279
      %454 = vmatmul.mubr.bf16.gmra.mxu0 %v278
      %v455 = vpop.f32.mrf.mxu0
      %v456 = vadd.f32 0.0, %v455
      %v457 = vpop.f32.mrf.mxu0
      %v458 = vpop.f32.mrf.mxu0
      %v459 = vpop.f32.mrf.mxu0
      %460 = vdwg.mxu0
      %461 = vmatprep.subr.bf16.mxu0 0
      %462 = vmatpush1.bf16.msra.mxu0 0
      %463 = vmatprep.subr.bf16.mxu0 0
      %464 = vmatpush1.bf16.msra.mxu0 0
      %465 = vmatprep.subr.bf16.mxu0 0
      %466 = vmatpush1.bf16.msra.mxu0 0
      %467 = vmatprep.subr.bf16.mxu0 0
      %468 = vmatpush1.bf16.msra.mxu0 0
      %469 = vmatprep.subr.bf16.mxu0 0
      %470 = vmatpush1.bf16.msra.mxu0 0
      %471 = vmatprep.subr.bf16.mxu0 0
      %472 = vmatpush1.bf16.msra.mxu0 0
      %473 = vmatprep.subr.bf16.mxu0 0
      %474 = vmatpush1.bf16.msra.mxu0 %v376
      %475 = vmatprep.subr.bf16.mxu0 0
      %476 = vmatpush1.bf16.msra.mxu0 %v375
      %477 = vmatprep.subr.bf16.mxu0 0
      %478 = vmatpush2.bf16.msra.mxu0 0
      %479 = vmatprep.subr.bf16.mxu0 0
      %480 = vmatpush2.bf16.msra.mxu0 0
      %481 = vmatprep.subr.bf16.mxu0 0
      %482 = vmatpush2.bf16.msra.mxu0 0
      %483 = vmatprep.subr.bf16.mxu0 0
      %484 = vmatpush2.bf16.msra.mxu0 0
      %485 = vmatprep.subr.bf16.mxu0 0
      %486 = vmatpush2.bf16.msra.mxu0 0
      %487 = vmatprep.subr.bf16.mxu0 0
      %488 = vmatpush2.bf16.msra.mxu0 0
      %489 = vmatprep.subr.bf16.mxu0 0
      %490 = vmatpush2.bf16.msra.mxu0 0
      %491 = vmatprep.subr.bf16.mxu0 0
      %492 = vmatpush2.bf16.msra.mxu0 0
      %493 = vmatprep.mubr.bf16.mxu0 0
      %494 = vmatmul.mubr.bf16.gmra.mxu0 %v397
      %v495 = vpop.f32.mrf.mxu0
      %v496 = vadd.f32 %v440, %v495
      %v497 = vpop.f32.mrf.mxu0
      %v498 = vpop.f32.mrf.mxu0
      %v499 = vadd.f32 %v443, %v498
      %v500 = vpop.f32.mrf.mxu0
      %501 = vmatprep.mubr.bf16.mxu0 0
      %502 = vmatmul.mubr.bf16.gmra.mxu0 %v400
      %v503 = vpop.f32.mrf.mxu0
      %v504 = vadd.f32 %v448, %v503
      %v505 = vpop.f32.mrf.mxu0
      %v506 = vpop.f32.mrf.mxu0
      %v507 = vadd.f32 %v451, %v506
      %v508 = vpop.f32.mrf.mxu0
      %509 = vmatprep.mubr.bf16.mxu0 0
      %510 = vmatmul.mubr.bf16.gmra.mxu0 %v403
      %v511 = vpop.f32.mrf.mxu0
      %v512 = vadd.f32 %v456, %v511
      %v513 = vpop.f32.mrf.mxu0
      %v514 = vpop.f32.mrf.mxu0
      %v515 = vpop.f32.mrf.mxu0
      %516 = vdwg.mxu0
      %v518 = vlaneseq
      %v519 = vshrl.u32 %v518, 7
      %v520 = vsub.s32 0, %v519
      %v521 = vrot.slane %v235, %v520
      %v523 = vmul.f32 %v496, %v521
      %v524 = vmul.f32 %v499, %v521
      %v525 = vmul.f32 %v504, %v521
      %v526 = vmul.f32 %v507, %v521
      %v527 = vmul.f32 %v512, %v521
      %v529 = vlaneseq
      %v530 = vshrl.u32 %v529, 7
      %v531 = vsub.s32 0, %v530
      %v532 = vrot.slane %v236, %v531
      %v534 = vadd.f32 %v523, %v532
      %v535 = vadd.f32 %v524, %v532
      %v536 = vadd.f32 %v525, %v532
      %v537 = vadd.f32 %v526, %v532
      %v538 = vadd.f32 %v527, %v532
      %s539 = scalar_lea.vmem %s192, 60
      %v540 = vld [vmem:[%s539] sm:$0xff]
      %v541 = vld [vmem:[%s539 + $0x8] sm:$0xf]
      %v542 = vld [vmem:[%s539 + $0xc] sm:$0xff]
      %v543 = vld [vmem:[%s539 + $0x14] sm:$0xf]
      %v544 = vld [vmem:[%s539 + $0x18] sm:$0xff]
      %v545 = vld [vmem:[%s539 + $0x20] sm:$0xf]
      %v546 = vld [vmem:[%s539 + $0x24] sm:$0xff]
      %v547 = vld [vmem:[%s539 + $0x2c] sm:$0xf]
      %v548 = vld [vmem:[%s539 + $0x30] sm:$0x33]
      %v549 = vld [vmem:[%s539 + $0x38] sm:$0x3]
      %v560 = vunpack.c.l.b16 %v540
      %v561 = vunpack.c.h.b16 %v540
      %v562 = vunpack.c.l.b16 %v541
      %v563 = vunpack.c.l.b16 %v542
      %v564 = vunpack.c.h.b16 %v542
      %v565 = vunpack.c.l.b16 %v543
      %v566 = vunpack.c.l.b16 %v544
      %v567 = vunpack.c.h.b16 %v544
      %v568 = vunpack.c.l.b16 %v545
      %v569 = vunpack.c.l.b16 %v546
      %v570 = vunpack.c.h.b16 %v546
      %v571 = vunpack.c.l.b16 %v547
      %v572 = vunpack.c.l.b16 %v548
      %v573 = vunpack.c.h.b16 %v548
      %v574 = vunpack.c.l.b16 %v549
      %v575 = vpack.c.b16 %v563, %v560
      %v576 = vpack.c.b16 %v564, %v561
      %v577 = vpack.c.b16 %v565, %v562
      %v578 = vpack.c.b16 %v569, %v566
      %v579 = vpack.c.b16 %v570, %v567
      %v580 = vpack.c.b16 %v571, %v568
      %v581 = vpack.c.b16 %v572, %v572
      %v582 = vpack.c.b16 %v573, %v573
      %v583 = vpack.c.b16 %v574, %v574
      %v591 = vsel %vm395, %v577, 0
      %v594 = vsel %vm395, %v580, 0
      %v597 = vsel %vm395, %v583, 0
      %599 = vmatprep.subr.bf16.mxu0 0
      %600 = vmatpush1.bf16.msra.mxu0 %v366
      %601 = vmatprep.subr.bf16.mxu0 0
      %602 = vmatpush1.bf16.msra.mxu0 %v365
      %603 = vmatprep.subr.bf16.mxu0 0
      %604 = vmatpush1.bf16.msra.mxu0 %v364
      %605 = vmatprep.subr.bf16.mxu0 0
      %606 = vmatpush1.bf16.msra.mxu0 %v363
      %607 = vmatprep.subr.bf16.mxu0 0
      %608 = vmatpush1.bf16.msra.mxu0 %v362
      %609 = vmatprep.subr.bf16.mxu0 0
      %610 = vmatpush1.bf16.msra.mxu0 %v361
      %611 = vmatprep.subr.bf16.mxu0 0
      %612 = vmatpush1.bf16.msra.mxu0 %v360
      %613 = vmatprep.subr.bf16.mxu0 0
      %614 = vmatpush1.bf16.msra.mxu0 %v359
      %615 = vmatprep.subr.bf16.mxu0 0
      %616 = vmatpush2.bf16.msra.mxu0 %v374
      %617 = vmatprep.subr.bf16.mxu0 0
      %618 = vmatpush2.bf16.msra.mxu0 %v373
      %619 = vmatprep.subr.bf16.mxu0 0
      %620 = vmatpush2.bf16.msra.mxu0 %v372
      %621 = vmatprep.subr.bf16.mxu0 0
      %622 = vmatpush2.bf16.msra.mxu0 %v371
      %623 = vmatprep.subr.bf16.mxu0 0
      %624 = vmatpush2.bf16.msra.mxu0 %v370
      %625 = vmatprep.subr.bf16.mxu0 0
      %626 = vmatpush2.bf16.msra.mxu0 %v369
      %627 = vmatprep.subr.bf16.mxu0 0
      %628 = vmatpush2.bf16.msra.mxu0 %v368
      %629 = vmatprep.subr.bf16.mxu0 0
      %630 = vmatpush2.bf16.msra.mxu0 %v367
      %631 = vmatprep.mubr.bf16.mxu0 %v576
      %632 = vmatmul.mubr.bf16.gmra.mxu0 %v575
      %v633 = vpop.f32.mrf.mxu0
      %v634 = vadd.f32 0.0, %v633
      %v635 = vpop.f32.mrf.mxu0
      %v636 = vpop.f32.mrf.mxu0
      %v637 = vadd.f32 0.0, %v636
      %v638 = vpop.f32.mrf.mxu0
      %639 = vmatprep.mubr.bf16.mxu0 %v579
      %640 = vmatmul.mubr.bf16.gmra.mxu0 %v578
      %v641 = vpop.f32.mrf.mxu0
      %v642 = vadd.f32 0.0, %v641
      %v643 = vpop.f32.mrf.mxu0
      %v644 = vpop.f32.mrf.mxu0
      %v645 = vadd.f32 0.0, %v644
      %v646 = vpop.f32.mrf.mxu0
      %647 = vmatprep.mubr.bf16.mxu0 %v582
      %648 = vmatmul.mubr.bf16.gmra.mxu0 %v581
      %v649 = vpop.f32.mrf.mxu0
      %v650 = vadd.f32 0.0, %v649
      %v651 = vpop.f32.mrf.mxu0
      %v652 = vpop.f32.mrf.mxu0
      %v653 = vpop.f32.mrf.mxu0
      %654 = vdwg.mxu0
      %655 = vmatprep.subr.bf16.mxu0 0
      %656 = vmatpush1.bf16.msra.mxu0 0
      %657 = vmatprep.subr.bf16.mxu0 0
      %658 = vmatpush1.bf16.msra.mxu0 0
      %659 = vmatprep.subr.bf16.mxu0 0
      %660 = vmatpush1.bf16.msra.mxu0 0
      %661 = vmatprep.subr.bf16.mxu0 0
      %662 = vmatpush1.bf16.msra.mxu0 0
      %663 = vmatprep.subr.bf16.mxu0 0
      %664 = vmatpush1.bf16.msra.mxu0 0
      %665 = vmatprep.subr.bf16.mxu0 0
      %666 = vmatpush1.bf16.msra.mxu0 0
      %667 = vmatprep.subr.bf16.mxu0 0
      %668 = vmatpush1.bf16.msra.mxu0 %v376
      %669 = vmatprep.subr.bf16.mxu0 0
      %670 = vmatpush1.bf16.msra.mxu0 %v375
      %671 = vmatprep.subr.bf16.mxu0 0
      %672 = vmatpush2.bf16.msra.mxu0 0
      %673 = vmatprep.subr.bf16.mxu0 0
      %674 = vmatpush2.bf16.msra.mxu0 0
      %675 = vmatprep.subr.bf16.mxu0 0
      %676 = vmatpush2.bf16.msra.mxu0 0
      %677 = vmatprep.subr.bf16.mxu0 0
      %678 = vmatpush2.bf16.msra.mxu0 0
      %679 = vmatprep.subr.bf16.mxu0 0
      %680 = vmatpush2.bf16.msra.mxu0 0
      %681 = vmatprep.subr.bf16.mxu0 0
      %682 = vmatpush2.bf16.msra.mxu0 0
      %683 = vmatprep.subr.bf16.mxu0 0
      %684 = vmatpush2.bf16.msra.mxu0 0
      %685 = vmatprep.subr.bf16.mxu0 0
      %686 = vmatpush2.bf16.msra.mxu0 0
      %687 = vmatprep.mubr.bf16.mxu0 0
      %688 = vmatmul.mubr.bf16.gmra.mxu0 %v591
      %v689 = vpop.f32.mrf.mxu0
      %v690 = vadd.f32 %v634, %v689
      %v691 = vpop.f32.mrf.mxu0
      %v692 = vpop.f32.mrf.mxu0
      %v693 = vadd.f32 %v637, %v692
      %v694 = vpop.f32.mrf.mxu0
      %695 = vmatprep.mubr.bf16.mxu0 0
      %696 = vmatmul.mubr.bf16.gmra.mxu0 %v594
      %v697 = vpop.f32.mrf.mxu0
      %v698 = vadd.f32 %v642, %v697
      %v699 = vpop.f32.mrf.mxu0
      %v700 = vpop.f32.mrf.mxu0
      %v701 = vadd.f32 %v645, %v700
      %v702 = vpop.f32.mrf.mxu0
      %703 = vmatprep.mubr.bf16.mxu0 0
      %704 = vmatmul.mubr.bf16.gmra.mxu0 %v597
      %v705 = vpop.f32.mrf.mxu0
      %v706 = vadd.f32 %v650, %v705
      %v707 = vpop.f32.mrf.mxu0
      %v708 = vpop.f32.mrf.mxu0
      %v709 = vpop.f32.mrf.mxu0
      %710 = vdwg.mxu0
      %v711 = vmul.f32 %v690, %v521
      %v712 = vmul.f32 %v693, %v521
      %v713 = vmul.f32 %v698, %v521
      %v714 = vmul.f32 %v701, %v521
      %v715 = vmul.f32 %v706, %v521
      %v716 = vadd.f32 %v711, %v532
      %v717 = vadd.f32 %v712, %v532
      %v718 = vadd.f32 %v713, %v532
      %v719 = vadd.f32 %v714, %v532
      %v720 = vadd.f32 %v715, %v532
      %v721 = vmax.f32 %v534, %v716
      %v722 = vmax.f32 %v535, %v717
      %v723 = vmax.f32 %v536, %v718
      %v724 = vmax.f32 %v537, %v719
      %v725 = vmax.f32 %v538, %v720
      %s726 = scalar_lea.vmem %s192, 120
      %v727 = vld [vmem:[%s726] sm:$0xff]
      %v728 = vld [vmem:[%s726 + $0x8] sm:$0xf]
      %v729 = vld [vmem:[%s726 + $0xc] sm:$0xff]
      %v730 = vld [vmem:[%s726 + $0x14] sm:$0xf]
      %v731 = vld [vmem:[%s726 + $0x18] sm:$0xff]
      %v732 = vld [vmem:[%s726 + $0x20] sm:$0xf]
      %v733 = vld [vmem:[%s726 + $0x24] sm:$0xff]
      %v734 = vld [vmem:[%s726 + $0x2c] sm:$0xf]
      %v735 = vld [vmem:[%s726 + $0x30] sm:$0x33]
      %v736 = vld [vmem:[%s726 + $0x38] sm:$0x3]
      %v747 = vunpack.c.l.b16 %v727
      %v748 = vunpack.c.h.b16 %v727
      %v749 = vunpack.c.l.b16 %v728
      %v750 = vunpack.c.l.b16 %v729
      %v751 = vunpack.c.h.b16 %v729
      %v752 = vunpack.c.l.b16 %v730
      %v753 = vunpack.c.l.b16 %v731
      %v754 = vunpack.c.h.b16 %v731
      %v755 = vunpack.c.l.b16 %v732
      %v756 = vunpack.c.l.b16 %v733
      %v757 = vunpack.c.h.b16 %v733
      %v758 = vunpack.c.l.b16 %v734
      %v759 = vunpack.c.l.b16 %v735
      %v760 = vunpack.c.h.b16 %v735
      %v761 = vunpack.c.l.b16 %v736
      %v762 = vpack.c.b16 %v750, %v747
      %v763 = vpack.c.b16 %v751, %v748
      %v764 = vpack.c.b16 %v752, %v749
      %v765 = vpack.c.b16 %v756, %v753
      %v766 = vpack.c.b16 %v757, %v754
      %v767 = vpack.c.b16 %v758, %v755
      %v768 = vpack.c.b16 %v759, %v759
      %v769 = vpack.c.b16 %v760, %v760
      %v770 = vpack.c.b16 %v761, %v761
      %v778 = vsel %vm395, %v764, 0
      %v781 = vsel %vm395, %v767, 0
      %v784 = vsel %vm395, %v770, 0
      %786 = vmatprep.subr.bf16.mxu0 0
      %787 = vmatpush1.bf16.msra.mxu0 %v366
      %788 = vmatprep.subr.bf16.mxu0 0
      %789 = vmatpush1.bf16.msra.mxu0 %v365
      %790 = vmatprep.subr.bf16.mxu0 0
      %791 = vmatpush1.bf16.msra.mxu0 %v364
      %792 = vmatprep.subr.bf16.mxu0 0
      %793 = vmatpush1.bf16.msra.mxu0 %v363
      %794 = vmatprep.subr.bf16.mxu0 0
      %795 = vmatpush1.bf16.msra.mxu0 %v362
      %796 = vmatprep.subr.bf16.mxu0 0
      %797 = vmatpush1.bf16.msra.mxu0 %v361
      %798 = vmatprep.subr.bf16.mxu0 0
      %799 = vmatpush1.bf16.msra.mxu0 %v360
      %800 = vmatprep.subr.bf16.mxu0 0
      %801 = vmatpush1.bf16.msra.mxu0 %v359
      %802 = vmatprep.subr.bf16.mxu0 0
      %803 = vmatpush2.bf16.msra.mxu0 %v374
      %804 = vmatprep.subr.bf16.mxu0 0
      %805 = vmatpush2.bf16.msra.mxu0 %v373
      %806 = vmatprep.subr.bf16.mxu0 0
      %807 = vmatpush2.bf16.msra.mxu0 %v372
      %808 = vmatprep.subr.bf16.mxu0 0
      %809 = vmatpush2.bf16.msra.mxu0 %v371
      %810 = vmatprep.subr.bf16.mxu0 0
      %811 = vmatpush2.bf16.msra.mxu0 %v370
      %812 = vmatprep.subr.bf16.mxu0 0
      %813 = vmatpush2.bf16.msra.mxu0 %v369
      %814 = vmatprep.subr.bf16.mxu0 0
      %815 = vmatpush2.bf16.msra.mxu0 %v368
      %816 = vmatprep.subr.bf16.mxu0 0
      %817 = vmatpush2.bf16.msra.mxu0 %v367
      %818 = vmatprep.mubr.bf16.mxu0 %v763
      %819 = vmatmul.mubr.bf16.gmra.mxu0 %v762
      %v820 = vpop.f32.mrf.mxu0
      %v821 = vadd.f32 0.0, %v820
      %v822 = vpop.f32.mrf.mxu0
      %v823 = vpop.f32.mrf.mxu0
      %v824 = vadd.f32 0.0, %v823
      %v825 = vpop.f32.mrf.mxu0
      %826 = vmatprep.mubr.bf16.mxu0 %v766
      %827 = vmatmul.mubr.bf16.gmra.mxu0 %v765
      %v828 = vpop.f32.mrf.mxu0
      %v829 = vadd.f32 0.0, %v828
      %v830 = vpop.f32.mrf.mxu0
      %v831 = vpop.f32.mrf.mxu0
      %v832 = vadd.f32 0.0, %v831
      %v833 = vpop.f32.mrf.mxu0
      %834 = vmatprep.mubr.bf16.mxu0 %v769
      %835 = vmatmul.mubr.bf16.gmra.mxu0 %v768
      %v836 = vpop.f32.mrf.mxu0
      %v837 = vadd.f32 0.0, %v836
      %v838 = vpop.f32.mrf.mxu0
      %v839 = vpop.f32.mrf.mxu0
      %v840 = vpop.f32.mrf.mxu0
      %841 = vdwg.mxu0
      %842 = vmatprep.subr.bf16.mxu0 0
      %843 = vmatpush1.bf16.msra.mxu0 0
      %844 = vmatprep.subr.bf16.mxu0 0
      %845 = vmatpush1.bf16.msra.mxu0 0
      %846 = vmatprep.subr.bf16.mxu0 0
      %847 = vmatpush1.bf16.msra.mxu0 0
      %848 = vmatprep.subr.bf16.mxu0 0
      %849 = vmatpush1.bf16.msra.mxu0 0
      %850 = vmatprep.subr.bf16.mxu0 0
      %851 = vmatpush1.bf16.msra.mxu0 0
      %852 = vmatprep.subr.bf16.mxu0 0
      %853 = vmatpush1.bf16.msra.mxu0 0
      %854 = vmatprep.subr.bf16.mxu0 0
      %855 = vmatpush1.bf16.msra.mxu0 %v376
      %856 = vmatprep.subr.bf16.mxu0 0
      %857 = vmatpush1.bf16.msra.mxu0 %v375
      %858 = vmatprep.subr.bf16.mxu0 0
      %859 = vmatpush2.bf16.msra.mxu0 0
      %860 = vmatprep.subr.bf16.mxu0 0
      %861 = vmatpush2.bf16.msra.mxu0 0
      %862 = vmatprep.subr.bf16.mxu0 0
      %863 = vmatpush2.bf16.msra.mxu0 0
      %864 = vmatprep.subr.bf16.mxu0 0
      %865 = vmatpush2.bf16.msra.mxu0 0
      %866 = vmatprep.subr.bf16.mxu0 0
      %867 = vmatpush2.bf16.msra.mxu0 0
      %868 = vmatprep.subr.bf16.mxu0 0
      %869 = vmatpush2.bf16.msra.mxu0 0
      %870 = vmatprep.subr.bf16.mxu0 0
      %871 = vmatpush2.bf16.msra.mxu0 0
      %872 = vmatprep.subr.bf16.mxu0 0
      %873 = vmatpush2.bf16.msra.mxu0 0
      %874 = vmatprep.mubr.bf16.mxu0 0
      %875 = vmatmul.mubr.bf16.gmra.mxu0 %v778
      %v876 = vpop.f32.mrf.mxu0
      %v877 = vadd.f32 %v821, %v876
      %v878 = vpop.f32.mrf.mxu0
      %v879 = vpop.f32.mrf.mxu0
      %v880 = vadd.f32 %v824, %v879
      %v881 = vpop.f32.mrf.mxu0
      %882 = vmatprep.mubr.bf16.mxu0 0
      %883 = vmatmul.mubr.bf16.gmra.mxu0 %v781
      %v884 = vpop.f32.mrf.mxu0
      %v885 = vadd.f32 %v829, %v884
      %v886 = vpop.f32.mrf.mxu0
      %v887 = vpop.f32.mrf.mxu0
      %v888 = vadd.f32 %v832, %v887
      %v889 = vpop.f32.mrf.mxu0
      %890 = vmatprep.mubr.bf16.mxu0 0
      %891 = vmatmul.mubr.bf16.gmra.mxu0 %v784
      %v892 = vpop.f32.mrf.mxu0
      %v893 = vadd.f32 %v837, %v892
      %v894 = vpop.f32.mrf.mxu0
      %v895 = vpop.f32.mrf.mxu0
      %v896 = vpop.f32.mrf.mxu0
      %897 = vdwg.mxu0
      %v898 = vmul.f32 %v877, %v521
      %v899 = vmul.f32 %v880, %v521
      %v900 = vmul.f32 %v885, %v521
      %v901 = vmul.f32 %v888, %v521
      %v902 = vmul.f32 %v893, %v521
      %v903 = vadd.f32 %v898, %v532
      %v904 = vadd.f32 %v899, %v532
      %v905 = vadd.f32 %v900, %v532
      %v906 = vadd.f32 %v901, %v532
      %v907 = vadd.f32 %v902, %v532
      %s908 = scalar_lea.vmem %s192, 180
      %v909 = vld [vmem:[%s908] sm:$0xff]
      %v910 = vld [vmem:[%s908 + $0x8] sm:$0xf]
      %v911 = vld [vmem:[%s908 + $0xc] sm:$0xff]
      %v912 = vld [vmem:[%s908 + $0x14] sm:$0xf]
      %v913 = vld [vmem:[%s908 + $0x18] sm:$0xff]
      %v914 = vld [vmem:[%s908 + $0x20] sm:$0xf]
      %v915 = vld [vmem:[%s908 + $0x24] sm:$0xff]
      %v916 = vld [vmem:[%s908 + $0x2c] sm:$0xf]
      %v917 = vld [vmem:[%s908 + $0x30] sm:$0x33]
      %v918 = vld [vmem:[%s908 + $0x38] sm:$0x3]
      %v929 = vunpack.c.l.b16 %v909
      %v930 = vunpack.c.h.b16 %v909
      %v931 = vunpack.c.l.b16 %v910
      %v932 = vunpack.c.l.b16 %v911
      %v933 = vunpack.c.h.b16 %v911
      %v934 = vunpack.c.l.b16 %v912
      %v935 = vunpack.c.l.b16 %v913
      %v936 = vunpack.c.h.b16 %v913
      %v937 = vunpack.c.l.b16 %v914
      %v938 = vunpack.c.l.b16 %v915
      %v939 = vunpack.c.h.b16 %v915
      %v940 = vunpack.c.l.b16 %v916
      %v941 = vunpack.c.l.b16 %v917
      %v942 = vunpack.c.h.b16 %v917
      %v943 = vunpack.c.l.b16 %v918
      %v944 = vpack.c.b16 %v932, %v929
      %v945 = vpack.c.b16 %v933, %v930
      %v946 = vpack.c.b16 %v934, %v931
      %v947 = vpack.c.b16 %v938, %v935
      %v948 = vpack.c.b16 %v939, %v936
      %v949 = vpack.c.b16 %v940, %v937
      %v950 = vpack.c.b16 %v941, %v941
      %v951 = vpack.c.b16 %v942, %v942
      %v952 = vpack.c.b16 %v943, %v943
      %v960 = vsel %vm395, %v946, 0
      %v963 = vsel %vm395, %v949, 0
      %v966 = vsel %vm395, %v952, 0
      %968 = vmatprep.subr.bf16.mxu0 0
      %969 = vmatpush1.bf16.msra.mxu0 %v366
      %970 = vmatprep.subr.bf16.mxu0 0
      %971 = vmatpush1.bf16.msra.mxu0 %v365
      %972 = vmatprep.subr.bf16.mxu0 0
      %973 = vmatpush1.bf16.msra.mxu0 %v364
      %974 = vmatprep.subr.bf16.mxu0 0
      %975 = vmatpush1.bf16.msra.mxu0 %v363
      %976 = vmatprep.subr.bf16.mxu0 0
      %977 = vmatpush1.bf16.msra.mxu0 %v362
      %978 = vmatprep.subr.bf16.mxu0 0
      %979 = vmatpush1.bf16.msra.mxu0 %v361
      %980 = vmatprep.subr.bf16.mxu0 0
      %981 = vmatpush1.bf16.msra.mxu0 %v360
      %982 = vmatprep.subr.bf16.mxu0 0
      %983 = vmatpush1.bf16.msra.mxu0 %v359
      %984 = vmatprep.subr.bf16.mxu0 0
      %985 = vmatpush2.bf16.msra.mxu0 %v374
      %986 = vmatprep.subr.bf16.mxu0 0
      %987 = vmatpush2.bf16.msra.mxu0 %v373
      %988 = vmatprep.subr.bf16.mxu0 0
      %989 = vmatpush2.bf16.msra.mxu0 %v372
      %990 = vmatprep.subr.bf16.mxu0 0
      %991 = vmatpush2.bf16.msra.mxu0 %v371
      %992 = vmatprep.subr.bf16.mxu0 0
      %993 = vmatpush2.bf16.msra.mxu0 %v370
      %994 = vmatprep.subr.bf16.mxu0 0
      %995 = vmatpush2.bf16.msra.mxu0 %v369
      %996 = vmatprep.subr.bf16.mxu0 0
      %997 = vmatpush2.bf16.msra.mxu0 %v368
      %998 = vmatprep.subr.bf16.mxu0 0
      %999 = vmatpush2.bf16.msra.mxu0 %v367
      %1000 = vmatprep.mubr.bf16.mxu0 %v945
      %1001 = vmatmul.mubr.bf16.gmra.mxu0 %v944
      %v1002 = vpop.f32.mrf.mxu0
      %v1003 = vadd.f32 0.0, %v1002
      %v1004 = vpop.f32.mrf.mxu0
      %v1005 = vpop.f32.mrf.mxu0
      %v1006 = vadd.f32 0.0, %v1005
      %v1007 = vpop.f32.mrf.mxu0
      %1008 = vmatprep.mubr.bf16.mxu0 %v948
      %1009 = vmatmul.mubr.bf16.gmra.mxu0 %v947
      %v1010 = vpop.f32.mrf.mxu0
      %v1011 = vadd.f32 0.0, %v1010
      %v1012 = vpop.f32.mrf.mxu0
      %v1013 = vpop.f32.mrf.mxu0
      %v1014 = vadd.f32 0.0, %v1013
      %v1015 = vpop.f32.mrf.mxu0
      %1016 = vmatprep.mubr.bf16.mxu0 %v951
      %1017 = vmatmul.mubr.bf16.gmra.mxu0 %v950
      %v1018 = vpop.f32.mrf.mxu0
      %v1019 = vadd.f32 0.0, %v1018
      %v1020 = vpop.f32.mrf.mxu0
      %v1021 = vpop.f32.mrf.mxu0
      %v1022 = vpop.f32.mrf.mxu0
      %1023 = vdwg.mxu0
      %1024 = vmatprep.subr.bf16.mxu0 0
      %1025 = vmatpush1.bf16.msra.mxu0 0
      %1026 = vmatprep.subr.bf16.mxu0 0
      %1027 = vmatpush1.bf16.msra.mxu0 0
      %1028 = vmatprep.subr.bf16.mxu0 0
      %1029 = vmatpush1.bf16.msra.mxu0 0
      %1030 = vmatprep.subr.bf16.mxu0 0
      %1031 = vmatpush1.bf16.msra.mxu0 0
      %1032 = vmatprep.subr.bf16.mxu0 0
      %1033 = vmatpush1.bf16.msra.mxu0 0
      %1034 = vmatprep.subr.bf16.mxu0 0
      %1035 = vmatpush1.bf16.msra.mxu0 0
      %1036 = vmatprep.subr.bf16.mxu0 0
      %1037 = vmatpush1.bf16.msra.mxu0 %v376
      %1038 = vmatprep.subr.bf16.mxu0 0
      %1039 = vmatpush1.bf16.msra.mxu0 %v375
      %1040 = vmatprep.subr.bf16.mxu0 0
      %1041 = vmatpush2.bf16.msra.mxu0 0
      %1042 = vmatprep.subr.bf16.mxu0 0
      %1043 = vmatpush2.bf16.msra.mxu0 0
      %1044 = vmatprep.subr.bf16.mxu0 0
      %1045 = vmatpush2.bf16.msra.mxu0 0
      %1046 = vmatprep.subr.bf16.mxu0 0
      %1047 = vmatpush2.bf16.msra.mxu0 0
      %1048 = vmatprep.subr.bf16.mxu0 0
      %1049 = vmatpush2.bf16.msra.mxu0 0
      %1050 = vmatprep.subr.bf16.mxu0 0
      %1051 = vmatpush2.bf16.msra.mxu0 0
      %1052 = vmatprep.subr.bf16.mxu0 0
      %1053 = vmatpush2.bf16.msra.mxu0 0
      %1054 = vmatprep.subr.bf16.mxu0 0
      %1055 = vmatpush2.bf16.msra.mxu0 0
      %1056 = vmatprep.mubr.bf16.mxu0 0
      %1057 = vmatmul.mubr.bf16.gmra.mxu0 %v960
      %v1058 = vpop.f32.mrf.mxu0
      %v1059 = vadd.f32 %v1003, %v1058
      %v1060 = vpop.f32.mrf.mxu0
      %v1061 = vpop.f32.mrf.mxu0
      %v1062 = vadd.f32 %v1006, %v1061
      %v1063 = vpop.f32.mrf.mxu0
      %1064 = vmatprep.mubr.bf16.mxu0 0
      %1065 = vmatmul.mubr.bf16.gmra.mxu0 %v963
      %v1066 = vpop.f32.mrf.mxu0
      %v1067 = vadd.f32 %v1011, %v1066
      %v1068 = vpop.f32.mrf.mxu0
      %v1069 = vpop.f32.mrf.mxu0
      %v1070 = vadd.f32 %v1014, %v1069
      %v1071 = vpop.f32.mrf.mxu0
      %1072 = vmatprep.mubr.bf16.mxu0 0
      %1073 = vmatmul.mubr.bf16.gmra.mxu0 %v966
      %v1074 = vpop.f32.mrf.mxu0
      %v1075 = vadd.f32 %v1019, %v1074
      %v1076 = vpop.f32.mrf.mxu0
      %v1077 = vpop.f32.mrf.mxu0
      %v1078 = vpop.f32.mrf.mxu0
      %1079 = vdwg.mxu0
      %v1080 = vmul.f32 %v1059, %v521
      %v1081 = vmul.f32 %v1062, %v521
      %v1082 = vmul.f32 %v1067, %v521
      %v1083 = vmul.f32 %v1070, %v521
      %v1084 = vmul.f32 %v1075, %v521
      %v1085 = vadd.f32 %v1080, %v532
      %v1086 = vadd.f32 %v1081, %v532
      %v1087 = vadd.f32 %v1082, %v532
      %v1088 = vadd.f32 %v1083, %v532
      %v1089 = vadd.f32 %v1084, %v532
      %v1090 = vmax.f32 %v903, %v1085
      %v1091 = vmax.f32 %v904, %v1086
      %v1092 = vmax.f32 %v905, %v1087
      %v1093 = vmax.f32 %v906, %v1088
      %v1094 = vmax.f32 %v907, %v1089
      %v1095 = vmax.f32 %v721, %v1090
      %v1096 = vmax.f32 %v722, %v1091
      %v1097 = vmax.f32 %v723, %v1092
      %v1098 = vmax.f32 %v724, %v1093
      %v1099 = vmax.f32 %v725, %v1094
      %v1100 = vmax.f32 %v1095, 0.0
      %v1101 = vmax.f32 %v1096, 0.0
      %v1102 = vmax.f32 %v1097, 0.0
      %v1103 = vmax.f32 %v1098, 0.0
      %v1104 = vmax.f32 %v1099, 0.0
      %v1105 = vpack.c.bf16 %v1101, %v1100
      %v1106 = vpack.c.bf16 %v1103, %v1102
      %v1107 = vpack.c.bf16 %v1104, %v1104
      %v1111 = vunpack.c.l.b16 %v1105
      %v1112 = vunpack.c.h.b16 %v1105
      %v1113 = vunpack.c.l.b16 %v1106
      %v1114 = vunpack.c.h.b16 %v1106
      %v1115 = vunpack.c.l.b16 %v1107
      %v1116 = vpack.c.b16 %v1111, %v1111
      %v1117 = vpack.c.b16 %v1112, %v1112
      %v1118 = vpack.c.b16 %v1113, %v1113
      %v1119 = vpack.c.b16 %v1114, %v1114
      %v1120 = vpack.c.b16 %v1115, %v1115
      %vm1126 = vcmask 519168
      %1127 = vst.msk [vmem:[%s197] sm:$0xf] %vm1126, %v1116
      %1128 = vst.msk [vmem:[%s197 + $0x4] sm:$0xf] %vm1126, %v1117
      %1129 = vst.msk [vmem:[%s197 + $0x8] sm:$0xf] %vm1126, %v1118
      %1130 = vst.msk [vmem:[%s197 + $0xc] sm:$0xf] %vm1126, %v1119
      %vm1131 = vcmask 517120
      %1132 = vst.msk [vmem:[%s197 + $0x10] sm:$0x3] %vm1131, %v1120
      %p1133 = scmp.lt.s32.totalorder %s15, 1
      %s1134 = scalar_select %p1133, %s15, 1
      %s1135 = smul.addr %s1134, 5
      %s1136 = smul.addr %s1135, 4
      %s1137 = scalar_lea.vmem %s4, %s1136
      // Predicated region
      $region37: #{a_call__.8} parent=35 // pred_check
        %p1138 = pneg %p122
      $region38: #{a_call__.8} parent=35 // pred_check_branch
        %1140 = sbr.rel (%p1138) target = $region40
      $region39: #{a_call__.8} parent=35 // pred_region
        _
      $region40: #{a_call__.8} parent=35 // pred_fallthru
        _
    $region36: #{a_call__.8} parent=5 // pred_fallthru
      _
    %p1141 = scmp.le.s32.totalorder 2, %s10
    // Predicated region
    $region41: #{a_call__.8} parent=5 // pred_check
      %p1142 = pneg %p1141
    $region42: #{a_call__.8} parent=5 // pred_check_branch
      %1144 = sbr.rel (%p1142) target = $region44
    $region43: #{a_call__.8} parent=5 // pred_region
      %s1145 = ssub.s32 %s10, 2
      // Predicated region
      $region45: #{a_call__.8} parent=43 // pred_check
        %p1146 = pneg %p128
      $region46: #{a_call__.8} parent=43 // pred_check_branch
        %1148 = sbr.rel (%p1146) target = $region48
      $region47: #{a_call__.8} parent=43 // pred_region
        %p1149 = scmp.lt.s32.totalorder %s16, 1
        %s1150 = scalar_select %p1149, %s16, 1
        %s1151 = smul.addr %s1150, 5
        %s1152 = smul.addr %s1151, 4
        %s1153 = scalar_lea.vmem %s4, %s1152
      $region48: #{a_call__.8} parent=43 // pred_fallthru
        _
    $region44: #{a_call__.8} parent=5 // pred_fallthru
      _
  $region6: #{a_call__.8} parent=0 // loop_footer
    %s14 = sadd.s32 1, %s10
  $region7: #{a_call__.8} parent=0 // loop_footer_branch
    %9 = sbr.rel target = $region3
  $region8: #{a_call__.8} parent=0 // loop_exit
    _

// kernel: a_call__.9
$region0: #{a_call__.9}
  #allocation0 [shape = 'u32[]', space=smem, size = 0x4, offset = 0x4, fixed_abs, tag = 'smem constant byte address 0x4 - core index']
  #allocation1 [shape = 'u32[144,128]{1,0:T(1,128)}', space=vmem, size = 0x12000, scoped, tag = 'internal scratch']
  %s0 = inlined_call_operand.vmem [shape: bf16[2,2304], index: 0, kind: input, shape index: {}]
  %s1 = inlined_call_operand.vmem [shape: bf16[2304,640], index: 1, kind: input, shape index: {}]
  %s2 = inlined_call_operand.vmem [shape: f32[1,640], index: 2, kind: input, shape index: {}]
  %s3 = inlined_call_operand.vmem [shape: bf16[640,128], index: 3, kind: input, shape index: {}]
  %s4 = inlined_call_operand.vmem [shape: f32[1,128], index: 4, kind: input, shape index: {}]
  %s5 = inlined_call_operand.vmem [shape: bf16[128,128], index: 5, kind: input, shape index: {}]
  %s6 = inlined_call_operand.vmem [shape: f32[1,128], index: 6, kind: input, shape index: {}]
  %s7 = inlined_call_operand.hbm [shape: f32[2,128], index: 7, kind: output, shape index: {}]
  %s8 = sld [smem:[#allocation0]]
  $region38: #{a_call__.9} parent=0
    _
  %s10 = ssub.s32 1, %s8
  %s11 = scalar_select 0, %s10, %s8
  $region1: #{a_call__.9} parent=0
    #allocation2 [shape = 'u8[1024]{0}', space=vmem, size = 0x400, scoped, tag = 'output window, operand 0, single buffered']
    #allocation3 [shape = 's32[1]{0}', space=sflag, size = 0x4, scoped, tag = 'scoped memory for a_call__.9']
    %12 = vsyncpa [#allocation3], 0
    // Predicated region
    $region2: #{a_call__.9} parent=1 // pred_check
      _
    $region3: #{a_call__.9} parent=1 // pred_check_branch
      %14 = sbr.rel (0) target = $region5
    $region4: #{a_call__.9} parent=1 // pred_region
      _
    $region5: #{a_call__.9} parent=1 // pred_fallthru
      _
    // Predicated region
    $region6: #{a_call__.9} parent=1 // pred_check
      _
    $region7: #{a_call__.9} parent=1 // pred_check_branch
      %16 = sbr.rel (0) target = $region9
    $region8: #{a_call__.9} parent=1 // pred_region
      _
    $region9: #{a_call__.9} parent=1 // pred_fallthru
      _
    // Predicated region
    $region10: #{a_call__.9} parent=1 // pred_check
      _
    $region11: #{a_call__.9} parent=1 // pred_check_branch
      %18 = sbr.rel (0) target = $region13
    $region12: #{a_call__.9} parent=1 // pred_region
      _
    $region13: #{a_call__.9} parent=1 // pred_fallthru
      _
    // Predicated region
    $region14: #{a_call__.9} parent=1 // pred_check
      _
    $region15: #{a_call__.9} parent=1 // pred_check_branch
      %20 = sbr.rel (0) target = $region17
    $region16: #{a_call__.9} parent=1 // pred_region
      _
    $region17: #{a_call__.9} parent=1 // pred_fallthru
      _
    // Predicated region
    $region18: #{a_call__.9} parent=1 // pred_check
      _
    $region19: #{a_call__.9} parent=1 // pred_check_branch
      %22 = sbr.rel (0) target = $region21
    $region20: #{a_call__.9} parent=1 // pred_region
      _
    $region21: #{a_call__.9} parent=1 // pred_fallthru
      _
    // Predicated region
    $region22: #{a_call__.9} parent=1 // pred_check
      _
    $region23: #{a_call__.9} parent=1 // pred_check_branch
      %24 = sbr.rel (0) target = $region25
    $region24: #{a_call__.9} parent=1 // pred_region
      _
    $region25: #{a_call__.9} parent=1 // pred_fallthru
      _
    // Predicated region
    $region26: #{a_call__.9} parent=1 // pred_check
      _
    $region27: #{a_call__.9} parent=1 // pred_check_branch
      %26 = sbr.rel (0) target = $region29
    $region28: #{a_call__.9} parent=1 // pred_region
      _
    $region29: #{a_call__.9} parent=1 // pred_fallthru
      _
    %v28 = vld [vmem:[%s0] sm:$0xff]
    %v29 = vld [vmem:[%s0 + $0x8] sm:$0xff]
    %v30 = vld [vmem:[%s0 + $0x10] sm:$0x3]
    %v31 = vld [vmem:[%s1] sm:$0xff]
    %v32 = vld [vmem:[%s1 + $0x8] sm:$0xff]
    %v33 = vld [vmem:[%s1 + $0x10] sm:$0xf]
    %v34 = vld [vmem:[%s1 + $0x14] sm:$0xff]
    %v35 = vld [vmem:[%s1 + $0x1c] sm:$0xff]
    %v36 = vld [vmem:[%s1 + $0x24] sm:$0xf]
    %v37 = vld [vmem:[%s1 + $0x28] sm:$0xff]
    %v38 = vld [vmem:[%s1 + $0x30] sm:$0xff]
    %v39 = vld [vmem:[%s1 + $0x38] sm:$0xf]
    %v40 = vld [vmem:[%s1 + $0x3c] sm:$0xff]
    %v41 = vld [vmem:[%s1 + $0x44] sm:$0xff]
    %v42 = vld [vmem:[%s1 + $0x4c] sm:$0xf]
    %v43 = vld [vmem:[%s1 + $0x50] sm:$0xff]
    %v44 = vld [vmem:[%s1 + $0x58] sm:$0xff]
    %v45 = vld [vmem:[%s1 + $0x60] sm:$0xf]
    %v46 = vld [vmem:[%s1 + $0x64] sm:$0xff]
    %v47 = vld [vmem:[%s1 + $0x6c] sm:$0xff]
    %v48 = vld [vmem:[%s1 + $0x74] sm:$0xf]
    %v49 = vld [vmem:[%s1 + $0x78] sm:$0xff]
    %v50 = vld [vmem:[%s1 + $0x80] sm:$0xff]
    %v51 = vld [vmem:[%s1 + $0x88] sm:$0xf]
    %v52 = vld [vmem:[%s1 + $0x8c] sm:$0xff]
    %v53 = vld [vmem:[%s1 + $0x94] sm:$0xff]
    %v54 = vld [vmem:[%s1 + $0x9c] sm:$0xf]
    %v55 = vld [vmem:[%s1 + $0xa0] sm:$0xff]
    %v56 = vld [vmem:[%s1 + $0xa8] sm:$0xff]
    %v57 = vld [vmem:[%s1 + $0xb0] sm:$0xf]
    %v58 = vld [vmem:[%s1 + $0xb4] sm:$0xff]
    %v59 = vld [vmem:[%s1 + $0xbc] sm:$0xff]
    %v60 = vld [vmem:[%s1 + $0xc4] sm:$0xf]
    %v61 = vld [vmem:[%s1 + $0xc8] sm:$0xff]
    %v62 = vld [vmem:[%s1 + $0xd0] sm:$0xff]
    %v63 = vld [vmem:[%s1 + $0xd8] sm:$0xf]
    %v64 = vld [vmem:[%s1 + $0xdc] sm:$0xff]
    %v65 = vld [vmem:[%s1 + $0xe4] sm:$0xff]
    %v66 = vld [vmem:[%s1 + $0xec] sm:$0xf]
    %v67 = vld [vmem:[%s1 + $0xf0] sm:$0xff]
    %v68 = vld [vmem:[%s1 + $0xf8] sm:$0xff]
    %v69 = vld [vmem:[%s1 + $0x100] sm:$0xf]
    %v70 = vld [vmem:[%s1 + $0x104] sm:$0xff]
    %v71 = vld [vmem:[%s1 + $0x10c] sm:$0xff]
    %v72 = vld [vmem:[%s1 + $0x114] sm:$0xf]
    %v73 = vld [vmem:[%s1 + $0x118] sm:$0xff]
    %v74 = vld [vmem:[%s1 + $0x120] sm:$0xff]
    %v75 = vld [vmem:[%s1 + $0x128] sm:$0xf]
    %v76 = vld [vmem:[%s1 + $0x12c] sm:$0xff]
    %v77 = vld [vmem:[%s1 + $0x134] sm:$0xff]
    %v78 = vld [vmem:[%s1 + $0x13c] sm:$0xf]
    %v79 = vld [vmem:[%s1 + $0x140] sm:$0xff]
    %v80 = vld [vmem:[%s1 + $0x148] sm:$0xff]
    %v81 = vld [vmem:[%s1 + $0x150] sm:$0xf]
    %v82 = vld [vmem:[%s1 + $0x154] sm:$0xff]
    %v83 = vld [vmem:[%s1 + $0x15c] sm:$0xff]
    %v84 = vld [vmem:[%s1 + $0x164] sm:$0xf]
    %v85 = vld [vmem:[%s1 + $0x168] sm:$0xff]
    %v86 = vld [vmem:[%s1 + $0x170] sm:$0xff]
    %v87 = vld [vmem:[%s1 + $0x178] sm:$0xf]
    %v88 = vld [vmem:[%s1 + $0x17c] sm:$0xff]
    %v89 = vld [vmem:[%s1 + $0x184] sm:$0xff]
    %v90 = vld [vmem:[%s1 + $0x18c] sm:$0xf]
    %v91 = vld [vmem:[%s1 + $0x190] sm:$0xff]
    %v92 = vld [vmem:[%s1 + $0x198] sm:$0xff]
    %v93 = vld [vmem:[%s1 + $0x1a0] sm:$0xf]
    %v94 = vld [vmem:[%s1 + $0x1a4] sm:$0xff]
    %v95 = vld [vmem:[%s1 + $0x1ac] sm:$0xff]
    %v96 = vld [vmem:[%s1 + $0x1b4] sm:$0xf]
    %v97 = vld [vmem:[%s1 + $0x1b8] sm:$0xff]
    %v98 = vld [vmem:[%s1 + $0x1c0] sm:$0xff]
    %v99 = vld [vmem:[%s1 + $0x1c8] sm:$0xf]
    %v100 = vld [vmem:[%s1 + $0x1cc] sm:$0xff]
    %v101 = vld [vmem:[%s1 + $0x1d4] sm:$0xff]
    %v102 = vld [vmem:[%s1 + $0x1dc] sm:$0xf]
    %v103 = vld [vmem:[%s1 + $0x1e0] sm:$0xff]
    %v104 = vld [vmem:[%s1 + $0x1e8] sm:$0xff]
    %v105 = vld [vmem:[%s1 + $0x1f0] sm:$0xf]
    %v106 = vld [vmem:[%s1 + $0x1f4] sm:$0xff]
    %v107 = vld [vmem:[%s1 + $0x1fc] sm:$0xff]
    %v108 = vld [vmem:[%s1 + $0x204] sm:$0xf]
    %v109 = vld [vmem:[%s1 + $0x208] sm:$0xff]
    %v110 = vld [vmem:[%s1 + $0x210] sm:$0xff]
    %v111 = vld [vmem:[%s1 + $0x218] sm:$0xf]
    %v112 = vld [vmem:[%s1 + $0x21c] sm:$0xff]
    %v113 = vld [vmem:[%s1 + $0x224] sm:$0xff]
    %v114 = vld [vmem:[%s1 + $0x22c] sm:$0xf]
    %v115 = vld [vmem:[%s1 + $0x230] sm:$0xff]
    %v116 = vld [vmem:[%s1 + $0x238] sm:$0xff]
    %v117 = vld [vmem:[%s1 + $0x240] sm:$0xf]
    %v118 = vld [vmem:[%s1 + $0x244] sm:$0xff]
    %v119 = vld [vmem:[%s1 + $0x24c] sm:$0xff]
    %v120 = vld [vmem:[%s1 + $0x254] sm:$0xf]
    %v121 = vld [vmem:[%s1 + $0x258] sm:$0xff]
    %v122 = vld [vmem:[%s1 + $0x260] sm:$0xff]
    %v123 = vld [vmem:[%s1 + $0x268] sm:$0xf]
    %v124 = vld [vmem:[%s1 + $0x26c] sm:$0xff]
    %v125 = vld [vmem:[%s1 + $0x274] sm:$0xff]
    %v126 = vld [vmem:[%s1 + $0x27c] sm:$0xf]
    %v127 = vld [vmem:[%s1 + $0x280] sm:$0xff]
    %v128 = vld [vmem:[%s1 + $0x288] sm:$0xff]
    %v129 = vld [vmem:[%s1 + $0x290] sm:$0xf]
    %v130 = vld [vmem:[%s1 + $0x294] sm:$0xff]
    %v131 = vld [vmem:[%s1 + $0x29c] sm:$0xff]
    %v132 = vld [vmem:[%s1 + $0x2a4] sm:$0xf]
    %v133 = vld [vmem:[%s1 + $0x2a8] sm:$0xff]
    %v134 = vld [vmem:[%s1 + $0x2b0] sm:$0xff]
    %v135 = vld [vmem:[%s1 + $0x2b8] sm:$0xf]
    %v136 = vld [vmem:[%s1 + $0x2bc] sm:$0xff]
    %v137 = vld [vmem:[%s1 + $0x2c4] sm:$0xff]
    %v138 = vld [vmem:[%s1 + $0x2cc] sm:$0xf]
    %v139 = vld [vmem:[%s1 + $0x2d0] sm:$0xff]
    %v140 = vld [vmem:[%s1 + $0x2d8] sm:$0xff]
    %v141 = vld [vmem:[%s1 + $0x2e0] sm:$0xf]
    %v142 = vld [vmem:[%s1 + $0x2e4] sm:$0xff]
    %v143 = vld [vmem:[%s1 + $0x2ec] sm:$0xff]
    %v144 = vld [vmem:[%s1 + $0x2f4] sm:$0xf]
    %v145 = vld [vmem:[%s1 + $0x2f8] sm:$0xff]
    %v146 = vld [vmem:[%s1 + $0x300] sm:$0xff]
    %v147 = vld [vmem:[%s1 + $0x308] sm:$0xf]
    %v148 = vld [vmem:[%s1 + $0x30c] sm:$0xff]
    %v149 = vld [vmem:[%s1 + $0x314] sm:$0xff]
    %v150 = vld [vmem:[%s1 + $0x31c] sm:$0xf]
    %v151 = vld [vmem:[%s1 + $0x320] sm:$0xff]
    %v152 = vld [vmem:[%s1 + $0x328] sm:$0xff]
    %v153 = vld [vmem:[%s1 + $0x330] sm:$0xf]
    %v154 = vld [vmem:[%s1 + $0x334] sm:$0xff]
    %v155 = vld [vmem:[%s1 + $0x33c] sm:$0xff]
    %v156 = vld [vmem:[%s1 + $0x344] sm:$0xf]
    %v157 = vld [vmem:[%s1 + $0x348] sm:$0xff]
    %v158 = vld [vmem:[%s1 + $0x350] sm:$0xff]
    %v159 = vld [vmem:[%s1 + $0x358] sm:$0xf]
    %v160 = vld [vmem:[%s1 + $0x35c] sm:$0xff]
    %v161 = vld [vmem:[%s1 + $0x364] sm:$0xff]
    %v162 = vld [vmem:[%s1 + $0x36c] sm:$0xf]
    %v163 = vld [vmem:[%s1 + $0x370] sm:$0xff]
    %v164 = vld [vmem:[%s1 + $0x378] sm:$0xff]
    %v165 = vld [vmem:[%s1 + $0x380] sm:$0xf]
    %v166 = vld [vmem:[%s1 + $0x384] sm:$0xff]
    %v167 = vld [vmem:[%s1 + $0x38c] sm:$0xff]
    %v168 = vld [vmem:[%s1 + $0x394] sm:$0xf]
    %v169 = vld [vmem:[%s1 + $0x398] sm:$0xff]
    %v170 = vld [vmem:[%s1 + $0x3a0] sm:$0xff]
    %v171 = vld [vmem:[%s1 + $0x3a8] sm:$0xf]
    %v172 = vld [vmem:[%s1 + $0x3ac] sm:$0xff]
    %v173 = vld [vmem:[%s1 + $0x3b4] sm:$0xff]
    %v174 = vld [vmem:[%s1 + $0x3bc] sm:$0xf]
    %v175 = vld [vmem:[%s1 + $0x3c0] sm:$0xff]
    %v176 = vld [vmem:[%s1 + $0x3c8] sm:$0xff]
    %v177 = vld [vmem:[%s1 + $0x3d0] sm:$0xf]
    %v178 = vld [vmem:[%s1 + $0x3d4] sm:$0xff]
    %v179 = vld [vmem:[%s1 + $0x3dc] sm:$0xff]
    %v180 = vld [vmem:[%s1 + $0x3e4] sm:$0xf]
    %v181 = vld [vmem:[%s1 + $0x3e8] sm:$0xff]
    %v182 = vld [vmem:[%s1 + $0x3f0] sm:$0xff]
    %v183 = vld [vmem:[%s1 + $0x3f8] sm:$0xf]
    %v184 = vld [vmem:[%s1 + $0x3fc] sm:$0xff]
    %v185 = vld [vmem:[%s1 + $0x404] sm:$0xff]
    %v186 = vld [vmem:[%s1 + $0x40c] sm:$0xf]
    %v187 = vld [vmem:[%s1 + $0x410] sm:$0xff]
    %v188 = vld [vmem:[%s1 + $0x418] sm:$0xff]
    %v189 = vld [vmem:[%s1 + $0x420] sm:$0xf]
    %v190 = vld [vmem:[%s1 + $0x424] sm:$0xff]
    %v191 = vld [vmem:[%s1 + $0x42c] sm:$0xff]
    %v192 = vld [vmem:[%s1 + $0x434] sm:$0xf]
    %v193 = vld [vmem:[%s1 + $0x438] sm:$0xff]
    %v194 = vld [vmem:[%s1 + $0x440] sm:$0xff]
    %v195 = vld [vmem:[%s1 + $0x448] sm:$0xf]
    %v196 = vld [vmem:[%s1 + $0x44c] sm:$0xff]
    %v197 = vld [vmem:[%s1 + $0x454] sm:$0xff]
    %v198 = vld [vmem:[%s1 + $0x45c] sm:$0xf]
    %v199 = vld [vmem:[%s1 + $0x460] sm:$0xff]
    %v200 = vld [vmem:[%s1 + $0x468] sm:$0xff]
    %v201 = vld [vmem:[%s1 + $0x470] sm:$0xf]
    %v202 = vld [vmem:[%s1 + $0x474] sm:$0xff]
    %v203 = vld [vmem:[%s1 + $0x47c] sm:$0xff]
    %v204 = vld [vmem:[%s1 + $0x484] sm:$0xf]
    %v205 = vld [vmem:[%s1 + $0x488] sm:$0xff]
    %v206 = vld [vmem:[%s1 + $0x490] sm:$0xff]
    %v207 = vld [vmem:[%s1 + $0x498] sm:$0xf]
    %v208 = vld [vmem:[%s1 + $0x49c] sm:$0xff]
    %v209 = vld [vmem:[%s1 + $0x4a4] sm:$0xff]
    %v210 = vld [vmem:[%s1 + $0x4ac] sm:$0xf]
    %v211 = vld [vmem:[%s1 + $0x4b0] sm:$0xff]
    %v212 = vld [vmem:[%s1 + $0x4b8] sm:$0xff]
    %v213 = vld [vmem:[%s1 + $0x4c0] sm:$0xf]
    %v214 = vld [vmem:[%s1 + $0x4c4] sm:$0xff]
    %v215 = vld [vmem:[%s1 + $0x4cc] sm:$0xff]
    %v216 = vld [vmem:[%s1 + $0x4d4] sm:$0xf]
    %v217 = vld [vmem:[%s1 + $0x4d8] sm:$0xff]
    %v218 = vld [vmem:[%s1 + $0x4e0] sm:$0xff]
    %v219 = vld [vmem:[%s1 + $0x4e8] sm:$0xf]
    %v220 = vld [vmem:[%s1 + $0x4ec] sm:$0xff]
    %v221 = vld [vmem:[%s1 + $0x4f4] sm:$0xff]
    %v222 = vld [vmem:[%s1 + $0x4fc] sm:$0xf]
    %v223 = vld [vmem:[%s1 + $0x500] sm:$0xff]
    %v224 = vld [vmem:[%s1 + $0x508] sm:$0xff]
    %v225 = vld [vmem:[%s1 + $0x510] sm:$0xf]
    %v226 = vld [vmem:[%s1 + $0x514] sm:$0xff]
    %v227 = vld [vmem:[%s1 + $0x51c] sm:$0xff]
    %v228 = vld [vmem:[%s1 + $0x524] sm:$0xf]
    %v229 = vld [vmem:[%s1 + $0x528] sm:$0xff]
    %v230 = vld [vmem:[%s1 + $0x530] sm:$0xff]
    %v231 = vld [vmem:[%s1 + $0x538] sm:$0xf]
    %v232 = vld [vmem:[%s1 + $0x53c] sm:$0xff]
    %v233 = vld [vmem:[%s1 + $0x544] sm:$0xff]
    %v234 = vld [vmem:[%s1 + $0x54c] sm:$0xf]
    %v235 = vld [vmem:[%s1 + $0x550] sm:$0xff]
    %v236 = vld [vmem:[%s1 + $0x558] sm:$0xff]
    %v237 = vld [vmem:[%s1 + $0x560] sm:$0xf]
    %v238 = vld [vmem:[%s1 + $0x564] sm:$0xff]
    %v239 = vld [vmem:[%s1 + $0x56c] sm:$0xff]
    %v240 = vld [vmem:[%s1 + $0x574] sm:$0xf]
    %v241 = vld [vmem:[%s1 + $0x578] sm:$0xff]
    %v242 = vld [vmem:[%s1 + $0x580] sm:$0xff]
    %v243 = vld [vmem:[%s1 + $0x588] sm:$0xf]
    %v244 = vld [vmem:[%s1 + $0x58c] sm:$0xff]
    %v245 = vld [vmem:[%s1 + $0x594] sm:$0xff]
    %v246 = vld [vmem:[%s1 + $0x59c] sm:$0xf]
    %v247 = vld [vmem:[%s1 + $0x5a0] sm:$0xff]
    %v248 = vld [vmem:[%s1 + $0x5a8] sm:$0xff]
    %v249 = vld [vmem:[%s1 + $0x5b0] sm:$0xf]
    %v250 = vld [vmem:[%s1 + $0x5b4] sm:$0xff]
    %v251 = vld [vmem:[%s1 + $0x5bc] sm:$0xff]
    %v252 = vld [vmem:[%s1 + $0x5c4] sm:$0xf]
    %v253 = vld [vmem:[%s1 + $0x5c8] sm:$0xff]
    %v254 = vld [vmem:[%s1 + $0x5d0] sm:$0xff]
    %v255 = vld [vmem:[%s1 + $0x5d8] sm:$0xf]
    %v256 = vld [vmem:[%s1 + $0x5dc] sm:$0xff]
    %v257 = vld [vmem:[%s1 + $0x5e4] sm:$0xff]
    %v258 = vld [vmem:[%s1 + $0x5ec] sm:$0xf]
    %v259 = vld [vmem:[%s1 + $0x5f0] sm:$0xff]
    %v260 = vld [vmem:[%s1 + $0x5f8] sm:$0xff]
    %v261 = vld [vmem:[%s1 + $0x600] sm:$0xf]
    %v262 = vld [vmem:[%s1 + $0x604] sm:$0xff]
    %v263 = vld [vmem:[%s1 + $0x60c] sm:$0xff]
    %v264 = vld [vmem:[%s1 + $0x614] sm:$0xf]
    %v265 = vld [vmem:[%s1 + $0x618] sm:$0xff]
    %v266 = vld [vmem:[%s1 + $0x620] sm:$0xff]
    %v267 = vld [vmem:[%s1 + $0x628] sm:$0xf]
    %v268 = vld [vmem:[%s1 + $0x62c] sm:$0xff]
    %v269 = vld [vmem:[%s1 + $0x634] sm:$0xff]
    %v270 = vld [vmem:[%s1 + $0x63c] sm:$0xf]
    %v271 = vld [vmem:[%s1 + $0x640] sm:$0xff]
    %v272 = vld [vmem:[%s1 + $0x648] sm:$0xff]
    %v273 = vld [vmem:[%s1 + $0x650] sm:$0xf]
    %v274 = vld [vmem:[%s1 + $0x654] sm:$0xff]
    %v275 = vld [vmem:[%s1 + $0x65c] sm:$0xff]
    %v276 = vld [vmem:[%s1 + $0x664] sm:$0xf]
    %v277 = vld [vmem:[%s1 + $0x668] sm:$0xff]
    %v278 = vld [vmem:[%s1 + $0x670] sm:$0xff]
    %v279 = vld [vmem:[%s1 + $0x678] sm:$0xf]
    %v280 = vld [vmem:[%s1 + $0x67c] sm:$0xff]
    %v281 = vld [vmem:[%s1 + $0x684] sm:$0xff]
    %v282 = vld [vmem:[%s1 + $0x68c] sm:$0xf]
    %v283 = vld [vmem:[%s1 + $0x690] sm:$0xff]
    %v284 = vld [vmem:[%s1 + $0x698] sm:$0xff]
    %v285 = vld [vmem:[%s1 + $0x6a0] sm:$0xf]
    %v286 = vld [vmem:[%s1 + $0x6a4] sm:$0xff]
    %v287 = vld [vmem:[%s1 + $0x6ac] sm:$0xff]
    %v288 = vld [vmem:[%s1 + $0x6b4] sm:$0xf]
    %v289 = vld [vmem:[%s1 + $0x6b8] sm:$0xff]
    %v290 = vld [vmem:[%s1 + $0x6c0] sm:$0xff]
    %v291 = vld [vmem:[%s1 + $0x6c8] sm:$0xf]
    %v292 = vld [vmem:[%s1 + $0x6cc] sm:$0xff]
    %v293 = vld [vmem:[%s1 + $0x6d4] sm:$0xff]
    %v294 = vld [vmem:[%s1 + $0x6dc] sm:$0xf]
    %v295 = vld [vmem:[%s1 + $0x6e0] sm:$0xff]
    %v296 = vld [vmem:[%s1 + $0x6e8] sm:$0xff]
    %v297 = vld [vmem:[%s1 + $0x6f0] sm:$0xf]
    %v298 = vld [vmem:[%s1 + $0x6f4] sm:$0xff]
    %v299 = vld [vmem:[%s1 + $0x6fc] sm:$0xff]
    %v300 = vld [vmem:[%s1 + $0x704] sm:$0xf]
    %v301 = vld [vmem:[%s1 + $0x708] sm:$0xff]
    %v302 = vld [vmem:[%s1 + $0x710] sm:$0xff]
    %v303 = vld [vmem:[%s1 + $0x718] sm:$0xf]
    %v304 = vld [vmem:[%s1 + $0x71c] sm:$0xff]
    %v305 = vld [vmem:[%s1 + $0x724] sm:$0xff]
    %v306 = vld [vmem:[%s1 + $0x72c] sm:$0xf]
    %v307 = vld [vmem:[%s1 + $0x730] sm:$0xff]
    %v308 = vld [vmem:[%s1 + $0x738] sm:$0xff]
    %v309 = vld [vmem:[%s1 + $0x740] sm:$0xf]
    %v310 = vld [vmem:[%s1 + $0x744] sm:$0xff]
    %v311 = vld [vmem:[%s1 + $0x74c] sm:$0xff]
    %v312 = vld [vmem:[%s1 + $0x754] sm:$0xf]
    %v313 = vld [vmem:[%s1 + $0x758] sm:$0xff]
    %v314 = vld [vmem:[%s1 + $0x760] sm:$0xff]
    %v315 = vld [vmem:[%s1 + $0x768] sm:$0xf]
    %v316 = vld [vmem:[%s1 + $0x76c] sm:$0xff]
    %v317 = vld [vmem:[%s1 + $0x774] sm:$0xff]
    %v318 = vld [vmem:[%s1 + $0x77c] sm:$0xf]
    %v319 = vld [vmem:[%s1 + $0x780] sm:$0xff]
    %v320 = vld [vmem:[%s1 + $0x788] sm:$0xff]
    %v321 = vld [vmem:[%s1 + $0x790] sm:$0xf]
    %v322 = vld [vmem:[%s1 + $0x794] sm:$0xff]
    %v323 = vld [vmem:[%s1 + $0x79c] sm:$0xff]
    %v324 = vld [vmem:[%s1 + $0x7a4] sm:$0xf]
    %v325 = vld [vmem:[%s1 + $0x7a8] sm:$0xff]
    %v326 = vld [vmem:[%s1 + $0x7b0] sm:$0xff]
    %v327 = vld [vmem:[%s1 + $0x7b8] sm:$0xf]
    %v328 = vld [vmem:[%s1 + $0x7bc] sm:$0xff]
    %v329 = vld [vmem:[%s1 + $0x7c4] sm:$0xff]
    %v330 = vld [vmem:[%s1 + $0x7cc] sm:$0xf]
    %v331 = vld [vmem:[%s1 + $0x7d0] sm:$0xff]
    %v332 = vld [vmem:[%s1 + $0x7d8] sm:$0xff]
    %v333 = vld [vmem:[%s1 + $0x7e0] sm:$0xf]
    %v334 = vld [vmem:[%s1 + $0x7e4] sm:$0xff]
    %v335 = vld [vmem:[%s1 + $0x7ec] sm:$0xff]
    %v336 = vld [vmem:[%s1 + $0x7f4] sm:$0xf]
    %v337 = vld [vmem:[%s1 + $0x7f8] sm:$0xff]
    %v338 = vld [vmem:[%s1 + $0x800] sm:$0xff]
    %v339 = vld [vmem:[%s1 + $0x808] sm:$0xf]
    %v340 = vld [vmem:[%s1 + $0x80c] sm:$0xff]
    %v341 = vld [vmem:[%s1 + $0x814] sm:$0xff]
    %v342 = vld [vmem:[%s1 + $0x81c] sm:$0xf]
    %v343 = vld [vmem:[%s1 + $0x820] sm:$0xff]
    %v344 = vld [vmem:[%s1 + $0x828] sm:$0xff]
    %v345 = vld [vmem:[%s1 + $0x830] sm:$0xf]
    %v346 = vld [vmem:[%s1 + $0x834] sm:$0xff]
    %v347 = vld [vmem:[%s1 + $0x83c] sm:$0xff]
    %v348 = vld [vmem:[%s1 + $0x844] sm:$0xf]
    %v349 = vld [vmem:[%s1 + $0x848] sm:$0xff]
    %v350 = vld [vmem:[%s1 + $0x850] sm:$0xff]
    %v351 = vld [vmem:[%s1 + $0x858] sm:$0xf]
    %v352 = vld [vmem:[%s1 + $0x85c] sm:$0xff]
    %v353 = vld [vmem:[%s1 + $0x864] sm:$0xff]
    %v354 = vld [vmem:[%s1 + $0x86c] sm:$0xf]
    %v355 = vld [vmem:[%s1 + $0x870] sm:$0xff]
    %v356 = vld [vmem:[%s1 + $0x878] sm:$0xff]
    %v357 = vld [vmem:[%s1 + $0x880] sm:$0xf]
    %v358 = vld [vmem:[%s1 + $0x884] sm:$0xff]
    %v359 = vld [vmem:[%s1 + $0x88c] sm:$0xff]
    %v360 = vld [vmem:[%s1 + $0x894] sm:$0xf]
    %v361 = vld [vmem:[%s1 + $0x898] sm:$0xff]
    %v362 = vld [vmem:[%s1 + $0x8a0] sm:$0xff]
    %v363 = vld [vmem:[%s1 + $0x8a8] sm:$0xf]
    %v364 = vld [vmem:[%s1 + $0x8ac] sm:$0xff]
    %v365 = vld [vmem:[%s1 + $0x8b4] sm:$0xff]
    %v366 = vld [vmem:[%s1 + $0x8bc] sm:$0xf]
    %v367 = vld [vmem:[%s1 + $0x8c0] sm:$0xff]
    %v368 = vld [vmem:[%s1 + $0x8c8] sm:$0xff]
    %v369 = vld [vmem:[%s1 + $0x8d0] sm:$0xf]
    %v370 = vld [vmem:[%s1 + $0x8d4] sm:$0xff]
    %v371 = vld [vmem:[%s1 + $0x8dc] sm:$0xff]
    %v372 = vld [vmem:[%s1 + $0x8e4] sm:$0xf]
    %v373 = vld [vmem:[%s1 + $0x8e8] sm:$0xff]
    %v374 = vld [vmem:[%s1 + $0x8f0] sm:$0xff]
    %v375 = vld [vmem:[%s1 + $0x8f8] sm:$0xf]
    %v376 = vld [vmem:[%s1 + $0x8fc] sm:$0xff]
    %v377 = vld [vmem:[%s1 + $0x904] sm:$0xff]
    %v378 = vld [vmem:[%s1 + $0x90c] sm:$0xf]
    %v379 = vld [vmem:[%s1 + $0x910] sm:$0xff]
    %v380 = vld [vmem:[%s1 + $0x918] sm:$0xff]
    %v381 = vld [vmem:[%s1 + $0x920] sm:$0xf]
    %v382 = vld [vmem:[%s1 + $0x924] sm:$0xff]
    %v383 = vld [vmem:[%s1 + $0x92c] sm:$0xff]
    %v384 = vld [vmem:[%s1 + $0x934] sm:$0xf]
    %v385 = vld [vmem:[%s1 + $0x938] sm:$0xff]
    %v386 = vld [vmem:[%s1 + $0x940] sm:$0xff]
    %v387 = vld [vmem:[%s1 + $0x948] sm:$0xf]
    %v388 = vld [vmem:[%s1 + $0x94c] sm:$0xff]
    %v389 = vld [vmem:[%s1 + $0x954] sm:$0xff]
    %v390 = vld [vmem:[%s1 + $0x95c] sm:$0xf]
    %v391 = vld [vmem:[%s1 + $0x960] sm:$0xff]
    %v392 = vld [vmem:[%s1 + $0x968] sm:$0xff]
    %v393 = vld [vmem:[%s1 + $0x970] sm:$0xf]
    %v394 = vld [vmem:[%s1 + $0x974] sm:$0xff]
    %v395 = vld [vmem:[%s1 + $0x97c] sm:$0xff]
    %v396 = vld [vmem:[%s1 + $0x984] sm:$0xf]
    %v397 = vld [vmem:[%s1 + $0x988] sm:$0xff]
    %v398 = vld [vmem:[%s1 + $0x990] sm:$0xff]
    %v399 = vld [vmem:[%s1 + $0x998] sm:$0xf]
    %v400 = vld [vmem:[%s1 + $0x99c] sm:$0xff]
    %v401 = vld [vmem:[%s1 + $0x9a4] sm:$0xff]
    %v402 = vld [vmem:[%s1 + $0x9ac] sm:$0xf]
    %v403 = vld [vmem:[%s1 + $0x9b0] sm:$0xff]
    %v404 = vld [vmem:[%s1 + $0x9b8] sm:$0xff]
    %v405 = vld [vmem:[%s1 + $0x9c0] sm:$0xf]
    %v406 = vld [vmem:[%s1 + $0x9c4] sm:$0xff]
    %v407 = vld [vmem:[%s1 + $0x9cc] sm:$0xff]
    %v408 = vld [vmem:[%s1 + $0x9d4] sm:$0xf]
    %v409 = vld [vmem:[%s1 + $0x9d8] sm:$0xff]
    %v410 = vld [vmem:[%s1 + $0x9e0] sm:$0xff]
    %v411 = vld [vmem:[%s1 + $0x9e8] sm:$0xf]
    %v412 = vld [vmem:[%s1 + $0x9ec] sm:$0xff]
    %v413 = vld [vmem:[%s1 + $0x9f4] sm:$0xff]
    %v414 = vld [vmem:[%s1 + $0x9fc] sm:$0xf]
    %v415 = vld [vmem:[%s1 + $0xa00] sm:$0xff]
    %v416 = vld [vmem:[%s1 + $0xa08] sm:$0xff]
    %v417 = vld [vmem:[%s1 + $0xa10] sm:$0xf]
    %v418 = vld [vmem:[%s1 + $0xa14] sm:$0xff]
    %v419 = vld [vmem:[%s1 + $0xa1c] sm:$0xff]
    %v420 = vld [vmem:[%s1 + $0xa24] sm:$0xf]
    %v421 = vld [vmem:[%s1 + $0xa28] sm:$0xff]
    %v422 = vld [vmem:[%s1 + $0xa30] sm:$0xff]
    %v423 = vld [vmem:[%s1 + $0xa38] sm:$0xf]
    %v424 = vld [vmem:[%s1 + $0xa3c] sm:$0xff]
    %v425 = vld [vmem:[%s1 + $0xa44] sm:$0xff]
    %v426 = vld [vmem:[%s1 + $0xa4c] sm:$0xf]
    %v427 = vld [vmem:[%s1 + $0xa50] sm:$0xff]
    %v428 = vld [vmem:[%s1 + $0xa58] sm:$0xff]
    %v429 = vld [vmem:[%s1 + $0xa60] sm:$0xf]
    %v430 = vld [vmem:[%s1 + $0xa64] sm:$0xff]
    %v431 = vld [vmem:[%s1 + $0xa6c] sm:$0xff]
    %v432 = vld [vmem:[%s1 + $0xa74] sm:$0xf]
    %v433 = vld [vmem:[%s1 + $0xa78] sm:$0xff]
    %v434 = vld [vmem:[%s1 + $0xa80] sm:$0xff]
    %v435 = vld [vmem:[%s1 + $0xa88] sm:$0xf]
    %v436 = vld [vmem:[%s1 + $0xa8c] sm:$0xff]
    %v437 = vld [vmem:[%s1 + $0xa94] sm:$0xff]
    %v438 = vld [vmem:[%s1 + $0xa9c] sm:$0xf]
    %v439 = vld [vmem:[%s1 + $0xaa0] sm:$0xff]
    %v440 = vld [vmem:[%s1 + $0xaa8] sm:$0xff]
    %v441 = vld [vmem:[%s1 + $0xab0] sm:$0xf]
    %v442 = vld [vmem:[%s1 + $0xab4] sm:$0xff]
    %v443 = vld [vmem:[%s1 + $0xabc] sm:$0xff]
    %v444 = vld [vmem:[%s1 + $0xac4] sm:$0xf]
    %v445 = vld [vmem:[%s1 + $0xac8] sm:$0xff]
    %v446 = vld [vmem:[%s1 + $0xad0] sm:$0xff]
    %v447 = vld [vmem:[%s1 + $0xad8] sm:$0xf]
    %v448 = vld [vmem:[%s1 + $0xadc] sm:$0xff]
    %v449 = vld [vmem:[%s1 + $0xae4] sm:$0xff]
    %v450 = vld [vmem:[%s1 + $0xaec] sm:$0xf]
    %v451 = vld [vmem:[%s1 + $0xaf0] sm:$0xff]
    %v452 = vld [vmem:[%s1 + $0xaf8] sm:$0xff]
    %v453 = vld [vmem:[%s1 + $0xb00] sm:$0xf]
    %v454 = vld [vmem:[%s1 + $0xb04] sm:$0xff]
    %v455 = vld [vmem:[%s1 + $0xb0c] sm:$0xff]
    %v456 = vld [vmem:[%s1 + $0xb14] sm:$0xf]
    %v457 = vld [vmem:[%s1 + $0xb18] sm:$0xff]
    %v458 = vld [vmem:[%s1 + $0xb20] sm:$0xff]
    %v459 = vld [vmem:[%s1 + $0xb28] sm:$0xf]
    %v460 = vld [vmem:[%s1 + $0xb2c] sm:$0xff]
    %v461 = vld [vmem:[%s1 + $0xb34] sm:$0xff]
    %v462 = vld [vmem:[%s1 + $0xb3c] sm:$0xf]
    %v463 = vld [vmem:[%s1 + $0xb40] sm:$0xff]
    %v464 = vld [vmem:[%s1 + $0xb48] sm:$0xff]
    %v465 = vld [vmem:[%s1 + $0xb50] sm:$0xf]
    %v466 = vld [vmem:[%s1 + $0xb54] sm:$0xff]
    %v467 = vld [vmem:[%s1 + $0xb5c] sm:$0xff]
    %v468 = vld [vmem:[%s1 + $0xb64] sm:$0xf]
    %v469 = vld [vmem:[%s1 + $0xb68] sm:$0xff]
    %v470 = vld [vmem:[%s1 + $0xb70] sm:$0xff]
    %v471 = vld [vmem:[%s1 + $0xb78] sm:$0xf]
    %v472 = vld [vmem:[%s1 + $0xb7c] sm:$0xff]
    %v473 = vld [vmem:[%s1 + $0xb84] sm:$0xff]
    %v474 = vld [vmem:[%s1 + $0xb8c] sm:$0xf]
    %v475 = vld [vmem:[%s1 + $0xb90] sm:$0xff]
    %v476 = vld [vmem:[%s1 + $0xb98] sm:$0xff]
    %v477 = vld [vmem:[%s1 + $0xba0] sm:$0xf]
    %v478 = vld [vmem:[%s1 + $0xba4] sm:$0xff]
    %v479 = vld [vmem:[%s1 + $0xbac] sm:$0xff]
    %v480 = vld [vmem:[%s1 + $0xbb4] sm:$0xf]
    %v481 = vld [vmem:[%s1 + $0xbb8] sm:$0xff]
    %v482 = vld [vmem:[%s1 + $0xbc0] sm:$0xff]
    %v483 = vld [vmem:[%s1 + $0xbc8] sm:$0xf]
    %v484 = vld [vmem:[%s1 + $0xbcc] sm:$0xff]
    %v485 = vld [vmem:[%s1 + $0xbd4] sm:$0xff]
    %v486 = vld [vmem:[%s1 + $0xbdc] sm:$0xf]
    %v487 = vld [vmem:[%s1 + $0xbe0] sm:$0xff]
    %v488 = vld [vmem:[%s1 + $0xbe8] sm:$0xff]
    %v489 = vld [vmem:[%s1 + $0xbf0] sm:$0xf]
    %v490 = vld [vmem:[%s1 + $0xbf4] sm:$0xff]
    %v491 = vld [vmem:[%s1 + $0xbfc] sm:$0xff]
    %v492 = vld [vmem:[%s1 + $0xc04] sm:$0xf]
    %v493 = vld [vmem:[%s1 + $0xc08] sm:$0xff]
    %v494 = vld [vmem:[%s1 + $0xc10] sm:$0xff]
    %v495 = vld [vmem:[%s1 + $0xc18] sm:$0xf]
    %v496 = vld [vmem:[%s1 + $0xc1c] sm:$0xff]
    %v497 = vld [vmem:[%s1 + $0xc24] sm:$0xff]
    %v498 = vld [vmem:[%s1 + $0xc2c] sm:$0xf]
    %v499 = vld [vmem:[%s1 + $0xc30] sm:$0xff]
    %v500 = vld [vmem:[%s1 + $0xc38] sm:$0xff]
    %v501 = vld [vmem:[%s1 + $0xc40] sm:$0xf]
    %v502 = vld [vmem:[%s1 + $0xc44] sm:$0xff]
    %v503 = vld [vmem:[%s1 + $0xc4c] sm:$0xff]
    %v504 = vld [vmem:[%s1 + $0xc54] sm:$0xf]
    %v505 = vld [vmem:[%s1 + $0xc58] sm:$0xff]
    %v506 = vld [vmem:[%s1 + $0xc60] sm:$0xff]
    %v507 = vld [vmem:[%s1 + $0xc68] sm:$0xf]
    %v508 = vld [vmem:[%s1 + $0xc6c] sm:$0xff]
    %v509 = vld [vmem:[%s1 + $0xc74] sm:$0xff]
    %v510 = vld [vmem:[%s1 + $0xc7c] sm:$0xf]
    %v511 = vld [vmem:[%s1 + $0xc80] sm:$0xff]
    %v512 = vld [vmem:[%s1 + $0xc88] sm:$0xff]
    %v513 = vld [vmem:[%s1 + $0xc90] sm:$0xf]
    %v514 = vld [vmem:[%s1 + $0xc94] sm:$0xff]
    %v515 = vld [vmem:[%s1 + $0xc9c] sm:$0xff]
    %v516 = vld [vmem:[%s1 + $0xca4] sm:$0xf]
    %v517 = vld [vmem:[%s1 + $0xca8] sm:$0xff]
    %v518 = vld [vmem:[%s1 + $0xcb0] sm:$0xff]
    %v519 = vld [vmem:[%s1 + $0xcb8] sm:$0xf]
    %v520 = vld [vmem:[%s1 + $0xcbc] sm:$0xff]
    %v521 = vld [vmem:[%s1 + $0xcc4] sm:$0xff]
    %v522 = vld [vmem:[%s1 + $0xccc] sm:$0xf]
    %v523 = vld [vmem:[%s1 + $0xcd0] sm:$0xff]
    %v524 = vld [vmem:[%s1 + $0xcd8] sm:$0xff]
    %v525 = vld [vmem:[%s1 + $0xce0] sm:$0xf]
    %v526 = vld [vmem:[%s1 + $0xce4] sm:$0xff]
    %v527 = vld [vmem:[%s1 + $0xcec] sm:$0xff]
    %v528 = vld [vmem:[%s1 + $0xcf4] sm:$0xf]
    %v529 = vld [vmem:[%s1 + $0xcf8] sm:$0xff]
    %v530 = vld [vmem:[%s1 + $0xd00] sm:$0xff]
    %v531 = vld [vmem:[%s1 + $0xd08] sm:$0xf]
    %v532 = vld [vmem:[%s1 + $0xd0c] sm:$0xff]
    %v533 = vld [vmem:[%s1 + $0xd14] sm:$0xff]
    %v534 = vld [vmem:[%s1 + $0xd1c] sm:$0xf]
    %v535 = vld [vmem:[%s1 + $0xd20] sm:$0xff]
    %v536 = vld [vmem:[%s1 + $0xd28] sm:$0xff]
    %v537 = vld [vmem:[%s1 + $0xd30] sm:$0xf]
    %v538 = vld [vmem:[%s1 + $0xd34] sm:$0xff]
    %v539 = vld [vmem:[%s1 + $0xd3c] sm:$0xff]
    %v540 = vld [vmem:[%s1 + $0xd44] sm:$0xf]
    %v541 = vld [vmem:[%s1 + $0xd48] sm:$0xff]
    %v542 = vld [vmem:[%s1 + $0xd50] sm:$0xff]
    %v543 = vld [vmem:[%s1 + $0xd58] sm:$0xf]
    %v544 = vld [vmem:[%s1 + $0xd5c] sm:$0xff]
    %v545 = vld [vmem:[%s1 + $0xd64] sm:$0xff]
    %v546 = vld [vmem:[%s1 + $0xd6c] sm:$0xf]
    %v547 = vld [vmem:[%s1 + $0xd70] sm:$0xff]
    %v548 = vld [vmem:[%s1 + $0xd78] sm:$0xff]
    %v549 = vld [vmem:[%s1 + $0xd80] sm:$0xf]
    %v550 = vld [vmem:[%s1 + $0xd84] sm:$0xff]
    %v551 = vld [vmem:[%s1 + $0xd8c] sm:$0xff]
    %v552 = vld [vmem:[%s1 + $0xd94] sm:$0xf]
    %v553 = vld [vmem:[%s1 + $0xd98] sm:$0xff]
    %v554 = vld [vmem:[%s1 + $0xda0] sm:$0xff]
    %v555 = vld [vmem:[%s1 + $0xda8] sm:$0xf]
    %v556 = vld [vmem:[%s1 + $0xdac] sm:$0xff]
    %v557 = vld [vmem:[%s1 + $0xdb4] sm:$0xff]
    %v558 = vld [vmem:[%s1 + $0xdbc] sm:$0xf]
    %v559 = vld [vmem:[%s1 + $0xdc0] sm:$0xff]
    %v560 = vld [vmem:[%s1 + $0xdc8] sm:$0xff]
    %v561 = vld [vmem:[%s1 + $0xdd0] sm:$0xf]
    %v562 = vld [vmem:[%s1 + $0xdd4] sm:$0xff]
    %v563 = vld [vmem:[%s1 + $0xddc] sm:$0xff]
    %v564 = vld [vmem:[%s1 + $0xde4] sm:$0xf]
    %v565 = vld [vmem:[%s1 + $0xde8] sm:$0xff]
    %v566 = vld [vmem:[%s1 + $0xdf0] sm:$0xff]
    %v567 = vld [vmem:[%s1 + $0xdf8] sm:$0xf]
    %v568 = vld [vmem:[%s1 + $0xdfc] sm:$0xff]
    %v569 = vld [vmem:[%s1 + $0xe04] sm:$0xff]
    %v570 = vld [vmem:[%s1 + $0xe0c] sm:$0xf]
    %v571 = vld [vmem:[%s1 + $0xe10] sm:$0xff]
    %v572 = vld [vmem:[%s1 + $0xe18] sm:$0xff]
    %v573 = vld [vmem:[%s1 + $0xe20] sm:$0xf]
    %v574 = vld [vmem:[%s1 + $0xe24] sm:$0xff]
    %v575 = vld [vmem:[%s1 + $0xe2c] sm:$0xff]
    %v576 = vld [vmem:[%s1 + $0xe34] sm:$0xf]
    %v577 = vld [vmem:[%s1 + $0xe38] sm:$0xff]
    %v578 = vld [vmem:[%s1 + $0xe40] sm:$0xff]
    %v579 = vld [vmem:[%s1 + $0xe48] sm:$0xf]
    %v580 = vld [vmem:[%s1 + $0xe4c] sm:$0xff]
    %v581 = vld [vmem:[%s1 + $0xe54] sm:$0xff]
    %v582 = vld [vmem:[%s1 + $0xe5c] sm:$0xf]
    %v583 = vld [vmem:[%s1 + $0xe60] sm:$0xff]
    %v584 = vld [vmem:[%s1 + $0xe68] sm:$0xff]
    %v585 = vld [vmem:[%s1 + $0xe70] sm:$0xf]
    %v586 = vld [vmem:[%s1 + $0xe74] sm:$0xff]
    %v587 = vld [vmem:[%s1 + $0xe7c] sm:$0xff]
    %v588 = vld [vmem:[%s1 + $0xe84] sm:$0xf]
    %v589 = vld [vmem:[%s1 + $0xe88] sm:$0xff]
    %v590 = vld [vmem:[%s1 + $0xe90] sm:$0xff]
    %v591 = vld [vmem:[%s1 + $0xe98] sm:$0xf]
    %v592 = vld [vmem:[%s1 + $0xe9c] sm:$0xff]
    %v593 = vld [vmem:[%s1 + $0xea4] sm:$0xff]
    %v594 = vld [vmem:[%s1 + $0xeac] sm:$0xf]
    %v595 = vld [vmem:[%s1 + $0xeb0] sm:$0xff]
    %v596 = vld [vmem:[%s1 + $0xeb8] sm:$0xff]
    %v597 = vld [vmem:[%s1 + $0xec0] sm:$0xf]
    %v598 = vld [vmem:[%s1 + $0xec4] sm:$0xff]
    %v599 = vld [vmem:[%s1 + $0xecc] sm:$0xff]
    %v600 = vld [vmem:[%s1 + $0xed4] sm:$0xf]
    %v601 = vld [vmem:[%s1 + $0xed8] sm:$0xff]
    %v602 = vld [vmem:[%s1 + $0xee0] sm:$0xff]
    %v603 = vld [vmem:[%s1 + $0xee8] sm:$0xf]
    %v604 = vld [vmem:[%s1 + $0xeec] sm:$0xff]
    %v605 = vld [vmem:[%s1 + $0xef4] sm:$0xff]
    %v606 = vld [vmem:[%s1 + $0xefc] sm:$0xf]
    %v607 = vld [vmem:[%s1 + $0xf00] sm:$0xff]
    %v608 = vld [vmem:[%s1 + $0xf08] sm:$0xff]
    %v609 = vld [vmem:[%s1 + $0xf10] sm:$0xf]
    %v610 = vld [vmem:[%s1 + $0xf14] sm:$0xff]
    %v611 = vld [vmem:[%s1 + $0xf1c] sm:$0xff]
    %v612 = vld [vmem:[%s1 + $0xf24] sm:$0xf]
    %v613 = vld [vmem:[%s1 + $0xf28] sm:$0xff]
    %v614 = vld [vmem:[%s1 + $0xf30] sm:$0xff]
    %v615 = vld [vmem:[%s1 + $0xf38] sm:$0xf]
    %v616 = vld [vmem:[%s1 + $0xf3c] sm:$0xff]
    %v617 = vld [vmem:[%s1 + $0xf44] sm:$0xff]
    %v618 = vld [vmem:[%s1 + $0xf4c] sm:$0xf]
    %v619 = vld [vmem:[%s1 + $0xf50] sm:$0xff]
    %v620 = vld [vmem:[%s1 + $0xf58] sm:$0xff]
    %v621 = vld [vmem:[%s1 + $0xf60] sm:$0xf]
    %v622 = vld [vmem:[%s1 + $0xf64] sm:$0xff]
    %v623 = vld [vmem:[%s1 + $0xf6c] sm:$0xff]
    %v624 = vld [vmem:[%s1 + $0xf74] sm:$0xf]
    %v625 = vld [vmem:[%s1 + $0xf78] sm:$0xff]
    %v626 = vld [vmem:[%s1 + $0xf80] sm:$0xff]
    %v627 = vld [vmem:[%s1 + $0xf88] sm:$0xf]
    %v628 = vld [vmem:[%s1 + $0xf8c] sm:$0xff]
    %v629 = vld [vmem:[%s1 + $0xf94] sm:$0xff]
    %v630 = vld [vmem:[%s1 + $0xf9c] sm:$0xf]
    %v631 = vld [vmem:[%s1 + $0xfa0] sm:$0xff]
    %v632 = vld [vmem:[%s1 + $0xfa8] sm:$0xff]
    %v633 = vld [vmem:[%s1 + $0xfb0] sm:$0xf]
    %v634 = vld [vmem:[%s1 + $0xfb4] sm:$0xff]
    %v635 = vld [vmem:[%s1 + $0xfbc] sm:$0xff]
    %v636 = vld [vmem:[%s1 + $0xfc4] sm:$0xf]
    %v637 = vld [vmem:[%s1 + $0xfc8] sm:$0xff]
    %v638 = vld [vmem:[%s1 + $0xfd0] sm:$0xff]
    %v639 = vld [vmem:[%s1 + $0xfd8] sm:$0xf]
    %v640 = vld [vmem:[%s1 + $0xfdc] sm:$0xff]
    %v641 = vld [vmem:[%s1 + $0xfe4] sm:$0xff]
    %v642 = vld [vmem:[%s1 + $0xfec] sm:$0xf]
    %v643 = vld [vmem:[%s1 + $0xff0] sm:$0xff]
    %v644 = vld [vmem:[%s1 + $0xff8] sm:$0xff]
    %v645 = vld [vmem:[%s1 + $0x1000] sm:$0xf]
    %v646 = vld [vmem:[%s1 + $0x1004] sm:$0xff]
    %v647 = vld [vmem:[%s1 + $0x100c] sm:$0xff]
    %v648 = vld [vmem:[%s1 + $0x1014] sm:$0xf]
    %v649 = vld [vmem:[%s1 + $0x1018] sm:$0xff]
    %v650 = vld [vmem:[%s1 + $0x1020] sm:$0xff]
    %v651 = vld [vmem:[%s1 + $0x1028] sm:$0xf]
    %v652 = vld [vmem:[%s1 + $0x102c] sm:$0xff]
    %v653 = vld [vmem:[%s1 + $0x1034] sm:$0xff]
    %v654 = vld [vmem:[%s1 + $0x103c] sm:$0xf]
    %v655 = vld [vmem:[%s1 + $0x1040] sm:$0xff]
    %v656 = vld [vmem:[%s1 + $0x1048] sm:$0xff]
    %v657 = vld [vmem:[%s1 + $0x1050] sm:$0xf]
    %v658 = vld [vmem:[%s1 + $0x1054] sm:$0xff]
    %v659 = vld [vmem:[%s1 + $0x105c] sm:$0xff]
    %v660 = vld [vmem:[%s1 + $0x1064] sm:$0xf]
    %v661 = vld [vmem:[%s1 + $0x1068] sm:$0xff]
    %v662 = vld [vmem:[%s1 + $0x1070] sm:$0xff]
    %v663 = vld [vmem:[%s1 + $0x1078] sm:$0xf]
    %v664 = vld [vmem:[%s1 + $0x107c] sm:$0xff]
    %v665 = vld [vmem:[%s1 + $0x1084] sm:$0xff]
    %v666 = vld [vmem:[%s1 + $0x108c] sm:$0xf]
    %v667 = vld [vmem:[%s1 + $0x1090] sm:$0xff]
    %v668 = vld [vmem:[%s1 + $0x1098] sm:$0xff]
    %v669 = vld [vmem:[%s1 + $0x10a0] sm:$0xf]
    %v670 = vld [vmem:[%s1 + $0x10a4] sm:$0xff]
    %v671 = vld [vmem:[%s1 + $0x10ac] sm:$0xff]
    %v672 = vld [vmem:[%s1 + $0x10b4] sm:$0xf]
    %v673 = vld [vmem:[%s1 + $0x10b8] sm:$0xff]
    %v674 = vld [vmem:[%s1 + $0x10c0] sm:$0xff]
    %v675 = vld [vmem:[%s1 + $0x10c8] sm:$0xf]
    %v676 = vld [vmem:[%s1 + $0x10cc] sm:$0xff]
    %v677 = vld [vmem:[%s1 + $0x10d4] sm:$0xff]
    %v678 = vld [vmem:[%s1 + $0x10dc] sm:$0xf]
    %v679 = vld [vmem:[%s1 + $0x10e0] sm:$0xff]
    %v680 = vld [vmem:[%s1 + $0x10e8] sm:$0xff]
    %v681 = vld [vmem:[%s1 + $0x10f0] sm:$0xf]
    %v682 = vld [vmem:[%s1 + $0x10f4] sm:$0xff]
    %v683 = vld [vmem:[%s1 + $0x10fc] sm:$0xff]
    %v684 = vld [vmem:[%s1 + $0x1104] sm:$0xf]
    %v685 = vld [vmem:[%s1 + $0x1108] sm:$0xff]
    %v686 = vld [vmem:[%s1 + $0x1110] sm:$0xff]
    %v687 = vld [vmem:[%s1 + $0x1118] sm:$0xf]
    %v688 = vld [vmem:[%s1 + $0x111c] sm:$0xff]
    %v689 = vld [vmem:[%s1 + $0x1124] sm:$0xff]
    %v690 = vld [vmem:[%s1 + $0x112c] sm:$0xf]
    %v691 = vld [vmem:[%s1 + $0x1130] sm:$0xff]
    %v692 = vld [vmem:[%s1 + $0x1138] sm:$0xff]
    %v693 = vld [vmem:[%s1 + $0x1140] sm:$0xf]
    %v694 = vld [vmem:[%s1 + $0x1144] sm:$0xff]
    %v695 = vld [vmem:[%s1 + $0x114c] sm:$0xff]
    %v696 = vld [vmem:[%s1 + $0x1154] sm:$0xf]
    %v697 = vld [vmem:[%s1 + $0x1158] sm:$0xff]
    %v698 = vld [vmem:[%s1 + $0x1160] sm:$0xff]
    %v699 = vld [vmem:[%s1 + $0x1168] sm:$0xf]
    %v700 = vld [vmem:[%s1 + $0x116c] sm:$0xff]
    %v701 = vld [vmem:[%s1 + $0x1174] sm:$0xff]
    %v702 = vld [vmem:[%s1 + $0x117c] sm:$0xf]
    %v703 = vld [vmem:[%s1 + $0x1180] sm:$0xff]
    %v704 = vld [vmem:[%s1 + $0x1188] sm:$0xff]
    %v705 = vld [vmem:[%s1 + $0x1190] sm:$0xf]
    %v706 = vld [vmem:[%s1 + $0x1194] sm:$0xff]
    %v707 = vld [vmem:[%s1 + $0x119c] sm:$0xff]
    %v708 = vld [vmem:[%s1 + $0x11a4] sm:$0xf]
    %v709 = vld [vmem:[%s1 + $0x11a8] sm:$0xff]
    %v710 = vld [vmem:[%s1 + $0x11b0] sm:$0xff]
    %v711 = vld [vmem:[%s1 + $0x11b8] sm:$0xf]
    %v712 = vld [vmem:[%s1 + $0x11bc] sm:$0xff]
    %v713 = vld [vmem:[%s1 + $0x11c4] sm:$0xff]
    %v714 = vld [vmem:[%s1 + $0x11cc] sm:$0xf]
    %v715 = vld [vmem:[%s1 + $0x11d0] sm:$0xff]
    %v716 = vld [vmem:[%s1 + $0x11d8] sm:$0xff]
    %v717 = vld [vmem:[%s1 + $0x11e0] sm:$0xf]
    %v718 = vld [vmem:[%s1 + $0x11e4] sm:$0xff]
    %v719 = vld [vmem:[%s1 + $0x11ec] sm:$0xff]
    %v720 = vld [vmem:[%s1 + $0x11f4] sm:$0xf]
    %v721 = vld [vmem:[%s1 + $0x11f8] sm:$0xff]
    %v722 = vld [vmem:[%s1 + $0x1200] sm:$0xff]
    %v723 = vld [vmem:[%s1 + $0x1208] sm:$0xf]
    %v724 = vld [vmem:[%s1 + $0x120c] sm:$0xff]
    %v725 = vld [vmem:[%s1 + $0x1214] sm:$0xff]
    %v726 = vld [vmem:[%s1 + $0x121c] sm:$0xf]
    %v727 = vld [vmem:[%s1 + $0x1220] sm:$0xff]
    %v728 = vld [vmem:[%s1 + $0x1228] sm:$0xff]
    %v729 = vld [vmem:[%s1 + $0x1230] sm:$0xf]
    %v730 = vld [vmem:[%s1 + $0x1234] sm:$0xff]
    %v731 = vld [vmem:[%s1 + $0x123c] sm:$0xff]
    %v732 = vld [vmem:[%s1 + $0x1244] sm:$0xf]
    %v733 = vld [vmem:[%s1 + $0x1248] sm:$0xff]
    %v734 = vld [vmem:[%s1 + $0x1250] sm:$0xff]
    %v735 = vld [vmem:[%s1 + $0x1258] sm:$0xf]
    %v736 = vld [vmem:[%s1 + $0x125c] sm:$0xff]
    %v737 = vld [vmem:[%s1 + $0x1264] sm:$0xff]
    %v738 = vld [vmem:[%s1 + $0x126c] sm:$0xf]
    %v739 = vld [vmem:[%s1 + $0x1270] sm:$0xff]
    %v740 = vld [vmem:[%s1 + $0x1278] sm:$0xff]
    %v741 = vld [vmem:[%s1 + $0x1280] sm:$0xf]
    %v742 = vld [vmem:[%s1 + $0x1284] sm:$0xff]
    %v743 = vld [vmem:[%s1 + $0x128c] sm:$0xff]
    %v744 = vld [vmem:[%s1 + $0x1294] sm:$0xf]
    %v745 = vld [vmem:[%s1 + $0x1298] sm:$0xff]
    %v746 = vld [vmem:[%s1 + $0x12a0] sm:$0xff]
    %v747 = vld [vmem:[%s1 + $0x12a8] sm:$0xf]
    %v748 = vld [vmem:[%s1 + $0x12ac] sm:$0xff]
    %v749 = vld [vmem:[%s1 + $0x12b4] sm:$0xff]
    %v750 = vld [vmem:[%s1 + $0x12bc] sm:$0xf]
    %v751 = vld [vmem:[%s1 + $0x12c0] sm:$0xff]
    %v752 = vld [vmem:[%s1 + $0x12c8] sm:$0xff]
    %v753 = vld [vmem:[%s1 + $0x12d0] sm:$0xf]
    %v754 = vld [vmem:[%s1 + $0x12d4] sm:$0xff]
    %v755 = vld [vmem:[%s1 + $0x12dc] sm:$0xff]
    %v756 = vld [vmem:[%s1 + $0x12e4] sm:$0xf]
    %v757 = vld [vmem:[%s1 + $0x12e8] sm:$0xff]
    %v758 = vld [vmem:[%s1 + $0x12f0] sm:$0xff]
    %v759 = vld [vmem:[%s1 + $0x12f8] sm:$0xf]
    %v760 = vld [vmem:[%s1 + $0x12fc] sm:$0xff]
    %v761 = vld [vmem:[%s1 + $0x1304] sm:$0xff]
    %v762 = vld [vmem:[%s1 + $0x130c] sm:$0xf]
    %v763 = vld [vmem:[%s1 + $0x1310] sm:$0xff]
    %v764 = vld [vmem:[%s1 + $0x1318] sm:$0xff]
    %v765 = vld [vmem:[%s1 + $0x1320] sm:$0xf]
    %v766 = vld [vmem:[%s1 + $0x1324] sm:$0xff]
    %v767 = vld [vmem:[%s1 + $0x132c] sm:$0xff]
    %v768 = vld [vmem:[%s1 + $0x1334] sm:$0xf]
    %v769 = vld [vmem:[%s1 + $0x1338] sm:$0xff]
    %v770 = vld [vmem:[%s1 + $0x1340] sm:$0xff]
    %v771 = vld [vmem:[%s1 + $0x1348] sm:$0xf]
    %v772 = vld [vmem:[%s1 + $0x134c] sm:$0xff]
    %v773 = vld [vmem:[%s1 + $0x1354] sm:$0xff]
    %v774 = vld [vmem:[%s1 + $0x135c] sm:$0xf]
    %v775 = vld [vmem:[%s1 + $0x1360] sm:$0xff]
    %v776 = vld [vmem:[%s1 + $0x1368] sm:$0xff]
    %v777 = vld [vmem:[%s1 + $0x1370] sm:$0xf]
    %v778 = vld [vmem:[%s1 + $0x1374] sm:$0xff]
    %v779 = vld [vmem:[%s1 + $0x137c] sm:$0xff]
    %v780 = vld [vmem:[%s1 + $0x1384] sm:$0xf]
    %v781 = vld [vmem:[%s1 + $0x1388] sm:$0xff]
    %v782 = vld [vmem:[%s1 + $0x1390] sm:$0xff]
    %v783 = vld [vmem:[%s1 + $0x1398] sm:$0xf]
    %v784 = vld [vmem:[%s1 + $0x139c] sm:$0xff]
    %v785 = vld [vmem:[%s1 + $0x13a4] sm:$0xff]
    %v786 = vld [vmem:[%s1 + $0x13ac] sm:$0xf]
    %v787 = vld [vmem:[%s1 + $0x13b0] sm:$0xff]
    %v788 = vld [vmem:[%s1 + $0x13b8] sm:$0xff]
    %v789 = vld [vmem:[%s1 + $0x13c0] sm:$0xf]
    %v790 = vld [vmem:[%s1 + $0x13c4] sm:$0xff]
    %v791 = vld [vmem:[%s1 + $0x13cc] sm:$0xff]
    %v792 = vld [vmem:[%s1 + $0x13d4] sm:$0xf]
    %v793 = vld [vmem:[%s1 + $0x13d8] sm:$0xff]
    %v794 = vld [vmem:[%s1 + $0x13e0] sm:$0xff]
    %v795 = vld [vmem:[%s1 + $0x13e8] sm:$0xf]
    %v796 = vld [vmem:[%s1 + $0x13ec] sm:$0xff]
    %v797 = vld [vmem:[%s1 + $0x13f4] sm:$0xff]
    %v798 = vld [vmem:[%s1 + $0x13fc] sm:$0xf]
    %v799 = vld [vmem:[%s1 + $0x1400] sm:$0xff]
    %v800 = vld [vmem:[%s1 + $0x1408] sm:$0xff]
    %v801 = vld [vmem:[%s1 + $0x1410] sm:$0xf]
    %v802 = vld [vmem:[%s1 + $0x1414] sm:$0xff]
    %v803 = vld [vmem:[%s1 + $0x141c] sm:$0xff]
    %v804 = vld [vmem:[%s1 + $0x1424] sm:$0xf]
    %v805 = vld [vmem:[%s1 + $0x1428] sm:$0xff]
    %v806 = vld [vmem:[%s1 + $0x1430] sm:$0xff]
    %v807 = vld [vmem:[%s1 + $0x1438] sm:$0xf]
    %v808 = vld [vmem:[%s1 + $0x143c] sm:$0xff]
    %v809 = vld [vmem:[%s1 + $0x1444] sm:$0xff]
    %v810 = vld [vmem:[%s1 + $0x144c] sm:$0xf]
    %v811 = vld [vmem:[%s1 + $0x1450] sm:$0xff]
    %v812 = vld [vmem:[%s1 + $0x1458] sm:$0xff]
    %v813 = vld [vmem:[%s1 + $0x1460] sm:$0xf]
    %v814 = vld [vmem:[%s1 + $0x1464] sm:$0xff]
    %v815 = vld [vmem:[%s1 + $0x146c] sm:$0xff]
    %v816 = vld [vmem:[%s1 + $0x1474] sm:$0xf]
    %v817 = vld [vmem:[%s1 + $0x1478] sm:$0xff]
    %v818 = vld [vmem:[%s1 + $0x1480] sm:$0xff]
    %v819 = vld [vmem:[%s1 + $0x1488] sm:$0xf]
    %v820 = vld [vmem:[%s1 + $0x148c] sm:$0xff]
    %v821 = vld [vmem:[%s1 + $0x1494] sm:$0xff]
    %v822 = vld [vmem:[%s1 + $0x149c] sm:$0xf]
    %v823 = vld [vmem:[%s1 + $0x14a0] sm:$0xff]
    %v824 = vld [vmem:[%s1 + $0x14a8] sm:$0xff]
    %v825 = vld [vmem:[%s1 + $0x14b0] sm:$0xf]
    %v826 = vld [vmem:[%s1 + $0x14b4] sm:$0xff]
    %v827 = vld [vmem:[%s1 + $0x14bc] sm:$0xff]
    %v828 = vld [vmem:[%s1 + $0x14c4] sm:$0xf]
    %v829 = vld [vmem:[%s1 + $0x14c8] sm:$0xff]
    %v830 = vld [vmem:[%s1 + $0x14d0] sm:$0xff]
    %v831 = vld [vmem:[%s1 + $0x14d8] sm:$0xf]
    %v832 = vld [vmem:[%s1 + $0x14dc] sm:$0xff]
    %v833 = vld [vmem:[%s1 + $0x14e4] sm:$0xff]
    %v834 = vld [vmem:[%s1 + $0x14ec] sm:$0xf]
    %v835 = vld [vmem:[%s1 + $0x14f0] sm:$0xff]
    %v836 = vld [vmem:[%s1 + $0x14f8] sm:$0xff]
    %v837 = vld [vmem:[%s1 + $0x1500] sm:$0xf]
    %v838 = vld [vmem:[%s1 + $0x1504] sm:$0xff]
    %v839 = vld [vmem:[%s1 + $0x150c] sm:$0xff]
    %v840 = vld [vmem:[%s1 + $0x1514] sm:$0xf]
    %v841 = vld [vmem:[%s1 + $0x1518] sm:$0xff]
    %v842 = vld [vmem:[%s1 + $0x1520] sm:$0xff]
    %v843 = vld [vmem:[%s1 + $0x1528] sm:$0xf]
    %v844 = vld [vmem:[%s1 + $0x152c] sm:$0xff]
    %v845 = vld [vmem:[%s1 + $0x1534] sm:$0xff]
    %v846 = vld [vmem:[%s1 + $0x153c] sm:$0xf]
    %v847 = vld [vmem:[%s1 + $0x1540] sm:$0xff]
    %v848 = vld [vmem:[%s1 + $0x1548] sm:$0xff]
    %v849 = vld [vmem:[%s1 + $0x1550] sm:$0xf]
    %v850 = vld [vmem:[%s1 + $0x1554] sm:$0xff]
    %v851 = vld [vmem:[%s1 + $0x155c] sm:$0xff]
    %v852 = vld [vmem:[%s1 + $0x1564] sm:$0xf]
    %v853 = vld [vmem:[%s1 + $0x1568] sm:$0xff]
    %v854 = vld [vmem:[%s1 + $0x1570] sm:$0xff]
    %v855 = vld [vmem:[%s1 + $0x1578] sm:$0xf]
    %v856 = vld [vmem:[%s1 + $0x157c] sm:$0xff]
    %v857 = vld [vmem:[%s1 + $0x1584] sm:$0xff]
    %v858 = vld [vmem:[%s1 + $0x158c] sm:$0xf]
    %v859 = vld [vmem:[%s1 + $0x1590] sm:$0xff]
    %v860 = vld [vmem:[%s1 + $0x1598] sm:$0xff]
    %v861 = vld [vmem:[%s1 + $0x15a0] sm:$0xf]
    %v862 = vld [vmem:[%s1 + $0x15a4] sm:$0xff]
    %v863 = vld [vmem:[%s1 + $0x15ac] sm:$0xff]
    %v864 = vld [vmem:[%s1 + $0x15b4] sm:$0xf]
    %v865 = vld [vmem:[%s1 + $0x15b8] sm:$0xff]
    %v866 = vld [vmem:[%s1 + $0x15c0] sm:$0xff]
    %v867 = vld [vmem:[%s1 + $0x15c8] sm:$0xf]
    %v868 = vld [vmem:[%s1 + $0x15cc] sm:$0xff]
    %v869 = vld [vmem:[%s1 + $0x15d4] sm:$0xff]
    %v870 = vld [vmem:[%s1 + $0x15dc] sm:$0xf]
    %v871 = vld [vmem:[%s1 + $0x15e0] sm:$0xff]
    %v872 = vld [vmem:[%s1 + $0x15e8] sm:$0xff]
    %v873 = vld [vmem:[%s1 + $0x15f0] sm:$0xf]
    %v874 = vld [vmem:[%s1 + $0x15f4] sm:$0xff]
    %v875 = vld [vmem:[%s1 + $0x15fc] sm:$0xff]
    %v876 = vld [vmem:[%s1 + $0x1604] sm:$0xf]
    %v877 = vld [vmem:[%s1 + $0x1608] sm:$0xff]
    %v878 = vld [vmem:[%s1 + $0x1610] sm:$0xff]
    %v879 = vld [vmem:[%s1 + $0x1618] sm:$0xf]
    %v880 = vld [vmem:[%s1 + $0x161c] sm:$0xff]
    %v881 = vld [vmem:[%s1 + $0x1624] sm:$0xff]
    %v882 = vld [vmem:[%s1 + $0x162c] sm:$0xf]
    %v883 = vld [vmem:[%s1 + $0x1630] sm:$0xff]
    %v884 = vld [vmem:[%s1 + $0x1638] sm:$0xff]
    %v885 = vld [vmem:[%s1 + $0x1640] sm:$0xf]
    %v886 = vld [vmem:[%s1 + $0x1644] sm:$0xff]
    %v887 = vld [vmem:[%s1 + $0x164c] sm:$0xff]
    %v888 = vld [vmem:[%s1 + $0x1654] sm:$0xf]
    %v889 = vld [vmem:[%s1 + $0x1658] sm:$0xff]
    %v890 = vld [vmem:[%s1 + $0x1660] sm:$0xff]
    %v891 = vld [vmem:[%s1 + $0x1668] sm:$0xf]
    %v892 = vld [vmem:[%s1 + $0x166c] sm:$0xff]
    %v893 = vld [vmem:[%s1 + $0x1674] sm:$0xff]
    %v894 = vld [vmem:[%s1 + $0x167c] sm:$0xf]
    %v895 = vld [vmem:[%s2] sm:$0x1f]
    %v897 = vlaneseq
    %v898 = vshrl.u32 %v897, 7
    %v899 = vsub.s32 0, %v898
    %v900 = vrot.slane %v895, %v899
    %v901 = vlaneseq
    %v902 = vshrl.u32 %v901, 7
    %v903 = vsub.s32 1, %v902
    %v904 = vrot.slane %v895, %v903
    %v905 = vlaneseq
    %v906 = vshrl.u32 %v905, 7
    %v907 = vsub.s32 2, %v906
    %v908 = vrot.slane %v895, %v907
    %v909 = vlaneseq
    %v910 = vshrl.u32 %v909, 7
    %v911 = vsub.s32 3, %v910
    %v912 = vrot.slane %v895, %v911
    %v913 = vlaneseq
    %v914 = vshrl.u32 %v913, 7
    %v915 = vsub.s32 4, %v914
    %v916 = vrot.slane %v895, %v915
    %v925 = vcombine.high %v28, %v28
    %v927 = vunpack.c.l.s4 1966171168
    %v928 = vunpack.c.0.s8 %v927
    %v929 = vlaneseq
    %v930 = vshrl.u32 %v929, 7
    %v931 = vsub.s32 %v928, %v930
    %v932 = vrot.slane %v28, %v931
    %v934 = vunpack.c.l.s4 1966171168
    %v935 = vunpack.c.0.s8 %v934
    %v936 = vlaneseq
    %v937 = vshrl.u32 %v936, 7
    %v938 = vsub.s32 %v935, %v937
    %v939 = vrot.slane %v925, %v938
    %v940 = vcombine.high %v932, %v932
    %v941 = vcombine.high %v939, %v939
    %v943 = vunpack.c.l.s4 1966171168
    %v944 = vunpack.c.0.s8 %v943
    %v945 = vlaneseq
    %v946 = vshrl.u32 %v945, 7
    %v947 = vsub.s32 %v944, %v946
    %v948 = vrot.slane %v932, %v947
    %v950 = vunpack.c.l.s4 1966171168
    %v951 = vunpack.c.0.s8 %v950
    %v952 = vlaneseq
    %v953 = vshrl.u32 %v952, 7
    %v954 = vsub.s32 %v951, %v953
    %v955 = vrot.slane %v939, %v954
    %v957 = vunpack.c.l.s4 1966171168
    %v958 = vunpack.c.0.s8 %v957
    %v959 = vlaneseq
    %v960 = vshrl.u32 %v959, 7
    %v961 = vsub.s32 %v958, %v960
    %v962 = vrot.slane %v940, %v961
    %v964 = vunpack.c.l.s4 1966171168
    %v965 = vunpack.c.0.s8 %v964
    %v966 = vlaneseq
    %v967 = vshrl.u32 %v966, 7
    %v968 = vsub.s32 %v965, %v967
    %v969 = vrot.slane %v941, %v968
    %v970 = vcombine.high %v948, %v948
    %v971 = vcombine.high %v955, %v955
    %v972 = vcombine.high %v962, %v962
    %v973 = vcombine.high %v969, %v969
    %v974 = vcombine.high %v29, %v29
    %v976 = vunpack.c.l.s4 1966171168
    %v977 = vunpack.c.0.s8 %v976
    %v978 = vlaneseq
    %v979 = vshrl.u32 %v978, 7
    %v980 = vsub.s32 %v977, %v979
    %v981 = vrot.slane %v29, %v980
    %v983 = vunpack.c.l.s4 1966171168
    %v984 = vunpack.c.0.s8 %v983
    %v985 = vlaneseq
    %v986 = vshrl.u32 %v985, 7
    %v987 = vsub.s32 %v984, %v986
    %v988 = vrot.slane %v974, %v987
    %v989 = vcombine.high %v981, %v981
    %v990 = vcombine.high %v988, %v988
    %v992 = vunpack.c.l.s4 1966171168
    %v993 = vunpack.c.0.s8 %v992
    %v994 = vlaneseq
    %v995 = vshrl.u32 %v994, 7
    %v996 = vsub.s32 %v993, %v995
    %v997 = vrot.slane %v981, %v996
    %v999 = vunpack.c.l.s4 1966171168
    %v1000 = vunpack.c.0.s8 %v999
    %v1001 = vlaneseq
    %v1002 = vshrl.u32 %v1001, 7
    %v1003 = vsub.s32 %v1000, %v1002
    %v1004 = vrot.slane %v988, %v1003
    %v1006 = vunpack.c.l.s4 1966171168
    %v1007 = vunpack.c.0.s8 %v1006
    %v1008 = vlaneseq
    %v1009 = vshrl.u32 %v1008, 7
    %v1010 = vsub.s32 %v1007, %v1009
    %v1011 = vrot.slane %v989, %v1010
    %v1013 = vunpack.c.l.s4 1966171168
    %v1014 = vunpack.c.0.s8 %v1013
    %v1015 = vlaneseq
    %v1016 = vshrl.u32 %v1015, 7
    %v1017 = vsub.s32 %v1014, %v1016
    %v1018 = vrot.slane %v990, %v1017
    %v1019 = vcombine.high %v997, %v997
    %v1020 = vcombine.high %v1004, %v1004
    %v1021 = vcombine.high %v1011, %v1011
    %v1022 = vcombine.high %v1018, %v1018
    %v1024 = vunpack.c.l.s4 1966171168
    %v1025 = vunpack.c.0.s8 %v1024
    %v1026 = vlaneseq
    %v1027 = vshrl.u32 %v1026, 7
    %v1028 = vsub.s32 %v1025, %v1027
    %v1029 = vrot.slane %v30, %v1028
    %v1030 = vcombine.high %v1029, %v1029
    %v1032 = vunpack.c.l.s4 1966171168
    %v1033 = vunpack.c.0.s8 %v1032
    %v1034 = vlaneseq
    %v1035 = vshrl.u32 %v1034, 7
    %v1036 = vsub.s32 %v1033, %v1035
    %v1037 = vrot.slane %v1029, %v1036
    %v1039 = vunpack.c.l.s4 1966171168
    %v1040 = vunpack.c.0.s8 %v1039
    %v1041 = vlaneseq
    %v1042 = vshrl.u32 %v1041, 7
    %v1043 = vsub.s32 %v1040, %v1042
    %v1044 = vrot.slane %v1030, %v1043
    %v1927 = vunpack.c.l.b16 %v31
    %v1928 = vunpack.c.h.b16 %v31
    %v1929 = vunpack.c.l.b16 %v32
    %v1930 = vunpack.c.h.b16 %v32
    %v1931 = vunpack.c.l.b16 %v33
    %v1932 = vunpack.c.l.b16 %v34
    %v1933 = vunpack.c.h.b16 %v34
    %v1934 = vunpack.c.l.b16 %v35
    %v1935 = vunpack.c.h.b16 %v35
    %v1936 = vunpack.c.l.b16 %v36
    %v1937 = vunpack.c.l.b16 %v37
    %v1938 = vunpack.c.h.b16 %v37
    %v1939 = vunpack.c.l.b16 %v38
    %v1940 = vunpack.c.h.b16 %v38
    %v1941 = vunpack.c.l.b16 %v39
    %v1942 = vunpack.c.l.b16 %v40
    %v1943 = vunpack.c.h.b16 %v40
    %v1944 = vunpack.c.l.b16 %v41
    %v1945 = vunpack.c.h.b16 %v41
    %v1946 = vunpack.c.l.b16 %v42
    %v1947 = vunpack.c.l.b16 %v43
    %v1948 = vunpack.c.h.b16 %v43
    %v1949 = vunpack.c.l.b16 %v44
    %v1950 = vunpack.c.h.b16 %v44
    %v1951 = vunpack.c.l.b16 %v45
    %v1952 = vunpack.c.l.b16 %v46
    %v1953 = vunpack.c.h.b16 %v46
    %v1954 = vunpack.c.l.b16 %v47
    %v1955 = vunpack.c.h.b16 %v47
    %v1956 = vunpack.c.l.b16 %v48
    %v1957 = vunpack.c.l.b16 %v49
    %v1958 = vunpack.c.h.b16 %v49
    %v1959 = vunpack.c.l.b16 %v50
    %v1960 = vunpack.c.h.b16 %v50
    %v1961 = vunpack.c.l.b16 %v51
    %v1962 = vunpack.c.l.b16 %v52
    %v1963 = vunpack.c.h.b16 %v52
    %v1964 = vunpack.c.l.b16 %v53
    %v1965 = vunpack.c.h.b16 %v53
    %v1966 = vunpack.c.l.b16 %v54
    %v1967 = vunpack.c.l.b16 %v55
    %v1968 = vunpack.c.h.b16 %v55
    %v1969 = vunpack.c.l.b16 %v56
    %v1970 = vunpack.c.h.b16 %v56
    %v1971 = vunpack.c.l.b16 %v57
    %v1972 = vunpack.c.l.b16 %v58
    %v1973 = vunpack.c.h.b16 %v58
    %v1974 = vunpack.c.l.b16 %v59
    %v1975 = vunpack.c.h.b16 %v59
    %v1976 = vunpack.c.l.b16 %v60
    %v1977 = vunpack.c.l.b16 %v61
    %v1978 = vunpack.c.h.b16 %v61
    %v1979 = vunpack.c.l.b16 %v62
    %v1980 = vunpack.c.h.b16 %v62
    %v1981 = vunpack.c.l.b16 %v63
    %v1982 = vunpack.c.l.b16 %v64
    %v1983 = vunpack.c.h.b16 %v64
    %v1984 = vunpack.c.l.b16 %v65
    %v1985 = vunpack.c.h.b16 %v65
    %v1986 = vunpack.c.l.b16 %v66
    %v1987 = vunpack.c.l.b16 %v67
    %v1988 = vunpack.c.h.b16 %v67
    %v1989 = vunpack.c.l.b16 %v68
    %v1990 = vunpack.c.h.b16 %v68
    %v1991 = vunpack.c.l.b16 %v69
    %v1992 = vunpack.c.l.b16 %v70
    %v1993 = vunpack.c.h.b16 %v70
    %v1994 = vunpack.c.l.b16 %v71
    %v1995 = vunpack.c.h.b16 %v71
    %v1996 = vunpack.c.l.b16 %v72
    %v1997 = vunpack.c.l.b16 %v73
    %v1998 = vunpack.c.h.b16 %v73
    %v1999 = vunpack.c.l.b16 %v74
    %v2000 = vunpack.c.h.b16 %v74
    %v2001 = vunpack.c.l.b16 %v75
    %v2002 = vunpack.c.l.b16 %v76
    %v2003 = vunpack.c.h.b16 %v76
    %v2004 = vunpack.c.l.b16 %v77
    %v2005 = vunpack.c.h.b16 %v77
    %v2006 = vunpack.c.l.b16 %v78
    %v2007 = vunpack.c.l.b16 %v79
    %v2008 = vunpack.c.h.b16 %v79
    %v2009 = vunpack.c.l.b16 %v80
    %v2010 = vunpack.c.h.b16 %v80
    %v2011 = vunpack.c.l.b16 %v81
    %v2012 = vunpack.c.l.b16 %v82
    %v2013 = vunpack.c.h.b16 %v82
    %v2014 = vunpack.c.l.b16 %v83
    %v2015 = vunpack.c.h.b16 %v83
    %v2016 = vunpack.c.l.b16 %v84
    %v2017 = vunpack.c.l.b16 %v85
    %v2018 = vunpack.c.h.b16 %v85
    %v2019 = vunpack.c.l.b16 %v86
    %v2020 = vunpack.c.h.b16 %v86
    %v2021 = vunpack.c.l.b16 %v87
    %v2022 = vunpack.c.l.b16 %v88
    %v2023 = vunpack.c.h.b16 %v88
    %v2024 = vunpack.c.l.b16 %v89
    %v2025 = vunpack.c.h.b16 %v89
    %v2026 = vunpack.c.l.b16 %v90
    %v2027 = vunpack.c.l.b16 %v91
    %v2028 = vunpack.c.h.b16 %v91
    %v2029 = vunpack.c.l.b16 %v92
    %v2030 = vunpack.c.h.b16 %v92
    %v2031 = vunpack.c.l.b16 %v93
    %v2032 = vunpack.c.l.b16 %v94
    %v2033 = vunpack.c.h.b16 %v94
    %v2034 = vunpack.c.l.b16 %v95
    %v2035 = vunpack.c.h.b16 %v95
    %v2036 = vunpack.c.l.b16 %v96
    %v2037 = vunpack.c.l.b16 %v97
    %v2038 = vunpack.c.h.b16 %v97
    %v2039 = vunpack.c.l.b16 %v98
    %v2040 = vunpack.c.h.b16 %v98
    %v2041 = vunpack.c.l.b16 %v99
    %v2042 = vunpack.c.l.b16 %v100
    %v2043 = vunpack.c.h.b16 %v100
    %v2044 = vunpack.c.l.b16 %v101
    %v2045 = vunpack.c.h.b16 %v101
    %v2046 = vunpack.c.l.b16 %v102
    %v2047 = vunpack.c.l.b16 %v103
    %v2048 = vunpack.c.h.b16 %v103
    %v2049 = vunpack.c.l.b16 %v104
    %v2050 = vunpack.c.h.b16 %v104
    %v2051 = vunpack.c.l.b16 %v105
    %v2052 = vunpack.c.l.b16 %v106
    %v2053 = vunpack.c.h.b16 %v106
    %v2054 = vunpack.c.l.b16 %v107
    %v2055 = vunpack.c.h.b16 %v107
    %v2056 = vunpack.c.l.b16 %v108
    %v2057 = vunpack.c.l.b16 %v109
    %v2058 = vunpack.c.h.b16 %v109
    %v2059 = vunpack.c.l.b16 %v110
    %v2060 = vunpack.c.h.b16 %v110
    %v2061 = vunpack.c.l.b16 %v111
    %v2062 = vunpack.c.l.b16 %v112
    %v2063 = vunpack.c.h.b16 %v112
    %v2064 = vunpack.c.l.b16 %v113
    %v2065 = vunpack.c.h.b16 %v113
    %v2066 = vunpack.c.l.b16 %v114
    %v2067 = vunpack.c.l.b16 %v115
    %v2068 = vunpack.c.h.b16 %v115
    %v2069 = vunpack.c.l.b16 %v116
    %v2070 = vunpack.c.h.b16 %v116
    %v2071 = vunpack.c.l.b16 %v117
    %v2072 = vunpack.c.l.b16 %v118
    %v2073 = vunpack.c.h.b16 %v118
    %v2074 = vunpack.c.l.b16 %v119
    %v2075 = vunpack.c.h.b16 %v119
    %v2076 = vunpack.c.l.b16 %v120
    %v2077 = vunpack.c.l.b16 %v121
    %v2078 = vunpack.c.h.b16 %v121
    %v2079 = vunpack.c.l.b16 %v122
    %v2080 = vunpack.c.h.b16 %v122
    %v2081 = vunpack.c.l.b16 %v123
    %v2082 = vunpack.c.l.b16 %v124
    %v2083 = vunpack.c.h.b16 %v124
    %v2084 = vunpack.c.l.b16 %v125
    %v2085 = vunpack.c.h.b16 %v125
    %v2086 = vunpack.c.l.b16 %v126
    %v2087 = vunpack.c.l.b16 %v127
    %v2088 = vunpack.c.h.b16 %v127
    %v2089 = vunpack.c.l.b16 %v128
    %v2090 = vunpack.c.h.b16 %v128
    %v2091 = vunpack.c.l.b16 %v129
    %v2092 = vunpack.c.l.b16 %v130
    %v2093 = vunpack.c.h.b16 %v130
    %v2094 = vunpack.c.l.b16 %v131
    %v2095 = vunpack.c.h.b16 %v131
    %v2096 = vunpack.c.l.b16 %v132
    %v2097 = vunpack.c.l.b16 %v133
    %v2098 = vunpack.c.h.b16 %v133
    %v2099 = vunpack.c.l.b16 %v134
    %v2100 = vunpack.c.h.b16 %v134
    %v2101 = vunpack.c.l.b16 %v135
    %v2102 = vunpack.c.l.b16 %v136
    %v2103 = vunpack.c.h.b16 %v136
    %v2104 = vunpack.c.l.b16 %v137
    %v2105 = vunpack.c.h.b16 %v137
    %v2106 = vunpack.c.l.b16 %v138
    %v2107 = vunpack.c.l.b16 %v139
    %v2108 = vunpack.c.h.b16 %v139
    %v2109 = vunpack.c.l.b16 %v140
    %v2110 = vunpack.c.h.b16 %v140
    %v2111 = vunpack.c.l.b16 %v141
    %v2112 = vunpack.c.l.b16 %v142
    %v2113 = vunpack.c.h.b16 %v142
    %v2114 = vunpack.c.l.b16 %v143
    %v2115 = vunpack.c.h.b16 %v143
    %v2116 = vunpack.c.l.b16 %v144
    %v2117 = vunpack.c.l.b16 %v145
    %v2118 = vunpack.c.h.b16 %v145
    %v2119 = vunpack.c.l.b16 %v146
    %v2120 = vunpack.c.h.b16 %v146
    %v2121 = vunpack.c.l.b16 %v147
    %v2122 = vunpack.c.l.b16 %v148
    %v2123 = vunpack.c.h.b16 %v148
    %v2124 = vunpack.c.l.b16 %v149
    %v2125 = vunpack.c.h.b16 %v149
    %v2126 = vunpack.c.l.b16 %v150
    %v2127 = vunpack.c.l.b16 %v151
    %v2128 = vunpack.c.h.b16 %v151
    %v2129 = vunpack.c.l.b16 %v152
    %v2130 = vunpack.c.h.b16 %v152
    %v2131 = vunpack.c.l.b16 %v153
    %v2132 = vunpack.c.l.b16 %v154
    %v2133 = vunpack.c.h.b16 %v154
    %v2134 = vunpack.c.l.b16 %v155
    %v2135 = vunpack.c.h.b16 %v155
    %v2136 = vunpack.c.l.b16 %v156
    %v2137 = vunpack.c.l.b16 %v157
    %v2138 = vunpack.c.h.b16 %v157
    %v2139 = vunpack.c.l.b16 %v158
    %v2140 = vunpack.c.h.b16 %v158
    %v2141 = vunpack.c.l.b16 %v159
    %v2142 = vunpack.c.l.b16 %v160
    %v2143 = vunpack.c.h.b16 %v160
    %v2144 = vunpack.c.l.b16 %v161
    %v2145 = vunpack.c.h.b16 %v161
    %v2146 = vunpack.c.l.b16 %v162
    %v2147 = vunpack.c.l.b16 %v163
    %v2148 = vunpack.c.h.b16 %v163
    %v2149 = vunpack.c.l.b16 %v164
    %v2150 = vunpack.c.h.b16 %v164
    %v2151 = vunpack.c.l.b16 %v165
    %v2152 = vunpack.c.l.b16 %v166
    %v2153 = vunpack.c.h.b16 %v166
    %v2154 = vunpack.c.l.b16 %v167
    %v2155 = vunpack.c.h.b16 %v167
    %v2156 = vunpack.c.l.b16 %v168
    %v2157 = vunpack.c.l.b16 %v169
    %v2158 = vunpack.c.h.b16 %v169
    %v2159 = vunpack.c.l.b16 %v170
    %v2160 = vunpack.c.h.b16 %v170
    %v2161 = vunpack.c.l.b16 %v171
    %v2162 = vunpack.c.l.b16 %v172
    %v2163 = vunpack.c.h.b16 %v172
    %v2164 = vunpack.c.l.b16 %v173
    %v2165 = vunpack.c.h.b16 %v173
    %v2166 = vunpack.c.l.b16 %v174
    %v2167 = vunpack.c.l.b16 %v175
    %v2168 = vunpack.c.h.b16 %v175
    %v2169 = vunpack.c.l.b16 %v176
    %v2170 = vunpack.c.h.b16 %v176
    %v2171 = vunpack.c.l.b16 %v177
    %v2172 = vunpack.c.l.b16 %v178
    %v2173 = vunpack.c.h.b16 %v178
    %v2174 = vunpack.c.l.b16 %v179
    %v2175 = vunpack.c.h.b16 %v179
    %v2176 = vunpack.c.l.b16 %v180
    %v2177 = vunpack.c.l.b16 %v181
    %v2178 = vunpack.c.h.b16 %v181
    %v2179 = vunpack.c.l.b16 %v182
    %v2180 = vunpack.c.h.b16 %v182
    %v2181 = vunpack.c.l.b16 %v183
    %v2182 = vunpack.c.l.b16 %v184
    %v2183 = vunpack.c.h.b16 %v184
    %v2184 = vunpack.c.l.b16 %v185
    %v2185 = vunpack.c.h.b16 %v185
    %v2186 = vunpack.c.l.b16 %v186
    %v2187 = vunpack.c.l.b16 %v187
    %v2188 = vunpack.c.h.b16 %v187
    %v2189 = vunpack.c.l.b16 %v188
    %v2190 = vunpack.c.h.b16 %v188
    %v2191 = vunpack.c.l.b16 %v189
    %v2192 = vunpack.c.l.b16 %v190
    %v2193 = vunpack.c.h.b16 %v190
    %v2194 = vunpack.c.l.b16 %v191
    %v2195 = vunpack.c.h.b16 %v191
    %v2196 = vunpack.c.l.b16 %v192
    %v2197 = vunpack.c.l.b16 %v193
    %v2198 = vunpack.c.h.b16 %v193
    %v2199 = vunpack.c.l.b16 %v194
    %v2200 = vunpack.c.h.b16 %v194
    %v2201 = vunpack.c.l.b16 %v195
    %v2202 = vunpack.c.l.b16 %v196
    %v2203 = vunpack.c.h.b16 %v196
    %v2204 = vunpack.c.l.b16 %v197
    %v2205 = vunpack.c.h.b16 %v197
    %v2206 = vunpack.c.l.b16 %v198
    %v2207 = vunpack.c.l.b16 %v199
    %v2208 = vunpack.c.h.b16 %v199
    %v2209 = vunpack.c.l.b16 %v200
    %v2210 = vunpack.c.h.b16 %v200
    %v2211 = vunpack.c.l.b16 %v201
    %v2212 = vunpack.c.l.b16 %v202
    %v2213 = vunpack.c.h.b16 %v202
    %v2214 = vunpack.c.l.b16 %v203
    %v2215 = vunpack.c.h.b16 %v203
    %v2216 = vunpack.c.l.b16 %v204
    %v2217 = vunpack.c.l.b16 %v205
    %v2218 = vunpack.c.h.b16 %v205
    %v2219 = vunpack.c.l.b16 %v206
    %v2220 = vunpack.c.h.b16 %v206
    %v2221 = vunpack.c.l.b16 %v207
    %v2222 = vunpack.c.l.b16 %v208
    %v2223 = vunpack.c.h.b16 %v208
    %v2224 = vunpack.c.l.b16 %v209
    %v2225 = vunpack.c.h.b16 %v209
    %v2226 = vunpack.c.l.b16 %v210
    %v2227 = vunpack.c.l.b16 %v211
    %v2228 = vunpack.c.h.b16 %v211
    %v2229 = vunpack.c.l.b16 %v212
    %v2230 = vunpack.c.h.b16 %v212
    %v2231 = vunpack.c.l.b16 %v213
    %v2232 = vunpack.c.l.b16 %v214
    %v2233 = vunpack.c.h.b16 %v214
    %v2234 = vunpack.c.l.b16 %v215
    %v2235 = vunpack.c.h.b16 %v215
    %v2236 = vunpack.c.l.b16 %v216
    %v2237 = vunpack.c.l.b16 %v217
    %v2238 = vunpack.c.h.b16 %v217
    %v2239 = vunpack.c.l.b16 %v218
    %v2240 = vunpack.c.h.b16 %v218
    %v2241 = vunpack.c.l.b16 %v219
    %v2242 = vunpack.c.l.b16 %v220
    %v2243 = vunpack.c.h.b16 %v220
    %v2244 = vunpack.c.l.b16 %v221
    %v2245 = vunpack.c.h.b16 %v221
    %v2246 = vunpack.c.l.b16 %v222
    %v2247 = vunpack.c.l.b16 %v223
    %v2248 = vunpack.c.h.b16 %v223
    %v2249 = vunpack.c.l.b16 %v224
    %v2250 = vunpack.c.h.b16 %v224
    %v2251 = vunpack.c.l.b16 %v225
    %v2252 = vunpack.c.l.b16 %v226
    %v2253 = vunpack.c.h.b16 %v226
    %v2254 = vunpack.c.l.b16 %v227
    %v2255 = vunpack.c.h.b16 %v227
    %v2256 = vunpack.c.l.b16 %v228
    %v2257 = vunpack.c.l.b16 %v229
    %v2258 = vunpack.c.h.b16 %v229
    %v2259 = vunpack.c.l.b16 %v230
    %v2260 = vunpack.c.h.b16 %v230
    %v2261 = vunpack.c.l.b16 %v231
    %v2262 = vunpack.c.l.b16 %v232
    %v2263 = vunpack.c.h.b16 %v232
    %v2264 = vunpack.c.l.b16 %v233
    %v2265 = vunpack.c.h.b16 %v233
    %v2266 = vunpack.c.l.b16 %v234
    %v2267 = vunpack.c.l.b16 %v235
    %v2268 = vunpack.c.h.b16 %v235
    %v2269 = vunpack.c.l.b16 %v236
    %v2270 = vunpack.c.h.b16 %v236
    %v2271 = vunpack.c.l.b16 %v237
    %v2272 = vunpack.c.l.b16 %v238
    %v2273 = vunpack.c.h.b16 %v238
    %v2274 = vunpack.c.l.b16 %v239
    %v2275 = vunpack.c.h.b16 %v239
    %v2276 = vunpack.c.l.b16 %v240
    %v2277 = vunpack.c.l.b16 %v241
    %v2278 = vunpack.c.h.b16 %v241
    %v2279 = vunpack.c.l.b16 %v242
    %v2280 = vunpack.c.h.b16 %v242
    %v2281 = vunpack.c.l.b16 %v243
    %v2282 = vunpack.c.l.b16 %v244
    %v2283 = vunpack.c.h.b16 %v244
    %v2284 = vunpack.c.l.b16 %v245
    %v2285 = vunpack.c.h.b16 %v245
    %v2286 = vunpack.c.l.b16 %v246
    %v2287 = vunpack.c.l.b16 %v247
    %v2288 = vunpack.c.h.b16 %v247
    %v2289 = vunpack.c.l.b16 %v248
    %v2290 = vunpack.c.h.b16 %v248
    %v2291 = vunpack.c.l.b16 %v249
    %v2292 = vunpack.c.l.b16 %v250
    %v2293 = vunpack.c.h.b16 %v250
    %v2294 = vunpack.c.l.b16 %v251
    %v2295 = vunpack.c.h.b16 %v251
    %v2296 = vunpack.c.l.b16 %v252
    %v2297 = vunpack.c.l.b16 %v253
    %v2298 = vunpack.c.h.b16 %v253
    %v2299 = vunpack.c.l.b16 %v254
    %v2300 = vunpack.c.h.b16 %v254
    %v2301 = vunpack.c.l.b16 %v255
    %v2302 = vunpack.c.l.b16 %v256
    %v2303 = vunpack.c.h.b16 %v256
    %v2304 = vunpack.c.l.b16 %v257
    %v2305 = vunpack.c.h.b16 %v257
    %v2306 = vunpack.c.l.b16 %v258
    %v2307 = vunpack.c.l.b16 %v259
    %v2308 = vunpack.c.h.b16 %v259
    %v2309 = vunpack.c.l.b16 %v260
    %v2310 = vunpack.c.h.b16 %v260
    %v2311 = vunpack.c.l.b16 %v261
    %v2312 = vunpack.c.l.b16 %v262
    %v2313 = vunpack.c.h.b16 %v262
    %v2314 = vunpack.c.l.b16 %v263
    %v2315 = vunpack.c.h.b16 %v263
    %v2316 = vunpack.c.l.b16 %v264
    %v2317 = vunpack.c.l.b16 %v265
    %v2318 = vunpack.c.h.b16 %v265
    %v2319 = vunpack.c.l.b16 %v266
    %v2320 = vunpack.c.h.b16 %v266
    %v2321 = vunpack.c.l.b16 %v267
    %v2322 = vunpack.c.l.b16 %v268
    %v2323 = vunpack.c.h.b16 %v268
    %v2324 = vunpack.c.l.b16 %v269
    %v2325 = vunpack.c.h.b16 %v269
    %v2326 = vunpack.c.l.b16 %v270
    %v2327 = vunpack.c.l.b16 %v271
    %v2328 = vunpack.c.h.b16 %v271
    %v2329 = vunpack.c.l.b16 %v272
    %v2330 = vunpack.c.h.b16 %v272
    %v2331 = vunpack.c.l.b16 %v273
    %v2332 = vunpack.c.l.b16 %v274
    %v2333 = vunpack.c.h.b16 %v274
    %v2334 = vunpack.c.l.b16 %v275
    %v2335 = vunpack.c.h.b16 %v275
    %v2336 = vunpack.c.l.b16 %v276
    %v2337 = vunpack.c.l.b16 %v277
    %v2338 = vunpack.c.h.b16 %v277
    %v2339 = vunpack.c.l.b16 %v278
    %v2340 = vunpack.c.h.b16 %v278
    %v2341 = vunpack.c.l.b16 %v279
    %v2342 = vunpack.c.l.b16 %v280
    %v2343 = vunpack.c.h.b16 %v280
    %v2344 = vunpack.c.l.b16 %v281
    %v2345 = vunpack.c.h.b16 %v281
    %v2346 = vunpack.c.l.b16 %v282
    %v2347 = vunpack.c.l.b16 %v283
    %v2348 = vunpack.c.h.b16 %v283
    %v2349 = vunpack.c.l.b16 %v284
    %v2350 = vunpack.c.h.b16 %v284
    %v2351 = vunpack.c.l.b16 %v285
    %v2352 = vunpack.c.l.b16 %v286
    %v2353 = vunpack.c.h.b16 %v286
    %v2354 = vunpack.c.l.b16 %v287
    %v2355 = vunpack.c.h.b16 %v287
    %v2356 = vunpack.c.l.b16 %v288
    %v2357 = vunpack.c.l.b16 %v289
    %v2358 = vunpack.c.h.b16 %v289
    %v2359 = vunpack.c.l.b16 %v290
    %v2360 = vunpack.c.h.b16 %v290
    %v2361 = vunpack.c.l.b16 %v291
    %v2362 = vunpack.c.l.b16 %v292
    %v2363 = vunpack.c.h.b16 %v292
    %v2364 = vunpack.c.l.b16 %v293
    %v2365 = vunpack.c.h.b16 %v293
    %v2366 = vunpack.c.l.b16 %v294
    %v2367 = vunpack.c.l.b16 %v295
    %v2368 = vunpack.c.h.b16 %v295
    %v2369 = vunpack.c.l.b16 %v296
    %v2370 = vunpack.c.h.b16 %v296
    %v2371 = vunpack.c.l.b16 %v297
    %v2372 = vunpack.c.l.b16 %v298
    %v2373 = vunpack.c.h.b16 %v298
    %v2374 = vunpack.c.l.b16 %v299
    %v2375 = vunpack.c.h.b16 %v299
    %v2376 = vunpack.c.l.b16 %v300
    %v2377 = vunpack.c.l.b16 %v301
    %v2378 = vunpack.c.h.b16 %v301
    %v2379 = vunpack.c.l.b16 %v302
    %v2380 = vunpack.c.h.b16 %v302
    %v2381 = vunpack.c.l.b16 %v303
    %v2382 = vunpack.c.l.b16 %v304
    %v2383 = vunpack.c.h.b16 %v304
    %v2384 = vunpack.c.l.b16 %v305
    %v2385 = vunpack.c.h.b16 %v305
    %v2386 = vunpack.c.l.b16 %v306
    %v2387 = vunpack.c.l.b16 %v307
    %v2388 = vunpack.c.h.b16 %v307
    %v2389 = vunpack.c.l.b16 %v308
    %v2390 = vunpack.c.h.b16 %v308
    %v2391 = vunpack.c.l.b16 %v309
    %v2392 = vunpack.c.l.b16 %v310
    %v2393 = vunpack.c.h.b16 %v310
    %v2394 = vunpack.c.l.b16 %v311
    %v2395 = vunpack.c.h.b16 %v311
    %v2396 = vunpack.c.l.b16 %v312
    %v2397 = vunpack.c.l.b16 %v313
    %v2398 = vunpack.c.h.b16 %v313
    %v2399 = vunpack.c.l.b16 %v314
    %v2400 = vunpack.c.h.b16 %v314
    %v2401 = vunpack.c.l.b16 %v315
    %v2402 = vunpack.c.l.b16 %v316
    %v2403 = vunpack.c.h.b16 %v316
    %v2404 = vunpack.c.l.b16 %v317
    %v2405 = vunpack.c.h.b16 %v317
    %v2406 = vunpack.c.l.b16 %v318
    %v2407 = vunpack.c.l.b16 %v319
    %v2408 = vunpack.c.h.b16 %v319
    %v2409 = vunpack.c.l.b16 %v320
    %v2410 = vunpack.c.h.b16 %v320
    %v2411 = vunpack.c.l.b16 %v321
    %v2412 = vunpack.c.l.b16 %v322
    %v2413 = vunpack.c.h.b16 %v322
    %v2414 = vunpack.c.l.b16 %v323
    %v2415 = vunpack.c.h.b16 %v323
    %v2416 = vunpack.c.l.b16 %v324
    %v2417 = vunpack.c.l.b16 %v325
    %v2418 = vunpack.c.h.b16 %v325
    %v2419 = vunpack.c.l.b16 %v326
    %v2420 = vunpack.c.h.b16 %v326
    %v2421 = vunpack.c.l.b16 %v327
    %v2422 = vunpack.c.l.b16 %v328
    %v2423 = vunpack.c.h.b16 %v328
    %v2424 = vunpack.c.l.b16 %v329
    %v2425 = vunpack.c.h.b16 %v329
    %v2426 = vunpack.c.l.b16 %v330
    %v2427 = vunpack.c.l.b16 %v331
    %v2428 = vunpack.c.h.b16 %v331
    %v2429 = vunpack.c.l.b16 %v332
    %v2430 = vunpack.c.h.b16 %v332
    %v2431 = vunpack.c.l.b16 %v333
    %v2432 = vunpack.c.l.b16 %v334
    %v2433 = vunpack.c.h.b16 %v334
    %v2434 = vunpack.c.l.b16 %v335
    %v2435 = vunpack.c.h.b16 %v335
    %v2436 = vunpack.c.l.b16 %v336
    %v2437 = vunpack.c.l.b16 %v337
    %v2438 = vunpack.c.h.b16 %v337
    %v2439 = vunpack.c.l.b16 %v338
    %v2440 = vunpack.c.h.b16 %v338
    %v2441 = vunpack.c.l.b16 %v339
    %v2442 = vunpack.c.l.b16 %v340
    %v2443 = vunpack.c.h.b16 %v340
    %v2444 = vunpack.c.l.b16 %v341
    %v2445 = vunpack.c.h.b16 %v341
    %v2446 = vunpack.c.l.b16 %v342
    %v2447 = vunpack.c.l.b16 %v343
    %v2448 = vunpack.c.h.b16 %v343
    %v2449 = vunpack.c.l.b16 %v344
    %v2450 = vunpack.c.h.b16 %v344
    %v2451 = vunpack.c.l.b16 %v345
    %v2452 = vunpack.c.l.b16 %v346
    %v2453 = vunpack.c.h.b16 %v346
    %v2454 = vunpack.c.l.b16 %v347
    %v2455 = vunpack.c.h.b16 %v347
    %v2456 = vunpack.c.l.b16 %v348
    %v2457 = vunpack.c.l.b16 %v349
    %v2458 = vunpack.c.h.b16 %v349
    %v2459 = vunpack.c.l.b16 %v350
    %v2460 = vunpack.c.h.b16 %v350
    %v2461 = vunpack.c.l.b16 %v351
    %v2462 = vunpack.c.l.b16 %v352
    %v2463 = vunpack.c.h.b16 %v352
    %v2464 = vunpack.c.l.b16 %v353
    %v2465 = vunpack.c.h.b16 %v353
    %v2466 = vunpack.c.l.b16 %v354
    %v2467 = vunpack.c.l.b16 %v355
    %v2468 = vunpack.c.h.b16 %v355
    %v2469 = vunpack.c.l.b16 %v356
    %v2470 = vunpack.c.h.b16 %v356
    %v2471 = vunpack.c.l.b16 %v357
    %v2472 = vunpack.c.l.b16 %v358
    %v2473 = vunpack.c.h.b16 %v358
    %v2474 = vunpack.c.l.b16 %v359
    %v2475 = vunpack.c.h.b16 %v359
    %v2476 = vunpack.c.l.b16 %v360
    %v2477 = vunpack.c.l.b16 %v361
    %v2478 = vunpack.c.h.b16 %v361
    %v2479 = vunpack.c.l.b16 %v362
    %v2480 = vunpack.c.h.b16 %v362
    %v2481 = vunpack.c.l.b16 %v363
    %v2482 = vunpack.c.l.b16 %v364
    %v2483 = vunpack.c.h.b16 %v364
    %v2484 = vunpack.c.l.b16 %v365
    %v2485 = vunpack.c.h.b16 %v365
    %v2486 = vunpack.c.l.b16 %v366
    %v2487 = vunpack.c.l.b16 %v367
    %v2488 = vunpack.c.h.b16 %v367
    %v2489 = vunpack.c.l.b16 %v368
    %v2490 = vunpack.c.h.b16 %v368
    %v2491 = vunpack.c.l.b16 %v369
    %v2492 = vunpack.c.l.b16 %v370
    %v2493 = vunpack.c.h.b16 %v370
    %v2494 = vunpack.c.l.b16 %v371
    %v2495 = vunpack.c.h.b16 %v371
    %v2496 = vunpack.c.l.b16 %v372
    %v2497 = vunpack.c.l.b16 %v373
    %v2498 = vunpack.c.h.b16 %v373
    %v2499 = vunpack.c.l.b16 %v374
    %v2500 = vunpack.c.h.b16 %v374
    %v2501 = vunpack.c.l.b16 %v375
    %v2502 = vunpack.c.l.b16 %v376
    %v2503 = vunpack.c.h.b16 %v376
    %v2504 = vunpack.c.l.b16 %v377
    %v2505 = vunpack.c.h.b16 %v377
    %v2506 = vunpack.c.l.b16 %v378
    %v2507 = vunpack.c.l.b16 %v379
    %v2508 = vunpack.c.h.b16 %v379
    %v2509 = vunpack.c.l.b16 %v380
    %v2510 = vunpack.c.h.b16 %v380
    %v2511 = vunpack.c.l.b16 %v381
    %v2512 = vunpack.c.l.b16 %v382
    %v2513 = vunpack.c.h.b16 %v382
    %v2514 = vunpack.c.l.b16 %v383
    %v2515 = vunpack.c.h.b16 %v383
    %v2516 = vunpack.c.l.b16 %v384
    %v2517 = vunpack.c.l.b16 %v385
    %v2518 = vunpack.c.h.b16 %v385
    %v2519 = vunpack.c.l.b16 %v386
    %v2520 = vunpack.c.h.b16 %v386
    %v2521 = vunpack.c.l.b16 %v387
    %v2522 = vunpack.c.l.b16 %v388
    %v2523 = vunpack.c.h.b16 %v388
    %v2524 = vunpack.c.l.b16 %v389
    %v2525 = vunpack.c.h.b16 %v389
    %v2526 = vunpack.c.l.b16 %v390
    %v2527 = vunpack.c.l.b16 %v391
    %v2528 = vunpack.c.h.b16 %v391
    %v2529 = vunpack.c.l.b16 %v392
    %v2530 = vunpack.c.h.b16 %v392
    %v2531 = vunpack.c.l.b16 %v393
    %v2532 = vunpack.c.l.b16 %v394
    %v2533 = vunpack.c.h.b16 %v394
    %v2534 = vunpack.c.l.b16 %v395
    %v2535 = vunpack.c.h.b16 %v395
    %v2536 = vunpack.c.l.b16 %v396
    %v2537 = vunpack.c.l.b16 %v397
    %v2538 = vunpack.c.h.b16 %v397
    %v2539 = vunpack.c.l.b16 %v398
    %v2540 = vunpack.c.h.b16 %v398
    %v2541 = vunpack.c.l.b16 %v399
    %v2542 = vunpack.c.l.b16 %v400
    %v2543 = vunpack.c.h.b16 %v400
    %v2544 = vunpack.c.l.b16 %v401
    %v2545 = vunpack.c.h.b16 %v401
    %v2546 = vunpack.c.l.b16 %v402
    %v2547 = vunpack.c.l.b16 %v403
    %v2548 = vunpack.c.h.b16 %v403
    %v2549 = vunpack.c.l.b16 %v404
    %v2550 = vunpack.c.h.b16 %v404
    %v2551 = vunpack.c.l.b16 %v405
    %v2552 = vunpack.c.l.b16 %v406
    %v2553 = vunpack.c.h.b16 %v406
    %v2554 = vunpack.c.l.b16 %v407
    %v2555 = vunpack.c.h.b16 %v407
    %v2556 = vunpack.c.l.b16 %v408
    %v2557 = vunpack.c.l.b16 %v409
    %v2558 = vunpack.c.h.b16 %v409
    %v2559 = vunpack.c.l.b16 %v410
    %v2560 = vunpack.c.h.b16 %v410
    %v2561 = vunpack.c.l.b16 %v411
    %v2562 = vunpack.c.l.b16 %v412
    %v2563 = vunpack.c.h.b16 %v412
    %v2564 = vunpack.c.l.b16 %v413
    %v2565 = vunpack.c.h.b16 %v413
    %v2566 = vunpack.c.l.b16 %v414
    %v2567 = vunpack.c.l.b16 %v415
    %v2568 = vunpack.c.h.b16 %v415
    %v2569 = vunpack.c.l.b16 %v416
    %v2570 = vunpack.c.h.b16 %v416
    %v2571 = vunpack.c.l.b16 %v417
    %v2572 = vunpack.c.l.b16 %v418
    %v2573 = vunpack.c.h.b16 %v418
    %v2574 = vunpack.c.l.b16 %v419
    %v2575 = vunpack.c.h.b16 %v419
    %v2576 = vunpack.c.l.b16 %v420
    %v2577 = vunpack.c.l.b16 %v421
    %v2578 = vunpack.c.h.b16 %v421
    %v2579 = vunpack.c.l.b16 %v422
    %v2580 = vunpack.c.h.b16 %v422
    %v2581 = vunpack.c.l.b16 %v423
    %v2582 = vunpack.c.l.b16 %v424
    %v2583 = vunpack.c.h.b16 %v424
    %v2584 = vunpack.c.l.b16 %v425
    %v2585 = vunpack.c.h.b16 %v425
    %v2586 = vunpack.c.l.b16 %v426
    %v2587 = vunpack.c.l.b16 %v427
    %v2588 = vunpack.c.h.b16 %v427
    %v2589 = vunpack.c.l.b16 %v428
    %v2590 = vunpack.c.h.b16 %v428
    %v2591 = vunpack.c.l.b16 %v429
    %v2592 = vunpack.c.l.b16 %v430
    %v2593 = vunpack.c.h.b16 %v430
    %v2594 = vunpack.c.l.b16 %v431
    %v2595 = vunpack.c.h.b16 %v431
    %v2596 = vunpack.c.l.b16 %v432
    %v2597 = vunpack.c.l.b16 %v433
    %v2598 = vunpack.c.h.b16 %v433
    %v2599 = vunpack.c.l.b16 %v434
    %v2600 = vunpack.c.h.b16 %v434
    %v2601 = vunpack.c.l.b16 %v435
    %v2602 = vunpack.c.l.b16 %v436
    %v2603 = vunpack.c.h.b16 %v436
    %v2604 = vunpack.c.l.b16 %v437
    %v2605 = vunpack.c.h.b16 %v437
    %v2606 = vunpack.c.l.b16 %v438
    %v2607 = vunpack.c.l.b16 %v439
    %v2608 = vunpack.c.h.b16 %v439
    %v2609 = vunpack.c.l.b16 %v440
    %v2610 = vunpack.c.h.b16 %v440
    %v2611 = vunpack.c.l.b16 %v441
    %v2612 = vunpack.c.l.b16 %v442
    %v2613 = vunpack.c.h.b16 %v442
    %v2614 = vunpack.c.l.b16 %v443
    %v2615 = vunpack.c.h.b16 %v443
    %v2616 = vunpack.c.l.b16 %v444
    %v2617 = vunpack.c.l.b16 %v445
    %v2618 = vunpack.c.h.b16 %v445
    %v2619 = vunpack.c.l.b16 %v446
    %v2620 = vunpack.c.h.b16 %v446
    %v2621 = vunpack.c.l.b16 %v447
    %v2622 = vunpack.c.l.b16 %v448
    %v2623 = vunpack.c.h.b16 %v448
    %v2624 = vunpack.c.l.b16 %v449
    %v2625 = vunpack.c.h.b16 %v449
    %v2626 = vunpack.c.l.b16 %v450
    %v2627 = vunpack.c.l.b16 %v451
    %v2628 = vunpack.c.h.b16 %v451
    %v2629 = vunpack.c.l.b16 %v452
    %v2630 = vunpack.c.h.b16 %v452
    %v2631 = vunpack.c.l.b16 %v453
    %v2632 = vunpack.c.l.b16 %v454
    %v2633 = vunpack.c.h.b16 %v454
    %v2634 = vunpack.c.l.b16 %v455
    %v2635 = vunpack.c.h.b16 %v455
    %v2636 = vunpack.c.l.b16 %v456
    %v2637 = vunpack.c.l.b16 %v457
    %v2638 = vunpack.c.h.b16 %v457
    %v2639 = vunpack.c.l.b16 %v458
    %v2640 = vunpack.c.h.b16 %v458
    %v2641 = vunpack.c.l.b16 %v459
    %v2642 = vunpack.c.l.b16 %v460
    %v2643 = vunpack.c.h.b16 %v460
    %v2644 = vunpack.c.l.b16 %v461
    %v2645 = vunpack.c.h.b16 %v461
    %v2646 = vunpack.c.l.b16 %v462
    %v2647 = vunpack.c.l.b16 %v463
    %v2648 = vunpack.c.h.b16 %v463
    %v2649 = vunpack.c.l.b16 %v464
    %v2650 = vunpack.c.h.b16 %v464
    %v2651 = vunpack.c.l.b16 %v465
    %v2652 = vunpack.c.l.b16 %v466
    %v2653 = vunpack.c.h.b16 %v466
    %v2654 = vunpack.c.l.b16 %v467
    %v2655 = vunpack.c.h.b16 %v467
    %v2656 = vunpack.c.l.b16 %v468
    %v2657 = vunpack.c.l.b16 %v469
    %v2658 = vunpack.c.h.b16 %v469
    %v2659 = vunpack.c.l.b16 %v470
    %v2660 = vunpack.c.h.b16 %v470
    %v2661 = vunpack.c.l.b16 %v471
    %v2662 = vunpack.c.l.b16 %v472
    %v2663 = vunpack.c.h.b16 %v472
    %v2664 = vunpack.c.l.b16 %v473
    %v2665 = vunpack.c.h.b16 %v473
    %v2666 = vunpack.c.l.b16 %v474
    %v2667 = vunpack.c.l.b16 %v475
    %v2668 = vunpack.c.h.b16 %v475
    %v2669 = vunpack.c.l.b16 %v476
    %v2670 = vunpack.c.h.b16 %v476
    %v2671 = vunpack.c.l.b16 %v477
    %v2672 = vunpack.c.l.b16 %v478
    %v2673 = vunpack.c.h.b16 %v478
    %v2674 = vunpack.c.l.b16 %v479
    %v2675 = vunpack.c.h.b16 %v479
    %v2676 = vunpack.c.l.b16 %v480
    %v2677 = vunpack.c.l.b16 %v481
    %v2678 = vunpack.c.h.b16 %v481
    %v2679 = vunpack.c.l.b16 %v482
    %v2680 = vunpack.c.h.b16 %v482
    %v2681 = vunpack.c.l.b16 %v483
    %v2682 = vunpack.c.l.b16 %v484
    %v2683 = vunpack.c.h.b16 %v484
    %v2684 = vunpack.c.l.b16 %v485
    %v2685 = vunpack.c.h.b16 %v485
    %v2686 = vunpack.c.l.b16 %v486
    %v2687 = vunpack.c.l.b16 %v487
    %v2688 = vunpack.c.h.b16 %v487
    %v2689 = vunpack.c.l.b16 %v488
    %v2690 = vunpack.c.h.b16 %v488
    %v2691 = vunpack.c.l.b16 %v489
    %v2692 = vunpack.c.l.b16 %v490
    %v2693 = vunpack.c.h.b16 %v490
    %v2694 = vunpack.c.l.b16 %v491
    %v2695 = vunpack.c.h.b16 %v491
    %v2696 = vunpack.c.l.b16 %v492
    %v2697 = vunpack.c.l.b16 %v493
    %v2698 = vunpack.c.h.b16 %v493
    %v2699 = vunpack.c.l.b16 %v494
    %v2700 = vunpack.c.h.b16 %v494
    %v2701 = vunpack.c.l.b16 %v495
    %v2702 = vunpack.c.l.b16 %v496
    %v2703 = vunpack.c.h.b16 %v496
    %v2704 = vunpack.c.l.b16 %v497
    %v2705 = vunpack.c.h.b16 %v497
    %v2706 = vunpack.c.l.b16 %v498
    %v2707 = vunpack.c.l.b16 %v499
    %v2708 = vunpack.c.h.b16 %v499
    %v2709 = vunpack.c.l.b16 %v500
    %v2710 = vunpack.c.h.b16 %v500
    %v2711 = vunpack.c.l.b16 %v501
    %v2712 = vunpack.c.l.b16 %v502
    %v2713 = vunpack.c.h.b16 %v502
    %v2714 = vunpack.c.l.b16 %v503
    %v2715 = vunpack.c.h.b16 %v503
    %v2716 = vunpack.c.l.b16 %v504
    %v2717 = vunpack.c.l.b16 %v505
    %v2718 = vunpack.c.h.b16 %v505
    %v2719 = vunpack.c.l.b16 %v506
    %v2720 = vunpack.c.h.b16 %v506
    %v2721 = vunpack.c.l.b16 %v507
    %v2722 = vunpack.c.l.b16 %v508
    %v2723 = vunpack.c.h.b16 %v508
    %v2724 = vunpack.c.l.b16 %v509
    %v2725 = vunpack.c.h.b16 %v509
    %v2726 = vunpack.c.l.b16 %v510
    %v2727 = vunpack.c.l.b16 %v511
    %v2728 = vunpack.c.h.b16 %v511
    %v2729 = vunpack.c.l.b16 %v512
    %v2730 = vunpack.c.h.b16 %v512
    %v2731 = vunpack.c.l.b16 %v513
    %v2732 = vunpack.c.l.b16 %v514
    %v2733 = vunpack.c.h.b16 %v514
    %v2734 = vunpack.c.l.b16 %v515
    %v2735 = vunpack.c.h.b16 %v515
    %v2736 = vunpack.c.l.b16 %v516
    %v2737 = vunpack.c.l.b16 %v517
    %v2738 = vunpack.c.h.b16 %v517
    %v2739 = vunpack.c.l.b16 %v518
    %v2740 = vunpack.c.h.b16 %v518
    %v2741 = vunpack.c.l.b16 %v519
    %v2742 = vunpack.c.l.b16 %v520
    %v2743 = vunpack.c.h.b16 %v520
    %v2744 = vunpack.c.l.b16 %v521
    %v2745 = vunpack.c.h.b16 %v521
    %v2746 = vunpack.c.l.b16 %v522
    %v2747 = vunpack.c.l.b16 %v523
    %v2748 = vunpack.c.h.b16 %v523
    %v2749 = vunpack.c.l.b16 %v524
    %v2750 = vunpack.c.h.b16 %v524
    %v2751 = vunpack.c.l.b16 %v525
    %v2752 = vunpack.c.l.b16 %v526
    %v2753 = vunpack.c.h.b16 %v526
    %v2754 = vunpack.c.l.b16 %v527
    %v2755 = vunpack.c.h.b16 %v527
    %v2756 = vunpack.c.l.b16 %v528
    %v2757 = vunpack.c.l.b16 %v529
    %v2758 = vunpack.c.h.b16 %v529
    %v2759 = vunpack.c.l.b16 %v530
    %v2760 = vunpack.c.h.b16 %v530
    %v2761 = vunpack.c.l.b16 %v531
    %v2762 = vunpack.c.l.b16 %v532
    %v2763 = vunpack.c.h.b16 %v532
    %v2764 = vunpack.c.l.b16 %v533
    %v2765 = vunpack.c.h.b16 %v533
    %v2766 = vunpack.c.l.b16 %v534
    %v2767 = vunpack.c.l.b16 %v535
    %v2768 = vunpack.c.h.b16 %v535
    %v2769 = vunpack.c.l.b16 %v536
    %v2770 = vunpack.c.h.b16 %v536
    %v2771 = vunpack.c.l.b16 %v537
    %v2772 = vunpack.c.l.b16 %v538
    %v2773 = vunpack.c.h.b16 %v538
    %v2774 = vunpack.c.l.b16 %v539
    %v2775 = vunpack.c.h.b16 %v539
    %v2776 = vunpack.c.l.b16 %v540
    %v2777 = vunpack.c.l.b16 %v541
    %v2778 = vunpack.c.h.b16 %v541
    %v2779 = vunpack.c.l.b16 %v542
    %v2780 = vunpack.c.h.b16 %v542
    %v2781 = vunpack.c.l.b16 %v543
    %v2782 = vunpack.c.l.b16 %v544
    %v2783 = vunpack.c.h.b16 %v544
    %v2784 = vunpack.c.l.b16 %v545
    %v2785 = vunpack.c.h.b16 %v545
    %v2786 = vunpack.c.l.b16 %v546
    %v2787 = vunpack.c.l.b16 %v547
    %v2788 = vunpack.c.h.b16 %v547
    %v2789 = vunpack.c.l.b16 %v548
    %v2790 = vunpack.c.h.b16 %v548
    %v2791 = vunpack.c.l.b16 %v549
    %v2792 = vunpack.c.l.b16 %v550
    %v2793 = vunpack.c.h.b16 %v550
    %v2794 = vunpack.c.l.b16 %v551
    %v2795 = vunpack.c.h.b16 %v551
    %v2796 = vunpack.c.l.b16 %v552
    %v2797 = vunpack.c.l.b16 %v553
    %v2798 = vunpack.c.h.b16 %v553
    %v2799 = vunpack.c.l.b16 %v554
    %v2800 = vunpack.c.h.b16 %v554
    %v2801 = vunpack.c.l.b16 %v555
    %v2802 = vunpack.c.l.b16 %v556
    %v2803 = vunpack.c.h.b16 %v556
    %v2804 = vunpack.c.l.b16 %v557
    %v2805 = vunpack.c.h.b16 %v557
    %v2806 = vunpack.c.l.b16 %v558
    %v2807 = vunpack.c.l.b16 %v559
    %v2808 = vunpack.c.h.b16 %v559
    %v2809 = vunpack.c.l.b16 %v560
    %v2810 = vunpack.c.h.b16 %v560
    %v2811 = vunpack.c.l.b16 %v561
    %v2812 = vunpack.c.l.b16 %v562
    %v2813 = vunpack.c.h.b16 %v562
    %v2814 = vunpack.c.l.b16 %v563
    %v2815 = vunpack.c.h.b16 %v563
    %v2816 = vunpack.c.l.b16 %v564
    %v2817 = vunpack.c.l.b16 %v565
    %v2818 = vunpack.c.h.b16 %v565
    %v2819 = vunpack.c.l.b16 %v566
    %v2820 = vunpack.c.h.b16 %v566
    %v2821 = vunpack.c.l.b16 %v567
    %v2822 = vunpack.c.l.b16 %v568
    %v2823 = vunpack.c.h.b16 %v568
    %v2824 = vunpack.c.l.b16 %v569
    %v2825 = vunpack.c.h.b16 %v569
    %v2826 = vunpack.c.l.b16 %v570
    %v2827 = vunpack.c.l.b16 %v571
    %v2828 = vunpack.c.h.b16 %v571
    %v2829 = vunpack.c.l.b16 %v572
    %v2830 = vunpack.c.h.b16 %v572
    %v2831 = vunpack.c.l.b16 %v573
    %v2832 = vunpack.c.l.b16 %v574
    %v2833 = vunpack.c.h.b16 %v574
    %v2834 = vunpack.c.l.b16 %v575
    %v2835 = vunpack.c.h.b16 %v575
    %v2836 = vunpack.c.l.b16 %v576
    %v2837 = vunpack.c.l.b16 %v577
    %v2838 = vunpack.c.h.b16 %v577
    %v2839 = vunpack.c.l.b16 %v578
    %v2840 = vunpack.c.h.b16 %v578
    %v2841 = vunpack.c.l.b16 %v579
    %v2842 = vunpack.c.l.b16 %v580
    %v2843 = vunpack.c.h.b16 %v580
    %v2844 = vunpack.c.l.b16 %v581
    %v2845 = vunpack.c.h.b16 %v581
    %v2846 = vunpack.c.l.b16 %v582
    %v2847 = vunpack.c.l.b16 %v583
    %v2848 = vunpack.c.h.b16 %v583
    %v2849 = vunpack.c.l.b16 %v584
    %v2850 = vunpack.c.h.b16 %v584
    %v2851 = vunpack.c.l.b16 %v585
    %v2852 = vunpack.c.l.b16 %v586
    %v2853 = vunpack.c.h.b16 %v586
    %v2854 = vunpack.c.l.b16 %v587
    %v2855 = vunpack.c.h.b16 %v587
    %v2856 = vunpack.c.l.b16 %v588
    %v2857 = vunpack.c.l.b16 %v589
    %v2858 = vunpack.c.h.b16 %v589
    %v2859 = vunpack.c.l.b16 %v590
    %v2860 = vunpack.c.h.b16 %v590
    %v2861 = vunpack.c.l.b16 %v591
    %v2862 = vunpack.c.l.b16 %v592
    %v2863 = vunpack.c.h.b16 %v592
    %v2864 = vunpack.c.l.b16 %v593
    %v2865 = vunpack.c.h.b16 %v593
    %v2866 = vunpack.c.l.b16 %v594
    %v2867 = vunpack.c.l.b16 %v595
    %v2868 = vunpack.c.h.b16 %v595
    %v2869 = vunpack.c.l.b16 %v596
    %v2870 = vunpack.c.h.b16 %v596
    %v2871 = vunpack.c.l.b16 %v597
    %v2872 = vunpack.c.l.b16 %v598
    %v2873 = vunpack.c.h.b16 %v598
    %v2874 = vunpack.c.l.b16 %v599
    %v2875 = vunpack.c.h.b16 %v599
    %v2876 = vunpack.c.l.b16 %v600
    %v2877 = vunpack.c.l.b16 %v601
    %v2878 = vunpack.c.h.b16 %v601
    %v2879 = vunpack.c.l.b16 %v602
    %v2880 = vunpack.c.h.b16 %v602
    %v2881 = vunpack.c.l.b16 %v603
    %v2882 = vunpack.c.l.b16 %v604
    %v2883 = vunpack.c.h.b16 %v604
    %v2884 = vunpack.c.l.b16 %v605
    %v2885 = vunpack.c.h.b16 %v605
    %v2886 = vunpack.c.l.b16 %v606
    %v2887 = vunpack.c.l.b16 %v607
    %v2888 = vunpack.c.h.b16 %v607
    %v2889 = vunpack.c.l.b16 %v608
    %v2890 = vunpack.c.h.b16 %v608
    %v2891 = vunpack.c.l.b16 %v609
    %v2892 = vunpack.c.l.b16 %v610
    %v2893 = vunpack.c.h.b16 %v610
    %v2894 = vunpack.c.l.b16 %v611
    %v2895 = vunpack.c.h.b16 %v611
    %v2896 = vunpack.c.l.b16 %v612
    %v2897 = vunpack.c.l.b16 %v613
    %v2898 = vunpack.c.h.b16 %v613
    %v2899 = vunpack.c.l.b16 %v614
    %v2900 = vunpack.c.h.b16 %v614
    %v2901 = vunpack.c.l.b16 %v615
    %v2902 = vunpack.c.l.b16 %v616
    %v2903 = vunpack.c.h.b16 %v616
    %v2904 = vunpack.c.l.b16 %v617
    %v2905 = vunpack.c.h.b16 %v617
    %v2906 = vunpack.c.l.b16 %v618
    %v2907 = vunpack.c.l.b16 %v619
    %v2908 = vunpack.c.h.b16 %v619
    %v2909 = vunpack.c.l.b16 %v620
    %v2910 = vunpack.c.h.b16 %v620
    %v2911 = vunpack.c.l.b16 %v621
    %v2912 = vunpack.c.l.b16 %v622
    %v2913 = vunpack.c.h.b16 %v622
    %v2914 = vunpack.c.l.b16 %v623
    %v2915 = vunpack.c.h.b16 %v623
    %v2916 = vunpack.c.l.b16 %v624
    %v2917 = vunpack.c.l.b16 %v625
    %v2918 = vunpack.c.h.b16 %v625
    %v2919 = vunpack.c.l.b16 %v626
    %v2920 = vunpack.c.h.b16 %v626
    %v2921 = vunpack.c.l.b16 %v627
    %v2922 = vunpack.c.l.b16 %v628
    %v2923 = vunpack.c.h.b16 %v628
    %v2924 = vunpack.c.l.b16 %v629
    %v2925 = vunpack.c.h.b16 %v629
    %v2926 = vunpack.c.l.b16 %v630
    %v2927 = vunpack.c.l.b16 %v631
    %v2928 = vunpack.c.h.b16 %v631
    %v2929 = vunpack.c.l.b16 %v632
    %v2930 = vunpack.c.h.b16 %v632
    %v2931 = vunpack.c.l.b16 %v633
    %v2932 = vunpack.c.l.b16 %v634
    %v2933 = vunpack.c.h.b16 %v634
    %v2934 = vunpack.c.l.b16 %v635
    %v2935 = vunpack.c.h.b16 %v635
    %v2936 = vunpack.c.l.b16 %v636
    %v2937 = vunpack.c.l.b16 %v637
    %v2938 = vunpack.c.h.b16 %v637
    %v2939 = vunpack.c.l.b16 %v638
    %v2940 = vunpack.c.h.b16 %v638
    %v2941 = vunpack.c.l.b16 %v639
    %v2942 = vunpack.c.l.b16 %v640
    %v2943 = vunpack.c.h.b16 %v640
    %v2944 = vunpack.c.l.b16 %v641
    %v2945 = vunpack.c.h.b16 %v641
    %v2946 = vunpack.c.l.b16 %v642
    %v2947 = vunpack.c.l.b16 %v643
    %v2948 = vunpack.c.h.b16 %v643
    %v2949 = vunpack.c.l.b16 %v644
    %v2950 = vunpack.c.h.b16 %v644
    %v2951 = vunpack.c.l.b16 %v645
    %v2952 = vunpack.c.l.b16 %v646
    %v2953 = vunpack.c.h.b16 %v646
    %v2954 = vunpack.c.l.b16 %v647
    %v2955 = vunpack.c.h.b16 %v647
    %v2956 = vunpack.c.l.b16 %v648
    %v2957 = vunpack.c.l.b16 %v649
    %v2958 = vunpack.c.h.b16 %v649
    %v2959 = vunpack.c.l.b16 %v650
    %v2960 = vunpack.c.h.b16 %v650
    %v2961 = vunpack.c.l.b16 %v651
    %v2962 = vunpack.c.l.b16 %v652
    %v2963 = vunpack.c.h.b16 %v652
    %v2964 = vunpack.c.l.b16 %v653
    %v2965 = vunpack.c.h.b16 %v653
    %v2966 = vunpack.c.l.b16 %v654
    %v2967 = vunpack.c.l.b16 %v655
    %v2968 = vunpack.c.h.b16 %v655
    %v2969 = vunpack.c.l.b16 %v656
    %v2970 = vunpack.c.h.b16 %v656
    %v2971 = vunpack.c.l.b16 %v657
    %v2972 = vunpack.c.l.b16 %v658
    %v2973 = vunpack.c.h.b16 %v658
    %v2974 = vunpack.c.l.b16 %v659
    %v2975 = vunpack.c.h.b16 %v659
    %v2976 = vunpack.c.l.b16 %v660
    %v2977 = vunpack.c.l.b16 %v661
    %v2978 = vunpack.c.h.b16 %v661
    %v2979 = vunpack.c.l.b16 %v662
    %v2980 = vunpack.c.h.b16 %v662
    %v2981 = vunpack.c.l.b16 %v663
    %v2982 = vunpack.c.l.b16 %v664
    %v2983 = vunpack.c.h.b16 %v664
    %v2984 = vunpack.c.l.b16 %v665
    %v2985 = vunpack.c.h.b16 %v665
    %v2986 = vunpack.c.l.b16 %v666
    %v2987 = vunpack.c.l.b16 %v667
    %v2988 = vunpack.c.h.b16 %v667
    %v2989 = vunpack.c.l.b16 %v668
    %v2990 = vunpack.c.h.b16 %v668
    %v2991 = vunpack.c.l.b16 %v669
    %v2992 = vunpack.c.l.b16 %v670
    %v2993 = vunpack.c.h.b16 %v670
    %v2994 = vunpack.c.l.b16 %v671
    %v2995 = vunpack.c.h.b16 %v671
    %v2996 = vunpack.c.l.b16 %v672
    %v2997 = vunpack.c.l.b16 %v673
    %v2998 = vunpack.c.h.b16 %v673
    %v2999 = vunpack.c.l.b16 %v674
    %v3000 = vunpack.c.h.b16 %v674
    %v3001 = vunpack.c.l.b16 %v675
    %v3002 = vunpack.c.l.b16 %v676
    %v3003 = vunpack.c.h.b16 %v676
    %v3004 = vunpack.c.l.b16 %v677
    %v3005 = vunpack.c.h.b16 %v677
    %v3006 = vunpack.c.l.b16 %v678
    %v3007 = vunpack.c.l.b16 %v679
    %v3008 = vunpack.c.h.b16 %v679
    %v3009 = vunpack.c.l.b16 %v680
    %v3010 = vunpack.c.h.b16 %v680
    %v3011 = vunpack.c.l.b16 %v681
    %v3012 = vunpack.c.l.b16 %v682
    %v3013 = vunpack.c.h.b16 %v682
    %v3014 = vunpack.c.l.b16 %v683
    %v3015 = vunpack.c.h.b16 %v683
    %v3016 = vunpack.c.l.b16 %v684
    %v3017 = vunpack.c.l.b16 %v685
    %v3018 = vunpack.c.h.b16 %v685
    %v3019 = vunpack.c.l.b16 %v686
    %v3020 = vunpack.c.h.b16 %v686
    %v3021 = vunpack.c.l.b16 %v687
    %v3022 = vunpack.c.l.b16 %v688
    %v3023 = vunpack.c.h.b16 %v688
    %v3024 = vunpack.c.l.b16 %v689
    %v3025 = vunpack.c.h.b16 %v689
    %v3026 = vunpack.c.l.b16 %v690
    %v3027 = vunpack.c.l.b16 %v691
    %v3028 = vunpack.c.h.b16 %v691
    %v3029 = vunpack.c.l.b16 %v692
    %v3030 = vunpack.c.h.b16 %v692
    %v3031 = vunpack.c.l.b16 %v693
    %v3032 = vunpack.c.l.b16 %v694
    %v3033 = vunpack.c.h.b16 %v694
    %v3034 = vunpack.c.l.b16 %v695
    %v3035 = vunpack.c.h.b16 %v695
    %v3036 = vunpack.c.l.b16 %v696
    %v3037 = vunpack.c.l.b16 %v697
    %v3038 = vunpack.c.h.b16 %v697
    %v3039 = vunpack.c.l.b16 %v698
    %v3040 = vunpack.c.h.b16 %v698
    %v3041 = vunpack.c.l.b16 %v699
    %v3042 = vunpack.c.l.b16 %v700
    %v3043 = vunpack.c.h.b16 %v700
    %v3044 = vunpack.c.l.b16 %v701
    %v3045 = vunpack.c.h.b16 %v701
    %v3046 = vunpack.c.l.b16 %v702
    %v3047 = vunpack.c.l.b16 %v703
    %v3048 = vunpack.c.h.b16 %v703
    %v3049 = vunpack.c.l.b16 %v704
    %v3050 = vunpack.c.h.b16 %v704
    %v3051 = vunpack.c.l.b16 %v705
    %v3052 = vunpack.c.l.b16 %v706
    %v3053 = vunpack.c.h.b16 %v706
    %v3054 = vunpack.c.l.b16 %v707
    %v3055 = vunpack.c.h.b16 %v707
    %v3056 = vunpack.c.l.b16 %v708
    %v3057 = vunpack.c.l.b16 %v709
    %v3058 = vunpack.c.h.b16 %v709
    %v3059 = vunpack.c.l.b16 %v710
    %v3060 = vunpack.c.h.b16 %v710
    %v3061 = vunpack.c.l.b16 %v711
    %v3062 = vunpack.c.l.b16 %v712
    %v3063 = vunpack.c.h.b16 %v712
    %v3064 = vunpack.c.l.b16 %v713
    %v3065 = vunpack.c.h.b16 %v713
    %v3066 = vunpack.c.l.b16 %v714
    %v3067 = vunpack.c.l.b16 %v715
    %v3068 = vunpack.c.h.b16 %v715
    %v3069 = vunpack.c.l.b16 %v716
    %v3070 = vunpack.c.h.b16 %v716
    %v3071 = vunpack.c.l.b16 %v717
    %v3072 = vunpack.c.l.b16 %v718
    %v3073 = vunpack.c.h.b16 %v718
    %v3074 = vunpack.c.l.b16 %v719
    %v3075 = vunpack.c.h.b16 %v719
    %v3076 = vunpack.c.l.b16 %v720
    %v3077 = vunpack.c.l.b16 %v721
    %v3078 = vunpack.c.h.b16 %v721
    %v3079 = vunpack.c.l.b16 %v722
    %v3080 = vunpack.c.h.b16 %v722
    %v3081 = vunpack.c.l.b16 %v723
    %v3082 = vunpack.c.l.b16 %v724
    %v3083 = vunpack.c.h.b16 %v724
    %v3084 = vunpack.c.l.b16 %v725
    %v3085 = vunpack.c.h.b16 %v725
    %v3086 = vunpack.c.l.b16 %v726
    %v3087 = vunpack.c.l.b16 %v727
    %v3088 = vunpack.c.h.b16 %v727
    %v3089 = vunpack.c.l.b16 %v728
    %v3090 = vunpack.c.h.b16 %v728
    %v3091 = vunpack.c.l.b16 %v729
    %v3092 = vunpack.c.l.b16 %v730
    %v3093 = vunpack.c.h.b16 %v730
    %v3094 = vunpack.c.l.b16 %v731
    %v3095 = vunpack.c.h.b16 %v731
    %v3096 = vunpack.c.l.b16 %v732
    %v3097 = vunpack.c.l.b16 %v733
    %v3098 = vunpack.c.h.b16 %v733
    %v3099 = vunpack.c.l.b16 %v734
    %v3100 = vunpack.c.h.b16 %v734
    %v3101 = vunpack.c.l.b16 %v735
    %v3102 = vunpack.c.l.b16 %v736
    %v3103 = vunpack.c.h.b16 %v736
    %v3104 = vunpack.c.l.b16 %v737
    %v3105 = vunpack.c.h.b16 %v737
    %v3106 = vunpack.c.l.b16 %v738
    %v3107 = vunpack.c.l.b16 %v739
    %v3108 = vunpack.c.h.b16 %v739
    %v3109 = vunpack.c.l.b16 %v740
    %v3110 = vunpack.c.h.b16 %v740
    %v3111 = vunpack.c.l.b16 %v741
    %v3112 = vunpack.c.l.b16 %v742
    %v3113 = vunpack.c.h.b16 %v742
    %v3114 = vunpack.c.l.b16 %v743
    %v3115 = vunpack.c.h.b16 %v743
    %v3116 = vunpack.c.l.b16 %v744
    %v3117 = vunpack.c.l.b16 %v745
    %v3118 = vunpack.c.h.b16 %v745
    %v3119 = vunpack.c.l.b16 %v746
    %v3120 = vunpack.c.h.b16 %v746
    %v3121 = vunpack.c.l.b16 %v747
    %v3122 = vunpack.c.l.b16 %v748
    %v3123 = vunpack.c.h.b16 %v748
    %v3124 = vunpack.c.l.b16 %v749
    %v3125 = vunpack.c.h.b16 %v749
    %v3126 = vunpack.c.l.b16 %v750
    %v3127 = vunpack.c.l.b16 %v751
    %v3128 = vunpack.c.h.b16 %v751
    %v3129 = vunpack.c.l.b16 %v752
    %v3130 = vunpack.c.h.b16 %v752
    %v3131 = vunpack.c.l.b16 %v753
    %v3132 = vunpack.c.l.b16 %v754
    %v3133 = vunpack.c.h.b16 %v754
    %v3134 = vunpack.c.l.b16 %v755
    %v3135 = vunpack.c.h.b16 %v755
    %v3136 = vunpack.c.l.b16 %v756
    %v3137 = vunpack.c.l.b16 %v757
    %v3138 = vunpack.c.h.b16 %v757
    %v3139 = vunpack.c.l.b16 %v758
    %v3140 = vunpack.c.h.b16 %v758
    %v3141 = vunpack.c.l.b16 %v759
    %v3142 = vunpack.c.l.b16 %v760
    %v3143 = vunpack.c.h.b16 %v760
    %v3144 = vunpack.c.l.b16 %v761
    %v3145 = vunpack.c.h.b16 %v761
    %v3146 = vunpack.c.l.b16 %v762
    %v3147 = vunpack.c.l.b16 %v763
    %v3148 = vunpack.c.h.b16 %v763
    %v3149 = vunpack.c.l.b16 %v764
    %v3150 = vunpack.c.h.b16 %v764
    %v3151 = vunpack.c.l.b16 %v765
    %v3152 = vunpack.c.l.b16 %v766
    %v3153 = vunpack.c.h.b16 %v766
    %v3154 = vunpack.c.l.b16 %v767
    %v3155 = vunpack.c.h.b16 %v767
    %v3156 = vunpack.c.l.b16 %v768
    %v3157 = vunpack.c.l.b16 %v769
    %v3158 = vunpack.c.h.b16 %v769
    %v3159 = vunpack.c.l.b16 %v770
    %v3160 = vunpack.c.h.b16 %v770
    %v3161 = vunpack.c.l.b16 %v771
    %v3162 = vunpack.c.l.b16 %v772
    %v3163 = vunpack.c.h.b16 %v772
    %v3164 = vunpack.c.l.b16 %v773
    %v3165 = vunpack.c.h.b16 %v773
    %v3166 = vunpack.c.l.b16 %v774
    %v3167 = vunpack.c.l.b16 %v775
    %v3168 = vunpack.c.h.b16 %v775
    %v3169 = vunpack.c.l.b16 %v776
    %v3170 = vunpack.c.h.b16 %v776
    %v3171 = vunpack.c.l.b16 %v777
    %v3172 = vunpack.c.l.b16 %v778
    %v3173 = vunpack.c.h.b16 %v778
    %v3174 = vunpack.c.l.b16 %v779
    %v3175 = vunpack.c.h.b16 %v779
    %v3176 = vunpack.c.l.b16 %v780
    %v3177 = vunpack.c.l.b16 %v781
    %v3178 = vunpack.c.h.b16 %v781
    %v3179 = vunpack.c.l.b16 %v782
    %v3180 = vunpack.c.h.b16 %v782
    %v3181 = vunpack.c.l.b16 %v783
    %v3182 = vunpack.c.l.b16 %v784
    %v3183 = vunpack.c.h.b16 %v784
    %v3184 = vunpack.c.l.b16 %v785
    %v3185 = vunpack.c.h.b16 %v785
    %v3186 = vunpack.c.l.b16 %v786
    %v3187 = vunpack.c.l.b16 %v787
    %v3188 = vunpack.c.h.b16 %v787
    %v3189 = vunpack.c.l.b16 %v788
    %v3190 = vunpack.c.h.b16 %v788
    %v3191 = vunpack.c.l.b16 %v789
    %v3192 = vunpack.c.l.b16 %v790
    %v3193 = vunpack.c.h.b16 %v790
    %v3194 = vunpack.c.l.b16 %v791
    %v3195 = vunpack.c.h.b16 %v791
    %v3196 = vunpack.c.l.b16 %v792
    %v3197 = vunpack.c.l.b16 %v793
    %v3198 = vunpack.c.h.b16 %v793
    %v3199 = vunpack.c.l.b16 %v794
    %v3200 = vunpack.c.h.b16 %v794
    %v3201 = vunpack.c.l.b16 %v795
    %v3202 = vunpack.c.l.b16 %v796
    %v3203 = vunpack.c.h.b16 %v796
    %v3204 = vunpack.c.l.b16 %v797
    %v3205 = vunpack.c.h.b16 %v797
    %v3206 = vunpack.c.l.b16 %v798
    %v3207 = vunpack.c.l.b16 %v799
    %v3208 = vunpack.c.h.b16 %v799
    %v3209 = vunpack.c.l.b16 %v800
    %v3210 = vunpack.c.h.b16 %v800
    %v3211 = vunpack.c.l.b16 %v801
    %v3212 = vunpack.c.l.b16 %v802
    %v3213 = vunpack.c.h.b16 %v802
    %v3214 = vunpack.c.l.b16 %v803
    %v3215 = vunpack.c.h.b16 %v803
    %v3216 = vunpack.c.l.b16 %v804
    %v3217 = vunpack.c.l.b16 %v805
    %v3218 = vunpack.c.h.b16 %v805
    %v3219 = vunpack.c.l.b16 %v806
    %v3220 = vunpack.c.h.b16 %v806
    %v3221 = vunpack.c.l.b16 %v807
    %v3222 = vunpack.c.l.b16 %v808
    %v3223 = vunpack.c.h.b16 %v808
    %v3224 = vunpack.c.l.b16 %v809
    %v3225 = vunpack.c.h.b16 %v809
    %v3226 = vunpack.c.l.b16 %v810
    %v3227 = vunpack.c.l.b16 %v811
    %v3228 = vunpack.c.h.b16 %v811
    %v3229 = vunpack.c.l.b16 %v812
    %v3230 = vunpack.c.h.b16 %v812
    %v3231 = vunpack.c.l.b16 %v813
    %v3232 = vunpack.c.l.b16 %v814
    %v3233 = vunpack.c.h.b16 %v814
    %v3234 = vunpack.c.l.b16 %v815
    %v3235 = vunpack.c.h.b16 %v815
    %v3236 = vunpack.c.l.b16 %v816
    %v3237 = vunpack.c.l.b16 %v817
    %v3238 = vunpack.c.h.b16 %v817
    %v3239 = vunpack.c.l.b16 %v818
    %v3240 = vunpack.c.h.b16 %v818
    %v3241 = vunpack.c.l.b16 %v819
    %v3242 = vunpack.c.l.b16 %v820
    %v3243 = vunpack.c.h.b16 %v820
    %v3244 = vunpack.c.l.b16 %v821
    %v3245 = vunpack.c.h.b16 %v821
    %v3246 = vunpack.c.l.b16 %v822
    %v3247 = vunpack.c.l.b16 %v823
    %v3248 = vunpack.c.h.b16 %v823
    %v3249 = vunpack.c.l.b16 %v824
    %v3250 = vunpack.c.h.b16 %v824
    %v3251 = vunpack.c.l.b16 %v825
    %v3252 = vunpack.c.l.b16 %v826
    %v3253 = vunpack.c.h.b16 %v826
    %v3254 = vunpack.c.l.b16 %v827
    %v3255 = vunpack.c.h.b16 %v827
    %v3256 = vunpack.c.l.b16 %v828
    %v3257 = vunpack.c.l.b16 %v829
    %v3258 = vunpack.c.h.b16 %v829
    %v3259 = vunpack.c.l.b16 %v830
    %v3260 = vunpack.c.h.b16 %v830
    %v3261 = vunpack.c.l.b16 %v831
    %v3262 = vunpack.c.l.b16 %v832
    %v3263 = vunpack.c.h.b16 %v832
    %v3264 = vunpack.c.l.b16 %v833
    %v3265 = vunpack.c.h.b16 %v833
    %v3266 = vunpack.c.l.b16 %v834
    %v3267 = vunpack.c.l.b16 %v835
    %v3268 = vunpack.c.h.b16 %v835
    %v3269 = vunpack.c.l.b16 %v836
    %v3270 = vunpack.c.h.b16 %v836
    %v3271 = vunpack.c.l.b16 %v837
    %v3272 = vunpack.c.l.b16 %v838
    %v3273 = vunpack.c.h.b16 %v838
    %v3274 = vunpack.c.l.b16 %v839
    %v3275 = vunpack.c.h.b16 %v839
    %v3276 = vunpack.c.l.b16 %v840
    %v3277 = vunpack.c.l.b16 %v841
    %v3278 = vunpack.c.h.b16 %v841
    %v3279 = vunpack.c.l.b16 %v842
    %v3280 = vunpack.c.h.b16 %v842
    %v3281 = vunpack.c.l.b16 %v843
    %v3282 = vunpack.c.l.b16 %v844
    %v3283 = vunpack.c.h.b16 %v844
    %v3284 = vunpack.c.l.b16 %v845
    %v3285 = vunpack.c.h.b16 %v845
    %v3286 = vunpack.c.l.b16 %v846
    %v3287 = vunpack.c.l.b16 %v847
    %v3288 = vunpack.c.h.b16 %v847
    %v3289 = vunpack.c.l.b16 %v848
    %v3290 = vunpack.c.h.b16 %v848
    %v3291 = vunpack.c.l.b16 %v849
    %v3292 = vunpack.c.l.b16 %v850
    %v3293 = vunpack.c.h.b16 %v850
    %v3294 = vunpack.c.l.b16 %v851
    %v3295 = vunpack.c.h.b16 %v851
    %v3296 = vunpack.c.l.b16 %v852
    %v3297 = vunpack.c.l.b16 %v853
    %v3298 = vunpack.c.h.b16 %v853
    %v3299 = vunpack.c.l.b16 %v854
    %v3300 = vunpack.c.h.b16 %v854
    %v3301 = vunpack.c.l.b16 %v855
    %v3302 = vunpack.c.l.b16 %v856
    %v3303 = vunpack.c.h.b16 %v856
    %v3304 = vunpack.c.l.b16 %v857
    %v3305 = vunpack.c.h.b16 %v857
    %v3306 = vunpack.c.l.b16 %v858
    %v3307 = vunpack.c.l.b16 %v859
    %v3308 = vunpack.c.h.b16 %v859
    %v3309 = vunpack.c.l.b16 %v860
    %v3310 = vunpack.c.h.b16 %v860
    %v3311 = vunpack.c.l.b16 %v861
    %v3312 = vunpack.c.l.b16 %v862
    %v3313 = vunpack.c.h.b16 %v862
    %v3314 = vunpack.c.l.b16 %v863
    %v3315 = vunpack.c.h.b16 %v863
    %v3316 = vunpack.c.l.b16 %v864
    %v3317 = vunpack.c.l.b16 %v865
    %v3318 = vunpack.c.h.b16 %v865
    %v3319 = vunpack.c.l.b16 %v866
    %v3320 = vunpack.c.h.b16 %v866
    %v3321 = vunpack.c.l.b16 %v867
    %v3322 = vunpack.c.l.b16 %v868
    %v3323 = vunpack.c.h.b16 %v868
    %v3324 = vunpack.c.l.b16 %v869
    %v3325 = vunpack.c.h.b16 %v869
    %v3326 = vunpack.c.l.b16 %v870
    %v3327 = vunpack.c.l.b16 %v871
    %v3328 = vunpack.c.h.b16 %v871
    %v3329 = vunpack.c.l.b16 %v872
    %v3330 = vunpack.c.h.b16 %v872
    %v3331 = vunpack.c.l.b16 %v873
    %v3332 = vunpack.c.l.b16 %v874
    %v3333 = vunpack.c.h.b16 %v874
    %v3334 = vunpack.c.l.b16 %v875
    %v3335 = vunpack.c.h.b16 %v875
    %v3336 = vunpack.c.l.b16 %v876
    %v3337 = vunpack.c.l.b16 %v877
    %v3338 = vunpack.c.h.b16 %v877
    %v3339 = vunpack.c.l.b16 %v878
    %v3340 = vunpack.c.h.b16 %v878
    %v3341 = vunpack.c.l.b16 %v879
    %v3342 = vunpack.c.l.b16 %v880
    %v3343 = vunpack.c.h.b16 %v880
    %v3344 = vunpack.c.l.b16 %v881
    %v3345 = vunpack.c.h.b16 %v881
    %v3346 = vunpack.c.l.b16 %v882
    %v3347 = vunpack.c.l.b16 %v883
    %v3348 = vunpack.c.h.b16 %v883
    %v3349 = vunpack.c.l.b16 %v884
    %v3350 = vunpack.c.h.b16 %v884
    %v3351 = vunpack.c.l.b16 %v885
    %v3352 = vunpack.c.l.b16 %v886
    %v3353 = vunpack.c.h.b16 %v886
    %v3354 = vunpack.c.l.b16 %v887
    %v3355 = vunpack.c.h.b16 %v887
    %v3356 = vunpack.c.l.b16 %v888
    %v3357 = vunpack.c.l.b16 %v889
    %v3358 = vunpack.c.h.b16 %v889
    %v3359 = vunpack.c.l.b16 %v890
    %v3360 = vunpack.c.h.b16 %v890
    %v3361 = vunpack.c.l.b16 %v891
    %v3362 = vunpack.c.l.b16 %v892
    %v3363 = vunpack.c.h.b16 %v892
    %v3364 = vunpack.c.l.b16 %v893
    %v3365 = vunpack.c.h.b16 %v893
    %v3366 = vunpack.c.l.b16 %v894
    %v3367 = vpack.c.b16 %v1932, %v1927
    %v3368 = vpack.c.b16 %v1933, %v1928
    %v3369 = vpack.c.b16 %v1934, %v1929
    %v3370 = vpack.c.b16 %v1935, %v1930
    %v3371 = vpack.c.b16 %v1936, %v1931
    %v3372 = vpack.c.b16 %v1942, %v1937
    %v3373 = vpack.c.b16 %v1943, %v1938
    %v3374 = vpack.c.b16 %v1944, %v1939
    %v3375 = vpack.c.b16 %v1945, %v1940
    %v3376 = vpack.c.b16 %v1946, %v1941
    %v3377 = vpack.c.b16 %v1952, %v1947
    %v3378 = vpack.c.b16 %v1953, %v1948
    %v3379 = vpack.c.b16 %v1954, %v1949
    %v3380 = vpack.c.b16 %v1955, %v1950
    %v3381 = vpack.c.b16 %v1956, %v1951
    %v3382 = vpack.c.b16 %v1962, %v1957
    %v3383 = vpack.c.b16 %v1963, %v1958
    %v3384 = vpack.c.b16 %v1964, %v1959
    %v3385 = vpack.c.b16 %v1965, %v1960
    %v3386 = vpack.c.b16 %v1966, %v1961
    %v3387 = vpack.c.b16 %v1972, %v1967
    %v3388 = vpack.c.b16 %v1973, %v1968
    %v3389 = vpack.c.b16 %v1974, %v1969
    %v3390 = vpack.c.b16 %v1975, %v1970
    %v3391 = vpack.c.b16 %v1976, %v1971
    %v3392 = vpack.c.b16 %v1982, %v1977
    %v3393 = vpack.c.b16 %v1983, %v1978
    %v3394 = vpack.c.b16 %v1984, %v1979
    %v3395 = vpack.c.b16 %v1985, %v1980
    %v3396 = vpack.c.b16 %v1986, %v1981
    %v3397 = vpack.c.b16 %v1992, %v1987
    %v3398 = vpack.c.b16 %v1993, %v1988
    %v3399 = vpack.c.b16 %v1994, %v1989
    %v3400 = vpack.c.b16 %v1995, %v1990
    %v3401 = vpack.c.b16 %v1996, %v1991
    %v3402 = vpack.c.b16 %v2002, %v1997
    %v3403 = vpack.c.b16 %v2003, %v1998
    %v3404 = vpack.c.b16 %v2004, %v1999
    %v3405 = vpack.c.b16 %v2005, %v2000
    %v3406 = vpack.c.b16 %v2006, %v2001
    %v3407 = vpack.c.b16 %v2012, %v2007
    %v3408 = vpack.c.b16 %v2013, %v2008
    %v3409 = vpack.c.b16 %v2014, %v2009
    %v3410 = vpack.c.b16 %v2015, %v2010
    %v3411 = vpack.c.b16 %v2016, %v2011
    %v3412 = vpack.c.b16 %v2022, %v2017
    %v3413 = vpack.c.b16 %v2023, %v2018
    %v3414 = vpack.c.b16 %v2024, %v2019
    %v3415 = vpack.c.b16 %v2025, %v2020
    %v3416 = vpack.c.b16 %v2026, %v2021
    %v3417 = vpack.c.b16 %v2032, %v2027
    %v3418 = vpack.c.b16 %v2033, %v2028
    %v3419 = vpack.c.b16 %v2034, %v2029
    %v3420 = vpack.c.b16 %v2035, %v2030
    %v3421 = vpack.c.b16 %v2036, %v2031
    %v3422 = vpack.c.b16 %v2042, %v2037
    %v3423 = vpack.c.b16 %v2043, %v2038
    %v3424 = vpack.c.b16 %v2044, %v2039
    %v3425 = vpack.c.b16 %v2045, %v2040
    %v3426 = vpack.c.b16 %v2046, %v2041
    %v3427 = vpack.c.b16 %v2052, %v2047
    %v3428 = vpack.c.b16 %v2053, %v2048
    %v3429 = vpack.c.b16 %v2054, %v2049
    %v3430 = vpack.c.b16 %v2055, %v2050
    %v3431 = vpack.c.b16 %v2056, %v2051
    %v3432 = vpack.c.b16 %v2062, %v2057
    %v3433 = vpack.c.b16 %v2063, %v2058
    %v3434 = vpack.c.b16 %v2064, %v2059
    %v3435 = vpack.c.b16 %v2065, %v2060
    %v3436 = vpack.c.b16 %v2066, %v2061
    %v3437 = vpack.c.b16 %v2072, %v2067
    %v3438 = vpack.c.b16 %v2073, %v2068
    %v3439 = vpack.c.b16 %v2074, %v2069
    %v3440 = vpack.c.b16 %v2075, %v2070
    %v3441 = vpack.c.b16 %v2076, %v2071
    %v3442 = vpack.c.b16 %v2082, %v2077
    %v3443 = vpack.c.b16 %v2083, %v2078
    %v3444 = vpack.c.b16 %v2084, %v2079
    %v3445 = vpack.c.b16 %v2085, %v2080
    %v3446 = vpack.c.b16 %v2086, %v2081
    %v3447 = vpack.c.b16 %v2092, %v2087
    %v3448 = vpack.c.b16 %v2093, %v2088
    %v3449 = vpack.c.b16 %v2094, %v2089
    %v3450 = vpack.c.b16 %v2095, %v2090
    %v3451 = vpack.c.b16 %v2096, %v2091
    %v3452 = vpack.c.b16 %v2102, %v2097
    %v3453 = vpack.c.b16 %v2103, %v2098
    %v3454 = vpack.c.b16 %v2104, %v2099
    %v3455 = vpack.c.b16 %v2105, %v2100
    %v3456 = vpack.c.b16 %v2106, %v2101
    %v3457 = vpack.c.b16 %v2112, %v2107
    %v3458 = vpack.c.b16 %v2113, %v2108
    %v3459 = vpack.c.b16 %v2114, %v2109
    %v3460 = vpack.c.b16 %v2115, %v2110
    %v3461 = vpack.c.b16 %v2116, %v2111
    %v3462 = vpack.c.b16 %v2122, %v2117
    %v3463 = vpack.c.b16 %v2123, %v2118
    %v3464 = vpack.c.b16 %v2124, %v2119
    %v3465 = vpack.c.b16 %v2125, %v2120
    %v3466 = vpack.c.b16 %v2126, %v2121
    %v3467 = vpack.c.b16 %v2132, %v2127
    %v3468 = vpack.c.b16 %v2133, %v2128
    %v3469 = vpack.c.b16 %v2134, %v2129
    %v3470 = vpack.c.b16 %v2135, %v2130
    %v3471 = vpack.c.b16 %v2136, %v2131
    %v3472 = vpack.c.b16 %v2142, %v2137
    %v3473 = vpack.c.b16 %v2143, %v2138
    %v3474 = vpack.c.b16 %v2144, %v2139
    %v3475 = vpack.c.b16 %v2145, %v2140
    %v3476 = vpack.c.b16 %v2146, %v2141
    %v3477 = vpack.c.b16 %v2152, %v2147
    %v3478 = vpack.c.b16 %v2153, %v2148
    %v3479 = vpack.c.b16 %v2154, %v2149
    %v3480 = vpack.c.b16 %v2155, %v2150
    %v3481 = vpack.c.b16 %v2156, %v2151
    %v3482 = vpack.c.b16 %v2162, %v2157
    %v3483 = vpack.c.b16 %v2163, %v2158
    %v3484 = vpack.c.b16 %v2164, %v2159
    %v3485 = vpack.c.b16 %v2165, %v2160
    %v3486 = vpack.c.b16 %v2166, %v2161
    %v3487 = vpack.c.b16 %v2172, %v2167
    %v3488 = vpack.c.b16 %v2173, %v2168
    %v3489 = vpack.c.b16 %v2174, %v2169
    %v3490 = vpack.c.b16 %v2175, %v2170
    %v3491 = vpack.c.b16 %v2176, %v2171
    %v3492 = vpack.c.b16 %v2182, %v2177
    %v3493 = vpack.c.b16 %v2183, %v2178
    %v3494 = vpack.c.b16 %v2184, %v2179
    %v3495 = vpack.c.b16 %v2185, %v2180
    %v3496 = vpack.c.b16 %v2186, %v2181
    %v3497 = vpack.c.b16 %v2192, %v2187
    %v3498 = vpack.c.b16 %v2193, %v2188
    %v3499 = vpack.c.b16 %v2194, %v2189
    %v3500 = vpack.c.b16 %v2195, %v2190
    %v3501 = vpack.c.b16 %v2196, %v2191
    %v3502 = vpack.c.b16 %v2202, %v2197
    %v3503 = vpack.c.b16 %v2203, %v2198
    %v3504 = vpack.c.b16 %v2204, %v2199
    %v3505 = vpack.c.b16 %v2205, %v2200
    %v3506 = vpack.c.b16 %v2206, %v2201
    %v3507 = vpack.c.b16 %v2212, %v2207
    %v3508 = vpack.c.b16 %v2213, %v2208
    %v3509 = vpack.c.b16 %v2214, %v2209
    %v3510 = vpack.c.b16 %v2215, %v2210
    %v3511 = vpack.c.b16 %v2216, %v2211
    %v3512 = vpack.c.b16 %v2222, %v2217
    %v3513 = vpack.c.b16 %v2223, %v2218
    %v3514 = vpack.c.b16 %v2224, %v2219
    %v3515 = vpack.c.b16 %v2225, %v2220
    %v3516 = vpack.c.b16 %v2226, %v2221
    %v3517 = vpack.c.b16 %v2232, %v2227
    %v3518 = vpack.c.b16 %v2233, %v2228
    %v3519 = vpack.c.b16 %v2234, %v2229
    %v3520 = vpack.c.b16 %v2235, %v2230
    %v3521 = vpack.c.b16 %v2236, %v2231
    %v3522 = vpack.c.b16 %v2242, %v2237
    %v3523 = vpack.c.b16 %v2243, %v2238
    %v3524 = vpack.c.b16 %v2244, %v2239
    %v3525 = vpack.c.b16 %v2245, %v2240
    %v3526 = vpack.c.b16 %v2246, %v2241
    %v3527 = vpack.c.b16 %v2252, %v2247
    %v3528 = vpack.c.b16 %v2253, %v2248
    %v3529 = vpack.c.b16 %v2254, %v2249
    %v3530 = vpack.c.b16 %v2255, %v2250
    %v3531 = vpack.c.b16 %v2256, %v2251
    %v3532 = vpack.c.b16 %v2262, %v2257
    %v3533 = vpack.c.b16 %v2263, %v2258
    %v3534 = vpack.c.b16 %v2264, %v2259
    %v3535 = vpack.c.b16 %v2265, %v2260
    %v3536 = vpack.c.b16 %v2266, %v2261
    %v3537 = vpack.c.b16 %v2272, %v2267
    %v3538 = vpack.c.b16 %v2273, %v2268
    %v3539 = vpack.c.b16 %v2274, %v2269
    %v3540 = vpack.c.b16 %v2275, %v2270
    %v3541 = vpack.c.b16 %v2276, %v2271
    %v3542 = vpack.c.b16 %v2282, %v2277
    %v3543 = vpack.c.b16 %v2283, %v2278
    %v3544 = vpack.c.b16 %v2284, %v2279
    %v3545 = vpack.c.b16 %v2285, %v2280
    %v3546 = vpack.c.b16 %v2286, %v2281
    %v3547 = vpack.c.b16 %v2292, %v2287
    %v3548 = vpack.c.b16 %v2293, %v2288
    %v3549 = vpack.c.b16 %v2294, %v2289
    %v3550 = vpack.c.b16 %v2295, %v2290
    %v3551 = vpack.c.b16 %v2296, %v2291
    %v3552 = vpack.c.b16 %v2302, %v2297
    %v3553 = vpack.c.b16 %v2303, %v2298
    %v3554 = vpack.c.b16 %v2304, %v2299
    %v3555 = vpack.c.b16 %v2305, %v2300
    %v3556 = vpack.c.b16 %v2306, %v2301
    %v3557 = vpack.c.b16 %v2312, %v2307
    %v3558 = vpack.c.b16 %v2313, %v2308
    %v3559 = vpack.c.b16 %v2314, %v2309
    %v3560 = vpack.c.b16 %v2315, %v2310
    %v3561 = vpack.c.b16 %v2316, %v2311
    %v3562 = vpack.c.b16 %v2322, %v2317
    %v3563 = vpack.c.b16 %v2323, %v2318
    %v3564 = vpack.c.b16 %v2324, %v2319
    %v3565 = vpack.c.b16 %v2325, %v2320
    %v3566 = vpack.c.b16 %v2326, %v2321
    %v3567 = vpack.c.b16 %v2332, %v2327
    %v3568 = vpack.c.b16 %v2333, %v2328
    %v3569 = vpack.c.b16 %v2334, %v2329
    %v3570 = vpack.c.b16 %v2335, %v2330
    %v3571 = vpack.c.b16 %v2336, %v2331
    %v3572 = vpack.c.b16 %v2342, %v2337
    %v3573 = vpack.c.b16 %v2343, %v2338
    %v3574 = vpack.c.b16 %v2344, %v2339
    %v3575 = vpack.c.b16 %v2345, %v2340
    %v3576 = vpack.c.b16 %v2346, %v2341
    %v3577 = vpack.c.b16 %v2352, %v2347
    %v3578 = vpack.c.b16 %v2353, %v2348
    %v3579 = vpack.c.b16 %v2354, %v2349
    %v3580 = vpack.c.b16 %v2355, %v2350
    %v3581 = vpack.c.b16 %v2356, %v2351
    %v3582 = vpack.c.b16 %v2362, %v2357
    %v3583 = vpack.c.b16 %v2363, %v2358
    %v3584 = vpack.c.b16 %v2364, %v2359
    %v3585 = vpack.c.b16 %v2365, %v2360
    %v3586 = vpack.c.b16 %v2366, %v2361
    %v3587 = vpack.c.b16 %v2372, %v2367
    %v3588 = vpack.c.b16 %v2373, %v2368
    %v3589 = vpack.c.b16 %v2374, %v2369
    %v3590 = vpack.c.b16 %v2375, %v2370
    %v3591 = vpack.c.b16 %v2376, %v2371
    %v3592 = vpack.c.b16 %v2382, %v2377
    %v3593 = vpack.c.b16 %v2383, %v2378
    %v3594 = vpack.c.b16 %v2384, %v2379
    %v3595 = vpack.c.b16 %v2385, %v2380
    %v3596 = vpack.c.b16 %v2386, %v2381
    %v3597 = vpack.c.b16 %v2392, %v2387
    %v3598 = vpack.c.b16 %v2393, %v2388
    %v3599 = vpack.c.b16 %v2394, %v2389
    %v3600 = vpack.c.b16 %v2395, %v2390
    %v3601 = vpack.c.b16 %v2396, %v2391
    %v3602 = vpack.c.b16 %v2402, %v2397
    %v3603 = vpack.c.b16 %v2403, %v2398
    %v3604 = vpack.c.b16 %v2404, %v2399
    %v3605 = vpack.c.b16 %v2405, %v2400
    %v3606 = vpack.c.b16 %v2406, %v2401
    %v3607 = vpack.c.b16 %v2412, %v2407
    %v3608 = vpack.c.b16 %v2413, %v2408
    %v3609 = vpack.c.b16 %v2414, %v2409
    %v3610 = vpack.c.b16 %v2415, %v2410
    %v3611 = vpack.c.b16 %v2416, %v2411
    %v3612 = vpack.c.b16 %v2422, %v2417
    %v3613 = vpack.c.b16 %v2423, %v2418
    %v3614 = vpack.c.b16 %v2424, %v2419
    %v3615 = vpack.c.b16 %v2425, %v2420
    %v3616 = vpack.c.b16 %v2426, %v2421
    %v3617 = vpack.c.b16 %v2432, %v2427
    %v3618 = vpack.c.b16 %v2433, %v2428
    %v3619 = vpack.c.b16 %v2434, %v2429
    %v3620 = vpack.c.b16 %v2435, %v2430
    %v3621 = vpack.c.b16 %v2436, %v2431
    %v3622 = vpack.c.b16 %v2442, %v2437
    %v3623 = vpack.c.b16 %v2443, %v2438
    %v3624 = vpack.c.b16 %v2444, %v2439
    %v3625 = vpack.c.b16 %v2445, %v2440
    %v3626 = vpack.c.b16 %v2446, %v2441
    %v3627 = vpack.c.b16 %v2452, %v2447
    %v3628 = vpack.c.b16 %v2453, %v2448
    %v3629 = vpack.c.b16 %v2454, %v2449
    %v3630 = vpack.c.b16 %v2455, %v2450
    %v3631 = vpack.c.b16 %v2456, %v2451
    %v3632 = vpack.c.b16 %v2462, %v2457
    %v3633 = vpack.c.b16 %v2463, %v2458
    %v3634 = vpack.c.b16 %v2464, %v2459
    %v3635 = vpack.c.b16 %v2465, %v2460
    %v3636 = vpack.c.b16 %v2466, %v2461
    %v3637 = vpack.c.b16 %v2472, %v2467
    %v3638 = vpack.c.b16 %v2473, %v2468
    %v3639 = vpack.c.b16 %v2474, %v2469
    %v3640 = vpack.c.b16 %v2475, %v2470
    %v3641 = vpack.c.b16 %v2476, %v2471
    %v3642 = vpack.c.b16 %v2482, %v2477
    %v3643 = vpack.c.b16 %v2483, %v2478
    %v3644 = vpack.c.b16 %v2484, %v2479
    %v3645 = vpack.c.b16 %v2485, %v2480
    %v3646 = vpack.c.b16 %v2486, %v2481
    %v3647 = vpack.c.b16 %v2492, %v2487
    %v3648 = vpack.c.b16 %v2493, %v2488
    %v3649 = vpack.c.b16 %v2494, %v2489
    %v3650 = vpack.c.b16 %v2495, %v2490
    %v3651 = vpack.c.b16 %v2496, %v2491
    %v3652 = vpack.c.b16 %v2502, %v2497
    %v3653 = vpack.c.b16 %v2503, %v2498
    %v3654 = vpack.c.b16 %v2504, %v2499
    %v3655 = vpack.c.b16 %v2505, %v2500
    %v3656 = vpack.c.b16 %v2506, %v2501
    %v3657 = vpack.c.b16 %v2512, %v2507
    %v3658 = vpack.c.b16 %v2513, %v2508
    %v3659 = vpack.c.b16 %v2514, %v2509
    %v3660 = vpack.c.b16 %v2515, %v2510
    %v3661 = vpack.c.b16 %v2516, %v2511
    %v3662 = vpack.c.b16 %v2522, %v2517
    %v3663 = vpack.c.b16 %v2523, %v2518
    %v3664 = vpack.c.b16 %v2524, %v2519
    %v3665 = vpack.c.b16 %v2525, %v2520
    %v3666 = vpack.c.b16 %v2526, %v2521
    %v3667 = vpack.c.b16 %v2532, %v2527
    %v3668 = vpack.c.b16 %v2533, %v2528
    %v3669 = vpack.c.b16 %v2534, %v2529
    %v3670 = vpack.c.b16 %v2535, %v2530
    %v3671 = vpack.c.b16 %v2536, %v2531
    %v3672 = vpack.c.b16 %v2542, %v2537
    %v3673 = vpack.c.b16 %v2543, %v2538
    %v3674 = vpack.c.b16 %v2544, %v2539
    %v3675 = vpack.c.b16 %v2545, %v2540
    %v3676 = vpack.c.b16 %v2546, %v2541
    %v3677 = vpack.c.b16 %v2552, %v2547
    %v3678 = vpack.c.b16 %v2553, %v2548
    %v3679 = vpack.c.b16 %v2554, %v2549
    %v3680 = vpack.c.b16 %v2555, %v2550
    %v3681 = vpack.c.b16 %v2556, %v2551
    %v3682 = vpack.c.b16 %v2562, %v2557
    %v3683 = vpack.c.b16 %v2563, %v2558
    %v3684 = vpack.c.b16 %v2564, %v2559
    %v3685 = vpack.c.b16 %v2565, %v2560
    %v3686 = vpack.c.b16 %v2566, %v2561
    %v3687 = vpack.c.b16 %v2572, %v2567
    %v3688 = vpack.c.b16 %v2573, %v2568
    %v3689 = vpack.c.b16 %v2574, %v2569
    %v3690 = vpack.c.b16 %v2575, %v2570
    %v3691 = vpack.c.b16 %v2576, %v2571
    %v3692 = vpack.c.b16 %v2582, %v2577
    %v3693 = vpack.c.b16 %v2583, %v2578
    %v3694 = vpack.c.b16 %v2584, %v2579
    %v3695 = vpack.c.b16 %v2585, %v2580
    %v3696 = vpack.c.b16 %v2586, %v2581
    %v3697 = vpack.c.b16 %v2592, %v2587
    %v3698 = vpack.c.b16 %v2593, %v2588
    %v3699 = vpack.c.b16 %v2594, %v2589
    %v3700 = vpack.c.b16 %v2595, %v2590
    %v3701 = vpack.c.b16 %v2596, %v2591
    %v3702 = vpack.c.b16 %v2602, %v2597
    %v3703 = vpack.c.b16 %v2603, %v2598
    %v3704 = vpack.c.b16 %v2604, %v2599
    %v3705 = vpack.c.b16 %v2605, %v2600
    %v3706 = vpack.c.b16 %v2606, %v2601
    %v3707 = vpack.c.b16 %v2612, %v2607
    %v3708 = vpack.c.b16 %v2613, %v2608
    %v3709 = vpack.c.b16 %v2614, %v2609
    %v3710 = vpack.c.b16 %v2615, %v2610
    %v3711 = vpack.c.b16 %v2616, %v2611
    %v3712 = vpack.c.b16 %v2622, %v2617
    %v3713 = vpack.c.b16 %v2623, %v2618
    %v3714 = vpack.c.b16 %v2624, %v2619
    %v3715 = vpack.c.b16 %v2625, %v2620
    %v3716 = vpack.c.b16 %v2626, %v2621
    %v3717 = vpack.c.b16 %v2632, %v2627
    %v3718 = vpack.c.b16 %v2633, %v2628
    %v3719 = vpack.c.b16 %v2634, %v2629
    %v3720 = vpack.c.b16 %v2635, %v2630
    %v3721 = vpack.c.b16 %v2636, %v2631
    %v3722 = vpack.c.b16 %v2642, %v2637
    %v3723 = vpack.c.b16 %v2643, %v2638
    %v3724 = vpack.c.b16 %v2644, %v2639
    %v3725 = vpack.c.b16 %v2645, %v2640
    %v3726 = vpack.c.b16 %v2646, %v2641
    %v3727 = vpack.c.b16 %v2652, %v2647
    %v3728 = vpack.c.b16 %v2653, %v2648
    %v3729 = vpack.c.b16 %v2654, %v2649
    %v3730 = vpack.c.b16 %v2655, %v2650
    %v3731 = vpack.c.b16 %v2656, %v2651
    %v3732 = vpack.c.b16 %v2662, %v2657
    %v3733 = vpack.c.b16 %v2663, %v2658
    %v3734 = vpack.c.b16 %v2664, %v2659
    %v3735 = vpack.c.b16 %v2665, %v2660
    %v3736 = vpack.c.b16 %v2666, %v2661
    %v3737 = vpack.c.b16 %v2672, %v2667
    %v3738 = vpack.c.b16 %v2673, %v2668
    %v3739 = vpack.c.b16 %v2674, %v2669
    %v3740 = vpack.c.b16 %v2675, %v2670
    %v3741 = vpack.c.b16 %v2676, %v2671
    %v3742 = vpack.c.b16 %v2682, %v2677
    %v3743 = vpack.c.b16 %v2683, %v2678
    %v3744 = vpack.c.b16 %v2684, %v2679
    %v3745 = vpack.c.b16 %v2685, %v2680
    %v3746 = vpack.c.b16 %v2686, %v2681
    %v3747 = vpack.c.b16 %v2692, %v2687
    %v3748 = vpack.c.b16 %v2693, %v2688
    %v3749 = vpack.c.b16 %v2694, %v2689
    %v3750 = vpack.c.b16 %v2695, %v2690
    %v3751 = vpack.c.b16 %v2696, %v2691
    %v3752 = vpack.c.b16 %v2702, %v2697
    %v3753 = vpack.c.b16 %v2703, %v2698
    %v3754 = vpack.c.b16 %v2704, %v2699
    %v3755 = vpack.c.b16 %v2705, %v2700
    %v3756 = vpack.c.b16 %v2706, %v2701
    %v3757 = vpack.c.b16 %v2712, %v2707
    %v3758 = vpack.c.b16 %v2713, %v2708
    %v3759 = vpack.c.b16 %v2714, %v2709
    %v3760 = vpack.c.b16 %v2715, %v2710
    %v3761 = vpack.c.b16 %v2716, %v2711
    %v3762 = vpack.c.b16 %v2722, %v2717
    %v3763 = vpack.c.b16 %v2723, %v2718
    %v3764 = vpack.c.b16 %v2724, %v2719
    %v3765 = vpack.c.b16 %v2725, %v2720
    %v3766 = vpack.c.b16 %v2726, %v2721
    %v3767 = vpack.c.b16 %v2732, %v2727
    %v3768 = vpack.c.b16 %v2733, %v2728
    %v3769 = vpack.c.b16 %v2734, %v2729
    %v3770 = vpack.c.b16 %v2735, %v2730
    %v3771 = vpack.c.b16 %v2736, %v2731
    %v3772 = vpack.c.b16 %v2742, %v2737
    %v3773 = vpack.c.b16 %v2743, %v2738
    %v3774 = vpack.c.b16 %v2744, %v2739
    %v3775 = vpack.c.b16 %v2745, %v2740
    %v3776 = vpack.c.b16 %v2746, %v2741
    %v3777 = vpack.c.b16 %v2752, %v2747
    %v3778 = vpack.c.b16 %v2753, %v2748
    %v3779 = vpack.c.b16 %v2754, %v2749
    %v3780 = vpack.c.b16 %v2755, %v2750
    %v3781 = vpack.c.b16 %v2756, %v2751
    %v3782 = vpack.c.b16 %v2762, %v2757
    %v3783 = vpack.c.b16 %v2763, %v2758
    %v3784 = vpack.c.b16 %v2764, %v2759
    %v3785 = vpack.c.b16 %v2765, %v2760
    %v3786 = vpack.c.b16 %v2766, %v2761
    %v3787 = vpack.c.b16 %v2772, %v2767
    %v3788 = vpack.c.b16 %v2773, %v2768
    %v3789 = vpack.c.b16 %v2774, %v2769
    %v3790 = vpack.c.b16 %v2775, %v2770
    %v3791 = vpack.c.b16 %v2776, %v2771
    %v3792 = vpack.c.b16 %v2782, %v2777
    %v3793 = vpack.c.b16 %v2783, %v2778
    %v3794 = vpack.c.b16 %v2784, %v2779
    %v3795 = vpack.c.b16 %v2785, %v2780
    %v3796 = vpack.c.b16 %v2786, %v2781
    %v3797 = vpack.c.b16 %v2792, %v2787
    %v3798 = vpack.c.b16 %v2793, %v2788
    %v3799 = vpack.c.b16 %v2794, %v2789
    %v3800 = vpack.c.b16 %v2795, %v2790
    %v3801 = vpack.c.b16 %v2796, %v2791
    %v3802 = vpack.c.b16 %v2802, %v2797
    %v3803 = vpack.c.b16 %v2803, %v2798
    %v3804 = vpack.c.b16 %v2804, %v2799
    %v3805 = vpack.c.b16 %v2805, %v2800
    %v3806 = vpack.c.b16 %v2806, %v2801
    %v3807 = vpack.c.b16 %v2812, %v2807
    %v3808 = vpack.c.b16 %v2813, %v2808
    %v3809 = vpack.c.b16 %v2814, %v2809
    %v3810 = vpack.c.b16 %v2815, %v2810
    %v3811 = vpack.c.b16 %v2816, %v2811
    %v3812 = vpack.c.b16 %v2822, %v2817
    %v3813 = vpack.c.b16 %v2823, %v2818
    %v3814 = vpack.c.b16 %v2824, %v2819
    %v3815 = vpack.c.b16 %v2825, %v2820
    %v3816 = vpack.c.b16 %v2826, %v2821
    %v3817 = vpack.c.b16 %v2832, %v2827
    %v3818 = vpack.c.b16 %v2833, %v2828
    %v3819 = vpack.c.b16 %v2834, %v2829
    %v3820 = vpack.c.b16 %v2835, %v2830
    %v3821 = vpack.c.b16 %v2836, %v2831
    %v3822 = vpack.c.b16 %v2842, %v2837
    %v3823 = vpack.c.b16 %v2843, %v2838
    %v3824 = vpack.c.b16 %v2844, %v2839
    %v3825 = vpack.c.b16 %v2845, %v2840
    %v3826 = vpack.c.b16 %v2846, %v2841
    %v3827 = vpack.c.b16 %v2852, %v2847
    %v3828 = vpack.c.b16 %v2853, %v2848
    %v3829 = vpack.c.b16 %v2854, %v2849
    %v3830 = vpack.c.b16 %v2855, %v2850
    %v3831 = vpack.c.b16 %v2856, %v2851
    %v3832 = vpack.c.b16 %v2862, %v2857
    %v3833 = vpack.c.b16 %v2863, %v2858
    %v3834 = vpack.c.b16 %v2864, %v2859
    %v3835 = vpack.c.b16 %v2865, %v2860
    %v3836 = vpack.c.b16 %v2866, %v2861
    %v3837 = vpack.c.b16 %v2872, %v2867
    %v3838 = vpack.c.b16 %v2873, %v2868
    %v3839 = vpack.c.b16 %v2874, %v2869
    %v3840 = vpack.c.b16 %v2875, %v2870
    %v3841 = vpack.c.b16 %v2876, %v2871
    %v3842 = vpack.c.b16 %v2882, %v2877
    %v3843 = vpack.c.b16 %v2883, %v2878
    %v3844 = vpack.c.b16 %v2884, %v2879
    %v3845 = vpack.c.b16 %v2885, %v2880
    %v3846 = vpack.c.b16 %v2886, %v2881
    %v3847 = vpack.c.b16 %v2892, %v2887
    %v3848 = vpack.c.b16 %v2893, %v2888
    %v3849 = vpack.c.b16 %v2894, %v2889
    %v3850 = vpack.c.b16 %v2895, %v2890
    %v3851 = vpack.c.b16 %v2896, %v2891
    %v3852 = vpack.c.b16 %v2902, %v2897
    %v3853 = vpack.c.b16 %v2903, %v2898
    %v3854 = vpack.c.b16 %v2904, %v2899
    %v3855 = vpack.c.b16 %v2905, %v2900
    %v3856 = vpack.c.b16 %v2906, %v2901
    %v3857 = vpack.c.b16 %v2912, %v2907
    %v3858 = vpack.c.b16 %v2913, %v2908
    %v3859 = vpack.c.b16 %v2914, %v2909
    %v3860 = vpack.c.b16 %v2915, %v2910
    %v3861 = vpack.c.b16 %v2916, %v2911
    %v3862 = vpack.c.b16 %v2922, %v2917
    %v3863 = vpack.c.b16 %v2923, %v2918
    %v3864 = vpack.c.b16 %v2924, %v2919
    %v3865 = vpack.c.b16 %v2925, %v2920
    %v3866 = vpack.c.b16 %v2926, %v2921
    %v3867 = vpack.c.b16 %v2932, %v2927
    %v3868 = vpack.c.b16 %v2933, %v2928
    %v3869 = vpack.c.b16 %v2934, %v2929
    %v3870 = vpack.c.b16 %v2935, %v2930
    %v3871 = vpack.c.b16 %v2936, %v2931
    %v3872 = vpack.c.b16 %v2942, %v2937
    %v3873 = vpack.c.b16 %v2943, %v2938
    %v3874 = vpack.c.b16 %v2944, %v2939
    %v3875 = vpack.c.b16 %v2945, %v2940
    %v3876 = vpack.c.b16 %v2946, %v2941
    %v3877 = vpack.c.b16 %v2952, %v2947
    %v3878 = vpack.c.b16 %v2953, %v2948
    %v3879 = vpack.c.b16 %v2954, %v2949
    %v3880 = vpack.c.b16 %v2955, %v2950
    %v3881 = vpack.c.b16 %v2956, %v2951
    %v3882 = vpack.c.b16 %v2962, %v2957
    %v3883 = vpack.c.b16 %v2963, %v2958
    %v3884 = vpack.c.b16 %v2964, %v2959
    %v3885 = vpack.c.b16 %v2965, %v2960
    %v3886 = vpack.c.b16 %v2966, %v2961
    %v3887 = vpack.c.b16 %v2972, %v2967
    %v3888 = vpack.c.b16 %v2973, %v2968
    %v3889 = vpack.c.b16 %v2974, %v2969
    %v3890 = vpack.c.b16 %v2975, %v2970
    %v3891 = vpack.c.b16 %v2976, %v2971
    %v3892 = vpack.c.b16 %v2982, %v2977
    %v3893 = vpack.c.b16 %v2983, %v2978
    %v3894 = vpack.c.b16 %v2984, %v2979
    %v3895 = vpack.c.b16 %v2985, %v2980
    %v3896 = vpack.c.b16 %v2986, %v2981
    %v3897 = vpack.c.b16 %v2992, %v2987
    %v3898 = vpack.c.b16 %v2993, %v2988
    %v3899 = vpack.c.b16 %v2994, %v2989
    %v3900 = vpack.c.b16 %v2995, %v2990
    %v3901 = vpack.c.b16 %v2996, %v2991
    %v3902 = vpack.c.b16 %v3002, %v2997
    %v3903 = vpack.c.b16 %v3003, %v2998
    %v3904 = vpack.c.b16 %v3004, %v2999
    %v3905 = vpack.c.b16 %v3005, %v3000
    %v3906 = vpack.c.b16 %v3006, %v3001
    %v3907 = vpack.c.b16 %v3012, %v3007
    %v3908 = vpack.c.b16 %v3013, %v3008
    %v3909 = vpack.c.b16 %v3014, %v3009
    %v3910 = vpack.c.b16 %v3015, %v3010
    %v3911 = vpack.c.b16 %v3016, %v3011
    %v3912 = vpack.c.b16 %v3022, %v3017
    %v3913 = vpack.c.b16 %v3023, %v3018
    %v3914 = vpack.c.b16 %v3024, %v3019
    %v3915 = vpack.c.b16 %v3025, %v3020
    %v3916 = vpack.c.b16 %v3026, %v3021
    %v3917 = vpack.c.b16 %v3032, %v3027
    %v3918 = vpack.c.b16 %v3033, %v3028
    %v3919 = vpack.c.b16 %v3034, %v3029
    %v3920 = vpack.c.b16 %v3035, %v3030
    %v3921 = vpack.c.b16 %v3036, %v3031
    %v3922 = vpack.c.b16 %v3042, %v3037
    %v3923 = vpack.c.b16 %v3043, %v3038
    %v3924 = vpack.c.b16 %v3044, %v3039
    %v3925 = vpack.c.b16 %v3045, %v3040
    %v3926 = vpack.c.b16 %v3046, %v3041
    %v3927 = vpack.c.b16 %v3052, %v3047
    %v3928 = vpack.c.b16 %v3053, %v3048
    %v3929 = vpack.c.b16 %v3054, %v3049
    %v3930 = vpack.c.b16 %v3055, %v3050
    %v3931 = vpack.c.b16 %v3056, %v3051
    %v3932 = vpack.c.b16 %v3062, %v3057
    %v3933 = vpack.c.b16 %v3063, %v3058
    %v3934 = vpack.c.b16 %v3064, %v3059
    %v3935 = vpack.c.b16 %v3065, %v3060
    %v3936 = vpack.c.b16 %v3066, %v3061
    %v3937 = vpack.c.b16 %v3072, %v3067
    %v3938 = vpack.c.b16 %v3073, %v3068
    %v3939 = vpack.c.b16 %v3074, %v3069
    %v3940 = vpack.c.b16 %v3075, %v3070
    %v3941 = vpack.c.b16 %v3076, %v3071
    %v3942 = vpack.c.b16 %v3082, %v3077
    %v3943 = vpack.c.b16 %v3083, %v3078
    %v3944 = vpack.c.b16 %v3084, %v3079
    %v3945 = vpack.c.b16 %v3085, %v3080
    %v3946 = vpack.c.b16 %v3086, %v3081
    %v3947 = vpack.c.b16 %v3092, %v3087
    %v3948 = vpack.c.b16 %v3093, %v3088
    %v3949 = vpack.c.b16 %v3094, %v3089
    %v3950 = vpack.c.b16 %v3095, %v3090
    %v3951 = vpack.c.b16 %v3096, %v3091
    %v3952 = vpack.c.b16 %v3102, %v3097
    %v3953 = vpack.c.b16 %v3103, %v3098
    %v3954 = vpack.c.b16 %v3104, %v3099
    %v3955 = vpack.c.b16 %v3105, %v3100
    %v3956 = vpack.c.b16 %v3106, %v3101
    %v3957 = vpack.c.b16 %v3112, %v3107
    %v3958 = vpack.c.b16 %v3113, %v3108
    %v3959 = vpack.c.b16 %v3114, %v3109
    %v3960 = vpack.c.b16 %v3115, %v3110
    %v3961 = vpack.c.b16 %v3116, %v3111
    %v3962 = vpack.c.b16 %v3122, %v3117
    %v3963 = vpack.c.b16 %v3123, %v3118
    %v3964 = vpack.c.b16 %v3124, %v3119
    %v3965 = vpack.c.b16 %v3125, %v3120
    %v3966 = vpack.c.b16 %v3126, %v3121
    %v3967 = vpack.c.b16 %v3132, %v3127
    %v3968 = vpack.c.b16 %v3133, %v3128
    %v3969 = vpack.c.b16 %v3134, %v3129
    %v3970 = vpack.c.b16 %v3135, %v3130
    %v3971 = vpack.c.b16 %v3136, %v3131
    %v3972 = vpack.c.b16 %v3142, %v3137
    %v3973 = vpack.c.b16 %v3143, %v3138
    %v3974 = vpack.c.b16 %v3144, %v3139
    %v3975 = vpack.c.b16 %v3145, %v3140
    %v3976 = vpack.c.b16 %v3146, %v3141
    %v3977 = vpack.c.b16 %v3152, %v3147
    %v3978 = vpack.c.b16 %v3153, %v3148
    %v3979 = vpack.c.b16 %v3154, %v3149
    %v3980 = vpack.c.b16 %v3155, %v3150
    %v3981 = vpack.c.b16 %v3156, %v3151
    %v3982 = vpack.c.b16 %v3162, %v3157
    %v3983 = vpack.c.b16 %v3163, %v3158
    %v3984 = vpack.c.b16 %v3164, %v3159
    %v3985 = vpack.c.b16 %v3165, %v3160
    %v3986 = vpack.c.b16 %v3166, %v3161
    %v3987 = vpack.c.b16 %v3172, %v3167
    %v3988 = vpack.c.b16 %v3173, %v3168
    %v3989 = vpack.c.b16 %v3174, %v3169
    %v3990 = vpack.c.b16 %v3175, %v3170
    %v3991 = vpack.c.b16 %v3176, %v3171
    %v3992 = vpack.c.b16 %v3182, %v3177
    %v3993 = vpack.c.b16 %v3183, %v3178
    %v3994 = vpack.c.b16 %v3184, %v3179
    %v3995 = vpack.c.b16 %v3185, %v3180
    %v3996 = vpack.c.b16 %v3186, %v3181
    %v3997 = vpack.c.b16 %v3192, %v3187
    %v3998 = vpack.c.b16 %v3193, %v3188
    %v3999 = vpack.c.b16 %v3194, %v3189
    %v4000 = vpack.c.b16 %v3195, %v3190
    %v4001 = vpack.c.b16 %v3196, %v3191
    %v4002 = vpack.c.b16 %v3202, %v3197
    %v4003 = vpack.c.b16 %v3203, %v3198
    %v4004 = vpack.c.b16 %v3204, %v3199
    %v4005 = vpack.c.b16 %v3205, %v3200
    %v4006 = vpack.c.b16 %v3206, %v3201
    %v4007 = vpack.c.b16 %v3212, %v3207
    %v4008 = vpack.c.b16 %v3213, %v3208
    %v4009 = vpack.c.b16 %v3214, %v3209
    %v4010 = vpack.c.b16 %v3215, %v3210
    %v4011 = vpack.c.b16 %v3216, %v3211
    %v4012 = vpack.c.b16 %v3222, %v3217
    %v4013 = vpack.c.b16 %v3223, %v3218
    %v4014 = vpack.c.b16 %v3224, %v3219
    %v4015 = vpack.c.b16 %v3225, %v3220
    %v4016 = vpack.c.b16 %v3226, %v3221
    %v4017 = vpack.c.b16 %v3232, %v3227
    %v4018 = vpack.c.b16 %v3233, %v3228
    %v4019 = vpack.c.b16 %v3234, %v3229
    %v4020 = vpack.c.b16 %v3235, %v3230
    %v4021 = vpack.c.b16 %v3236, %v3231
    %v4022 = vpack.c.b16 %v3242, %v3237
    %v4023 = vpack.c.b16 %v3243, %v3238
    %v4024 = vpack.c.b16 %v3244, %v3239
    %v4025 = vpack.c.b16 %v3245, %v3240
    %v4026 = vpack.c.b16 %v3246, %v3241
    %v4027 = vpack.c.b16 %v3252, %v3247
    %v4028 = vpack.c.b16 %v3253, %v3248
    %v4029 = vpack.c.b16 %v3254, %v3249
    %v4030 = vpack.c.b16 %v3255, %v3250
    %v4031 = vpack.c.b16 %v3256, %v3251
    %v4032 = vpack.c.b16 %v3262, %v3257
    %v4033 = vpack.c.b16 %v3263, %v3258
    %v4034 = vpack.c.b16 %v3264, %v3259
    %v4035 = vpack.c.b16 %v3265, %v3260
    %v4036 = vpack.c.b16 %v3266, %v3261
    %v4037 = vpack.c.b16 %v3272, %v3267
    %v4038 = vpack.c.b16 %v3273, %v3268
    %v4039 = vpack.c.b16 %v3274, %v3269
    %v4040 = vpack.c.b16 %v3275, %v3270
    %v4041 = vpack.c.b16 %v3276, %v3271
    %v4042 = vpack.c.b16 %v3282, %v3277
    %v4043 = vpack.c.b16 %v3283, %v3278
    %v4044 = vpack.c.b16 %v3284, %v3279
    %v4045 = vpack.c.b16 %v3285, %v3280
    %v4046 = vpack.c.b16 %v3286, %v3281
    %v4047 = vpack.c.b16 %v3292, %v3287
    %v4048 = vpack.c.b16 %v3293, %v3288
    %v4049 = vpack.c.b16 %v3294, %v3289
    %v4050 = vpack.c.b16 %v3295, %v3290
    %v4051 = vpack.c.b16 %v3296, %v3291
    %v4052 = vpack.c.b16 %v3302, %v3297
    %v4053 = vpack.c.b16 %v3303, %v3298
    %v4054 = vpack.c.b16 %v3304, %v3299
    %v4055 = vpack.c.b16 %v3305, %v3300
    %v4056 = vpack.c.b16 %v3306, %v3301
    %v4057 = vpack.c.b16 %v3312, %v3307
    %v4058 = vpack.c.b16 %v3313, %v3308
    %v4059 = vpack.c.b16 %v3314, %v3309
    %v4060 = vpack.c.b16 %v3315, %v3310
    %v4061 = vpack.c.b16 %v3316, %v3311
    %v4062 = vpack.c.b16 %v3322, %v3317
    %v4063 = vpack.c.b16 %v3323, %v3318
    %v4064 = vpack.c.b16 %v3324, %v3319
    %v4065 = vpack.c.b16 %v3325, %v3320
    %v4066 = vpack.c.b16 %v3326, %v3321
    %v4067 = vpack.c.b16 %v3332, %v3327
    %v4068 = vpack.c.b16 %v3333, %v3328
    %v4069 = vpack.c.b16 %v3334, %v3329
    %v4070 = vpack.c.b16 %v3335, %v3330
    %v4071 = vpack.c.b16 %v3336, %v3331
    %v4072 = vpack.c.b16 %v3342, %v3337
    %v4073 = vpack.c.b16 %v3343, %v3338
    %v4074 = vpack.c.b16 %v3344, %v3339
    %v4075 = vpack.c.b16 %v3345, %v3340
    %v4076 = vpack.c.b16 %v3346, %v3341
    %v4077 = vpack.c.b16 %v3352, %v3347
    %v4078 = vpack.c.b16 %v3353, %v3348
    %v4079 = vpack.c.b16 %v3354, %v3349
    %v4080 = vpack.c.b16 %v3355, %v3350
    %v4081 = vpack.c.b16 %v3356, %v3351
    %v4082 = vpack.c.b16 %v3362, %v3357
    %v4083 = vpack.c.b16 %v3363, %v3358
    %v4084 = vpack.c.b16 %v3364, %v3359
    %v4085 = vpack.c.b16 %v3365, %v3360
    %v4086 = vpack.c.b16 %v3366, %v3361
    %4807 = vmatprep.subr.bf16.mxu0 %v3403
    %4808 = vmatpush1.bf16.msra.mxu0 %v3402
    %4809 = vmatprep.subr.bf16.mxu0 %v3398
    %4810 = vmatpush1.bf16.msra.mxu0 %v3397
    %4811 = vmatprep.subr.bf16.mxu0 %v3393
    %4812 = vmatpush1.bf16.msra.mxu0 %v3392
    %4813 = vmatprep.subr.bf16.mxu0 %v3388
    %4814 = vmatpush1.bf16.msra.mxu0 %v3387
    %4815 = vmatprep.subr.bf16.mxu0 %v3383
    %4816 = vmatpush1.bf16.msra.mxu0 %v3382
    %4817 = vmatprep.subr.bf16.mxu0 %v3378
    %4818 = vmatpush1.bf16.msra.mxu0 %v3377
    %4819 = vmatprep.subr.bf16.mxu0 %v3373
    %4820 = vmatpush1.bf16.msra.mxu0 %v3372
    %4821 = vmatprep.subr.bf16.mxu0 %v3368
    %4822 = vmatpush1.bf16.msra.mxu0 %v3367
    %4823 = vmatprep.subr.bf16.mxu0 %v3443
    %4824 = vmatpush2.bf16.msra.mxu0 %v3442
    %4825 = vmatprep.subr.bf16.mxu0 %v3438
    %4826 = vmatpush2.bf16.msra.mxu0 %v3437
    %4827 = vmatprep.subr.bf16.mxu0 %v3433
    %4828 = vmatpush2.bf16.msra.mxu0 %v3432
    %4829 = vmatprep.subr.bf16.mxu0 %v3428
    %4830 = vmatpush2.bf16.msra.mxu0 %v3427
    %4831 = vmatprep.subr.bf16.mxu0 %v3423
    %4832 = vmatpush2.bf16.msra.mxu0 %v3422
    %4833 = vmatprep.subr.bf16.mxu0 %v3418
    %4834 = vmatpush2.bf16.msra.mxu0 %v3417
    %4835 = vmatprep.subr.bf16.mxu0 %v3413
    %4836 = vmatpush2.bf16.msra.mxu0 %v3412
    %4837 = vmatprep.subr.bf16.mxu0 %v3408
    %4838 = vmatpush2.bf16.msra.mxu0 %v3407
    %4839 = vmatprep.mubr.bf16.mxu0 %v962
    %4840 = vmatmul.mubr.bf16.gmra.mxu0 %v948
    %v4841 = vpop.f32.mrf.mxu0
    %v4842 = vadd.f32 %v900, %v4841
    %v4843 = vpop.f32.mrf.mxu0
    %v4844 = vadd.f32 %v904, %v4843
    %v4845 = vpop.f32.mrf.mxu0
    %v4846 = vpop.f32.mrf.mxu0
    %4847 = vdwg.mxu0
    %4848 = vmatprep.subr.bf16.mxu0 %v3483
    %4849 = vmatpush1.bf16.msra.mxu0 %v3482
    %4850 = vmatprep.subr.bf16.mxu0 %v3478
    %4851 = vmatpush1.bf16.msra.mxu0 %v3477
    %4852 = vmatprep.subr.bf16.mxu0 %v3473
    %4853 = vmatpush1.bf16.msra.mxu0 %v3472
    %4854 = vmatprep.subr.bf16.mxu0 %v3468
    %4855 = vmatpush1.bf16.msra.mxu0 %v3467
    %4856 = vmatprep.subr.bf16.mxu0 %v3463
    %4857 = vmatpush1.bf16.msra.mxu0 %v3462
    %4858 = vmatprep.subr.bf16.mxu0 %v3458
    %4859 = vmatpush1.bf16.msra.mxu0 %v3457
    %4860 = vmatprep.subr.bf16.mxu0 %v3453
    %4861 = vmatpush1.bf16.msra.mxu0 %v3452
    %4862 = vmatprep.subr.bf16.mxu0 %v3448
    %4863 = vmatpush1.bf16.msra.mxu0 %v3447
    %4864 = vmatprep.subr.bf16.mxu0 %v3523
    %4865 = vmatpush2.bf16.msra.mxu0 %v3522
    %4866 = vmatprep.subr.bf16.mxu0 %v3518
    %4867 = vmatpush2.bf16.msra.mxu0 %v3517
    %4868 = vmatprep.subr.bf16.mxu0 %v3513
    %4869 = vmatpush2.bf16.msra.mxu0 %v3512
    %4870 = vmatprep.subr.bf16.mxu0 %v3508
    %4871 = vmatpush2.bf16.msra.mxu0 %v3507
    %4872 = vmatprep.subr.bf16.mxu0 %v3503
    %4873 = vmatpush2.bf16.msra.mxu0 %v3502
    %4874 = vmatprep.subr.bf16.mxu0 %v3498
    %4875 = vmatpush2.bf16.msra.mxu0 %v3497
    %4876 = vmatprep.subr.bf16.mxu0 %v3493
    %4877 = vmatpush2.bf16.msra.mxu0 %v3492
    %4878 = vmatprep.subr.bf16.mxu0 %v3488
    %4879 = vmatpush2.bf16.msra.mxu0 %v3487
    %4880 = vmatprep.mubr.bf16.mxu0 %v972
    %4881 = vmatmul.mubr.bf16.gmra.mxu0 %v970
    %v4882 = vpop.f32.mrf.mxu0
    %v4883 = vadd.f32 %v4842, %v4882
    %v4884 = vpop.f32.mrf.mxu0
    %v4885 = vadd.f32 %v4844, %v4884
    %v4886 = vpop.f32.mrf.mxu0
    %v4887 = vpop.f32.mrf.mxu0
    %4888 = vdwg.mxu0
    %4889 = vmatprep.subr.bf16.mxu0 %v3563
    %4890 = vmatpush1.bf16.msra.mxu0 %v3562
    %4891 = vmatprep.subr.bf16.mxu0 %v3558
    %4892 = vmatpush1.bf16.msra.mxu0 %v3557
    %4893 = vmatprep.subr.bf16.mxu0 %v3553
    %4894 = vmatpush1.bf16.msra.mxu0 %v3552
    %4895 = vmatprep.subr.bf16.mxu0 %v3548
    %4896 = vmatpush1.bf16.msra.mxu0 %v3547
    %4897 = vmatprep.subr.bf16.mxu0 %v3543
    %4898 = vmatpush1.bf16.msra.mxu0 %v3542
    %4899 = vmatprep.subr.bf16.mxu0 %v3538
    %4900 = vmatpush1.bf16.msra.mxu0 %v3537
    %4901 = vmatprep.subr.bf16.mxu0 %v3533
    %4902 = vmatpush1.bf16.msra.mxu0 %v3532
    %4903 = vmatprep.subr.bf16.mxu0 %v3528
    %4904 = vmatpush1.bf16.msra.mxu0 %v3527
    %4905 = vmatprep.subr.bf16.mxu0 %v3603
    %4906 = vmatpush2.bf16.msra.mxu0 %v3602
    %4907 = vmatprep.subr.bf16.mxu0 %v3598
    %4908 = vmatpush2.bf16.msra.mxu0 %v3597
    %4909 = vmatprep.subr.bf16.mxu0 %v3593
    %4910 = vmatpush2.bf16.msra.mxu0 %v3592
    %4911 = vmatprep.subr.bf16.mxu0 %v3588
    %4912 = vmatpush2.bf16.msra.mxu0 %v3587
    %4913 = vmatprep.subr.bf16.mxu0 %v3583
    %4914 = vmatpush2.bf16.msra.mxu0 %v3582
    %4915 = vmatprep.subr.bf16.mxu0 %v3578
    %4916 = vmatpush2.bf16.msra.mxu0 %v3577
    %4917 = vmatprep.subr.bf16.mxu0 %v3573
    %4918 = vmatpush2.bf16.msra.mxu0 %v3572
    %4919 = vmatprep.subr.bf16.mxu0 %v3568
    %4920 = vmatpush2.bf16.msra.mxu0 %v3567
    %4921 = vmatprep.mubr.bf16.mxu0 %v969
    %4922 = vmatmul.mubr.bf16.gmra.mxu0 %v955
    %v4923 = vpop.f32.mrf.mxu0
    %v4924 = vadd.f32 %v4883, %v4923
    %v4925 = vpop.f32.mrf.mxu0
    %v4926 = vadd.f32 %v4885, %v4925
    %v4927 = vpop.f32.mrf.mxu0
    %v4928 = vpop.f32.mrf.mxu0
    %4929 = vdwg.mxu0
    %4930 = vmatprep.subr.bf16.mxu0 %v3643
    %4931 = vmatpush1.bf16.msra.mxu0 %v3642
    %4932 = vmatprep.subr.bf16.mxu0 %v3638
    %4933 = vmatpush1.bf16.msra.mxu0 %v3637
    %4934 = vmatprep.subr.bf16.mxu0 %v3633
    %4935 = vmatpush1.bf16.msra.mxu0 %v3632
    %4936 = vmatprep.subr.bf16.mxu0 %v3628
    %4937 = vmatpush1.bf16.msra.mxu0 %v3627
    %4938 = vmatprep.subr.bf16.mxu0 %v3623
    %4939 = vmatpush1.bf16.msra.mxu0 %v3622
    %4940 = vmatprep.subr.bf16.mxu0 %v3618
    %4941 = vmatpush1.bf16.msra.mxu0 %v3617
    %4942 = vmatprep.subr.bf16.mxu0 %v3613
    %4943 = vmatpush1.bf16.msra.mxu0 %v3612
    %4944 = vmatprep.subr.bf16.mxu0 %v3608
    %4945 = vmatpush1.bf16.msra.mxu0 %v3607
    %4946 = vmatprep.subr.bf16.mxu0 %v3683
    %4947 = vmatpush2.bf16.msra.mxu0 %v3682
    %4948 = vmatprep.subr.bf16.mxu0 %v3678
    %4949 = vmatpush2.bf16.msra.mxu0 %v3677
    %4950 = vmatprep.subr.bf16.mxu0 %v3673
    %4951 = vmatpush2.bf16.msra.mxu0 %v3672
    %4952 = vmatprep.subr.bf16.mxu0 %v3668
    %4953 = vmatpush2.bf16.msra.mxu0 %v3667
    %4954 = vmatprep.subr.bf16.mxu0 %v3663
    %4955 = vmatpush2.bf16.msra.mxu0 %v3662
    %4956 = vmatprep.subr.bf16.mxu0 %v3658
    %4957 = vmatpush2.bf16.msra.mxu0 %v3657
    %4958 = vmatprep.subr.bf16.mxu0 %v3653
    %4959 = vmatpush2.bf16.msra.mxu0 %v3652
    %4960 = vmatprep.subr.bf16.mxu0 %v3648
    %4961 = vmatpush2.bf16.msra.mxu0 %v3647
    %4962 = vmatprep.mubr.bf16.mxu0 %v973
    %4963 = vmatmul.mubr.bf16.gmra.mxu0 %v971
    %v4964 = vpop.f32.mrf.mxu0
    %v4965 = vadd.f32 %v4924, %v4964
    %v4966 = vpop.f32.mrf.mxu0
    %v4967 = vadd.f32 %v4926, %v4966
    %v4968 = vpop.f32.mrf.mxu0
    %v4969 = vpop.f32.mrf.mxu0
    %4970 = vdwg.mxu0
    %4971 = vmatprep.subr.bf16.mxu0 %v3723
    %4972 = vmatpush1.bf16.msra.mxu0 %v3722
    %4973 = vmatprep.subr.bf16.mxu0 %v3718
    %4974 = vmatpush1.bf16.msra.mxu0 %v3717
    %4975 = vmatprep.subr.bf16.mxu0 %v3713
    %4976 = vmatpush1.bf16.msra.mxu0 %v3712
    %4977 = vmatprep.subr.bf16.mxu0 %v3708
    %4978 = vmatpush1.bf16.msra.mxu0 %v3707
    %4979 = vmatprep.subr.bf16.mxu0 %v3703
    %4980 = vmatpush1.bf16.msra.mxu0 %v3702
    %4981 = vmatprep.subr.bf16.mxu0 %v3698
    %4982 = vmatpush1.bf16.msra.mxu0 %v3697
    %4983 = vmatprep.subr.bf16.mxu0 %v3693
    %4984 = vmatpush1.bf16.msra.mxu0 %v3692
    %4985 = vmatprep.subr.bf16.mxu0 %v3688
    %4986 = vmatpush1.bf16.msra.mxu0 %v3687
    %4987 = vmatprep.subr.bf16.mxu0 %v3763
    %4988 = vmatpush2.bf16.msra.mxu0 %v3762
    %4989 = vmatprep.subr.bf16.mxu0 %v3758
    %4990 = vmatpush2.bf16.msra.mxu0 %v3757
    %4991 = vmatprep.subr.bf16.mxu0 %v3753
    %4992 = vmatpush2.bf16.msra.mxu0 %v3752
    %4993 = vmatprep.subr.bf16.mxu0 %v3748
    %4994 = vmatpush2.bf16.msra.mxu0 %v3747
    %4995 = vmatprep.subr.bf16.mxu0 %v3743
    %4996 = vmatpush2.bf16.msra.mxu0 %v3742
    %4997 = vmatprep.subr.bf16.mxu0 %v3738
    %4998 = vmatpush2.bf16.msra.mxu0 %v3737
    %4999 = vmatprep.subr.bf16.mxu0 %v3733
    %5000 = vmatpush2.bf16.msra.mxu0 %v3732
    %5001 = vmatprep.subr.bf16.mxu0 %v3728
    %5002 = vmatpush2.bf16.msra.mxu0 %v3727
    %5003 = vmatprep.mubr.bf16.mxu0 %v1011
    %5004 = vmatmul.mubr.bf16.gmra.mxu0 %v997
    %v5005 = vpop.f32.mrf.mxu0
    %v5006 = vadd.f32 %v4965, %v5005
    %v5007 = vpop.f32.mrf.mxu0
    %v5008 = vadd.f32 %v4967, %v5007
    %v5009 = vpop.f32.mrf.mxu0
    %v5010 = vpop.f32.mrf.mxu0
    %5011 = vdwg.mxu0
    %5012 = vmatprep.subr.bf16.mxu0 %v3803
    %5013 = vmatpush1.bf16.msra.mxu0 %v3802
    %5014 = vmatprep.subr.bf16.mxu0 %v3798
    %5015 = vmatpush1.bf16.msra.mxu0 %v3797
    %5016 = vmatprep.subr.bf16.mxu0 %v3793
    %5017 = vmatpush1.bf16.msra.mxu0 %v3792
    %5018 = vmatprep.subr.bf16.mxu0 %v3788
    %5019 = vmatpush1.bf16.msra.mxu0 %v3787
    %5020 = vmatprep.subr.bf16.mxu0 %v3783
    %5021 = vmatpush1.bf16.msra.mxu0 %v3782
    %5022 = vmatprep.subr.bf16.mxu0 %v3778
    %5023 = vmatpush1.bf16.msra.mxu0 %v3777
    %5024 = vmatprep.subr.bf16.mxu0 %v3773
    %5025 = vmatpush1.bf16.msra.mxu0 %v3772
    %5026 = vmatprep.subr.bf16.mxu0 %v3768
    %5027 = vmatpush1.bf16.msra.mxu0 %v3767
    %5028 = vmatprep.subr.bf16.mxu0 %v3843
    %5029 = vmatpush2.bf16.msra.mxu0 %v3842
    %5030 = vmatprep.subr.bf16.mxu0 %v3838
    %5031 = vmatpush2.bf16.msra.mxu0 %v3837
    %5032 = vmatprep.subr.bf16.mxu0 %v3833
    %5033 = vmatpush2.bf16.msra.mxu0 %v3832
    %5034 = vmatprep.subr.bf16.mxu0 %v3828
    %5035 = vmatpush2.bf16.msra.mxu0 %v3827
    %5036 = vmatprep.subr.bf16.mxu0 %v3823
    %5037 = vmatpush2.bf16.msra.mxu0 %v3822
    %5038 = vmatprep.subr.bf16.mxu0 %v3818
    %5039 = vmatpush2.bf16.msra.mxu0 %v3817
    %5040 = vmatprep.subr.bf16.mxu0 %v3813
    %5041 = vmatpush2.bf16.msra.mxu0 %v3812
    %5042 = vmatprep.subr.bf16.mxu0 %v3808
    %5043 = vmatpush2.bf16.msra.mxu0 %v3807
    %5044 = vmatprep.mubr.bf16.mxu0 %v1021
    %5045 = vmatmul.mubr.bf16.gmra.mxu0 %v1019
    %v5046 = vpop.f32.mrf.mxu0
    %v5047 = vadd.f32 %v5006, %v5046
    %v5048 = vpop.f32.mrf.mxu0
    %v5049 = vadd.f32 %v5008, %v5048
    %v5050 = vpop.f32.mrf.mxu0
    %v5051 = vpop.f32.mrf.mxu0
    %5052 = vdwg.mxu0
    %5053 = vmatprep.subr.bf16.mxu0 %v3883
    %5054 = vmatpush1.bf16.msra.mxu0 %v3882
    %5055 = vmatprep.subr.bf16.mxu0 %v3878
    %5056 = vmatpush1.bf16.msra.mxu0 %v3877
    %5057 = vmatprep.subr.bf16.mxu0 %v3873
    %5058 = vmatpush1.bf16.msra.mxu0 %v3872
    %5059 = vmatprep.subr.bf16.mxu0 %v3868
    %5060 = vmatpush1.bf16.msra.mxu0 %v3867
    %5061 = vmatprep.subr.bf16.mxu0 %v3863
    %5062 = vmatpush1.bf16.msra.mxu0 %v3862
    %5063 = vmatprep.subr.bf16.mxu0 %v3858
    %5064 = vmatpush1.bf16.msra.mxu0 %v3857
    %5065 = vmatprep.subr.bf16.mxu0 %v3853
    %5066 = vmatpush1.bf16.msra.mxu0 %v3852
    %5067 = vmatprep.subr.bf16.mxu0 %v3848
    %5068 = vmatpush1.bf16.msra.mxu0 %v3847
    %5069 = vmatprep.subr.bf16.mxu0 %v3923
    %5070 = vmatpush2.bf16.msra.mxu0 %v3922
    %5071 = vmatprep.subr.bf16.mxu0 %v3918
    %5072 = vmatpush2.bf16.msra.mxu0 %v3917
    %5073 = vmatprep.subr.bf16.mxu0 %v3913
    %5074 = vmatpush2.bf16.msra.mxu0 %v3912
    %5075 = vmatprep.subr.bf16.mxu0 %v3908
    %5076 = vmatpush2.bf16.msra.mxu0 %v3907
    %5077 = vmatprep.subr.bf16.mxu0 %v3903
    %5078 = vmatpush2.bf16.msra.mxu0 %v3902
    %5079 = vmatprep.subr.bf16.mxu0 %v3898
    %5080 = vmatpush2.bf16.msra.mxu0 %v3897
    %5081 = vmatprep.subr.bf16.mxu0 %v3893
    %5082 = vmatpush2.bf16.msra.mxu0 %v3892
    %5083 = vmatprep.subr.bf16.mxu0 %v3888
    %5084 = vmatpush2.bf16.msra.mxu0 %v3887
    %5085 = vmatprep.mubr.bf16.mxu0 %v1018
    %5086 = vmatmul.mubr.bf16.gmra.mxu0 %v1004
    %v5087 = vpop.f32.mrf.mxu0
    %v5088 = vadd.f32 %v5047, %v5087
    %v5089 = vpop.f32.mrf.mxu0
    %v5090 = vadd.f32 %v5049, %v5089
    %v5091 = vpop.f32.mrf.mxu0
    %v5092 = vpop.f32.mrf.mxu0
    %5093 = vdwg.mxu0
    %5094 = vmatprep.subr.bf16.mxu0 %v3963
    %5095 = vmatpush1.bf16.msra.mxu0 %v3962
    %5096 = vmatprep.subr.bf16.mxu0 %v3958
    %5097 = vmatpush1.bf16.msra.mxu0 %v3957
    %5098 = vmatprep.subr.bf16.mxu0 %v3953
    %5099 = vmatpush1.bf16.msra.mxu0 %v3952
    %5100 = vmatprep.subr.bf16.mxu0 %v3948
    %5101 = vmatpush1.bf16.msra.mxu0 %v3947
    %5102 = vmatprep.subr.bf16.mxu0 %v3943
    %5103 = vmatpush1.bf16.msra.mxu0 %v3942
    %5104 = vmatprep.subr.bf16.mxu0 %v3938
    %5105 = vmatpush1.bf16.msra.mxu0 %v3937
    %5106 = vmatprep.subr.bf16.mxu0 %v3933
    %5107 = vmatpush1.bf16.msra.mxu0 %v3932
    %5108 = vmatprep.subr.bf16.mxu0 %v3928
    %5109 = vmatpush1.bf16.msra.mxu0 %v3927
    %5110 = vmatprep.subr.bf16.mxu0 %v4003
    %5111 = vmatpush2.bf16.msra.mxu0 %v4002
    %5112 = vmatprep.subr.bf16.mxu0 %v3998
    %5113 = vmatpush2.bf16.msra.mxu0 %v3997
    %5114 = vmatprep.subr.bf16.mxu0 %v3993
    %5115 = vmatpush2.bf16.msra.mxu0 %v3992
    %5116 = vmatprep.subr.bf16.mxu0 %v3988
    %5117 = vmatpush2.bf16.msra.mxu0 %v3987
    %5118 = vmatprep.subr.bf16.mxu0 %v3983
    %5119 = vmatpush2.bf16.msra.mxu0 %v3982
    %5120 = vmatprep.subr.bf16.mxu0 %v3978
    %5121 = vmatpush2.bf16.msra.mxu0 %v3977
    %5122 = vmatprep.subr.bf16.mxu0 %v3973
    %5123 = vmatpush2.bf16.msra.mxu0 %v3972
    %5124 = vmatprep.subr.bf16.mxu0 %v3968
    %5125 = vmatpush2.bf16.msra.mxu0 %v3967
    %5126 = vmatprep.mubr.bf16.mxu0 %v1022
    %5127 = vmatmul.mubr.bf16.gmra.mxu0 %v1020
    %v5128 = vpop.f32.mrf.mxu0
    %v5129 = vadd.f32 %v5088, %v5128
    %v5130 = vpop.f32.mrf.mxu0
    %v5131 = vadd.f32 %v5090, %v5130
    %v5132 = vpop.f32.mrf.mxu0
    %v5133 = vpop.f32.mrf.mxu0
    %5134 = vdwg.mxu0
    %5135 = vmatprep.subr.bf16.mxu0 %v4043
    %5136 = vmatpush1.bf16.msra.mxu0 %v4042
    %5137 = vmatprep.subr.bf16.mxu0 %v4038
    %5138 = vmatpush1.bf16.msra.mxu0 %v4037
    %5139 = vmatprep.subr.bf16.mxu0 %v4033
    %5140 = vmatpush1.bf16.msra.mxu0 %v4032
    %5141 = vmatprep.subr.bf16.mxu0 %v4028
    %5142 = vmatpush1.bf16.msra.mxu0 %v4027
    %5143 = vmatprep.subr.bf16.mxu0 %v4023
    %5144 = vmatpush1.bf16.msra.mxu0 %v4022
    %5145 = vmatprep.subr.bf16.mxu0 %v4018
    %5146 = vmatpush1.bf16.msra.mxu0 %v4017
    %5147 = vmatprep.subr.bf16.mxu0 %v4013
    %5148 = vmatpush1.bf16.msra.mxu0 %v4012
    %5149 = vmatprep.subr.bf16.mxu0 %v4008
    %5150 = vmatpush1.bf16.msra.mxu0 %v4007
    %5151 = vmatprep.subr.bf16.mxu0 %v4083
    %5152 = vmatpush2.bf16.msra.mxu0 %v4082
    %5153 = vmatprep.subr.bf16.mxu0 %v4078
    %5154 = vmatpush2.bf16.msra.mxu0 %v4077
    %5155 = vmatprep.subr.bf16.mxu0 %v4073
    %5156 = vmatpush2.bf16.msra.mxu0 %v4072
    %5157 = vmatprep.subr.bf16.mxu0 %v4068
    %5158 = vmatpush2.bf16.msra.mxu0 %v4067
    %5159 = vmatprep.subr.bf16.mxu0 %v4063
    %5160 = vmatpush2.bf16.msra.mxu0 %v4062
    %5161 = vmatprep.subr.bf16.mxu0 %v4058
    %5162 = vmatpush2.bf16.msra.mxu0 %v4057
    %5163 = vmatprep.subr.bf16.mxu0 %v4053
    %5164 = vmatpush2.bf16.msra.mxu0 %v4052
    %5165 = vmatprep.subr.bf16.mxu0 %v4048
    %5166 = vmatpush2.bf16.msra.mxu0 %v4047
    %5167 = vmatprep.mubr.bf16.mxu0 %v1044
    %5168 = vmatmul.mubr.bf16.gmra.mxu0 %v1037
    %v5169 = vpop.f32.mrf.mxu0
    %v5170 = vadd.f32 %v5129, %v5169
    %v5171 = vpop.f32.mrf.mxu0
    %v5172 = vadd.f32 %v5131, %v5171
    %v5173 = vpop.f32.mrf.mxu0
    %v5174 = vpop.f32.mrf.mxu0
    %5175 = vdwg.mxu0
    %5176 = vmatprep.subr.bf16.mxu0 %v3405
    %5177 = vmatpush1.bf16.msra.mxu0 %v3404
    %5178 = vmatprep.subr.bf16.mxu0 %v3400
    %5179 = vmatpush1.bf16.msra.mxu0 %v3399
    %5180 = vmatprep.subr.bf16.mxu0 %v3395
    %5181 = vmatpush1.bf16.msra.mxu0 %v3394
    %5182 = vmatprep.subr.bf16.mxu0 %v3390
    %5183 = vmatpush1.bf16.msra.mxu0 %v3389
    %5184 = vmatprep.subr.bf16.mxu0 %v3385
    %5185 = vmatpush1.bf16.msra.mxu0 %v3384
    %5186 = vmatprep.subr.bf16.mxu0 %v3380
    %5187 = vmatpush1.bf16.msra.mxu0 %v3379
    %5188 = vmatprep.subr.bf16.mxu0 %v3375
    %5189 = vmatpush1.bf16.msra.mxu0 %v3374
    %5190 = vmatprep.subr.bf16.mxu0 %v3370
    %5191 = vmatpush1.bf16.msra.mxu0 %v3369
    %5192 = vmatprep.subr.bf16.mxu0 %v3445
    %5193 = vmatpush2.bf16.msra.mxu0 %v3444
    %5194 = vmatprep.subr.bf16.mxu0 %v3440
    %5195 = vmatpush2.bf16.msra.mxu0 %v3439
    %5196 = vmatprep.subr.bf16.mxu0 %v3435
    %5197 = vmatpush2.bf16.msra.mxu0 %v3434
    %5198 = vmatprep.subr.bf16.mxu0 %v3430
    %5199 = vmatpush2.bf16.msra.mxu0 %v3429
    %5200 = vmatprep.subr.bf16.mxu0 %v3425
    %5201 = vmatpush2.bf16.msra.mxu0 %v3424
    %5202 = vmatprep.subr.bf16.mxu0 %v3420
    %5203 = vmatpush2.bf16.msra.mxu0 %v3419
    %5204 = vmatprep.subr.bf16.mxu0 %v3415
    %5205 = vmatpush2.bf16.msra.mxu0 %v3414
    %5206 = vmatprep.subr.bf16.mxu0 %v3410
    %5207 = vmatpush2.bf16.msra.mxu0 %v3409
    %5208 = vmatprep.mubr.bf16.mxu0 %v962
    %5209 = vmatmul.mubr.bf16.gmra.mxu0 %v948
    %v5210 = vpop.f32.mrf.mxu0
    %v5211 = vadd.f32 %v908, %v5210
    %v5212 = vpop.f32.mrf.mxu0
    %v5213 = vadd.f32 %v912, %v5212
    %v5214 = vpop.f32.mrf.mxu0
    %v5215 = vpop.f32.mrf.mxu0
    %5216 = vdwg.mxu0
    %5217 = vmatprep.subr.bf16.mxu0 %v3485
    %5218 = vmatpush1.bf16.msra.mxu0 %v3484
    %5219 = vmatprep.subr.bf16.mxu0 %v3480
    %5220 = vmatpush1.bf16.msra.mxu0 %v3479
    %5221 = vmatprep.subr.bf16.mxu0 %v3475
    %5222 = vmatpush1.bf16.msra.mxu0 %v3474
    %5223 = vmatprep.subr.bf16.mxu0 %v3470
    %5224 = vmatpush1.bf16.msra.mxu0 %v3469
    %5225 = vmatprep.subr.bf16.mxu0 %v3465
    %5226 = vmatpush1.bf16.msra.mxu0 %v3464
    %5227 = vmatprep.subr.bf16.mxu0 %v3460
    %5228 = vmatpush1.bf16.msra.mxu0 %v3459
    %5229 = vmatprep.subr.bf16.mxu0 %v3455
    %5230 = vmatpush1.bf16.msra.mxu0 %v3454
    %5231 = vmatprep.subr.bf16.mxu0 %v3450
    %5232 = vmatpush1.bf16.msra.mxu0 %v3449
    %5233 = vmatprep.subr.bf16.mxu0 %v3525
    %5234 = vmatpush2.bf16.msra.mxu0 %v3524
    %5235 = vmatprep.subr.bf16.mxu0 %v3520
    %5236 = vmatpush2.bf16.msra.mxu0 %v3519
    %5237 = vmatprep.subr.bf16.mxu0 %v3515
    %5238 = vmatpush2.bf16.msra.mxu0 %v3514
    %5239 = vmatprep.subr.bf16.mxu0 %v3510
    %5240 = vmatpush2.bf16.msra.mxu0 %v3509
    %5241 = vmatprep.subr.bf16.mxu0 %v3505
    %5242 = vmatpush2.bf16.msra.mxu0 %v3504
    %5243 = vmatprep.subr.bf16.mxu0 %v3500
    %5244 = vmatpush2.bf16.msra.mxu0 %v3499
    %5245 = vmatprep.subr.bf16.mxu0 %v3495
    %5246 = vmatpush2.bf16.msra.mxu0 %v3494
    %5247 = vmatprep.subr.bf16.mxu0 %v3490
    %5248 = vmatpush2.bf16.msra.mxu0 %v3489
    %5249 = vmatprep.mubr.bf16.mxu0 %v972
    %5250 = vmatmul.mubr.bf16.gmra.mxu0 %v970
    %v5251 = vpop.f32.mrf.mxu0
    %v5252 = vadd.f32 %v5211, %v5251
    %v5253 = vpop.f32.mrf.mxu0
    %v5254 = vadd.f32 %v5213, %v5253
    %v5255 = vpop.f32.mrf.mxu0
    %v5256 = vpop.f32.mrf.mxu0
    %5257 = vdwg.mxu0
    %5258 = vmatprep.subr.bf16.mxu0 %v3565
    %5259 = vmatpush1.bf16.msra.mxu0 %v3564
    %5260 = vmatprep.subr.bf16.mxu0 %v3560
    %5261 = vmatpush1.bf16.msra.mxu0 %v3559
    %5262 = vmatprep.subr.bf16.mxu0 %v3555
    %5263 = vmatpush1.bf16.msra.mxu0 %v3554
    %5264 = vmatprep.subr.bf16.mxu0 %v3550
    %5265 = vmatpush1.bf16.msra.mxu0 %v3549
    %5266 = vmatprep.subr.bf16.mxu0 %v3545
    %5267 = vmatpush1.bf16.msra.mxu0 %v3544
    %5268 = vmatprep.subr.bf16.mxu0 %v3540
    %5269 = vmatpush1.bf16.msra.mxu0 %v3539
    %5270 = vmatprep.subr.bf16.mxu0 %v3535
    %5271 = vmatpush1.bf16.msra.mxu0 %v3534
    %5272 = vmatprep.subr.bf16.mxu0 %v3530
    %5273 = vmatpush1.bf16.msra.mxu0 %v3529
    %5274 = vmatprep.subr.bf16.mxu0 %v3605
    %5275 = vmatpush2.bf16.msra.mxu0 %v3604
    %5276 = vmatprep.subr.bf16.mxu0 %v3600
    %5277 = vmatpush2.bf16.msra.mxu0 %v3599
    %5278 = vmatprep.subr.bf16.mxu0 %v3595
    %5279 = vmatpush2.bf16.msra.mxu0 %v3594
    %5280 = vmatprep.subr.bf16.mxu0 %v3590
    %5281 = vmatpush2.bf16.msra.mxu0 %v3589
    %5282 = vmatprep.subr.bf16.mxu0 %v3585
    %5283 = vmatpush2.bf16.msra.mxu0 %v3584
    %5284 = vmatprep.subr.bf16.mxu0 %v3580
    %5285 = vmatpush2.bf16.msra.mxu0 %v3579
    %5286 = vmatprep.subr.bf16.mxu0 %v3575
    %5287 = vmatpush2.bf16.msra.mxu0 %v3574
    %5288 = vmatprep.subr.bf16.mxu0 %v3570
    %5289 = vmatpush2.bf16.msra.mxu0 %v3569
    %5290 = vmatprep.mubr.bf16.mxu0 %v969
    %5291 = vmatmul.mubr.bf16.gmra.mxu0 %v955
    %v5292 = vpop.f32.mrf.mxu0
    %v5293 = vadd.f32 %v5252, %v5292
    %v5294 = vpop.f32.mrf.mxu0
    %v5295 = vadd.f32 %v5254, %v5294
    %v5296 = vpop.f32.mrf.mxu0
    %v5297 = vpop.f32.mrf.mxu0
    %5298 = vdwg.mxu0
    %5299 = vmatprep.subr.bf16.mxu0 %v3645
    %5300 = vmatpush1.bf16.msra.mxu0 %v3644
    %5301 = vmatprep.subr.bf16.mxu0 %v3640
    %5302 = vmatpush1.bf16.msra.mxu0 %v3639
    %5303 = vmatprep.subr.bf16.mxu0 %v3635
    %5304 = vmatpush1.bf16.msra.mxu0 %v3634
    %5305 = vmatprep.subr.bf16.mxu0 %v3630
    %5306 = vmatpush1.bf16.msra.mxu0 %v3629
    %5307 = vmatprep.subr.bf16.mxu0 %v3625
    %5308 = vmatpush1.bf16.msra.mxu0 %v3624
    %5309 = vmatprep.subr.bf16.mxu0 %v3620
    %5310 = vmatpush1.bf16.msra.mxu0 %v3619
    %5311 = vmatprep.subr.bf16.mxu0 %v3615
    %5312 = vmatpush1.bf16.msra.mxu0 %v3614
    %5313 = vmatprep.subr.bf16.mxu0 %v3610
    %5314 = vmatpush1.bf16.msra.mxu0 %v3609
    %5315 = vmatprep.subr.bf16.mxu0 %v3685
    %5316 = vmatpush2.bf16.msra.mxu0 %v3684
    %5317 = vmatprep.subr.bf16.mxu0 %v3680
    %5318 = vmatpush2.bf16.msra.mxu0 %v3679
    %5319 = vmatprep.subr.bf16.mxu0 %v3675
    %5320 = vmatpush2.bf16.msra.mxu0 %v3674
    %5321 = vmatprep.subr.bf16.mxu0 %v3670
    %5322 = vmatpush2.bf16.msra.mxu0 %v3669
    %5323 = vmatprep.subr.bf16.mxu0 %v3665
    %5324 = vmatpush2.bf16.msra.mxu0 %v3664
    %5325 = vmatprep.subr.bf16.mxu0 %v3660
    %5326 = vmatpush2.bf16.msra.mxu0 %v3659
    %5327 = vmatprep.subr.bf16.mxu0 %v3655
    %5328 = vmatpush2.bf16.msra.mxu0 %v3654
    %5329 = vmatprep.subr.bf16.mxu0 %v3650
    %5330 = vmatpush2.bf16.msra.mxu0 %v3649
    %5331 = vmatprep.mubr.bf16.mxu0 %v973
    %5332 = vmatmul.mubr.bf16.gmra.mxu0 %v971
    %v5333 = vpop.f32.mrf.mxu0
    %v5334 = vadd.f32 %v5293, %v5333
    %v5335 = vpop.f32.mrf.mxu0
    %v5336 = vadd.f32 %v5295, %v5335
    %v5337 = vpop.f32.mrf.mxu0
    %v5338 = vpop.f32.mrf.mxu0
    %5339 = vdwg.mxu0
    %5340 = vmatprep.subr.bf16.mxu0 %v3725
    %5341 = vmatpush1.bf16.msra.mxu0 %v3724
    %5342 = vmatprep.subr.bf16.mxu0 %v3720
    %5343 = vmatpush1.bf16.msra.mxu0 %v3719
    %5344 = vmatprep.subr.bf16.mxu0 %v3715
    %5345 = vmatpush1.bf16.msra.mxu0 %v3714
    %5346 = vmatprep.subr.bf16.mxu0 %v3710
    %5347 = vmatpush1.bf16.msra.mxu0 %v3709
    %5348 = vmatprep.subr.bf16.mxu0 %v3705
    %5349 = vmatpush1.bf16.msra.mxu0 %v3704
    %5350 = vmatprep.subr.bf16.mxu0 %v3700
    %5351 = vmatpush1.bf16.msra.mxu0 %v3699
    %5352 = vmatprep.subr.bf16.mxu0 %v3695
    %5353 = vmatpush1.bf16.msra.mxu0 %v3694
    %5354 = vmatprep.subr.bf16.mxu0 %v3690
    %5355 = vmatpush1.bf16.msra.mxu0 %v3689
    %5356 = vmatprep.subr.bf16.mxu0 %v3765
    %5357 = vmatpush2.bf16.msra.mxu0 %v3764
    %5358 = vmatprep.subr.bf16.mxu0 %v3760
    %5359 = vmatpush2.bf16.msra.mxu0 %v3759
    %5360 = vmatprep.subr.bf16.mxu0 %v3755
    %5361 = vmatpush2.bf16.msra.mxu0 %v3754
    %5362 = vmatprep.subr.bf16.mxu0 %v3750
    %5363 = vmatpush2.bf16.msra.mxu0 %v3749
    %5364 = vmatprep.subr.bf16.mxu0 %v3745
    %5365 = vmatpush2.bf16.msra.mxu0 %v3744
    %5366 = vmatprep.subr.bf16.mxu0 %v3740
    %5367 = vmatpush2.bf16.msra.mxu0 %v3739
    %5368 = vmatprep.subr.bf16.mxu0 %v3735
    %5369 = vmatpush2.bf16.msra.mxu0 %v3734
    %5370 = vmatprep.subr.bf16.mxu0 %v3730
    %5371 = vmatpush2.bf16.msra.mxu0 %v3729
    %5372 = vmatprep.mubr.bf16.mxu0 %v1011
    %5373 = vmatmul.mubr.bf16.gmra.mxu0 %v997
    %v5374 = vpop.f32.mrf.mxu0
    %v5375 = vadd.f32 %v5334, %v5374
    %v5376 = vpop.f32.mrf.mxu0
    %v5377 = vadd.f32 %v5336, %v5376
    %v5378 = vpop.f32.mrf.mxu0
    %v5379 = vpop.f32.mrf.mxu0
    %5380 = vdwg.mxu0
    %5381 = vmatprep.subr.bf16.mxu0 %v3805
    %5382 = vmatpush1.bf16.msra.mxu0 %v3804
    %5383 = vmatprep.subr.bf16.mxu0 %v3800
    %5384 = vmatpush1.bf16.msra.mxu0 %v3799
    %5385 = vmatprep.subr.bf16.mxu0 %v3795
    %5386 = vmatpush1.bf16.msra.mxu0 %v3794
    %5387 = vmatprep.subr.bf16.mxu0 %v3790
    %5388 = vmatpush1.bf16.msra.mxu0 %v3789
    %5389 = vmatprep.subr.bf16.mxu0 %v3785
    %5390 = vmatpush1.bf16.msra.mxu0 %v3784
    %5391 = vmatprep.subr.bf16.mxu0 %v3780
    %5392 = vmatpush1.bf16.msra.mxu0 %v3779
    %5393 = vmatprep.subr.bf16.mxu0 %v3775
    %5394 = vmatpush1.bf16.msra.mxu0 %v3774
    %5395 = vmatprep.subr.bf16.mxu0 %v3770
    %5396 = vmatpush1.bf16.msra.mxu0 %v3769
    %5397 = vmatprep.subr.bf16.mxu0 %v3845
    %5398 = vmatpush2.bf16.msra.mxu0 %v3844
    %5399 = vmatprep.subr.bf16.mxu0 %v3840
    %5400 = vmatpush2.bf16.msra.mxu0 %v3839
    %5401 = vmatprep.subr.bf16.mxu0 %v3835
    %5402 = vmatpush2.bf16.msra.mxu0 %v3834
    %5403 = vmatprep.subr.bf16.mxu0 %v3830
    %5404 = vmatpush2.bf16.msra.mxu0 %v3829
    %5405 = vmatprep.subr.bf16.mxu0 %v3825
    %5406 = vmatpush2.bf16.msra.mxu0 %v3824
    %5407 = vmatprep.subr.bf16.mxu0 %v3820
    %5408 = vmatpush2.bf16.msra.mxu0 %v3819
    %5409 = vmatprep.subr.bf16.mxu0 %v3815
    %5410 = vmatpush2.bf16.msra.mxu0 %v3814
    %5411 = vmatprep.subr.bf16.mxu0 %v3810
    %5412 = vmatpush2.bf16.msra.mxu0 %v3809
    %5413 = vmatprep.mubr.bf16.mxu0 %v1021
    %5414 = vmatmul.mubr.bf16.gmra.mxu0 %v1019
    %v5415 = vpop.f32.mrf.mxu0
    %v5416 = vadd.f32 %v5375, %v5415
    %v5417 = vpop.f32.mrf.mxu0
    %v5418 = vadd.f32 %v5377, %v5417
    %v5419 = vpop.f32.mrf.mxu0
    %v5420 = vpop.f32.mrf.mxu0
    %5421 = vdwg.mxu0
    %5422 = vmatprep.subr.bf16.mxu0 %v3885
    %5423 = vmatpush1.bf16.msra.mxu0 %v3884
    %5424 = vmatprep.subr.bf16.mxu0 %v3880
    %5425 = vmatpush1.bf16.msra.mxu0 %v3879
    %5426 = vmatprep.subr.bf16.mxu0 %v3875
    %5427 = vmatpush1.bf16.msra.mxu0 %v3874
    %5428 = vmatprep.subr.bf16.mxu0 %v3870
    %5429 = vmatpush1.bf16.msra.mxu0 %v3869
    %5430 = vmatprep.subr.bf16.mxu0 %v3865
    %5431 = vmatpush1.bf16.msra.mxu0 %v3864
    %5432 = vmatprep.subr.bf16.mxu0 %v3860
    %5433 = vmatpush1.bf16.msra.mxu0 %v3859
    %5434 = vmatprep.subr.bf16.mxu0 %v3855
    %5435 = vmatpush1.bf16.msra.mxu0 %v3854
    %5436 = vmatprep.subr.bf16.mxu0 %v3850
    %5437 = vmatpush1.bf16.msra.mxu0 %v3849
    %5438 = vmatprep.subr.bf16.mxu0 %v3925
    %5439 = vmatpush2.bf16.msra.mxu0 %v3924
    %5440 = vmatprep.subr.bf16.mxu0 %v3920
    %5441 = vmatpush2.bf16.msra.mxu0 %v3919
    %5442 = vmatprep.subr.bf16.mxu0 %v3915
    %5443 = vmatpush2.bf16.msra.mxu0 %v3914
    %5444 = vmatprep.subr.bf16.mxu0 %v3910
    %5445 = vmatpush2.bf16.msra.mxu0 %v3909
    %5446 = vmatprep.subr.bf16.mxu0 %v3905
    %5447 = vmatpush2.bf16.msra.mxu0 %v3904
    %5448 = vmatprep.subr.bf16.mxu0 %v3900
    %5449 = vmatpush2.bf16.msra.mxu0 %v3899
    %5450 = vmatprep.subr.bf16.mxu0 %v3895
    %5451 = vmatpush2.bf16.msra.mxu0 %v3894
    %5452 = vmatprep.subr.bf16.mxu0 %v3890
    %5453 = vmatpush2.bf16.msra.mxu0 %v3889
    %5454 = vmatprep.mubr.bf16.mxu0 %v1018
    %5455 = vmatmul.mubr.bf16.gmra.mxu0 %v1004
    %v5456 = vpop.f32.mrf.mxu0
    %v5457 = vadd.f32 %v5416, %v5456
    %v5458 = vpop.f32.mrf.mxu0
    %v5459 = vadd.f32 %v5418, %v5458
    %v5460 = vpop.f32.mrf.mxu0
    %v5461 = vpop.f32.mrf.mxu0
    %5462 = vdwg.mxu0
    %5463 = vmatprep.subr.bf16.mxu0 %v3965
    %5464 = vmatpush1.bf16.msra.mxu0 %v3964
    %5465 = vmatprep.subr.bf16.mxu0 %v3960
    %5466 = vmatpush1.bf16.msra.mxu0 %v3959
    %5467 = vmatprep.subr.bf16.mxu0 %v3955
    %5468 = vmatpush1.bf16.msra.mxu0 %v3954
    %5469 = vmatprep.subr.bf16.mxu0 %v3950
    %5470 = vmatpush1.bf16.msra.mxu0 %v3949
    %5471 = vmatprep.subr.bf16.mxu0 %v3945
    %5472 = vmatpush1.bf16.msra.mxu0 %v3944
    %5473 = vmatprep.subr.bf16.mxu0 %v3940
    %5474 = vmatpush1.bf16.msra.mxu0 %v3939
    %5475 = vmatprep.subr.bf16.mxu0 %v3935
    %5476 = vmatpush1.bf16.msra.mxu0 %v3934
    %5477 = vmatprep.subr.bf16.mxu0 %v3930
    %5478 = vmatpush1.bf16.msra.mxu0 %v3929
    %5479 = vmatprep.subr.bf16.mxu0 %v4005
    %5480 = vmatpush2.bf16.msra.mxu0 %v4004
    %5481 = vmatprep.subr.bf16.mxu0 %v4000
    %5482 = vmatpush2.bf16.msra.mxu0 %v3999
    %5483 = vmatprep.subr.bf16.mxu0 %v3995
    %5484 = vmatpush2.bf16.msra.mxu0 %v3994
    %5485 = vmatprep.subr.bf16.mxu0 %v3990
    %5486 = vmatpush2.bf16.msra.mxu0 %v3989
    %5487 = vmatprep.subr.bf16.mxu0 %v3985
    %5488 = vmatpush2.bf16.msra.mxu0 %v3984
    %5489 = vmatprep.subr.bf16.mxu0 %v3980
    %5490 = vmatpush2.bf16.msra.mxu0 %v3979
    %5491 = vmatprep.subr.bf16.mxu0 %v3975
    %5492 = vmatpush2.bf16.msra.mxu0 %v3974
    %5493 = vmatprep.subr.bf16.mxu0 %v3970
    %5494 = vmatpush2.bf16.msra.mxu0 %v3969
    %5495 = vmatprep.mubr.bf16.mxu0 %v1022
    %5496 = vmatmul.mubr.bf16.gmra.mxu0 %v1020
    %v5497 = vpop.f32.mrf.mxu0
    %v5498 = vadd.f32 %v5457, %v5497
    %v5499 = vpop.f32.mrf.mxu0
    %v5500 = vadd.f32 %v5459, %v5499
    %v5501 = vpop.f32.mrf.mxu0
    %v5502 = vpop.f32.mrf.mxu0
    %5503 = vdwg.mxu0
    %5504 = vmatprep.subr.bf16.mxu0 %v4045
    %5505 = vmatpush1.bf16.msra.mxu0 %v4044
    %5506 = vmatprep.subr.bf16.mxu0 %v4040
    %5507 = vmatpush1.bf16.msra.mxu0 %v4039
    %5508 = vmatprep.subr.bf16.mxu0 %v4035
    %5509 = vmatpush1.bf16.msra.mxu0 %v4034
    %5510 = vmatprep.subr.bf16.mxu0 %v4030
    %5511 = vmatpush1.bf16.msra.mxu0 %v4029
    %5512 = vmatprep.subr.bf16.mxu0 %v4025
    %5513 = vmatpush1.bf16.msra.mxu0 %v4024
    %5514 = vmatprep.subr.bf16.mxu0 %v4020
    %5515 = vmatpush1.bf16.msra.mxu0 %v4019
    %5516 = vmatprep.subr.bf16.mxu0 %v4015
    %5517 = vmatpush1.bf16.msra.mxu0 %v4014
    %5518 = vmatprep.subr.bf16.mxu0 %v4010
    %5519 = vmatpush1.bf16.msra.mxu0 %v4009
    %5520 = vmatprep.subr.bf16.mxu0 %v4085
    %5521 = vmatpush2.bf16.msra.mxu0 %v4084
    %5522 = vmatprep.subr.bf16.mxu0 %v4080
    %5523 = vmatpush2.bf16.msra.mxu0 %v4079
    %5524 = vmatprep.subr.bf16.mxu0 %v4075
    %5525 = vmatpush2.bf16.msra.mxu0 %v4074
    %5526 = vmatprep.subr.bf16.mxu0 %v4070
    %5527 = vmatpush2.bf16.msra.mxu0 %v4069
    %5528 = vmatprep.subr.bf16.mxu0 %v4065
    %5529 = vmatpush2.bf16.msra.mxu0 %v4064
    %5530 = vmatprep.subr.bf16.mxu0 %v4060
    %5531 = vmatpush2.bf16.msra.mxu0 %v4059
    %5532 = vmatprep.subr.bf16.mxu0 %v4055
    %5533 = vmatpush2.bf16.msra.mxu0 %v4054
    %5534 = vmatprep.subr.bf16.mxu0 %v4050
    %5535 = vmatpush2.bf16.msra.mxu0 %v4049
    %5536 = vmatprep.mubr.bf16.mxu0 %v1044
    %5537 = vmatmul.mubr.bf16.gmra.mxu0 %v1037
    %v5538 = vpop.f32.mrf.mxu0
    %v5539 = vadd.f32 %v5498, %v5538
    %v5540 = vpop.f32.mrf.mxu0
    %v5541 = vadd.f32 %v5500, %v5540
    %v5542 = vpop.f32.mrf.mxu0
    %v5543 = vpop.f32.mrf.mxu0
    %5544 = vdwg.mxu0
    %5545 = vmatprep.subr.bf16.mxu0 0
    %5546 = vmatpush1.bf16.msra.mxu0 %v3406
    %5547 = vmatprep.subr.bf16.mxu0 0
    %5548 = vmatpush1.bf16.msra.mxu0 %v3401
    %5549 = vmatprep.subr.bf16.mxu0 0
    %5550 = vmatpush1.bf16.msra.mxu0 %v3396
    %5551 = vmatprep.subr.bf16.mxu0 0
    %5552 = vmatpush1.bf16.msra.mxu0 %v3391
    %5553 = vmatprep.subr.bf16.mxu0 0
    %5554 = vmatpush1.bf16.msra.mxu0 %v3386
    %5555 = vmatprep.subr.bf16.mxu0 0
    %5556 = vmatpush1.bf16.msra.mxu0 %v3381
    %5557 = vmatprep.subr.bf16.mxu0 0
    %5558 = vmatpush1.bf16.msra.mxu0 %v3376
    %5559 = vmatprep.subr.bf16.mxu0 0
    %5560 = vmatpush1.bf16.msra.mxu0 %v3371
    %5561 = vmatprep.subr.bf16.mxu0 0
    %5562 = vmatpush2.bf16.msra.mxu0 %v3446
    %5563 = vmatprep.subr.bf16.mxu0 0
    %5564 = vmatpush2.bf16.msra.mxu0 %v3441
    %5565 = vmatprep.subr.bf16.mxu0 0
    %5566 = vmatpush2.bf16.msra.mxu0 %v3436
    %5567 = vmatprep.subr.bf16.mxu0 0
    %5568 = vmatpush2.bf16.msra.mxu0 %v3431
    %5569 = vmatprep.subr.bf16.mxu0 0
    %5570 = vmatpush2.bf16.msra.mxu0 %v3426
    %5571 = vmatprep.subr.bf16.mxu0 0
    %5572 = vmatpush2.bf16.msra.mxu0 %v3421
    %5573 = vmatprep.subr.bf16.mxu0 0
    %5574 = vmatpush2.bf16.msra.mxu0 %v3416
    %5575 = vmatprep.subr.bf16.mxu0 0
    %5576 = vmatpush2.bf16.msra.mxu0 %v3411
    %5577 = vmatprep.mubr.bf16.mxu0 %v962
    %5578 = vmatmul.mubr.bf16.gmra.mxu0 %v948
    %v5579 = vpop.f32.mrf.mxu0
    %v5580 = vadd.f32 %v916, %v5579
    %v5581 = vpop.f32.mrf.mxu0
    %v5582 = vpop.f32.mrf.mxu0
    %v5583 = vpop.f32.mrf.mxu0
    %5584 = vdwg.mxu0
    %5585 = vmatprep.subr.bf16.mxu0 0
    %5586 = vmatpush1.bf16.msra.mxu0 %v3486
    %5587 = vmatprep.subr.bf16.mxu0 0
    %5588 = vmatpush1.bf16.msra.mxu0 %v3481
    %5589 = vmatprep.subr.bf16.mxu0 0
    %5590 = vmatpush1.bf16.msra.mxu0 %v3476
    %5591 = vmatprep.subr.bf16.mxu0 0
    %5592 = vmatpush1.bf16.msra.mxu0 %v3471
    %5593 = vmatprep.subr.bf16.mxu0 0
    %5594 = vmatpush1.bf16.msra.mxu0 %v3466
    %5595 = vmatprep.subr.bf16.mxu0 0
    %5596 = vmatpush1.bf16.msra.mxu0 %v3461
    %5597 = vmatprep.subr.bf16.mxu0 0
    %5598 = vmatpush1.bf16.msra.mxu0 %v3456
    %5599 = vmatprep.subr.bf16.mxu0 0
    %5600 = vmatpush1.bf16.msra.mxu0 %v3451
    %5601 = vmatprep.subr.bf16.mxu0 0
    %5602 = vmatpush2.bf16.msra.mxu0 %v3526
    %5603 = vmatprep.subr.bf16.mxu0 0
    %5604 = vmatpush2.bf16.msra.mxu0 %v3521
    %5605 = vmatprep.subr.bf16.mxu0 0
    %5606 = vmatpush2.bf16.msra.mxu0 %v3516
    %5607 = vmatprep.subr.bf16.mxu0 0
    %5608 = vmatpush2.bf16.msra.mxu0 %v3511
    %5609 = vmatprep.subr.bf16.mxu0 0
    %5610 = vmatpush2.bf16.msra.mxu0 %v3506
    %5611 = vmatprep.subr.bf16.mxu0 0
    %5612 = vmatpush2.bf16.msra.mxu0 %v3501
    %5613 = vmatprep.subr.bf16.mxu0 0
    %5614 = vmatpush2.bf16.msra.mxu0 %v3496
    %5615 = vmatprep.subr.bf16.mxu0 0
    %5616 = vmatpush2.bf16.msra.mxu0 %v3491
    %5617 = vmatprep.mubr.bf16.mxu0 %v972
    %5618 = vmatmul.mubr.bf16.gmra.mxu0 %v970
    %v5619 = vpop.f32.mrf.mxu0
    %v5620 = vadd.f32 %v5580, %v5619
    %v5621 = vpop.f32.mrf.mxu0
    %v5622 = vpop.f32.mrf.mxu0
    %v5623 = vpop.f32.mrf.mxu0
    %5624 = vdwg.mxu0
    %5625 = vmatprep.subr.bf16.mxu0 0
    %5626 = vmatpush1.bf16.msra.mxu0 %v3566
    %5627 = vmatprep.subr.bf16.mxu0 0
    %5628 = vmatpush1.bf16.msra.mxu0 %v3561
    %5629 = vmatprep.subr.bf16.mxu0 0
    %5630 = vmatpush1.bf16.msra.mxu0 %v3556
    %5631 = vmatprep.subr.bf16.mxu0 0
    %5632 = vmatpush1.bf16.msra.mxu0 %v3551
    %5633 = vmatprep.subr.bf16.mxu0 0
    %5634 = vmatpush1.bf16.msra.mxu0 %v3546
    %5635 = vmatprep.subr.bf16.mxu0 0
    %5636 = vmatpush1.bf16.msra.mxu0 %v3541
    %5637 = vmatprep.subr.bf16.mxu0 0
    %5638 = vmatpush1.bf16.msra.mxu0 %v3536
    %5639 = vmatprep.subr.bf16.mxu0 0
    %5640 = vmatpush1.bf16.msra.mxu0 %v3531
    %5641 = vmatprep.subr.bf16.mxu0 0
    %5642 = vmatpush2.bf16.msra.mxu0 %v3606
    %5643 = vmatprep.subr.bf16.mxu0 0
    %5644 = vmatpush2.bf16.msra.mxu0 %v3601
    %5645 = vmatprep.subr.bf16.mxu0 0
    %5646 = vmatpush2.bf16.msra.mxu0 %v3596
    %5647 = vmatprep.subr.bf16.mxu0 0
    %5648 = vmatpush2.bf16.msra.mxu0 %v3591
    %5649 = vmatprep.subr.bf16.mxu0 0
    %5650 = vmatpush2.bf16.msra.mxu0 %v3586
    %5651 = vmatprep.subr.bf16.mxu0 0
    %5652 = vmatpush2.bf16.msra.mxu0 %v3581
    %5653 = vmatprep.subr.bf16.mxu0 0
    %5654 = vmatpush2.bf16.msra.mxu0 %v3576
    %5655 = vmatprep.subr.bf16.mxu0 0
    %5656 = vmatpush2.bf16.msra.mxu0 %v3571
    %5657 = vmatprep.mubr.bf16.mxu0 %v969
    %5658 = vmatmul.mubr.bf16.gmra.mxu0 %v955
    %v5659 = vpop.f32.mrf.mxu0
    %v5660 = vadd.f32 %v5620, %v5659
    %v5661 = vpop.f32.mrf.mxu0
    %v5662 = vpop.f32.mrf.mxu0
    %v5663 = vpop.f32.mrf.mxu0
    %5664 = vdwg.mxu0
    %5665 = vmatprep.subr.bf16.mxu0 0
    %5666 = vmatpush1.bf16.msra.mxu0 %v3646
    %5667 = vmatprep.subr.bf16.mxu0 0
    %5668 = vmatpush1.bf16.msra.mxu0 %v3641
    %5669 = vmatprep.subr.bf16.mxu0 0
    %5670 = vmatpush1.bf16.msra.mxu0 %v3636
    %5671 = vmatprep.subr.bf16.mxu0 0
    %5672 = vmatpush1.bf16.msra.mxu0 %v3631
    %5673 = vmatprep.subr.bf16.mxu0 0
    %5674 = vmatpush1.bf16.msra.mxu0 %v3626
    %5675 = vmatprep.subr.bf16.mxu0 0
    %5676 = vmatpush1.bf16.msra.mxu0 %v3621
    %5677 = vmatprep.subr.bf16.mxu0 0
    %5678 = vmatpush1.bf16.msra.mxu0 %v3616
    %5679 = vmatprep.subr.bf16.mxu0 0
    %5680 = vmatpush1.bf16.msra.mxu0 %v3611
    %5681 = vmatprep.subr.bf16.mxu0 0
    %5682 = vmatpush2.bf16.msra.mxu0 %v3686
    %5683 = vmatprep.subr.bf16.mxu0 0
    %5684 = vmatpush2.bf16.msra.mxu0 %v3681
    %5685 = vmatprep.subr.bf16.mxu0 0
    %5686 = vmatpush2.bf16.msra.mxu0 %v3676
    %5687 = vmatprep.subr.bf16.mxu0 0
    %5688 = vmatpush2.bf16.msra.mxu0 %v3671
    %5689 = vmatprep.subr.bf16.mxu0 0
    %5690 = vmatpush2.bf16.msra.mxu0 %v3666
    %5691 = vmatprep.subr.bf16.mxu0 0
    %5692 = vmatpush2.bf16.msra.mxu0 %v3661
    %5693 = vmatprep.subr.bf16.mxu0 0
    %5694 = vmatpush2.bf16.msra.mxu0 %v3656
    %5695 = vmatprep.subr.bf16.mxu0 0
    %5696 = vmatpush2.bf16.msra.mxu0 %v3651
    %5697 = vmatprep.mubr.bf16.mxu0 %v973
    %5698 = vmatmul.mubr.bf16.gmra.mxu0 %v971
    %v5699 = vpop.f32.mrf.mxu0
    %v5700 = vadd.f32 %v5660, %v5699
    %v5701 = vpop.f32.mrf.mxu0
    %v5702 = vpop.f32.mrf.mxu0
    %v5703 = vpop.f32.mrf.mxu0
    %5704 = vdwg.mxu0
    %5705 = vmatprep.subr.bf16.mxu0 0
    %5706 = vmatpush1.bf16.msra.mxu0 %v3726
    %5707 = vmatprep.subr.bf16.mxu0 0
    %5708 = vmatpush1.bf16.msra.mxu0 %v3721
    %5709 = vmatprep.subr.bf16.mxu0 0
    %5710 = vmatpush1.bf16.msra.mxu0 %v3716
    %5711 = vmatprep.subr.bf16.mxu0 0
    %5712 = vmatpush1.bf16.msra.mxu0 %v3711
    %5713 = vmatprep.subr.bf16.mxu0 0
    %5714 = vmatpush1.bf16.msra.mxu0 %v3706
    %5715 = vmatprep.subr.bf16.mxu0 0
    %5716 = vmatpush1.bf16.msra.mxu0 %v3701
    %5717 = vmatprep.subr.bf16.mxu0 0
    %5718 = vmatpush1.bf16.msra.mxu0 %v3696
    %5719 = vmatprep.subr.bf16.mxu0 0
    %5720 = vmatpush1.bf16.msra.mxu0 %v3691
    %5721 = vmatprep.subr.bf16.mxu0 0
    %5722 = vmatpush2.bf16.msra.mxu0 %v3766
    %5723 = vmatprep.subr.bf16.mxu0 0
    %5724 = vmatpush2.bf16.msra.mxu0 %v3761
    %5725 = vmatprep.subr.bf16.mxu0 0
    %5726 = vmatpush2.bf16.msra.mxu0 %v3756
    %5727 = vmatprep.subr.bf16.mxu0 0
    %5728 = vmatpush2.bf16.msra.mxu0 %v3751
    %5729 = vmatprep.subr.bf16.mxu0 0
    %5730 = vmatpush2.bf16.msra.mxu0 %v3746
    %5731 = vmatprep.subr.bf16.mxu0 0
    %5732 = vmatpush2.bf16.msra.mxu0 %v3741
    %5733 = vmatprep.subr.bf16.mxu0 0
    %5734 = vmatpush2.bf16.msra.mxu0 %v3736
    %5735 = vmatprep.subr.bf16.mxu0 0
    %5736 = vmatpush2.bf16.msra.mxu0 %v3731
    %5737 = vmatprep.mubr.bf16.mxu0 %v1011
    %5738 = vmatmul.mubr.bf16.gmra.mxu0 %v997
    %v5739 = vpop.f32.mrf.mxu0
    %v5740 = vadd.f32 %v5700, %v5739
    %v5741 = vpop.f32.mrf.mxu0
    %v5742 = vpop.f32.mrf.mxu0
    %v5743 = vpop.f32.mrf.mxu0
    %5744 = vdwg.mxu0
    %5745 = vmatprep.subr.bf16.mxu0 0
    %5746 = vmatpush1.bf16.msra.mxu0 %v3806
    %5747 = vmatprep.subr.bf16.mxu0 0
    %5748 = vmatpush1.bf16.msra.mxu0 %v3801
    %5749 = vmatprep.subr.bf16.mxu0 0
    %5750 = vmatpush1.bf16.msra.mxu0 %v3796
    %5751 = vmatprep.subr.bf16.mxu0 0
    %5752 = vmatpush1.bf16.msra.mxu0 %v3791
    %5753 = vmatprep.subr.bf16.mxu0 0
    %5754 = vmatpush1.bf16.msra.mxu0 %v3786
    %5755 = vmatprep.subr.bf16.mxu0 0
    %5756 = vmatpush1.bf16.msra.mxu0 %v3781
    %5757 = vmatprep.subr.bf16.mxu0 0
    %5758 = vmatpush1.bf16.msra.mxu0 %v3776
    %5759 = vmatprep.subr.bf16.mxu0 0
    %5760 = vmatpush1.bf16.msra.mxu0 %v3771
    %5761 = vmatprep.subr.bf16.mxu0 0
    %5762 = vmatpush2.bf16.msra.mxu0 %v3846
    %5763 = vmatprep.subr.bf16.mxu0 0
    %5764 = vmatpush2.bf16.msra.mxu0 %v3841
    %5765 = vmatprep.subr.bf16.mxu0 0
    %5766 = vmatpush2.bf16.msra.mxu0 %v3836
    %5767 = vmatprep.subr.bf16.mxu0 0
    %5768 = vmatpush2.bf16.msra.mxu0 %v3831
    %5769 = vmatprep.subr.bf16.mxu0 0
    %5770 = vmatpush2.bf16.msra.mxu0 %v3826
    %5771 = vmatprep.subr.bf16.mxu0 0
    %5772 = vmatpush2.bf16.msra.mxu0 %v3821
    %5773 = vmatprep.subr.bf16.mxu0 0
    %5774 = vmatpush2.bf16.msra.mxu0 %v3816
    %5775 = vmatprep.subr.bf16.mxu0 0
    %5776 = vmatpush2.bf16.msra.mxu0 %v3811
    %5777 = vmatprep.mubr.bf16.mxu0 %v1021
    %5778 = vmatmul.mubr.bf16.gmra.mxu0 %v1019
    %v5779 = vpop.f32.mrf.mxu0
    %v5780 = vadd.f32 %v5740, %v5779
    %v5781 = vpop.f32.mrf.mxu0
    %v5782 = vpop.f32.mrf.mxu0
    %v5783 = vpop.f32.mrf.mxu0
    %5784 = vdwg.mxu0
    %5785 = vmatprep.subr.bf16.mxu0 0
    %5786 = vmatpush1.bf16.msra.mxu0 %v3886
    %5787 = vmatprep.subr.bf16.mxu0 0
    %5788 = vmatpush1.bf16.msra.mxu0 %v3881
    %5789 = vmatprep.subr.bf16.mxu0 0
    %5790 = vmatpush1.bf16.msra.mxu0 %v3876
    %5791 = vmatprep.subr.bf16.mxu0 0
    %5792 = vmatpush1.bf16.msra.mxu0 %v3871
    %5793 = vmatprep.subr.bf16.mxu0 0
    %5794 = vmatpush1.bf16.msra.mxu0 %v3866
    %5795 = vmatprep.subr.bf16.mxu0 0
    %5796 = vmatpush1.bf16.msra.mxu0 %v3861
    %5797 = vmatprep.subr.bf16.mxu0 0
    %5798 = vmatpush1.bf16.msra.mxu0 %v3856
    %5799 = vmatprep.subr.bf16.mxu0 0
    %5800 = vmatpush1.bf16.msra.mxu0 %v3851
    %5801 = vmatprep.subr.bf16.mxu0 0
    %5802 = vmatpush2.bf16.msra.mxu0 %v3926
    %5803 = vmatprep.subr.bf16.mxu0 0
    %5804 = vmatpush2.bf16.msra.mxu0 %v3921
    %5805 = vmatprep.subr.bf16.mxu0 0
    %5806 = vmatpush2.bf16.msra.mxu0 %v3916
    %5807 = vmatprep.subr.bf16.mxu0 0
    %5808 = vmatpush2.bf16.msra.mxu0 %v3911
    %5809 = vmatprep.subr.bf16.mxu0 0
    %5810 = vmatpush2.bf16.msra.mxu0 %v3906
    %5811 = vmatprep.subr.bf16.mxu0 0
    %5812 = vmatpush2.bf16.msra.mxu0 %v3901
    %5813 = vmatprep.subr.bf16.mxu0 0
    %5814 = vmatpush2.bf16.msra.mxu0 %v3896
    %5815 = vmatprep.subr.bf16.mxu0 0
    %5816 = vmatpush2.bf16.msra.mxu0 %v3891
    %5817 = vmatprep.mubr.bf16.mxu0 %v1018
    %5818 = vmatmul.mubr.bf16.gmra.mxu0 %v1004
    %v5819 = vpop.f32.mrf.mxu0
    %v5820 = vadd.f32 %v5780, %v5819
    %v5821 = vpop.f32.mrf.mxu0
    %v5822 = vpop.f32.mrf.mxu0
    %v5823 = vpop.f32.mrf.mxu0
    %5824 = vdwg.mxu0
    %5825 = vmatprep.subr.bf16.mxu0 0
    %5826 = vmatpush1.bf16.msra.mxu0 %v3966
    %5827 = vmatprep.subr.bf16.mxu0 0
    %5828 = vmatpush1.bf16.msra.mxu0 %v3961
    %5829 = vmatprep.subr.bf16.mxu0 0
    %5830 = vmatpush1.bf16.msra.mxu0 %v3956
    %5831 = vmatprep.subr.bf16.mxu0 0
    %5832 = vmatpush1.bf16.msra.mxu0 %v3951
    %5833 = vmatprep.subr.bf16.mxu0 0
    %5834 = vmatpush1.bf16.msra.mxu0 %v3946
    %5835 = vmatprep.subr.bf16.mxu0 0
    %5836 = vmatpush1.bf16.msra.mxu0 %v3941
    %5837 = vmatprep.subr.bf16.mxu0 0
    %5838 = vmatpush1.bf16.msra.mxu0 %v3936
    %5839 = vmatprep.subr.bf16.mxu0 0
    %5840 = vmatpush1.bf16.msra.mxu0 %v3931
    %5841 = vmatprep.subr.bf16.mxu0 0
    %5842 = vmatpush2.bf16.msra.mxu0 %v4006
    %5843 = vmatprep.subr.bf16.mxu0 0
    %5844 = vmatpush2.bf16.msra.mxu0 %v4001
    %5845 = vmatprep.subr.bf16.mxu0 0
    %5846 = vmatpush2.bf16.msra.mxu0 %v3996
    %5847 = vmatprep.subr.bf16.mxu0 0
    %5848 = vmatpush2.bf16.msra.mxu0 %v3991
    %5849 = vmatprep.subr.bf16.mxu0 0
    %5850 = vmatpush2.bf16.msra.mxu0 %v3986
    %5851 = vmatprep.subr.bf16.mxu0 0
    %5852 = vmatpush2.bf16.msra.mxu0 %v3981
    %5853 = vmatprep.subr.bf16.mxu0 0
    %5854 = vmatpush2.bf16.msra.mxu0 %v3976
    %5855 = vmatprep.subr.bf16.mxu0 0
    %5856 = vmatpush2.bf16.msra.mxu0 %v3971
    %5857 = vmatprep.mubr.bf16.mxu0 %v1022
    %5858 = vmatmul.mubr.bf16.gmra.mxu0 %v1020
    %v5859 = vpop.f32.mrf.mxu0
    %v5860 = vadd.f32 %v5820, %v5859
    %v5861 = vpop.f32.mrf.mxu0
    %v5862 = vpop.f32.mrf.mxu0
    %v5863 = vpop.f32.mrf.mxu0
    %5864 = vdwg.mxu0
    %5865 = vmatprep.subr.bf16.mxu0 0
    %5866 = vmatpush1.bf16.msra.mxu0 %v4046
    %5867 = vmatprep.subr.bf16.mxu0 0
    %5868 = vmatpush1.bf16.msra.mxu0 %v4041
    %5869 = vmatprep.subr.bf16.mxu0 0
    %5870 = vmatpush1.bf16.msra.mxu0 %v4036
    %5871 = vmatprep.subr.bf16.mxu0 0
    %5872 = vmatpush1.bf16.msra.mxu0 %v4031
    %5873 = vmatprep.subr.bf16.mxu0 0
    %5874 = vmatpush1.bf16.msra.mxu0 %v4026
    %5875 = vmatprep.subr.bf16.mxu0 0
    %5876 = vmatpush1.bf16.msra.mxu0 %v4021
    %5877 = vmatprep.subr.bf16.mxu0 0
    %5878 = vmatpush1.bf16.msra.mxu0 %v4016
    %5879 = vmatprep.subr.bf16.mxu0 0
    %5880 = vmatpush1.bf16.msra.mxu0 %v4011
    %5881 = vmatprep.subr.bf16.mxu0 0
    %5882 = vmatpush2.bf16.msra.mxu0 %v4086
    %5883 = vmatprep.subr.bf16.mxu0 0
    %5884 = vmatpush2.bf16.msra.mxu0 %v4081
    %5885 = vmatprep.subr.bf16.mxu0 0
    %5886 = vmatpush2.bf16.msra.mxu0 %v4076
    %5887 = vmatprep.subr.bf16.mxu0 0
    %5888 = vmatpush2.bf16.msra.mxu0 %v4071
    %5889 = vmatprep.subr.bf16.mxu0 0
    %5890 = vmatpush2.bf16.msra.mxu0 %v4066
    %5891 = vmatprep.subr.bf16.mxu0 0
    %5892 = vmatpush2.bf16.msra.mxu0 %v4061
    %5893 = vmatprep.subr.bf16.mxu0 0
    %5894 = vmatpush2.bf16.msra.mxu0 %v4056
    %5895 = vmatprep.subr.bf16.mxu0 0
    %5896 = vmatpush2.bf16.msra.mxu0 %v4051
    %5897 = vmatprep.mubr.bf16.mxu0 %v1044
    %5898 = vmatmul.mubr.bf16.gmra.mxu0 %v1037
    %v5899 = vpop.f32.mrf.mxu0
    %v5900 = vadd.f32 %v5860, %v5899
    %v5901 = vpop.f32.mrf.mxu0
    %v5902 = vpop.f32.mrf.mxu0
    %v5903 = vpop.f32.mrf.mxu0
    %5904 = vdwg.mxu0
    %v5905 = vpack.c.bf16 %v5170, %v5170
    %v5906 = vpack.c.bf16 %v5172, %v5172
    %v5907 = vpack.c.bf16 %v5539, %v5539
    %v5908 = vpack.c.bf16 %v5541, %v5541
    %v5909 = vpack.c.bf16 %v5900, %v5900
    %v5910 = vld [vmem:[%s3] sm:$0xf]
    %v5911 = vld [vmem:[%s3 + $0x4] sm:$0xf]
    %v5912 = vld [vmem:[%s3 + $0x8] sm:$0xf]
    %v5913 = vld [vmem:[%s3 + $0xc] sm:$0xf]
    %v5914 = vld [vmem:[%s3 + $0x10] sm:$0xf]
    %v5915 = vld [vmem:[%s3 + $0x14] sm:$0xf]
    %v5916 = vld [vmem:[%s3 + $0x18] sm:$0xf]
    %v5917 = vld [vmem:[%s3 + $0x1c] sm:$0xf]
    %v5918 = vld [vmem:[%s3 + $0x20] sm:$0xf]
    %v5919 = vld [vmem:[%s3 + $0x24] sm:$0xf]
    %v5920 = vld [vmem:[%s3 + $0x28] sm:$0xf]
    %v5921 = vld [vmem:[%s3 + $0x2c] sm:$0xf]
    %v5922 = vld [vmem:[%s3 + $0x30] sm:$0xf]
    %v5923 = vld [vmem:[%s3 + $0x34] sm:$0xf]
    %v5924 = vld [vmem:[%s3 + $0x38] sm:$0xf]
    %v5925 = vld [vmem:[%s3 + $0x3c] sm:$0xf]
    %v5926 = vld [vmem:[%s3 + $0x40] sm:$0xf]
    %v5927 = vld [vmem:[%s3 + $0x44] sm:$0xf]
    %v5928 = vld [vmem:[%s3 + $0x48] sm:$0xf]
    %v5929 = vld [vmem:[%s3 + $0x4c] sm:$0xf]
    %v5930 = vld [vmem:[%s3 + $0x50] sm:$0xf]
    %v5931 = vld [vmem:[%s3 + $0x54] sm:$0xf]
    %v5932 = vld [vmem:[%s3 + $0x58] sm:$0xf]
    %v5933 = vld [vmem:[%s3 + $0x5c] sm:$0xf]
    %v5934 = vld [vmem:[%s3 + $0x60] sm:$0xf]
    %v5935 = vld [vmem:[%s3 + $0x64] sm:$0xf]
    %v5936 = vld [vmem:[%s3 + $0x68] sm:$0xf]
    %v5937 = vld [vmem:[%s3 + $0x6c] sm:$0xf]
    %v5938 = vld [vmem:[%s3 + $0x70] sm:$0xf]
    %v5939 = vld [vmem:[%s3 + $0x74] sm:$0xf]
    %v5940 = vld [vmem:[%s3 + $0x78] sm:$0xf]
    %v5941 = vld [vmem:[%s3 + $0x7c] sm:$0xf]
    %v5942 = vld [vmem:[%s3 + $0x80] sm:$0xf]
    %v5943 = vld [vmem:[%s3 + $0x84] sm:$0xf]
    %v5944 = vld [vmem:[%s3 + $0x88] sm:$0xf]
    %v5945 = vld [vmem:[%s3 + $0x8c] sm:$0xf]
    %v5946 = vld [vmem:[%s3 + $0x90] sm:$0xf]
    %v5947 = vld [vmem:[%s3 + $0x94] sm:$0xf]
    %v5948 = vld [vmem:[%s3 + $0x98] sm:$0xf]
    %v5949 = vld [vmem:[%s3 + $0x9c] sm:$0xf]
    %v5950 = vld [vmem:[%s3 + $0xa0] sm:$0xf]
    %v5951 = vld [vmem:[%s3 + $0xa4] sm:$0xf]
    %v5952 = vld [vmem:[%s3 + $0xa8] sm:$0xf]
    %v5953 = vld [vmem:[%s3 + $0xac] sm:$0xf]
    %v5954 = vld [vmem:[%s3 + $0xb0] sm:$0xf]
    %v5955 = vld [vmem:[%s3 + $0xb4] sm:$0xf]
    %v5956 = vld [vmem:[%s3 + $0xb8] sm:$0xf]
    %v5957 = vld [vmem:[%s3 + $0xbc] sm:$0xf]
    %v5958 = vld [vmem:[%s3 + $0xc0] sm:$0xf]
    %v5959 = vld [vmem:[%s3 + $0xc4] sm:$0xf]
    %v5960 = vld [vmem:[%s3 + $0xc8] sm:$0xf]
    %v5961 = vld [vmem:[%s3 + $0xcc] sm:$0xf]
    %v5962 = vld [vmem:[%s3 + $0xd0] sm:$0xf]
    %v5963 = vld [vmem:[%s3 + $0xd4] sm:$0xf]
    %v5964 = vld [vmem:[%s3 + $0xd8] sm:$0xf]
    %v5965 = vld [vmem:[%s3 + $0xdc] sm:$0xf]
    %v5966 = vld [vmem:[%s3 + $0xe0] sm:$0xf]
    %v5967 = vld [vmem:[%s3 + $0xe4] sm:$0xf]
    %v5968 = vld [vmem:[%s3 + $0xe8] sm:$0xf]
    %v5969 = vld [vmem:[%s3 + $0xec] sm:$0xf]
    %v5970 = vld [vmem:[%s3 + $0xf0] sm:$0xf]
    %v5971 = vld [vmem:[%s3 + $0xf4] sm:$0xf]
    %v5972 = vld [vmem:[%s3 + $0xf8] sm:$0xf]
    %v5973 = vld [vmem:[%s3 + $0xfc] sm:$0xf]
    %v5974 = vld [vmem:[%s3 + $0x100] sm:$0xf]
    %v5975 = vld [vmem:[%s3 + $0x104] sm:$0xf]
    %v5976 = vld [vmem:[%s3 + $0x108] sm:$0xf]
    %v5977 = vld [vmem:[%s3 + $0x10c] sm:$0xf]
    %v5978 = vld [vmem:[%s3 + $0x110] sm:$0xf]
    %v5979 = vld [vmem:[%s3 + $0x114] sm:$0xf]
    %v5980 = vld [vmem:[%s3 + $0x118] sm:$0xf]
    %v5981 = vld [vmem:[%s3 + $0x11c] sm:$0xf]
    %v5982 = vld [vmem:[%s3 + $0x120] sm:$0xf]
    %v5983 = vld [vmem:[%s3 + $0x124] sm:$0xf]
    %v5984 = vld [vmem:[%s3 + $0x128] sm:$0xf]
    %v5985 = vld [vmem:[%s3 + $0x12c] sm:$0xf]
    %v5986 = vld [vmem:[%s3 + $0x130] sm:$0xf]
    %v5987 = vld [vmem:[%s3 + $0x134] sm:$0xf]
    %v5988 = vld [vmem:[%s3 + $0x138] sm:$0xf]
    %v5989 = vld [vmem:[%s3 + $0x13c] sm:$0xf]
    %v5990 = vld [vmem:[%s4] sm:$0x1]
    %v5992 = vlaneseq
    %v5993 = vshrl.u32 %v5992, 7
    %v5994 = vsub.s32 0, %v5993
    %v5995 = vrot.slane %v5990, %v5994
    %v6077 = vunpack.c.l.b16 %v5910
    %v6078 = vunpack.c.l.b16 %v5911
    %v6079 = vunpack.c.l.b16 %v5912
    %v6080 = vunpack.c.l.b16 %v5913
    %v6081 = vunpack.c.l.b16 %v5914
    %v6082 = vunpack.c.l.b16 %v5915
    %v6083 = vunpack.c.l.b16 %v5916
    %v6084 = vunpack.c.l.b16 %v5917
    %v6085 = vunpack.c.l.b16 %v5918
    %v6086 = vunpack.c.l.b16 %v5919
    %v6087 = vunpack.c.l.b16 %v5920
    %v6088 = vunpack.c.l.b16 %v5921
    %v6089 = vunpack.c.l.b16 %v5922
    %v6090 = vunpack.c.l.b16 %v5923
    %v6091 = vunpack.c.l.b16 %v5924
    %v6092 = vunpack.c.l.b16 %v5925
    %v6093 = vunpack.c.l.b16 %v5926
    %v6094 = vunpack.c.l.b16 %v5927
    %v6095 = vunpack.c.l.b16 %v5928
    %v6096 = vunpack.c.l.b16 %v5929
    %v6097 = vunpack.c.l.b16 %v5930
    %v6098 = vunpack.c.l.b16 %v5931
    %v6099 = vunpack.c.l.b16 %v5932
    %v6100 = vunpack.c.l.b16 %v5933
    %v6101 = vunpack.c.l.b16 %v5934
    %v6102 = vunpack.c.l.b16 %v5935
    %v6103 = vunpack.c.l.b16 %v5936
    %v6104 = vunpack.c.l.b16 %v5937
    %v6105 = vunpack.c.l.b16 %v5938
    %v6106 = vunpack.c.l.b16 %v5939
    %v6107 = vunpack.c.l.b16 %v5940
    %v6108 = vunpack.c.l.b16 %v5941
    %v6109 = vunpack.c.l.b16 %v5942
    %v6110 = vunpack.c.l.b16 %v5943
    %v6111 = vunpack.c.l.b16 %v5944
    %v6112 = vunpack.c.l.b16 %v5945
    %v6113 = vunpack.c.l.b16 %v5946
    %v6114 = vunpack.c.l.b16 %v5947
    %v6115 = vunpack.c.l.b16 %v5948
    %v6116 = vunpack.c.l.b16 %v5949
    %v6117 = vunpack.c.l.b16 %v5950
    %v6118 = vunpack.c.l.b16 %v5951
    %v6119 = vunpack.c.l.b16 %v5952
    %v6120 = vunpack.c.l.b16 %v5953
    %v6121 = vunpack.c.l.b16 %v5954
    %v6122 = vunpack.c.l.b16 %v5955
    %v6123 = vunpack.c.l.b16 %v5956
    %v6124 = vunpack.c.l.b16 %v5957
    %v6125 = vunpack.c.l.b16 %v5958
    %v6126 = vunpack.c.l.b16 %v5959
    %v6127 = vunpack.c.l.b16 %v5960
    %v6128 = vunpack.c.l.b16 %v5961
    %v6129 = vunpack.c.l.b16 %v5962
    %v6130 = vunpack.c.l.b16 %v5963
    %v6131 = vunpack.c.l.b16 %v5964
    %v6132 = vunpack.c.l.b16 %v5965
    %v6133 = vunpack.c.l.b16 %v5966
    %v6134 = vunpack.c.l.b16 %v5967
    %v6135 = vunpack.c.l.b16 %v5968
    %v6136 = vunpack.c.l.b16 %v5969
    %v6137 = vunpack.c.l.b16 %v5970
    %v6138 = vunpack.c.l.b16 %v5971
    %v6139 = vunpack.c.l.b16 %v5972
    %v6140 = vunpack.c.l.b16 %v5973
    %v6141 = vunpack.c.l.b16 %v5974
    %v6142 = vunpack.c.l.b16 %v5975
    %v6143 = vunpack.c.l.b16 %v5976
    %v6144 = vunpack.c.l.b16 %v5977
    %v6145 = vunpack.c.l.b16 %v5978
    %v6146 = vunpack.c.l.b16 %v5979
    %v6147 = vunpack.c.l.b16 %v5980
    %v6148 = vunpack.c.l.b16 %v5981
    %v6149 = vunpack.c.l.b16 %v5982
    %v6150 = vunpack.c.l.b16 %v5983
    %v6151 = vunpack.c.l.b16 %v5984
    %v6152 = vunpack.c.l.b16 %v5985
    %v6153 = vunpack.c.l.b16 %v5986
    %v6154 = vunpack.c.l.b16 %v5987
    %v6155 = vunpack.c.l.b16 %v5988
    %v6156 = vunpack.c.l.b16 %v5989
    %v6157 = vpack.c.b16 %v6078, %v6077
    %v6158 = vpack.c.b16 %v6080, %v6079
    %v6159 = vpack.c.b16 %v6082, %v6081
    %v6160 = vpack.c.b16 %v6084, %v6083
    %v6161 = vpack.c.b16 %v6086, %v6085
    %v6162 = vpack.c.b16 %v6088, %v6087
    %v6163 = vpack.c.b16 %v6090, %v6089
    %v6164 = vpack.c.b16 %v6092, %v6091
    %v6165 = vpack.c.b16 %v6094, %v6093
    %v6166 = vpack.c.b16 %v6096, %v6095
    %v6167 = vpack.c.b16 %v6098, %v6097
    %v6168 = vpack.c.b16 %v6100, %v6099
    %v6169 = vpack.c.b16 %v6102, %v6101
    %v6170 = vpack.c.b16 %v6104, %v6103
    %v6171 = vpack.c.b16 %v6106, %v6105
    %v6172 = vpack.c.b16 %v6108, %v6107
    %v6173 = vpack.c.b16 %v6110, %v6109
    %v6174 = vpack.c.b16 %v6112, %v6111
    %v6175 = vpack.c.b16 %v6114, %v6113
    %v6176 = vpack.c.b16 %v6116, %v6115
    %v6177 = vpack.c.b16 %v6118, %v6117
    %v6178 = vpack.c.b16 %v6120, %v6119
    %v6179 = vpack.c.b16 %v6122, %v6121
    %v6180 = vpack.c.b16 %v6124, %v6123
    %v6181 = vpack.c.b16 %v6126, %v6125
    %v6182 = vpack.c.b16 %v6128, %v6127
    %v6183 = vpack.c.b16 %v6130, %v6129
    %v6184 = vpack.c.b16 %v6132, %v6131
    %v6185 = vpack.c.b16 %v6134, %v6133
    %v6186 = vpack.c.b16 %v6136, %v6135
    %v6187 = vpack.c.b16 %v6138, %v6137
    %v6188 = vpack.c.b16 %v6140, %v6139
    %v6189 = vpack.c.b16 %v6142, %v6141
    %v6190 = vpack.c.b16 %v6144, %v6143
    %v6191 = vpack.c.b16 %v6146, %v6145
    %v6192 = vpack.c.b16 %v6148, %v6147
    %v6193 = vpack.c.b16 %v6150, %v6149
    %v6194 = vpack.c.b16 %v6152, %v6151
    %v6195 = vpack.c.b16 %v6154, %v6153
    %v6196 = vpack.c.b16 %v6156, %v6155
    %6237 = vmatprep.subr.bf16.mxu0 0
    %6238 = vmatpush1.bf16.msra.mxu0 %v6164
    %6239 = vmatprep.subr.bf16.mxu0 0
    %6240 = vmatpush1.bf16.msra.mxu0 %v6163
    %6241 = vmatprep.subr.bf16.mxu0 0
    %6242 = vmatpush1.bf16.msra.mxu0 %v6162
    %6243 = vmatprep.subr.bf16.mxu0 0
    %6244 = vmatpush1.bf16.msra.mxu0 %v6161
    %6245 = vmatprep.subr.bf16.mxu0 0
    %6246 = vmatpush1.bf16.msra.mxu0 %v6160
    %6247 = vmatprep.subr.bf16.mxu0 0
    %6248 = vmatpush1.bf16.msra.mxu0 %v6159
    %6249 = vmatprep.subr.bf16.mxu0 0
    %6250 = vmatpush1.bf16.msra.mxu0 %v6158
    %6251 = vmatprep.subr.bf16.mxu0 0
    %6252 = vmatpush1.bf16.msra.mxu0 %v6157
    %6253 = vmatprep.subr.bf16.mxu0 0
    %6254 = vmatpush2.bf16.msra.mxu0 %v6172
    %6255 = vmatprep.subr.bf16.mxu0 0
    %6256 = vmatpush2.bf16.msra.mxu0 %v6171
    %6257 = vmatprep.subr.bf16.mxu0 0
    %6258 = vmatpush2.bf16.msra.mxu0 %v6170
    %6259 = vmatprep.subr.bf16.mxu0 0
    %6260 = vmatpush2.bf16.msra.mxu0 %v6169
    %6261 = vmatprep.subr.bf16.mxu0 0
    %6262 = vmatpush2.bf16.msra.mxu0 %v6168
    %6263 = vmatprep.subr.bf16.mxu0 0
    %6264 = vmatpush2.bf16.msra.mxu0 %v6167
    %6265 = vmatprep.subr.bf16.mxu0 0
    %6266 = vmatpush2.bf16.msra.mxu0 %v6166
    %6267 = vmatprep.subr.bf16.mxu0 0
    %6268 = vmatpush2.bf16.msra.mxu0 %v6165
    %6269 = vmatprep.mubr.bf16.mxu0 %v5906
    %6270 = vmatmul.mubr.bf16.gmra.mxu0 %v5905
    %v6271 = vpop.f32.mrf.mxu0
    %v6272 = vadd.f32 %v5995, %v6271
    %v6273 = vpop.f32.mrf.mxu0
    %v6274 = vpop.f32.mrf.mxu0
    %v6275 = vpop.f32.mrf.mxu0
    %6276 = vdwg.mxu0
    %6277 = vmatprep.subr.bf16.mxu0 0
    %6278 = vmatpush1.bf16.msra.mxu0 %v6180
    %6279 = vmatprep.subr.bf16.mxu0 0
    %6280 = vmatpush1.bf16.msra.mxu0 %v6179
    %6281 = vmatprep.subr.bf16.mxu0 0
    %6282 = vmatpush1.bf16.msra.mxu0 %v6178
    %6283 = vmatprep.subr.bf16.mxu0 0
    %6284 = vmatpush1.bf16.msra.mxu0 %v6177
    %6285 = vmatprep.subr.bf16.mxu0 0
    %6286 = vmatpush1.bf16.msra.mxu0 %v6176
    %6287 = vmatprep.subr.bf16.mxu0 0
    %6288 = vmatpush1.bf16.msra.mxu0 %v6175
    %6289 = vmatprep.subr.bf16.mxu0 0
    %6290 = vmatpush1.bf16.msra.mxu0 %v6174
    %6291 = vmatprep.subr.bf16.mxu0 0
    %6292 = vmatpush1.bf16.msra.mxu0 %v6173
    %6293 = vmatprep.subr.bf16.mxu0 0
    %6294 = vmatpush2.bf16.msra.mxu0 %v6188
    %6295 = vmatprep.subr.bf16.mxu0 0
    %6296 = vmatpush2.bf16.msra.mxu0 %v6187
    %6297 = vmatprep.subr.bf16.mxu0 0
    %6298 = vmatpush2.bf16.msra.mxu0 %v6186
    %6299 = vmatprep.subr.bf16.mxu0 0
    %6300 = vmatpush2.bf16.msra.mxu0 %v6185
    %6301 = vmatprep.subr.bf16.mxu0 0
    %6302 = vmatpush2.bf16.msra.mxu0 %v6184
    %6303 = vmatprep.subr.bf16.mxu0 0
    %6304 = vmatpush2.bf16.msra.mxu0 %v6183
    %6305 = vmatprep.subr.bf16.mxu0 0
    %6306 = vmatpush2.bf16.msra.mxu0 %v6182
    %6307 = vmatprep.subr.bf16.mxu0 0
    %6308 = vmatpush2.bf16.msra.mxu0 %v6181
    %6309 = vmatprep.mubr.bf16.mxu0 %v5908
    %6310 = vmatmul.mubr.bf16.gmra.mxu0 %v5907
    %v6311 = vpop.f32.mrf.mxu0
    %v6312 = vadd.f32 %v6272, %v6311
    %v6313 = vpop.f32.mrf.mxu0
    %v6314 = vpop.f32.mrf.mxu0
    %v6315 = vpop.f32.mrf.mxu0
    %6316 = vdwg.mxu0
    %6317 = vmatprep.subr.bf16.mxu0 0
    %6318 = vmatpush1.bf16.msra.mxu0 %v6196
    %6319 = vmatprep.subr.bf16.mxu0 0
    %6320 = vmatpush1.bf16.msra.mxu0 %v6195
    %6321 = vmatprep.subr.bf16.mxu0 0
    %6322 = vmatpush1.bf16.msra.mxu0 %v6194
    %6323 = vmatprep.subr.bf16.mxu0 0
    %6324 = vmatpush1.bf16.msra.mxu0 %v6193
    %6325 = vmatprep.subr.bf16.mxu0 0
    %6326 = vmatpush1.bf16.msra.mxu0 %v6192
    %6327 = vmatprep.subr.bf16.mxu0 0
    %6328 = vmatpush1.bf16.msra.mxu0 %v6191
    %6329 = vmatprep.subr.bf16.mxu0 0
    %6330 = vmatpush1.bf16.msra.mxu0 %v6190
    %6331 = vmatprep.subr.bf16.mxu0 0
    %6332 = vmatpush1.bf16.msra.mxu0 %v6189
    %6333 = vmatprep.subr.bf16.mxu0 0
    %6334 = vmatpush2.bf16.msra.mxu0 0
    %6335 = vmatprep.subr.bf16.mxu0 0
    %6336 = vmatpush2.bf16.msra.mxu0 0
    %6337 = vmatprep.subr.bf16.mxu0 0
    %6338 = vmatpush2.bf16.msra.mxu0 0
    %6339 = vmatprep.subr.bf16.mxu0 0
    %6340 = vmatpush2.bf16.msra.mxu0 0
    %6341 = vmatprep.subr.bf16.mxu0 0
    %6342 = vmatpush2.bf16.msra.mxu0 0
    %6343 = vmatprep.subr.bf16.mxu0 0
    %6344 = vmatpush2.bf16.msra.mxu0 0
    %6345 = vmatprep.subr.bf16.mxu0 0
    %6346 = vmatpush2.bf16.msra.mxu0 0
    %6347 = vmatprep.subr.bf16.mxu0 0
    %6348 = vmatpush2.bf16.msra.mxu0 0
    %6349 = vmatprep.mubr.bf16.mxu0 0
    %6350 = vmatmul.mubr.bf16.gmra.mxu0 %v5909
    %v6351 = vpop.f32.mrf.mxu0
    %v6352 = vadd.f32 %v6312, %v6351
    %v6353 = vpop.f32.mrf.mxu0
    %v6354 = vpop.f32.mrf.mxu0
    %v6355 = vpop.f32.mrf.mxu0
    %6356 = vdwg.mxu0
    %v6357 = vpack.c.bf16 %v6352, %v6352
    %v6358 = vld [vmem:[%s5] sm:$0xf]
    %v6359 = vld [vmem:[%s5 + $0x4] sm:$0xf]
    %v6360 = vld [vmem:[%s5 + $0x8] sm:$0xf]
    %v6361 = vld [vmem:[%s5 + $0xc] sm:$0xf]
    %v6362 = vld [vmem:[%s5 + $0x10] sm:$0xf]
    %v6363 = vld [vmem:[%s5 + $0x14] sm:$0xf]
    %v6364 = vld [vmem:[%s5 + $0x18] sm:$0xf]
    %v6365 = vld [vmem:[%s5 + $0x1c] sm:$0xf]
    %v6366 = vld [vmem:[%s5 + $0x20] sm:$0xf]
    %v6367 = vld [vmem:[%s5 + $0x24] sm:$0xf]
    %v6368 = vld [vmem:[%s5 + $0x28] sm:$0xf]
    %v6369 = vld [vmem:[%s5 + $0x2c] sm:$0xf]
    %v6370 = vld [vmem:[%s5 + $0x30] sm:$0xf]
    %v6371 = vld [vmem:[%s5 + $0x34] sm:$0xf]
    %v6372 = vld [vmem:[%s5 + $0x38] sm:$0xf]
    %v6373 = vld [vmem:[%s5 + $0x3c] sm:$0xf]
    %v6374 = vld [vmem:[%s6] sm:$0x1]
    %v6376 = vlaneseq
    %v6377 = vshrl.u32 %v6376, 7
    %v6378 = vsub.s32 0, %v6377
    %v6379 = vrot.slane %v6374, %v6378
    %v6397 = vunpack.c.l.b16 %v6358
    %v6398 = vunpack.c.l.b16 %v6359
    %v6399 = vunpack.c.l.b16 %v6360
    %v6400 = vunpack.c.l.b16 %v6361
    %v6401 = vunpack.c.l.b16 %v6362
    %v6402 = vunpack.c.l.b16 %v6363
    %v6403 = vunpack.c.l.b16 %v6364
    %v6404 = vunpack.c.l.b16 %v6365
    %v6405 = vunpack.c.l.b16 %v6366
    %v6406 = vunpack.c.l.b16 %v6367
    %v6407 = vunpack.c.l.b16 %v6368
    %v6408 = vunpack.c.l.b16 %v6369
    %v6409 = vunpack.c.l.b16 %v6370
    %v6410 = vunpack.c.l.b16 %v6371
    %v6411 = vunpack.c.l.b16 %v6372
    %v6412 = vunpack.c.l.b16 %v6373
    %v6413 = vpack.c.b16 %v6398, %v6397
    %v6414 = vpack.c.b16 %v6400, %v6399
    %v6415 = vpack.c.b16 %v6402, %v6401
    %v6416 = vpack.c.b16 %v6404, %v6403
    %v6417 = vpack.c.b16 %v6406, %v6405
    %v6418 = vpack.c.b16 %v6408, %v6407
    %v6419 = vpack.c.b16 %v6410, %v6409
    %v6420 = vpack.c.b16 %v6412, %v6411
    %6429 = vmatprep.subr.bf16.mxu0 0
    %6430 = vmatpush1.bf16.msra.mxu0 %v6420
    %6431 = vmatprep.subr.bf16.mxu0 0
    %6432 = vmatpush1.bf16.msra.mxu0 %v6419
    %6433 = vmatprep.subr.bf16.mxu0 0
    %6434 = vmatpush1.bf16.msra.mxu0 %v6418
    %6435 = vmatprep.subr.bf16.mxu0 0
    %6436 = vmatpush1.bf16.msra.mxu0 %v6417
    %6437 = vmatprep.subr.bf16.mxu0 0
    %6438 = vmatpush1.bf16.msra.mxu0 %v6416
    %6439 = vmatprep.subr.bf16.mxu0 0
    %6440 = vmatpush1.bf16.msra.mxu0 %v6415
    %6441 = vmatprep.subr.bf16.mxu0 0
    %6442 = vmatpush1.bf16.msra.mxu0 %v6414
    %6443 = vmatprep.subr.bf16.mxu0 0
    %6444 = vmatpush1.bf16.msra.mxu0 %v6413
    %6445 = vmatprep.subr.bf16.mxu0 0
    %6446 = vmatpush2.bf16.msra.mxu0 0
    %6447 = vmatprep.subr.bf16.mxu0 0
    %6448 = vmatpush2.bf16.msra.mxu0 0
    %6449 = vmatprep.subr.bf16.mxu0 0
    %6450 = vmatpush2.bf16.msra.mxu0 0
    %6451 = vmatprep.subr.bf16.mxu0 0
    %6452 = vmatpush2.bf16.msra.mxu0 0
    %6453 = vmatprep.subr.bf16.mxu0 0
    %6454 = vmatpush2.bf16.msra.mxu0 0
    %6455 = vmatprep.subr.bf16.mxu0 0
    %6456 = vmatpush2.bf16.msra.mxu0 0
    %6457 = vmatprep.subr.bf16.mxu0 0
    %6458 = vmatpush2.bf16.msra.mxu0 0
    %6459 = vmatprep.subr.bf16.mxu0 0
    %6460 = vmatpush2.bf16.msra.mxu0 0
    %6461 = vmatprep.mubr.bf16.mxu0 0
    %6462 = vmatmul.mubr.bf16.gmra.mxu0 %v6357
    %v6463 = vpop.f32.mrf.mxu0
    %v6464 = vadd.f32 %v6379, %v6463
    %v6465 = vpop.f32.mrf.mxu0
    %v6466 = vpop.f32.mrf.mxu0
    %v6467 = vpop.f32.mrf.mxu0
    %6468 = vdwg.mxu0
    %6469 = vst [vmem:[#allocation2] sm:$0x3] %v6464
    // Predicated region
    $region30: #{a_call__.9} parent=1 // pred_check
      _
    $region31: #{a_call__.9} parent=1 // pred_check_branch
      %6471 = sbr.rel (0) target = $region33
    $region32: #{a_call__.9} parent=1 // pred_region
      %s6473 = ssub.s32 32, 32
      %6474 = vsyncadd [#allocation3], %s6473
      %s6476 = sshll.u32 [#allocation2], 4
      %s6477 = int_to_ptr.vmem [resolvable:$true] %s6476
      %6479 = dma.vmem_to_hbm [thread:$0]  %s6477, 32, %s7, [#allocation3]
    $region33: #{a_call__.9} parent=1 // pred_fallthru
      _
    // Predicated region
    $region34: #{a_call__.9} parent=1 // pred_check
      _
    $region35: #{a_call__.9} parent=1 // pred_check_branch
      %6481 = sbr.rel (0) target = $region37
    $region36: #{a_call__.9} parent=1 // pred_region
      %6482 = dma.done [#allocation3], 32
    $region37: #{a_call__.9} parent=1 // pred_fallthru
      _
    %6483 = vsyncpa [#allocation3], 1

</llo_original>
